<compile_context>
chip_gen: v6e
topology: v6e:2x2x1
jax: 0.10.0
libtpu: 0.0.40
codegen_flags: <defaults>
</compile_context>

<pallas_src>
import jax
import jax.numpy as jnp
from jax.experimental import pallas as pl
from jax.experimental.pallas import tpu as pltpu


NEG_SLOPE = 0.2
_PARAM_ORDER = ("w1", "b1", "w2", "b2", "w3", "b3", "w4", "b4")


def _round_up(n, m):
    return ((n + m - 1) // m) * m


def _leaky_relu(v):
    # max(v, a*v) == leaky_relu(v, a) for 0 < a < 1; one fewer VALU op than where().
    return jnp.maximum(v, NEG_SLOPE * v)


# ----------------------------------------------------------------------------
# Kernel
# ----------------------------------------------------------------------------
def make_generator_kernel(compute_dtype):
    """compute_dtype: dtype of bias-add / activations after the f32 MXU acc.
    bf16 on v6e/v7x (native bf16 VALU/EUP), f32 on v5e / unknown chips."""

    def kernel(x_ref,
               w1_ref, b1_ref,
               w2_ref, b2_ref,
               w3_ref, b3_ref,
               w4_ref, b4_ref,
               out_ref):
        def layer(h, w_ref, b_ref, last):
            acc = jnp.dot(h, w_ref[...], preferred_element_type=jnp.float32)
            acc = acc.astype(compute_dtype) + b_ref[...]
            if last:
                return acc
            return _leaky_relu(acc).astype(jnp.bfloat16)

        h = x_ref[...]                      # bf16, cast on the host
        h = layer(h, w1_ref, b1_ref, last=False)
        h = layer(h, w2_ref, b2_ref, last=False)
        h = layer(h, w3_ref, b3_ref, last=False)
        h = layer(h, w4_ref, b4_ref, last=True)
        out_ref[...] = jnp.tanh(h).astype(out_ref.dtype)

    return kernel


# ----------------------------------------------------------------------------
# Parameters
# ----------------------------------------------------------------------------
def init_params(key, g_input_dim, g_output_dim):
    """Deterministic synthetic init; shapes match torch nn.Linear (stored transposed)."""
    dims = [g_input_dim, 256, 256 * 2, 256 * 4, g_output_dim]
    params = {}
    keys = jax.random.split(key, 8)
    for i in range(4):
        fan_in, fan_out = dims[i], dims[i + 1]
        bound = 1.0 / float(fan_in) ** 0.5
        params[f"w{i+1}"] = jax.random.uniform(
            keys[2 * i], (fan_in, fan_out), jnp.float32, -bound, bound)
        params[f"b{i+1}"] = jax.random.uniform(
            keys[2 * i + 1], (1, fan_out), jnp.float32, -bound, bound)
    return params


def prepare_padded_params(params, compute_dtype=jnp.float32):
    """Cast weights to bf16 and zero-pad the output dim to a lane-dense 128 multiple.

    * w1 keeps its raw (g_input_dim, 256) shape: the input block's last dim
      equals the full array dim, so no K padding is needed.
    * w4 / b4 columns padded (g_output_dim -> 128-multiple): extra columns are
      exactly zero -> tanh(0) = 0, sliced off outside the kernel.
    * Biases stored in compute_dtype (bf16 on v6e/v7x, f32 on v5e).
    """
    d_out = params["w4"].shape[1]
    d_out_pad = _round_up(d_out, 128)
    pad_c = d_out_pad - d_out
    return {
        "w1": params["w1"].astype(jnp.bfloat16),
        "b1": params["b1"].astype(compute_dtype),
        "w2": params["w2"].astype(jnp.bfloat16),
        "b2": params["b2"].astype(compute_dtype),
        "w3": params["w3"].astype(jnp.bfloat16),
        "b3": params["b3"].astype(compute_dtype),
        "w4": jnp.pad(params["w4"], ((0, 0), (0, pad_c))).astype(jnp.bfloat16),
        "b4": jnp.pad(params["b4"], ((0, 0), (0, pad_c))).astype(compute_dtype),
    }


# ----------------------------------------------------------------------------
# Generation-aware configuration
# ----------------------------------------------------------------------------
def tpu_config():
    """(num_tensorcores_per_chip, compute_dtype) from the attached device kind."""
    kind = jax.devices()[0].device_kind.lower()
    num_tc = 2 if "v7" in kind else 1                       # v7x: 2 TCs / chip
    bf16_vector = ("v6" in kind) or ("v7" in kind)          # native bf16 VALU/EUP
    compute_dtype = jnp.bfloat16 if bf16_vector else jnp.float32
    return num_tc, compute_dtype


def _select_tiling(batch, requested_tile, num_tensorcores):
    """Pick (batch_tile, padded_batch): biggest tile / fewest grid steps on
    single-TC chips, but keep >= num_tensorcores grid steps on v7x so the
    "parallel" axis shards across both cores."""
    b8 = _round_up(batch, 8)                                # sublane alignment
    tile = min(_round_up(requested_tile, 8), b8)
    if num_tensorcores > 1 and b8 > 8:
        tile = min(tile, _round_up(-(-b8 // num_tensorcores), 8))
    b_pad = _round_up(b8, tile)
    return tile, b_pad


# ----------------------------------------------------------------------------
# pallas_call wrapper
# ----------------------------------------------------------------------------
def _build_pallas_call(kernel, param_shapes, b_pad, batch_tile, d_in, d_out_pad,
                       out_dtype, cost_estimate):
    in_specs = [pl.BlockSpec((batch_tile, d_in), lambda i: (i, 0))]
    # Constant-index weight/bias blocks stay VMEM-resident across grid steps.
    in_specs += [pl.BlockSpec(param_shapes[name], lambda i: (0, 0))
                 for name in _PARAM_ORDER]
    out_specs = pl.BlockSpec((batch_tile, d_out_pad), lambda i: (i, 0))

    return pl.pallas_call(
        kernel,
        out_shape=jax.ShapeDtypeStruct((b_pad, d_out_pad), out_dtype),
        grid_spec=pltpu.PrefetchScalarGridSpec(
            num_scalar_prefetch=0,
            grid=(b_pad // batch_tile,),
            in_specs=in_specs,
            out_specs=out_specs,
        ),
        compiler_params=pltpu.CompilerParams(
            dimension_semantics=("parallel",),   # batch tiles are independent
            vmem_limit_bytes=32 << 20,
        ),
        cost_estimate=cost_estimate,
    )


def mnist_generator_forward(x, padded_params, g_output_dim, *,
                            batch_tile=512, out_dtype=jnp.float32,
                            num_tensorcores=None):
    """x: (B, g_input_dim) f32/bf16. padded_params: output of prepare_padded_params."""
    B, d_in = x.shape
    assert padded_params["w1"].shape[0] == d_in
    d_out_pad = padded_params["w4"].shape[1]
    assert g_output_dim <= d_out_pad

    compute_dtype = padded_params["b1"].dtype
    if num_tensorcores is None:
        num_tensorcores, _ = tpu_config()

    bt, b_pad = _select_tiling(B, batch_tile, num_tensorcores)

    # Single host-side prep op: cast to bf16 (halves input DMA), pad batch rows
    # only if needed.  No K-dim padding: the block last dim equals the full dim.
    x_p = x.astype(jnp.bfloat16)
    if b_pad != B:
        x_p = jnp.pad(x_p, ((0, b_pad - B), (0, 0)))

    param_bytes = sum(int(v.size) * v.dtype.itemsize for v in padded_params.values())
    flops = 2 * b_pad * (d_in * 256 + 256 * 512 + 512 * 1024 + 1024 * d_out_pad)
    cost = pl.CostEstimate(
        flops=flops,
        transcendentals=b_pad * d_out_pad,                       # tanh
        bytes_accessed=param_bytes + b_pad * d_in * 2
                       + b_pad * d_out_pad * jnp.dtype(out_dtype).itemsize,
    )

    kernel = make_generator_kernel(compute_dtype)
    shapes = {name: padded_params[name].shape for name in _PARAM_ORDER}
    call = _build_pallas_call(kernel, shapes, b_pad, bt, d_in, d_out_pad,
                              out_dtype, cost)
    out = call(x_p, *(padded_params[name] for name in _PARAM_ORDER))
    return out[:B, :g_output_dim]


# ----------------------------------------------------------------------------
# Pure-JAX references
# ----------------------------------------------------------------------------
def reference_forward(x, params, *, simulate=False, compute_dtype=jnp.float32):
    """simulate=True mimics the kernel's bf16 weight/activation + compute_dtype chain."""
    h = x.astype(jnp.bfloat16) if simulate else x
    for i in range(1, 5):
        w, b = params[f"w{i}"], params[f"b{i}"]
        if simulate:
            acc = jnp.dot(h, w.astype(jnp.bfloat16),
                          preferred_element_type=jnp.float32)
            acc = acc.astype(compute_dtype) + b.astype(compute_dtype)
        else:
            acc = jnp.dot(h, w, preferred_element_type=jnp.float32) + b
        if i < 4:
            h = _leaky_relu(acc)
            if simulate:
                h = h.astype(jnp.bfloat16)
        else:
            h = acc
    return jnp.tanh(h).astype(jnp.float32)


if __name__ == "__main__":
    key = jax.random.PRNGKey(0)
    k_param, k_x = jax.random.split(key)

    g_input_dim = 64      # noise dim
    g_output_dim = 784    # 28*28 MNIST image, flattened
    batch = 256

    num_tc, compute_dtype = tpu_config()
    params = init_params(k_param, g_input_dim, g_output_dim)
    padded = prepare_padded_params(params, compute_dtype=compute_dtype)
    x = jax.random.normal(k_x, (batch, g_input_dim), jnp.float32)

    out = mnist_generator_forward(x, padded, g_output_dim,
                                  num_tensorcores=num_tc)
    out = jax.block_until_ready(out)
    assert out.shape == (batch, g_output_dim)

    # Wiring check: reference with the same reduced-precision chain.
    ref_sim = reference_forward(x, params, simulate=True, compute_dtype=compute_dtype)
    assert jnp.allclose(out, ref_sim, atol=2e-2, rtol=0), "mismatch vs simulated reference"

    # Fidelity check vs the full-f32 torch-equivalent forward (bf16 weights ->
    # relaxed tolerance; tanh output is bounded in [-1, 1]).
    ref_f32 = reference_forward(x, params)
    assert jnp.allclose(out, ref_f32, atol=6e-2, rtol=0), "mismatch vs f32 reference"

    print("KERNEL_OK")
</pallas_src>

<mosaic_0001>
module attributes {stable_mosaic.version = 11 : i64} {
  func.func @kernel(%arg0: i32, %arg1: memref<256x64xbf16, #tpu.memory_space<vmem>>, %arg2: memref<64x256xbf16, #tpu.memory_space<vmem>>, %arg3: memref<1x256xf32, #tpu.memory_space<vmem>>, %arg4: memref<256x512xbf16, #tpu.memory_space<vmem>>, %arg5: memref<1x512xf32, #tpu.memory_space<vmem>>, %arg6: memref<512x1024xbf16, #tpu.memory_space<vmem>>, %arg7: memref<1x1024xf32, #tpu.memory_space<vmem>>, %arg8: memref<1024x896xbf16, #tpu.memory_space<vmem>>, %arg9: memref<1x896xf32, #tpu.memory_space<vmem>>, %arg10: memref<256x896xf32, #tpu.memory_space<vmem>>) attributes {dimension_semantics = [#tpu.dimension_semantics<parallel>], iteration_bounds = array<i64: 1>, scalar_prefetch = 0 : i64, scratch_operands = 0 : i64, tpu.core_type = #tpu.core_type<tc>, window_params = [{transform_indices = @transform_0, window_bounds = array<i64: 256, 64>}, {pipeline_mode = #tpu.pipeline_mode<synchronous>, transform_indices = @transform_1, window_bounds = array<i64: 64, 256>}, {pipeline_mode = #tpu.pipeline_mode<synchronous>, transform_indices = @transform_2, window_bounds = array<i64: 1, 256>}, {pipeline_mode = #tpu.pipeline_mode<synchronous>, transform_indices = @transform_3, window_bounds = array<i64: 256, 512>}, {pipeline_mode = #tpu.pipeline_mode<synchronous>, transform_indices = @transform_4, window_bounds = array<i64: 1, 512>}, {pipeline_mode = #tpu.pipeline_mode<synchronous>, transform_indices = @transform_5, window_bounds = array<i64: 512, 1024>}, {pipeline_mode = #tpu.pipeline_mode<synchronous>, transform_indices = @transform_6, window_bounds = array<i64: 1, 1024>}, {pipeline_mode = #tpu.pipeline_mode<synchronous>, transform_indices = @transform_7, window_bounds = array<i64: 1024, 896>}, {pipeline_mode = #tpu.pipeline_mode<synchronous>, transform_indices = @transform_8, window_bounds = array<i64: 1, 896>}, {transform_indices = @transform_9, window_bounds = array<i64: 256, 896>}]} {
    %c0 = arith.constant 0 : index
    %c0_0 = arith.constant 0 : index
    %0 = vector.load %arg1[%c0, %c0_0] : memref<256x64xbf16, #tpu.memory_space<vmem>>, vector<256x64xbf16>
    %c0_1 = arith.constant 0 : index
    %c0_2 = arith.constant 0 : index
    %1 = vector.load %arg2[%c0_1, %c0_2] : memref<64x256xbf16, #tpu.memory_space<vmem>>, vector<64x256xbf16>
    %cst = arith.constant dense<0.000000e+00> : vector<256x256xf32>
    %2 = tpu.matmul %0, %1, %cst {dimension_numbers = #tpu.dot_dimension_numbers<[1], [0], [0], [1], [0, 0, 1, 1], [], []>} : vector<256x64xbf16>, vector<64x256xbf16>, vector<256x256xf32> -> vector<256x256xf32>
    %c0_3 = arith.constant 0 : index
    %c0_4 = arith.constant 0 : index
    %3 = vector.load %arg3[%c0_3, %c0_4] : memref<1x256xf32, #tpu.memory_space<vmem>>, vector<1x256xf32>
    %4 = vector.broadcast %3 : vector<1x256xf32> to vector<256x256xf32>
    %5 = arith.addf %2, %4 : vector<256x256xf32>
    %cst_5 = arith.constant 2.000000e-01 : f32
    %6 = vector.broadcast %cst_5 : f32 to vector<256x256xf32>
    %7 = arith.mulf %6, %5 : vector<256x256xf32>
    %8 = arith.maximumf %5, %7 : vector<256x256xf32>
    %9 = arith.truncf %8 : vector<256x256xf32> to vector<256x256xbf16>
    %c0_6 = arith.constant 0 : index
    %c0_7 = arith.constant 0 : index
    %10 = vector.load %arg4[%c0_6, %c0_7] : memref<256x512xbf16, #tpu.memory_space<vmem>>, vector<256x512xbf16>
    %cst_8 = arith.constant dense<0.000000e+00> : vector<256x512xf32>
    %11 = tpu.matmul %9, %10, %cst_8 {dimension_numbers = #tpu.dot_dimension_numbers<[1], [0], [0], [1], [0, 0, 1, 1], [], []>} : vector<256x256xbf16>, vector<256x512xbf16>, vector<256x512xf32> -> vector<256x512xf32>
    %c0_9 = arith.constant 0 : index
    %c0_10 = arith.constant 0 : index
    %12 = vector.load %arg5[%c0_9, %c0_10] : memref<1x512xf32, #tpu.memory_space<vmem>>, vector<1x512xf32>
    %13 = vector.broadcast %12 : vector<1x512xf32> to vector<256x512xf32>
    %14 = arith.addf %11, %13 : vector<256x512xf32>
    %cst_11 = arith.constant 2.000000e-01 : f32
    %15 = vector.broadcast %cst_11 : f32 to vector<256x512xf32>
    %16 = arith.mulf %15, %14 : vector<256x512xf32>
    %17 = arith.maximumf %14, %16 : vector<256x512xf32>
    %18 = arith.truncf %17 : vector<256x512xf32> to vector<256x512xbf16>
    %c0_12 = arith.constant 0 : index
    %c0_13 = arith.constant 0 : index
    %19 = vector.load %arg6[%c0_12, %c0_13] : memref<512x1024xbf16, #tpu.memory_space<vmem>>, vector<512x1024xbf16>
    %cst_14 = arith.constant dense<0.000000e+00> : vector<256x1024xf32>
    %20 = tpu.matmul %18, %19, %cst_14 {dimension_numbers = #tpu.dot_dimension_numbers<[1], [0], [0], [1], [0, 0, 1, 1], [], []>} : vector<256x512xbf16>, vector<512x1024xbf16>, vector<256x1024xf32> -> vector<256x1024xf32>
    %c0_15 = arith.constant 0 : index
    %c0_16 = arith.constant 0 : index
    %21 = vector.load %arg7[%c0_15, %c0_16] : memref<1x1024xf32, #tpu.memory_space<vmem>>, vector<1x1024xf32>
    %22 = vector.broadcast %21 : vector<1x1024xf32> to vector<256x1024xf32>
    %23 = arith.addf %20, %22 : vector<256x1024xf32>
    %cst_17 = arith.constant 2.000000e-01 : f32
    %24 = vector.broadcast %cst_17 : f32 to vector<256x1024xf32>
    %25 = arith.mulf %24, %23 : vector<256x1024xf32>
    %26 = arith.maximumf %23, %25 : vector<256x1024xf32>
    %27 = arith.truncf %26 : vector<256x1024xf32> to vector<256x1024xbf16>
    %c0_18 = arith.constant 0 : index
    %c0_19 = arith.constant 0 : index
    %28 = vector.load %arg8[%c0_18, %c0_19] : memref<1024x896xbf16, #tpu.memory_space<vmem>>, vector<1024x896xbf16>
    %cst_20 = arith.constant dense<0.000000e+00> : vector<256x896xf32>
    %29 = tpu.matmul %27, %28, %cst_20 {dimension_numbers = #tpu.dot_dimension_numbers<[1], [0], [0], [1], [0, 0, 1, 1], [], []>} : vector<256x1024xbf16>, vector<1024x896xbf16>, vector<256x896xf32> -> vector<256x896xf32>
    %c0_21 = arith.constant 0 : index
    %c0_22 = arith.constant 0 : index
    %30 = vector.load %arg9[%c0_21, %c0_22] : memref<1x896xf32, #tpu.memory_space<vmem>>, vector<1x896xf32>
    %31 = vector.broadcast %30 : vector<1x896xf32> to vector<256x896xf32>
    %32 = arith.addf %29, %31 : vector<256x896xf32>
    %33 = math.tanh %32 : vector<256x896xf32>
    %c0_23 = arith.constant 0 : index
    %c0_24 = arith.constant 0 : index
    %34 = vector.load %arg10[%c0_23, %c0_24] : memref<256x896xf32, #tpu.memory_space<vmem>>, vector<256x896xf32>
    tpu.vector_store %arg10[%c0_23, %c0_24], %33 {strides = array<i32>} : memref<256x896xf32, #tpu.memory_space<vmem>>, vector<256x896xf32>,
    return
  }
  func.func @transform_0(%arg0: i32) -> (i32, i32) {
    %c0_i32 = arith.constant 0 : i32
    %c0_i32_0 = arith.constant 0 : i32
    return %arg0, %c0_i32 : i32, i32
  }
  func.func @transform_1(%arg0: i32) -> (i32, i32) {
    %c0_i32 = arith.constant 0 : i32
    %c0_i32_0 = arith.constant 0 : i32
    %c0_i32_1 = arith.constant 0 : i32
    return %c0_i32, %c0_i32_0 : i32, i32
  }
  func.func @transform_2(%arg0: i32) -> (i32, i32) {
    %c0_i32 = arith.constant 0 : i32
    %c0_i32_0 = arith.constant 0 : i32
    %c0_i32_1 = arith.constant 0 : i32
    return %c0_i32, %c0_i32_0 : i32, i32
  }
  func.func @transform_3(%arg0: i32) -> (i32, i32) {
    %c0_i32 = arith.constant 0 : i32
    %c0_i32_0 = arith.constant 0 : i32
    %c0_i32_1 = arith.constant 0 : i32
    return %c0_i32, %c0_i32_0 : i32, i32
  }
  func.func @transform_4(%arg0: i32) -> (i32, i32) {
    %c0_i32 = arith.constant 0 : i32
    %c0_i32_0 = arith.constant 0 : i32
    %c0_i32_1 = arith.constant 0 : i32
    return %c0_i32, %c0_i32_0 : i32, i32
  }
  func.func @transform_5(%arg0: i32) -> (i32, i32) {
    %c0_i32 = arith.constant 0 : i32
    %c0_i32_0 = arith.constant 0 : i32
    %c0_i32_1 = arith.constant 0 : i32
    return %c0_i32, %c0_i32_0 : i32, i32
  }
  func.func @transform_6(%arg0: i32) -> (i32, i32) {
    %c0_i32 = arith.constant 0 : i32
    %c0_i32_0 = arith.constant 0 : i32
    %c0_i32_1 = arith.constant 0 : i32
    return %c0_i32, %c0_i32_0 : i32, i32
  }
  func.func @transform_7(%arg0: i32) -> (i32, i32) {
    %c0_i32 = arith.constant 0 : i32
    %c0_i32_0 = arith.constant 0 : i32
    %c0_i32_1 = arith.constant 0 : i32
    return %c0_i32, %c0_i32_0 : i32, i32
  }
  func.func @transform_8(%arg0: i32) -> (i32, i32) {
    %c0_i32 = arith.constant 0 : i32
    %c0_i32_0 = arith.constant 0 : i32
    %c0_i32_1 = arith.constant 0 : i32
    return %c0_i32, %c0_i32_0 : i32, i32
  }
  func.func @transform_9(%arg0: i32) -> (i32, i32) {
    %c0_i32 = arith.constant 0 : i32
    %c0_i32_0 = arith.constant 0 : i32
    return %arg0, %c0_i32 : i32, i32
  }
}

</mosaic_0001>

<llo_original>
// kernel: tpu_custom_call.1
$region0: #{tpu_custom_call.1}
  #allocation0 [shape = 'u32[]', space=smem, size = 0x4, offset = 0x4, fixed_abs, tag = 'smem constant byte address 0x4 - core index']
  #allocation1 [shape = 'u32[144,128]{1,0:T(1,128)}', space=vmem, size = 0x12000, scoped, tag = 'internal scratch']
  %s0 = inlined_call_operand.vmem [shape: bf16[256,64], index: 0, kind: input, shape index: {}]
  %s1 = inlined_call_operand.hbm [shape: bf16[64,256], index: 1, kind: input, shape index: {}]
  %s2 = inlined_call_operand.hbm [shape: f32[1,256], index: 2, kind: input, shape index: {}]
  %s3 = inlined_call_operand.hbm [shape: bf16[256,512], index: 3, kind: input, shape index: {}]
  %s4 = inlined_call_operand.hbm [shape: f32[1,512], index: 4, kind: input, shape index: {}]
  %s5 = inlined_call_operand.hbm [shape: bf16[512,1024], index: 5, kind: input, shape index: {}]
  %s6 = inlined_call_operand.hbm [shape: f32[1,1024], index: 6, kind: input, shape index: {}]
  %s7 = inlined_call_operand.hbm [shape: bf16[1024,896], index: 7, kind: input, shape index: {}]
  %s8 = inlined_call_operand.hbm [shape: f32[1,896], index: 8, kind: input, shape index: {}]
  %s9 = inlined_call_operand.hbm [shape: f32[256,896], index: 9, kind: output, shape index: {}]
  %s10 = sld [smem:[#allocation0]]
  $region78: #{tpu_custom_call.1} parent=0
    _
  %s12 = ssub.s32 1, %s10
  %s13 = scalar_select 0, %s12, %s10
  $region1: #{tpu_custom_call.1} parent=0
    #allocation2 [shape = 'u8[32768]{0}', space=vmem, size = 0x8000, scoped, tag = 'input window, operand 1, single buffered']
    #allocation3 [shape = 's32[1]{0}', space=sflag, size = 0x4, scoped, tag = 'scoped memory for tpu_custom_call.1']
    #allocation4 [shape = 's32[1]{0}', space=sflag, size = 0x4, scoped, tag = 'scoped memory for tpu_custom_call.1']
    #allocation5 [shape = 'u8[1024]{0}', space=vmem, size = 0x400, scoped, tag = 'input window, operand 2, single buffered']
    #allocation6 [shape = 's32[1]{0}', space=sflag, size = 0x4, scoped, tag = 'scoped memory for tpu_custom_call.1']
    #allocation7 [shape = 'u8[262144]{0}', space=vmem, size = 0x40000, scoped, tag = 'input window, operand 3, single buffered']
    #allocation8 [shape = 'u8[2048]{0}', space=vmem, size = 0x800, scoped, tag = 'input window, operand 4, single buffered']
    #allocation9 [shape = 's32[1]{0}', space=sflag, size = 0x4, scoped, tag = 'scoped memory for tpu_custom_call.1']
    #allocation10 [shape = 'u8[1048576]{0}', space=vmem, size = 0x100000, scoped, tag = 'input window, operand 5, single buffered']
    #allocation11 [shape = 'u8[4096]{0}', space=vmem, size = 0x1000, scoped, tag = 'input window, operand 6, single buffered']
    #allocation12 [shape = 's32[1]{0}', space=sflag, size = 0x4, scoped, tag = 'scoped memory for tpu_custom_call.1']
    #allocation13 [shape = 'u8[1835008]{0}', space=vmem, size = 0x1c0000, scoped, tag = 'input window, operand 7, single buffered']
    #allocation14 [shape = 'u8[3584]{0}', space=vmem, size = 0x1000, scoped, tag = 'input window, operand 8, single buffered']
    #allocation15 [shape = 's32[1]{0}', space=sflag, size = 0x4, scoped, tag = 'scoped memory for tpu_custom_call.1']
    #allocation16 [shape = 'u8[917504]{0}', space=vmem, size = 0xe0000, scoped, tag = 'output window, operand 0, single buffered']
    %14 = vsyncpa [#allocation3], 0
    %15 = vsyncpa [#allocation6], 0
    %16 = vsyncpa [#allocation9], 0
    %17 = vsyncpa [#allocation12], 0
    %18 = vsyncpa [#allocation15], 0
    %19 = vsyncpa [#allocation4], 0
    // Predicated region
    $region2: #{tpu_custom_call.1} parent=1 // pred_check
      _
    $region3: #{tpu_custom_call.1} parent=1 // pred_check_branch
      %21 = sbr.rel (0) target = $region5
    $region4: #{tpu_custom_call.1} parent=1 // pred_region
      _
    $region5: #{tpu_custom_call.1} parent=1 // pred_fallthru
      _
    // Predicated region
    $region6: #{tpu_custom_call.1} parent=1 // pred_check
      _
    $region7: #{tpu_custom_call.1} parent=1 // pred_check_branch
      %23 = sbr.rel (0) target = $region9
    $region8: #{tpu_custom_call.1} parent=1 // pred_region
      %s25 = ssub.s32 1024, 1024
      %26 = vsyncadd [#allocation3], %s25
      %s27 = sshll.u32 [#allocation2], 4
      %s28 = int_to_ptr.vmem [resolvable:$true] %s27
      %33 = dma.hbm_to_vmem [thread:$0]  %s1, 1024, %s28, [#allocation3], 128, 128, 8
    $region9: #{tpu_custom_call.1} parent=1 // pred_fallthru
      _
    // Predicated region
    $region10: #{tpu_custom_call.1} parent=1 // pred_check
      _
    $region11: #{tpu_custom_call.1} parent=1 // pred_check_branch
      %35 = sbr.rel (0) target = $region13
    $region12: #{tpu_custom_call.1} parent=1 // pred_region
      %s37 = ssub.s32 32, 32
      %38 = vsyncadd [#allocation6], %s37
      %s40 = sshll.u32 [#allocation5], 4
      %s41 = int_to_ptr.vmem [resolvable:$true] %s40
      %43 = dma.hbm_to_vmem [thread:$0]  %s2, 32, %s41, [#allocation6]
    $region13: #{tpu_custom_call.1} parent=1 // pred_fallthru
      _
    // Predicated region
    $region14: #{tpu_custom_call.1} parent=1 // pred_check
      _
    $region15: #{tpu_custom_call.1} parent=1 // pred_check_branch
      %45 = sbr.rel (0) target = $region17
    $region16: #{tpu_custom_call.1} parent=1 // pred_region
      %s47 = ssub.s32 8192, 8192
      %48 = vsyncadd [#allocation6], %s47
      %s49 = sshll.u32 [#allocation7], 4
      %s50 = int_to_ptr.vmem [resolvable:$true] %s49
      %55 = dma.hbm_to_vmem [thread:$0]  %s3, 8192, %s50, [#allocation6], 256, 256, 16
    $region17: #{tpu_custom_call.1} parent=1 // pred_fallthru
      _
    // Predicated region
    $region18: #{tpu_custom_call.1} parent=1 // pred_check
      _
    $region19: #{tpu_custom_call.1} parent=1 // pred_check_branch
      %57 = sbr.rel (0) target = $region21
    $region20: #{tpu_custom_call.1} parent=1 // pred_region
      %s59 = ssub.s32 64, 64
      %60 = vsyncadd [#allocation9], %s59
      %s62 = sshll.u32 [#allocation8], 4
      %s63 = int_to_ptr.vmem [resolvable:$true] %s62
      %65 = dma.hbm_to_vmem [thread:$0]  %s4, 64, %s63, [#allocation9]
    $region21: #{tpu_custom_call.1} parent=1 // pred_fallthru
      _
    // Predicated region
    $region22: #{tpu_custom_call.1} parent=1 // pred_check
      _
    $region23: #{tpu_custom_call.1} parent=1 // pred_check_branch
      %67 = sbr.rel (0) target = $region25
    $region24: #{tpu_custom_call.1} parent=1 // pred_region
      %s69 = ssub.s32 32768, 32768
      %70 = vsyncadd [#allocation9], %s69
      %s71 = sshll.u32 [#allocation10], 4
      %s72 = int_to_ptr.vmem [resolvable:$true] %s71
      %77 = dma.hbm_to_vmem [thread:$0]  %s5, 32768, %s72, [#allocation9], 512, 512, 32
    $region25: #{tpu_custom_call.1} parent=1 // pred_fallthru
      _
    // Predicated region
    $region26: #{tpu_custom_call.1} parent=1 // pred_check
      _
    $region27: #{tpu_custom_call.1} parent=1 // pred_check_branch
      %79 = sbr.rel (0) target = $region29
    $region28: #{tpu_custom_call.1} parent=1 // pred_region
      %s81 = ssub.s32 128, 128
      %82 = vsyncadd [#allocation12], %s81
      %s84 = sshll.u32 [#allocation11], 4
      %s85 = int_to_ptr.vmem [resolvable:$true] %s84
      %87 = dma.hbm_to_vmem [thread:$0]  %s6, 128, %s85, [#allocation12]
    $region29: #{tpu_custom_call.1} parent=1 // pred_fallthru
      _
    // Predicated region
    $region30: #{tpu_custom_call.1} parent=1 // pred_check
      _
    $region31: #{tpu_custom_call.1} parent=1 // pred_check_branch
      %89 = sbr.rel (0) target = $region33
    $region32: #{tpu_custom_call.1} parent=1 // pred_region
      %s91 = ssub.s32 57344, 57344
      %92 = vsyncadd [#allocation12], %s91
      %s93 = sshll.u32 [#allocation13], 4
      %s94 = int_to_ptr.vmem [resolvable:$true] %s93
      %99 = dma.hbm_to_vmem [thread:$0]  %s7, 57344, %s94, [#allocation12], 448, 448, 28
    $region33: #{tpu_custom_call.1} parent=1 // pred_fallthru
      _
    // Predicated region
    $region34: #{tpu_custom_call.1} parent=1 // pred_check
      _
    $region35: #{tpu_custom_call.1} parent=1 // pred_check_branch
      %101 = sbr.rel (0) target = $region37
    $region36: #{tpu_custom_call.1} parent=1 // pred_region
      %s103 = ssub.s32 112, 112
      %104 = vsyncadd [#allocation15], %s103
      %s106 = sshll.u32 [#allocation14], 4
      %s107 = int_to_ptr.vmem [resolvable:$true] %s106
      %109 = dma.hbm_to_vmem [thread:$0]  %s8, 112, %s107, [#allocation15]
    $region37: #{tpu_custom_call.1} parent=1 // pred_fallthru
      _
    // Predicated region
    $region38: #{tpu_custom_call.1} parent=1 // pred_check
      _
    $region39: #{tpu_custom_call.1} parent=1 // pred_check_branch
      %111 = sbr.rel (0) target = $region41
    $region40: #{tpu_custom_call.1} parent=1 // pred_region
      %112 = dma.done [#allocation3], 1024
    $region41: #{tpu_custom_call.1} parent=1 // pred_fallthru
      _
    // Predicated region
    $region42: #{tpu_custom_call.1} parent=1 // pred_check
      _
    $region43: #{tpu_custom_call.1} parent=1 // pred_check_branch
      %114 = sbr.rel (0) target = $region45
    $region44: #{tpu_custom_call.1} parent=1 // pred_region
      %115 = dma.done [#allocation6], 32
    $region45: #{tpu_custom_call.1} parent=1 // pred_fallthru
      _
    // Predicated region
    $region46: #{tpu_custom_call.1} parent=1 // pred_check
      _
    $region47: #{tpu_custom_call.1} parent=1 // pred_check_branch
      %117 = sbr.rel (0) target = $region49
    $region48: #{tpu_custom_call.1} parent=1 // pred_region
      %118 = dma.done [#allocation6], 8192
    $region49: #{tpu_custom_call.1} parent=1 // pred_fallthru
      _
    // Predicated region
    $region50: #{tpu_custom_call.1} parent=1 // pred_check
      _
    $region51: #{tpu_custom_call.1} parent=1 // pred_check_branch
      %120 = sbr.rel (0) target = $region53
    $region52: #{tpu_custom_call.1} parent=1 // pred_region
      %121 = dma.done [#allocation9], 64
    $region53: #{tpu_custom_call.1} parent=1 // pred_fallthru
      _
    // Predicated region
    $region54: #{tpu_custom_call.1} parent=1 // pred_check
      _
    $region55: #{tpu_custom_call.1} parent=1 // pred_check_branch
      %123 = sbr.rel (0) target = $region57
    $region56: #{tpu_custom_call.1} parent=1 // pred_region
      %124 = dma.done [#allocation9], 32768
    $region57: #{tpu_custom_call.1} parent=1 // pred_fallthru
      _
    // Predicated region
    $region58: #{tpu_custom_call.1} parent=1 // pred_check
      _
    $region59: #{tpu_custom_call.1} parent=1 // pred_check_branch
      %126 = sbr.rel (0) target = $region61
    $region60: #{tpu_custom_call.1} parent=1 // pred_region
      %127 = dma.done [#allocation12], 128
    $region61: #{tpu_custom_call.1} parent=1 // pred_fallthru
      _
    // Predicated region
    $region62: #{tpu_custom_call.1} parent=1 // pred_check
      _
    $region63: #{tpu_custom_call.1} parent=1 // pred_check_branch
      %129 = sbr.rel (0) target = $region65
    $region64: #{tpu_custom_call.1} parent=1 // pred_region
      %130 = dma.done [#allocation12], 57344
    $region65: #{tpu_custom_call.1} parent=1 // pred_fallthru
      _
    // Predicated region
    $region66: #{tpu_custom_call.1} parent=1 // pred_check
      _
    $region67: #{tpu_custom_call.1} parent=1 // pred_check_branch
      %132 = sbr.rel (0) target = $region69
    $region68: #{tpu_custom_call.1} parent=1 // pred_region
      %133 = dma.done [#allocation15], 112
    $region69: #{tpu_custom_call.1} parent=1 // pred_fallthru
      _
    %v135 = vld [vmem:[%s0] sm:$0xf]
    %v136 = vld [vmem:[%s0 + $0x4] sm:$0xf]
    %v137 = vld [vmem:[%s0 + $0x8] sm:$0xf]
    %v138 = vld [vmem:[%s0 + $0xc] sm:$0xf]
    %v139 = vld [vmem:[%s0 + $0x10] sm:$0xf]
    %v140 = vld [vmem:[%s0 + $0x14] sm:$0xf]
    %v141 = vld [vmem:[%s0 + $0x18] sm:$0xf]
    %v142 = vld [vmem:[%s0 + $0x1c] sm:$0xf]
    %v143 = vld [vmem:[%s0 + $0x20] sm:$0xf]
    %v144 = vld [vmem:[%s0 + $0x24] sm:$0xf]
    %v145 = vld [vmem:[%s0 + $0x28] sm:$0xf]
    %v146 = vld [vmem:[%s0 + $0x2c] sm:$0xf]
    %v147 = vld [vmem:[%s0 + $0x30] sm:$0xf]
    %v148 = vld [vmem:[%s0 + $0x34] sm:$0xf]
    %v149 = vld [vmem:[%s0 + $0x38] sm:$0xf]
    %v150 = vld [vmem:[%s0 + $0x3c] sm:$0xf]
    %v151 = vld [vmem:[%s0 + $0x40] sm:$0xf]
    %v152 = vld [vmem:[%s0 + $0x44] sm:$0xf]
    %v153 = vld [vmem:[%s0 + $0x48] sm:$0xf]
    %v154 = vld [vmem:[%s0 + $0x4c] sm:$0xf]
    %v155 = vld [vmem:[%s0 + $0x50] sm:$0xf]
    %v156 = vld [vmem:[%s0 + $0x54] sm:$0xf]
    %v157 = vld [vmem:[%s0 + $0x58] sm:$0xf]
    %v158 = vld [vmem:[%s0 + $0x5c] sm:$0xf]
    %v159 = vld [vmem:[%s0 + $0x60] sm:$0xf]
    %v160 = vld [vmem:[%s0 + $0x64] sm:$0xf]
    %v161 = vld [vmem:[%s0 + $0x68] sm:$0xf]
    %v162 = vld [vmem:[%s0 + $0x6c] sm:$0xf]
    %v163 = vld [vmem:[%s0 + $0x70] sm:$0xf]
    %v164 = vld [vmem:[%s0 + $0x74] sm:$0xf]
    %v165 = vld [vmem:[%s0 + $0x78] sm:$0xf]
    %v166 = vld [vmem:[%s0 + $0x7c] sm:$0xf]
    %v167 = vld [vmem:[#allocation2] sm:$0xff]
    %v168 = vld [vmem:[#allocation2 + $0x8] sm:$0xff]
    %v169 = vld [vmem:[#allocation2 + $0x10] sm:$0xff]
    %v170 = vld [vmem:[#allocation2 + $0x18] sm:$0xff]
    %v171 = vld [vmem:[#allocation2 + $0x20] sm:$0xff]
    %v172 = vld [vmem:[#allocation2 + $0x28] sm:$0xff]
    %v173 = vld [vmem:[#allocation2 + $0x30] sm:$0xff]
    %v174 = vld [vmem:[#allocation2 + $0x38] sm:$0xff]
    %v175 = vld [vmem:[#allocation5] sm:$0x3]
    %v177 = vlaneseq
    %v178 = vshrl.u32 %v177, 7
    %v179 = vsub.s32 0, %v178
    %v180 = vrot.slane %v175, %v179
    %v181 = vlaneseq
    %v182 = vshrl.u32 %v181, 7
    %v183 = vsub.s32 1, %v182
    %v184 = vrot.slane %v175, %v183
    %v219 = vunpack.c.l.b16 %v135
    %v220 = vunpack.c.l.b16 %v136
    %v221 = vunpack.c.l.b16 %v137
    %v222 = vunpack.c.l.b16 %v138
    %v223 = vunpack.c.l.b16 %v139
    %v224 = vunpack.c.l.b16 %v140
    %v225 = vunpack.c.l.b16 %v141
    %v226 = vunpack.c.l.b16 %v142
    %v227 = vunpack.c.l.b16 %v143
    %v228 = vunpack.c.l.b16 %v144
    %v229 = vunpack.c.l.b16 %v145
    %v230 = vunpack.c.l.b16 %v146
    %v231 = vunpack.c.l.b16 %v147
    %v232 = vunpack.c.l.b16 %v148
    %v233 = vunpack.c.l.b16 %v149
    %v234 = vunpack.c.l.b16 %v150
    %v235 = vunpack.c.l.b16 %v151
    %v236 = vunpack.c.l.b16 %v152
    %v237 = vunpack.c.l.b16 %v153
    %v238 = vunpack.c.l.b16 %v154
    %v239 = vunpack.c.l.b16 %v155
    %v240 = vunpack.c.l.b16 %v156
    %v241 = vunpack.c.l.b16 %v157
    %v242 = vunpack.c.l.b16 %v158
    %v243 = vunpack.c.l.b16 %v159
    %v244 = vunpack.c.l.b16 %v160
    %v245 = vunpack.c.l.b16 %v161
    %v246 = vunpack.c.l.b16 %v162
    %v247 = vunpack.c.l.b16 %v163
    %v248 = vunpack.c.l.b16 %v164
    %v249 = vunpack.c.l.b16 %v165
    %v250 = vunpack.c.l.b16 %v166
    %v251 = vpack.c.b16 %v220, %v219
    %v252 = vpack.c.b16 %v222, %v221
    %v253 = vpack.c.b16 %v224, %v223
    %v254 = vpack.c.b16 %v226, %v225
    %v255 = vpack.c.b16 %v228, %v227
    %v256 = vpack.c.b16 %v230, %v229
    %v257 = vpack.c.b16 %v232, %v231
    %v258 = vpack.c.b16 %v234, %v233
    %v259 = vpack.c.b16 %v236, %v235
    %v260 = vpack.c.b16 %v238, %v237
    %v261 = vpack.c.b16 %v240, %v239
    %v262 = vpack.c.b16 %v242, %v241
    %v263 = vpack.c.b16 %v244, %v243
    %v264 = vpack.c.b16 %v246, %v245
    %v265 = vpack.c.b16 %v248, %v247
    %v266 = vpack.c.b16 %v250, %v249
    %v275 = vunpack.c.l.b16 %v167
    %v276 = vunpack.c.h.b16 %v167
    %v277 = vunpack.c.l.b16 %v168
    %v278 = vunpack.c.h.b16 %v168
    %v279 = vunpack.c.l.b16 %v169
    %v280 = vunpack.c.h.b16 %v169
    %v281 = vunpack.c.l.b16 %v170
    %v282 = vunpack.c.h.b16 %v170
    %v283 = vunpack.c.l.b16 %v171
    %v284 = vunpack.c.h.b16 %v171
    %v285 = vunpack.c.l.b16 %v172
    %v286 = vunpack.c.h.b16 %v172
    %v287 = vunpack.c.l.b16 %v173
    %v288 = vunpack.c.h.b16 %v173
    %v289 = vunpack.c.l.b16 %v174
    %v290 = vunpack.c.h.b16 %v174
    %v291 = vpack.c.b16 %v277, %v275
    %v292 = vpack.c.b16 %v278, %v276
    %v293 = vpack.c.b16 %v281, %v279
    %v294 = vpack.c.b16 %v282, %v280
    %v295 = vpack.c.b16 %v285, %v283
    %v296 = vpack.c.b16 %v286, %v284
    %v297 = vpack.c.b16 %v289, %v287
    %v298 = vpack.c.b16 %v290, %v288
    %vm307 = vcmask 523264
    %v309 = vsel %vm307, %v251, 0
    %v312 = vsel %vm307, %v252, 0
    %v315 = vsel %vm307, %v253, 0
    %v318 = vsel %vm307, %v254, 0
    %v321 = vsel %vm307, %v255, 0
    %v324 = vsel %vm307, %v256, 0
    %v327 = vsel %vm307, %v257, 0
    %v330 = vsel %vm307, %v258, 0
    %v333 = vsel %vm307, %v259, 0
    %v336 = vsel %vm307, %v260, 0
    %v339 = vsel %vm307, %v261, 0
    %v342 = vsel %vm307, %v262, 0
    %v345 = vsel %vm307, %v263, 0
    %v348 = vsel %vm307, %v264, 0
    %v351 = vsel %vm307, %v265, 0
    %v354 = vsel %vm307, %v266, 0
    %356 = vmatprep.subr.bf16.mxu0 0
    %357 = vmatpush1.bf16.msra.mxu0 0
    %358 = vmatprep.subr.bf16.mxu0 0
    %359 = vmatpush1.bf16.msra.mxu0 0
    %360 = vmatprep.subr.bf16.mxu0 0
    %361 = vmatpush1.bf16.msra.mxu0 0
    %362 = vmatprep.subr.bf16.mxu0 0
    %363 = vmatpush1.bf16.msra.mxu0 0
    %364 = vmatprep.subr.bf16.mxu0 %v298
    %365 = vmatpush1.bf16.msra.mxu0 %v297
    %366 = vmatprep.subr.bf16.mxu0 %v296
    %367 = vmatpush1.bf16.msra.mxu0 %v295
    %368 = vmatprep.subr.bf16.mxu0 %v294
    %369 = vmatpush1.bf16.msra.mxu0 %v293
    %370 = vmatprep.subr.bf16.mxu0 %v292
    %371 = vmatpush1.bf16.msra.mxu0 %v291
    %372 = vmatprep.subr.bf16.mxu0 0
    %373 = vmatpush2.bf16.msra.mxu0 0
    %374 = vmatprep.subr.bf16.mxu0 0
    %375 = vmatpush2.bf16.msra.mxu0 0
    %376 = vmatprep.subr.bf16.mxu0 0
    %377 = vmatpush2.bf16.msra.mxu0 0
    %378 = vmatprep.subr.bf16.mxu0 0
    %379 = vmatpush2.bf16.msra.mxu0 0
    %380 = vmatprep.subr.bf16.mxu0 0
    %381 = vmatpush2.bf16.msra.mxu0 0
    %382 = vmatprep.subr.bf16.mxu0 0
    %383 = vmatpush2.bf16.msra.mxu0 0
    %384 = vmatprep.subr.bf16.mxu0 0
    %385 = vmatpush2.bf16.msra.mxu0 0
    %386 = vmatprep.subr.bf16.mxu0 0
    %387 = vmatpush2.bf16.msra.mxu0 0
    %388 = vmatprep.mubr.bf16.mxu0 0
    %389 = vmatmul.mubr.bf16.gmra.mxu0 %v309
    %v390 = vpop.f32.mrf.mxu0
    %v391 = vadd.f32 %v180, %v390
    %v392 = vpop.f32.mrf.mxu0
    %v393 = vadd.f32 %v184, %v392
    %v394 = vpop.f32.mrf.mxu0
    %v395 = vadd.f32 %v180, %v394
    %v396 = vpop.f32.mrf.mxu0
    %v397 = vadd.f32 %v184, %v396
    %398 = vmatprep.mubr.bf16.mxu0 0
    %399 = vmatmul.mubr.bf16.gmra.mxu0 %v312
    %v400 = vpop.f32.mrf.mxu0
    %v401 = vadd.f32 %v180, %v400
    %v402 = vpop.f32.mrf.mxu0
    %v403 = vadd.f32 %v184, %v402
    %v404 = vpop.f32.mrf.mxu0
    %v405 = vadd.f32 %v180, %v404
    %v406 = vpop.f32.mrf.mxu0
    %v407 = vadd.f32 %v184, %v406
    %408 = vmatprep.mubr.bf16.mxu0 0
    %409 = vmatmul.mubr.bf16.gmra.mxu0 %v315
    %v410 = vpop.f32.mrf.mxu0
    %v411 = vadd.f32 %v180, %v410
    %v412 = vpop.f32.mrf.mxu0
    %v413 = vadd.f32 %v184, %v412
    %v414 = vpop.f32.mrf.mxu0
    %v415 = vadd.f32 %v180, %v414
    %v416 = vpop.f32.mrf.mxu0
    %v417 = vadd.f32 %v184, %v416
    %418 = vmatprep.mubr.bf16.mxu0 0
    %419 = vmatmul.mubr.bf16.gmra.mxu0 %v318
    %v420 = vpop.f32.mrf.mxu0
    %v421 = vadd.f32 %v180, %v420
    %v422 = vpop.f32.mrf.mxu0
    %v423 = vadd.f32 %v184, %v422
    %v424 = vpop.f32.mrf.mxu0
    %v425 = vadd.f32 %v180, %v424
    %v426 = vpop.f32.mrf.mxu0
    %v427 = vadd.f32 %v184, %v426
    %428 = vmatprep.mubr.bf16.mxu0 0
    %429 = vmatmul.mubr.bf16.gmra.mxu0 %v321
    %v430 = vpop.f32.mrf.mxu0
    %v431 = vadd.f32 %v180, %v430
    %v432 = vpop.f32.mrf.mxu0
    %v433 = vadd.f32 %v184, %v432
    %v434 = vpop.f32.mrf.mxu0
    %v435 = vadd.f32 %v180, %v434
    %v436 = vpop.f32.mrf.mxu0
    %v437 = vadd.f32 %v184, %v436
    %438 = vmatprep.mubr.bf16.mxu0 0
    %439 = vmatmul.mubr.bf16.gmra.mxu0 %v324
    %v440 = vpop.f32.mrf.mxu0
    %v441 = vadd.f32 %v180, %v440
    %v442 = vpop.f32.mrf.mxu0
    %v443 = vadd.f32 %v184, %v442
    %v444 = vpop.f32.mrf.mxu0
    %v445 = vadd.f32 %v180, %v444
    %v446 = vpop.f32.mrf.mxu0
    %v447 = vadd.f32 %v184, %v446
    %448 = vmatprep.mubr.bf16.mxu0 0
    %449 = vmatmul.mubr.bf16.gmra.mxu0 %v327
    %v450 = vpop.f32.mrf.mxu0
    %v451 = vadd.f32 %v180, %v450
    %v452 = vpop.f32.mrf.mxu0
    %v453 = vadd.f32 %v184, %v452
    %v454 = vpop.f32.mrf.mxu0
    %v455 = vadd.f32 %v180, %v454
    %v456 = vpop.f32.mrf.mxu0
    %v457 = vadd.f32 %v184, %v456
    %458 = vmatprep.mubr.bf16.mxu0 0
    %459 = vmatmul.mubr.bf16.gmra.mxu0 %v330
    %v460 = vpop.f32.mrf.mxu0
    %v461 = vadd.f32 %v180, %v460
    %v462 = vpop.f32.mrf.mxu0
    %v463 = vadd.f32 %v184, %v462
    %v464 = vpop.f32.mrf.mxu0
    %v465 = vadd.f32 %v180, %v464
    %v466 = vpop.f32.mrf.mxu0
    %v467 = vadd.f32 %v184, %v466
    %468 = vmatprep.mubr.bf16.mxu0 0
    %469 = vmatmul.mubr.bf16.gmra.mxu0 %v333
    %v470 = vpop.f32.mrf.mxu0
    %v471 = vadd.f32 %v180, %v470
    %v472 = vpop.f32.mrf.mxu0
    %v473 = vadd.f32 %v184, %v472
    %v474 = vpop.f32.mrf.mxu0
    %v475 = vadd.f32 %v180, %v474
    %v476 = vpop.f32.mrf.mxu0
    %v477 = vadd.f32 %v184, %v476
    %478 = vmatprep.mubr.bf16.mxu0 0
    %479 = vmatmul.mubr.bf16.gmra.mxu0 %v336
    %v480 = vpop.f32.mrf.mxu0
    %v481 = vadd.f32 %v180, %v480
    %v482 = vpop.f32.mrf.mxu0
    %v483 = vadd.f32 %v184, %v482
    %v484 = vpop.f32.mrf.mxu0
    %v485 = vadd.f32 %v180, %v484
    %v486 = vpop.f32.mrf.mxu0
    %v487 = vadd.f32 %v184, %v486
    %488 = vmatprep.mubr.bf16.mxu0 0
    %489 = vmatmul.mubr.bf16.gmra.mxu0 %v339
    %v490 = vpop.f32.mrf.mxu0
    %v491 = vadd.f32 %v180, %v490
    %v492 = vpop.f32.mrf.mxu0
    %v493 = vadd.f32 %v184, %v492
    %v494 = vpop.f32.mrf.mxu0
    %v495 = vadd.f32 %v180, %v494
    %v496 = vpop.f32.mrf.mxu0
    %v497 = vadd.f32 %v184, %v496
    %498 = vmatprep.mubr.bf16.mxu0 0
    %499 = vmatmul.mubr.bf16.gmra.mxu0 %v342
    %v500 = vpop.f32.mrf.mxu0
    %v501 = vadd.f32 %v180, %v500
    %v502 = vpop.f32.mrf.mxu0
    %v503 = vadd.f32 %v184, %v502
    %v504 = vpop.f32.mrf.mxu0
    %v505 = vadd.f32 %v180, %v504
    %v506 = vpop.f32.mrf.mxu0
    %v507 = vadd.f32 %v184, %v506
    %508 = vmatprep.mubr.bf16.mxu0 0
    %509 = vmatmul.mubr.bf16.gmra.mxu0 %v345
    %v510 = vpop.f32.mrf.mxu0
    %v511 = vadd.f32 %v180, %v510
    %v512 = vpop.f32.mrf.mxu0
    %v513 = vadd.f32 %v184, %v512
    %v514 = vpop.f32.mrf.mxu0
    %v515 = vadd.f32 %v180, %v514
    %v516 = vpop.f32.mrf.mxu0
    %v517 = vadd.f32 %v184, %v516
    %518 = vmatprep.mubr.bf16.mxu0 0
    %519 = vmatmul.mubr.bf16.gmra.mxu0 %v348
    %v520 = vpop.f32.mrf.mxu0
    %v521 = vadd.f32 %v180, %v520
    %v522 = vpop.f32.mrf.mxu0
    %v523 = vadd.f32 %v184, %v522
    %v524 = vpop.f32.mrf.mxu0
    %v525 = vadd.f32 %v180, %v524
    %v526 = vpop.f32.mrf.mxu0
    %v527 = vadd.f32 %v184, %v526
    %528 = vmatprep.mubr.bf16.mxu0 0
    %529 = vmatmul.mubr.bf16.gmra.mxu0 %v351
    %v530 = vpop.f32.mrf.mxu0
    %v531 = vadd.f32 %v180, %v530
    %v532 = vpop.f32.mrf.mxu0
    %v533 = vadd.f32 %v184, %v532
    %v534 = vpop.f32.mrf.mxu0
    %v535 = vadd.f32 %v180, %v534
    %v536 = vpop.f32.mrf.mxu0
    %v537 = vadd.f32 %v184, %v536
    %538 = vmatprep.mubr.bf16.mxu0 0
    %539 = vmatmul.mubr.bf16.gmra.mxu0 %v354
    %v540 = vpop.f32.mrf.mxu0
    %v541 = vadd.f32 %v180, %v540
    %v542 = vpop.f32.mrf.mxu0
    %v543 = vadd.f32 %v184, %v542
    %v544 = vpop.f32.mrf.mxu0
    %v545 = vadd.f32 %v180, %v544
    %v546 = vpop.f32.mrf.mxu0
    %v547 = vadd.f32 %v184, %v546
    %548 = vdwg.mxu0
    %v549 = vmul.f32 %v391, 0.2
    %v550 = vmul.f32 %v393, 0.2
    %v551 = vmul.f32 %v395, 0.2
    %v552 = vmul.f32 %v397, 0.2
    %v553 = vmul.f32 %v401, 0.2
    %v554 = vmul.f32 %v403, 0.2
    %v555 = vmul.f32 %v405, 0.2
    %v556 = vmul.f32 %v407, 0.2
    %v557 = vmul.f32 %v411, 0.2
    %v558 = vmul.f32 %v413, 0.2
    %v559 = vmul.f32 %v415, 0.2
    %v560 = vmul.f32 %v417, 0.2
    %v561 = vmul.f32 %v421, 0.2
    %v562 = vmul.f32 %v423, 0.2
    %v563 = vmul.f32 %v425, 0.2
    %v564 = vmul.f32 %v427, 0.2
    %v565 = vmul.f32 %v431, 0.2
    %v566 = vmul.f32 %v433, 0.2
    %v567 = vmul.f32 %v435, 0.2
    %v568 = vmul.f32 %v437, 0.2
    %v569 = vmul.f32 %v441, 0.2
    %v570 = vmul.f32 %v443, 0.2
    %v571 = vmul.f32 %v445, 0.2
    %v572 = vmul.f32 %v447, 0.2
    %v573 = vmul.f32 %v451, 0.2
    %v574 = vmul.f32 %v453, 0.2
    %v575 = vmul.f32 %v455, 0.2
    %v576 = vmul.f32 %v457, 0.2
    %v577 = vmul.f32 %v461, 0.2
    %v578 = vmul.f32 %v463, 0.2
    %v579 = vmul.f32 %v465, 0.2
    %v580 = vmul.f32 %v467, 0.2
    %v581 = vmul.f32 %v471, 0.2
    %v582 = vmul.f32 %v473, 0.2
    %v583 = vmul.f32 %v475, 0.2
    %v584 = vmul.f32 %v477, 0.2
    %v585 = vmul.f32 %v481, 0.2
    %v586 = vmul.f32 %v483, 0.2
    %v587 = vmul.f32 %v485, 0.2
    %v588 = vmul.f32 %v487, 0.2
    %v589 = vmul.f32 %v491, 0.2
    %v590 = vmul.f32 %v493, 0.2
    %v591 = vmul.f32 %v495, 0.2
    %v592 = vmul.f32 %v497, 0.2
    %v593 = vmul.f32 %v501, 0.2
    %v594 = vmul.f32 %v503, 0.2
    %v595 = vmul.f32 %v505, 0.2
    %v596 = vmul.f32 %v507, 0.2
    %v597 = vmul.f32 %v511, 0.2
    %v598 = vmul.f32 %v513, 0.2
    %v599 = vmul.f32 %v515, 0.2
    %v600 = vmul.f32 %v517, 0.2
    %v601 = vmul.f32 %v521, 0.2
    %v602 = vmul.f32 %v523, 0.2
    %v603 = vmul.f32 %v525, 0.2
    %v604 = vmul.f32 %v527, 0.2
    %v605 = vmul.f32 %v531, 0.2
    %v606 = vmul.f32 %v533, 0.2
    %v607 = vmul.f32 %v535, 0.2
    %v608 = vmul.f32 %v537, 0.2
    %v609 = vmul.f32 %v541, 0.2
    %v610 = vmul.f32 %v543, 0.2
    %v611 = vmul.f32 %v545, 0.2
    %v612 = vmul.f32 %v547, 0.2
    %v613 = vmax.f32 %v391, %v549
    %v614 = vmax.f32 %v393, %v550
    %v615 = vmax.f32 %v395, %v551
    %v616 = vmax.f32 %v397, %v552
    %v617 = vmax.f32 %v401, %v553
    %v618 = vmax.f32 %v403, %v554
    %v619 = vmax.f32 %v405, %v555
    %v620 = vmax.f32 %v407, %v556
    %v621 = vmax.f32 %v411, %v557
    %v622 = vmax.f32 %v413, %v558
    %v623 = vmax.f32 %v415, %v559
    %v624 = vmax.f32 %v417, %v560
    %v625 = vmax.f32 %v421, %v561
    %v626 = vmax.f32 %v423, %v562
    %v627 = vmax.f32 %v425, %v563
    %v628 = vmax.f32 %v427, %v564
    %v629 = vmax.f32 %v431, %v565
    %v630 = vmax.f32 %v433, %v566
    %v631 = vmax.f32 %v435, %v567
    %v632 = vmax.f32 %v437, %v568
    %v633 = vmax.f32 %v441, %v569
    %v634 = vmax.f32 %v443, %v570
    %v635 = vmax.f32 %v445, %v571
    %v636 = vmax.f32 %v447, %v572
    %v637 = vmax.f32 %v451, %v573
    %v638 = vmax.f32 %v453, %v574
    %v639 = vmax.f32 %v455, %v575
    %v640 = vmax.f32 %v457, %v576
    %v641 = vmax.f32 %v461, %v577
    %v642 = vmax.f32 %v463, %v578
    %v643 = vmax.f32 %v465, %v579
    %v644 = vmax.f32 %v467, %v580
    %v645 = vmax.f32 %v471, %v581
    %v646 = vmax.f32 %v473, %v582
    %v647 = vmax.f32 %v475, %v583
    %v648 = vmax.f32 %v477, %v584
    %v649 = vmax.f32 %v481, %v585
    %v650 = vmax.f32 %v483, %v586
    %v651 = vmax.f32 %v485, %v587
    %v652 = vmax.f32 %v487, %v588
    %v653 = vmax.f32 %v491, %v589
    %v654 = vmax.f32 %v493, %v590
    %v655 = vmax.f32 %v495, %v591
    %v656 = vmax.f32 %v497, %v592
    %v657 = vmax.f32 %v501, %v593
    %v658 = vmax.f32 %v503, %v594
    %v659 = vmax.f32 %v505, %v595
    %v660 = vmax.f32 %v507, %v596
    %v661 = vmax.f32 %v511, %v597
    %v662 = vmax.f32 %v513, %v598
    %v663 = vmax.f32 %v515, %v599
    %v664 = vmax.f32 %v517, %v600
    %v665 = vmax.f32 %v521, %v601
    %v666 = vmax.f32 %v523, %v602
    %v667 = vmax.f32 %v525, %v603
    %v668 = vmax.f32 %v527, %v604
    %v669 = vmax.f32 %v531, %v605
    %v670 = vmax.f32 %v533, %v606
    %v671 = vmax.f32 %v535, %v607
    %v672 = vmax.f32 %v537, %v608
    %v673 = vmax.f32 %v541, %v609
    %v674 = vmax.f32 %v543, %v610
    %v675 = vmax.f32 %v545, %v611
    %v676 = vmax.f32 %v547, %v612
    %v677 = vpack.c.bf16 %v615, %v613
    %v678 = vpack.c.bf16 %v616, %v614
    %v679 = vpack.c.bf16 %v619, %v617
    %v680 = vpack.c.bf16 %v620, %v618
    %v681 = vpack.c.bf16 %v623, %v621
    %v682 = vpack.c.bf16 %v624, %v622
    %v683 = vpack.c.bf16 %v627, %v625
    %v684 = vpack.c.bf16 %v628, %v626
    %v685 = vpack.c.bf16 %v631, %v629
    %v686 = vpack.c.bf16 %v632, %v630
    %v687 = vpack.c.bf16 %v635, %v633
    %v688 = vpack.c.bf16 %v636, %v634
    %v689 = vpack.c.bf16 %v639, %v637
    %v690 = vpack.c.bf16 %v640, %v638
    %v691 = vpack.c.bf16 %v643, %v641
    %v692 = vpack.c.bf16 %v644, %v642
    %v693 = vpack.c.bf16 %v647, %v645
    %v694 = vpack.c.bf16 %v648, %v646
    %v695 = vpack.c.bf16 %v651, %v649
    %v696 = vpack.c.bf16 %v652, %v650
    %v697 = vpack.c.bf16 %v655, %v653
    %v698 = vpack.c.bf16 %v656, %v654
    %v699 = vpack.c.bf16 %v659, %v657
    %v700 = vpack.c.bf16 %v660, %v658
    %v701 = vpack.c.bf16 %v663, %v661
    %v702 = vpack.c.bf16 %v664, %v662
    %v703 = vpack.c.bf16 %v667, %v665
    %v704 = vpack.c.bf16 %v668, %v666
    %v705 = vpack.c.bf16 %v671, %v669
    %v706 = vpack.c.bf16 %v672, %v670
    %v707 = vpack.c.bf16 %v675, %v673
    %v708 = vpack.c.bf16 %v676, %v674
    %v709 = vld [vmem:[#allocation7] sm:$0xff]
    %v710 = vld [vmem:[#allocation7 + $0x8] sm:$0xff]
    %v711 = vld [vmem:[#allocation7 + $0x10] sm:$0xff]
    %v712 = vld [vmem:[#allocation7 + $0x18] sm:$0xff]
    %v713 = vld [vmem:[#allocation7 + $0x20] sm:$0xff]
    %v714 = vld [vmem:[#allocation7 + $0x28] sm:$0xff]
    %v715 = vld [vmem:[#allocation7 + $0x30] sm:$0xff]
    %v716 = vld [vmem:[#allocation7 + $0x38] sm:$0xff]
    %v717 = vld [vmem:[#allocation7 + $0x40] sm:$0xff]
    %v718 = vld [vmem:[#allocation7 + $0x48] sm:$0xff]
    %v719 = vld [vmem:[#allocation7 + $0x50] sm:$0xff]
    %v720 = vld [vmem:[#allocation7 + $0x58] sm:$0xff]
    %v721 = vld [vmem:[#allocation7 + $0x60] sm:$0xff]
    %v722 = vld [vmem:[#allocation7 + $0x68] sm:$0xff]
    %v723 = vld [vmem:[#allocation7 + $0x70] sm:$0xff]
    %v724 = vld [vmem:[#allocation7 + $0x78] sm:$0xff]
    %v725 = vld [vmem:[#allocation7 + $0x80] sm:$0xff]
    %v726 = vld [vmem:[#allocation7 + $0x88] sm:$0xff]
    %v727 = vld [vmem:[#allocation7 + $0x90] sm:$0xff]
    %v728 = vld [vmem:[#allocation7 + $0x98] sm:$0xff]
    %v729 = vld [vmem:[#allocation7 + $0xa0] sm:$0xff]
    %v730 = vld [vmem:[#allocation7 + $0xa8] sm:$0xff]
    %v731 = vld [vmem:[#allocation7 + $0xb0] sm:$0xff]
    %v732 = vld [vmem:[#allocation7 + $0xb8] sm:$0xff]
    %v733 = vld [vmem:[#allocation7 + $0xc0] sm:$0xff]
    %v734 = vld [vmem:[#allocation7 + $0xc8] sm:$0xff]
    %v735 = vld [vmem:[#allocation7 + $0xd0] sm:$0xff]
    %v736 = vld [vmem:[#allocation7 + $0xd8] sm:$0xff]
    %v737 = vld [vmem:[#allocation7 + $0xe0] sm:$0xff]
    %v738 = vld [vmem:[#allocation7 + $0xe8] sm:$0xff]
    %v739 = vld [vmem:[#allocation7 + $0xf0] sm:$0xff]
    %v740 = vld [vmem:[#allocation7 + $0xf8] sm:$0xff]
    %v741 = vld [vmem:[#allocation7 + $0x100] sm:$0xff]
    %v742 = vld [vmem:[#allocation7 + $0x108] sm:$0xff]
    %v743 = vld [vmem:[#allocation7 + $0x110] sm:$0xff]
    %v744 = vld [vmem:[#allocation7 + $0x118] sm:$0xff]
    %v745 = vld [vmem:[#allocation7 + $0x120] sm:$0xff]
    %v746 = vld [vmem:[#allocation7 + $0x128] sm:$0xff]
    %v747 = vld [vmem:[#allocation7 + $0x130] sm:$0xff]
    %v748 = vld [vmem:[#allocation7 + $0x138] sm:$0xff]
    %v749 = vld [vmem:[#allocation7 + $0x140] sm:$0xff]
    %v750 = vld [vmem:[#allocation7 + $0x148] sm:$0xff]
    %v751 = vld [vmem:[#allocation7 + $0x150] sm:$0xff]
    %v752 = vld [vmem:[#allocation7 + $0x158] sm:$0xff]
    %v753 = vld [vmem:[#allocation7 + $0x160] sm:$0xff]
    %v754 = vld [vmem:[#allocation7 + $0x168] sm:$0xff]
    %v755 = vld [vmem:[#allocation7 + $0x170] sm:$0xff]
    %v756 = vld [vmem:[#allocation7 + $0x178] sm:$0xff]
    %v757 = vld [vmem:[#allocation7 + $0x180] sm:$0xff]
    %v758 = vld [vmem:[#allocation7 + $0x188] sm:$0xff]
    %v759 = vld [vmem:[#allocation7 + $0x190] sm:$0xff]
    %v760 = vld [vmem:[#allocation7 + $0x198] sm:$0xff]
    %v761 = vld [vmem:[#allocation7 + $0x1a0] sm:$0xff]
    %v762 = vld [vmem:[#allocation7 + $0x1a8] sm:$0xff]
    %v763 = vld [vmem:[#allocation7 + $0x1b0] sm:$0xff]
    %v764 = vld [vmem:[#allocation7 + $0x1b8] sm:$0xff]
    %v765 = vld [vmem:[#allocation7 + $0x1c0] sm:$0xff]
    %v766 = vld [vmem:[#allocation7 + $0x1c8] sm:$0xff]
    %v767 = vld [vmem:[#allocation7 + $0x1d0] sm:$0xff]
    %v768 = vld [vmem:[#allocation7 + $0x1d8] sm:$0xff]
    %v769 = vld [vmem:[#allocation7 + $0x1e0] sm:$0xff]
    %v770 = vld [vmem:[#allocation7 + $0x1e8] sm:$0xff]
    %v771 = vld [vmem:[#allocation7 + $0x1f0] sm:$0xff]
    %v772 = vld [vmem:[#allocation7 + $0x1f8] sm:$0xff]
    %v773 = vld [vmem:[#allocation8] sm:$0xf]
    %v775 = vlaneseq
    %v776 = vshrl.u32 %v775, 7
    %v777 = vsub.s32 0, %v776
    %v778 = vrot.slane %v773, %v777
    %v779 = vlaneseq
    %v780 = vshrl.u32 %v779, 7
    %v781 = vsub.s32 1, %v780
    %v782 = vrot.slane %v773, %v781
    %v783 = vlaneseq
    %v784 = vshrl.u32 %v783, 7
    %v785 = vsub.s32 2, %v784
    %v786 = vrot.slane %v773, %v785
    %v787 = vlaneseq
    %v788 = vshrl.u32 %v787, 7
    %v789 = vsub.s32 3, %v788
    %v790 = vrot.slane %v773, %v789
    %v859 = vunpack.c.l.b16 %v709
    %v860 = vunpack.c.h.b16 %v709
    %v861 = vunpack.c.l.b16 %v710
    %v862 = vunpack.c.h.b16 %v710
    %v863 = vunpack.c.l.b16 %v711
    %v864 = vunpack.c.h.b16 %v711
    %v865 = vunpack.c.l.b16 %v712
    %v866 = vunpack.c.h.b16 %v712
    %v867 = vunpack.c.l.b16 %v713
    %v868 = vunpack.c.h.b16 %v713
    %v869 = vunpack.c.l.b16 %v714
    %v870 = vunpack.c.h.b16 %v714
    %v871 = vunpack.c.l.b16 %v715
    %v872 = vunpack.c.h.b16 %v715
    %v873 = vunpack.c.l.b16 %v716
    %v874 = vunpack.c.h.b16 %v716
    %v875 = vunpack.c.l.b16 %v717
    %v876 = vunpack.c.h.b16 %v717
    %v877 = vunpack.c.l.b16 %v718
    %v878 = vunpack.c.h.b16 %v718
    %v879 = vunpack.c.l.b16 %v719
    %v880 = vunpack.c.h.b16 %v719
    %v881 = vunpack.c.l.b16 %v720
    %v882 = vunpack.c.h.b16 %v720
    %v883 = vunpack.c.l.b16 %v721
    %v884 = vunpack.c.h.b16 %v721
    %v885 = vunpack.c.l.b16 %v722
    %v886 = vunpack.c.h.b16 %v722
    %v887 = vunpack.c.l.b16 %v723
    %v888 = vunpack.c.h.b16 %v723
    %v889 = vunpack.c.l.b16 %v724
    %v890 = vunpack.c.h.b16 %v724
    %v891 = vunpack.c.l.b16 %v725
    %v892 = vunpack.c.h.b16 %v725
    %v893 = vunpack.c.l.b16 %v726
    %v894 = vunpack.c.h.b16 %v726
    %v895 = vunpack.c.l.b16 %v727
    %v896 = vunpack.c.h.b16 %v727
    %v897 = vunpack.c.l.b16 %v728
    %v898 = vunpack.c.h.b16 %v728
    %v899 = vunpack.c.l.b16 %v729
    %v900 = vunpack.c.h.b16 %v729
    %v901 = vunpack.c.l.b16 %v730
    %v902 = vunpack.c.h.b16 %v730
    %v903 = vunpack.c.l.b16 %v731
    %v904 = vunpack.c.h.b16 %v731
    %v905 = vunpack.c.l.b16 %v732
    %v906 = vunpack.c.h.b16 %v732
    %v907 = vunpack.c.l.b16 %v733
    %v908 = vunpack.c.h.b16 %v733
    %v909 = vunpack.c.l.b16 %v734
    %v910 = vunpack.c.h.b16 %v734
    %v911 = vunpack.c.l.b16 %v735
    %v912 = vunpack.c.h.b16 %v735
    %v913 = vunpack.c.l.b16 %v736
    %v914 = vunpack.c.h.b16 %v736
    %v915 = vunpack.c.l.b16 %v737
    %v916 = vunpack.c.h.b16 %v737
    %v917 = vunpack.c.l.b16 %v738
    %v918 = vunpack.c.h.b16 %v738
    %v919 = vunpack.c.l.b16 %v739
    %v920 = vunpack.c.h.b16 %v739
    %v921 = vunpack.c.l.b16 %v740
    %v922 = vunpack.c.h.b16 %v740
    %v923 = vunpack.c.l.b16 %v741
    %v924 = vunpack.c.h.b16 %v741
    %v925 = vunpack.c.l.b16 %v742
    %v926 = vunpack.c.h.b16 %v742
    %v927 = vunpack.c.l.b16 %v743
    %v928 = vunpack.c.h.b16 %v743
    %v929 = vunpack.c.l.b16 %v744
    %v930 = vunpack.c.h.b16 %v744
    %v931 = vunpack.c.l.b16 %v745
    %v932 = vunpack.c.h.b16 %v745
    %v933 = vunpack.c.l.b16 %v746
    %v934 = vunpack.c.h.b16 %v746
    %v935 = vunpack.c.l.b16 %v747
    %v936 = vunpack.c.h.b16 %v747
    %v937 = vunpack.c.l.b16 %v748
    %v938 = vunpack.c.h.b16 %v748
    %v939 = vunpack.c.l.b16 %v749
    %v940 = vunpack.c.h.b16 %v749
    %v941 = vunpack.c.l.b16 %v750
    %v942 = vunpack.c.h.b16 %v750
    %v943 = vunpack.c.l.b16 %v751
    %v944 = vunpack.c.h.b16 %v751
    %v945 = vunpack.c.l.b16 %v752
    %v946 = vunpack.c.h.b16 %v752
    %v947 = vunpack.c.l.b16 %v753
    %v948 = vunpack.c.h.b16 %v753
    %v949 = vunpack.c.l.b16 %v754
    %v950 = vunpack.c.h.b16 %v754
    %v951 = vunpack.c.l.b16 %v755
    %v952 = vunpack.c.h.b16 %v755
    %v953 = vunpack.c.l.b16 %v756
    %v954 = vunpack.c.h.b16 %v756
    %v955 = vunpack.c.l.b16 %v757
    %v956 = vunpack.c.h.b16 %v757
    %v957 = vunpack.c.l.b16 %v758
    %v958 = vunpack.c.h.b16 %v758
    %v959 = vunpack.c.l.b16 %v759
    %v960 = vunpack.c.h.b16 %v759
    %v961 = vunpack.c.l.b16 %v760
    %v962 = vunpack.c.h.b16 %v760
    %v963 = vunpack.c.l.b16 %v761
    %v964 = vunpack.c.h.b16 %v761
    %v965 = vunpack.c.l.b16 %v762
    %v966 = vunpack.c.h.b16 %v762
    %v967 = vunpack.c.l.b16 %v763
    %v968 = vunpack.c.h.b16 %v763
    %v969 = vunpack.c.l.b16 %v764
    %v970 = vunpack.c.h.b16 %v764
    %v971 = vunpack.c.l.b16 %v765
    %v972 = vunpack.c.h.b16 %v765
    %v973 = vunpack.c.l.b16 %v766
    %v974 = vunpack.c.h.b16 %v766
    %v975 = vunpack.c.l.b16 %v767
    %v976 = vunpack.c.h.b16 %v767
    %v977 = vunpack.c.l.b16 %v768
    %v978 = vunpack.c.h.b16 %v768
    %v979 = vunpack.c.l.b16 %v769
    %v980 = vunpack.c.h.b16 %v769
    %v981 = vunpack.c.l.b16 %v770
    %v982 = vunpack.c.h.b16 %v770
    %v983 = vunpack.c.l.b16 %v771
    %v984 = vunpack.c.h.b16 %v771
    %v985 = vunpack.c.l.b16 %v772
    %v986 = vunpack.c.h.b16 %v772
    %v987 = vpack.c.b16 %v863, %v859
    %v988 = vpack.c.b16 %v864, %v860
    %v989 = vpack.c.b16 %v865, %v861
    %v990 = vpack.c.b16 %v866, %v862
    %v991 = vpack.c.b16 %v871, %v867
    %v992 = vpack.c.b16 %v872, %v868
    %v993 = vpack.c.b16 %v873, %v869
    %v994 = vpack.c.b16 %v874, %v870
    %v995 = vpack.c.b16 %v879, %v875
    %v996 = vpack.c.b16 %v880, %v876
    %v997 = vpack.c.b16 %v881, %v877
    %v998 = vpack.c.b16 %v882, %v878
    %v999 = vpack.c.b16 %v887, %v883
    %v1000 = vpack.c.b16 %v888, %v884
    %v1001 = vpack.c.b16 %v889, %v885
    %v1002 = vpack.c.b16 %v890, %v886
    %v1003 = vpack.c.b16 %v895, %v891
    %v1004 = vpack.c.b16 %v896, %v892
    %v1005 = vpack.c.b16 %v897, %v893
    %v1006 = vpack.c.b16 %v898, %v894
    %v1007 = vpack.c.b16 %v903, %v899
    %v1008 = vpack.c.b16 %v904, %v900
    %v1009 = vpack.c.b16 %v905, %v901
    %v1010 = vpack.c.b16 %v906, %v902
    %v1011 = vpack.c.b16 %v911, %v907
    %v1012 = vpack.c.b16 %v912, %v908
    %v1013 = vpack.c.b16 %v913, %v909
    %v1014 = vpack.c.b16 %v914, %v910
    %v1015 = vpack.c.b16 %v919, %v915
    %v1016 = vpack.c.b16 %v920, %v916
    %v1017 = vpack.c.b16 %v921, %v917
    %v1018 = vpack.c.b16 %v922, %v918
    %v1019 = vpack.c.b16 %v927, %v923
    %v1020 = vpack.c.b16 %v928, %v924
    %v1021 = vpack.c.b16 %v929, %v925
    %v1022 = vpack.c.b16 %v930, %v926
    %v1023 = vpack.c.b16 %v935, %v931
    %v1024 = vpack.c.b16 %v936, %v932
    %v1025 = vpack.c.b16 %v937, %v933
    %v1026 = vpack.c.b16 %v938, %v934
    %v1027 = vpack.c.b16 %v943, %v939
    %v1028 = vpack.c.b16 %v944, %v940
    %v1029 = vpack.c.b16 %v945, %v941
    %v1030 = vpack.c.b16 %v946, %v942
    %v1031 = vpack.c.b16 %v951, %v947
    %v1032 = vpack.c.b16 %v952, %v948
    %v1033 = vpack.c.b16 %v953, %v949
    %v1034 = vpack.c.b16 %v954, %v950
    %v1035 = vpack.c.b16 %v959, %v955
    %v1036 = vpack.c.b16 %v960, %v956
    %v1037 = vpack.c.b16 %v961, %v957
    %v1038 = vpack.c.b16 %v962, %v958
    %v1039 = vpack.c.b16 %v967, %v963
    %v1040 = vpack.c.b16 %v968, %v964
    %v1041 = vpack.c.b16 %v969, %v965
    %v1042 = vpack.c.b16 %v970, %v966
    %v1043 = vpack.c.b16 %v975, %v971
    %v1044 = vpack.c.b16 %v976, %v972
    %v1045 = vpack.c.b16 %v977, %v973
    %v1046 = vpack.c.b16 %v978, %v974
    %v1047 = vpack.c.b16 %v983, %v979
    %v1048 = vpack.c.b16 %v984, %v980
    %v1049 = vpack.c.b16 %v985, %v981
    %v1050 = vpack.c.b16 %v986, %v982
    %1115 = vmatprep.subr.bf16.mxu0 %v1016
    %1116 = vmatpush1.bf16.msra.mxu0 %v1015
    %1117 = vmatprep.subr.bf16.mxu0 %v1012
    %1118 = vmatpush1.bf16.msra.mxu0 %v1011
    %1119 = vmatprep.subr.bf16.mxu0 %v1008
    %1120 = vmatpush1.bf16.msra.mxu0 %v1007
    %1121 = vmatprep.subr.bf16.mxu0 %v1004
    %1122 = vmatpush1.bf16.msra.mxu0 %v1003
    %1123 = vmatprep.subr.bf16.mxu0 %v1000
    %1124 = vmatpush1.bf16.msra.mxu0 %v999
    %1125 = vmatprep.subr.bf16.mxu0 %v996
    %1126 = vmatpush1.bf16.msra.mxu0 %v995
    %1127 = vmatprep.subr.bf16.mxu0 %v992
    %1128 = vmatpush1.bf16.msra.mxu0 %v991
    %1129 = vmatprep.subr.bf16.mxu0 %v988
    %1130 = vmatpush1.bf16.msra.mxu0 %v987
    %1131 = vmatprep.subr.bf16.mxu0 %v1048
    %1132 = vmatpush2.bf16.msra.mxu0 %v1047
    %1133 = vmatprep.subr.bf16.mxu0 %v1044
    %1134 = vmatpush2.bf16.msra.mxu0 %v1043
    %1135 = vmatprep.subr.bf16.mxu0 %v1040
    %1136 = vmatpush2.bf16.msra.mxu0 %v1039
    %1137 = vmatprep.subr.bf16.mxu0 %v1036
    %1138 = vmatpush2.bf16.msra.mxu0 %v1035
    %1139 = vmatprep.subr.bf16.mxu0 %v1032
    %1140 = vmatpush2.bf16.msra.mxu0 %v1031
    %1141 = vmatprep.subr.bf16.mxu0 %v1028
    %1142 = vmatpush2.bf16.msra.mxu0 %v1027
    %1143 = vmatprep.subr.bf16.mxu0 %v1024
    %1144 = vmatpush2.bf16.msra.mxu0 %v1023
    %1145 = vmatprep.subr.bf16.mxu0 %v1020
    %1146 = vmatpush2.bf16.msra.mxu0 %v1019
    %1147 = vmatprep.mubr.bf16.mxu0 %v678
    %1148 = vmatmul.mubr.bf16.gmra.mxu0 %v677
    %v1149 = vpop.f32.mrf.mxu0
    %v1150 = vadd.f32 %v778, %v1149
    %v1151 = vpop.f32.mrf.mxu0
    %v1152 = vadd.f32 %v782, %v1151
    %v1153 = vpop.f32.mrf.mxu0
    %v1154 = vadd.f32 %v778, %v1153
    %v1155 = vpop.f32.mrf.mxu0
    %v1156 = vadd.f32 %v782, %v1155
    %1157 = vmatprep.mubr.bf16.mxu0 %v680
    %1158 = vmatmul.mubr.bf16.gmra.mxu0 %v679
    %v1159 = vpop.f32.mrf.mxu0
    %v1160 = vadd.f32 %v778, %v1159
    %v1161 = vpop.f32.mrf.mxu0
    %v1162 = vadd.f32 %v782, %v1161
    %v1163 = vpop.f32.mrf.mxu0
    %v1164 = vadd.f32 %v778, %v1163
    %v1165 = vpop.f32.mrf.mxu0
    %v1166 = vadd.f32 %v782, %v1165
    %1167 = vmatprep.mubr.bf16.mxu0 %v682
    %1168 = vmatmul.mubr.bf16.gmra.mxu0 %v681
    %v1169 = vpop.f32.mrf.mxu0
    %v1170 = vadd.f32 %v778, %v1169
    %v1171 = vpop.f32.mrf.mxu0
    %v1172 = vadd.f32 %v782, %v1171
    %v1173 = vpop.f32.mrf.mxu0
    %v1174 = vadd.f32 %v778, %v1173
    %v1175 = vpop.f32.mrf.mxu0
    %v1176 = vadd.f32 %v782, %v1175
    %1177 = vmatprep.mubr.bf16.mxu0 %v684
    %1178 = vmatmul.mubr.bf16.gmra.mxu0 %v683
    %v1179 = vpop.f32.mrf.mxu0
    %v1180 = vadd.f32 %v778, %v1179
    %v1181 = vpop.f32.mrf.mxu0
    %v1182 = vadd.f32 %v782, %v1181
    %v1183 = vpop.f32.mrf.mxu0
    %v1184 = vadd.f32 %v778, %v1183
    %v1185 = vpop.f32.mrf.mxu0
    %v1186 = vadd.f32 %v782, %v1185
    %1187 = vmatprep.mubr.bf16.mxu0 %v686
    %1188 = vmatmul.mubr.bf16.gmra.mxu0 %v685
    %v1189 = vpop.f32.mrf.mxu0
    %v1190 = vadd.f32 %v778, %v1189
    %v1191 = vpop.f32.mrf.mxu0
    %v1192 = vadd.f32 %v782, %v1191
    %v1193 = vpop.f32.mrf.mxu0
    %v1194 = vadd.f32 %v778, %v1193
    %v1195 = vpop.f32.mrf.mxu0
    %v1196 = vadd.f32 %v782, %v1195
    %1197 = vmatprep.mubr.bf16.mxu0 %v688
    %1198 = vmatmul.mubr.bf16.gmra.mxu0 %v687
    %v1199 = vpop.f32.mrf.mxu0
    %v1200 = vadd.f32 %v778, %v1199
    %v1201 = vpop.f32.mrf.mxu0
    %v1202 = vadd.f32 %v782, %v1201
    %v1203 = vpop.f32.mrf.mxu0
    %v1204 = vadd.f32 %v778, %v1203
    %v1205 = vpop.f32.mrf.mxu0
    %v1206 = vadd.f32 %v782, %v1205
    %1207 = vmatprep.mubr.bf16.mxu0 %v690
    %1208 = vmatmul.mubr.bf16.gmra.mxu0 %v689
    %v1209 = vpop.f32.mrf.mxu0
    %v1210 = vadd.f32 %v778, %v1209
    %v1211 = vpop.f32.mrf.mxu0
    %v1212 = vadd.f32 %v782, %v1211
    %v1213 = vpop.f32.mrf.mxu0
    %v1214 = vadd.f32 %v778, %v1213
    %v1215 = vpop.f32.mrf.mxu0
    %v1216 = vadd.f32 %v782, %v1215
    %1217 = vmatprep.mubr.bf16.mxu0 %v692
    %1218 = vmatmul.mubr.bf16.gmra.mxu0 %v691
    %v1219 = vpop.f32.mrf.mxu0
    %v1220 = vadd.f32 %v778, %v1219
    %v1221 = vpop.f32.mrf.mxu0
    %v1222 = vadd.f32 %v782, %v1221
    %v1223 = vpop.f32.mrf.mxu0
    %v1224 = vadd.f32 %v778, %v1223
    %v1225 = vpop.f32.mrf.mxu0
    %v1226 = vadd.f32 %v782, %v1225
    %1227 = vmatprep.mubr.bf16.mxu0 %v694
    %1228 = vmatmul.mubr.bf16.gmra.mxu0 %v693
    %v1229 = vpop.f32.mrf.mxu0
    %v1230 = vadd.f32 %v778, %v1229
    %v1231 = vpop.f32.mrf.mxu0
    %v1232 = vadd.f32 %v782, %v1231
    %v1233 = vpop.f32.mrf.mxu0
    %v1234 = vadd.f32 %v778, %v1233
    %v1235 = vpop.f32.mrf.mxu0
    %v1236 = vadd.f32 %v782, %v1235
    %1237 = vmatprep.mubr.bf16.mxu0 %v696
    %1238 = vmatmul.mubr.bf16.gmra.mxu0 %v695
    %v1239 = vpop.f32.mrf.mxu0
    %v1240 = vadd.f32 %v778, %v1239
    %v1241 = vpop.f32.mrf.mxu0
    %v1242 = vadd.f32 %v782, %v1241
    %v1243 = vpop.f32.mrf.mxu0
    %v1244 = vadd.f32 %v778, %v1243
    %v1245 = vpop.f32.mrf.mxu0
    %v1246 = vadd.f32 %v782, %v1245
    %1247 = vmatprep.mubr.bf16.mxu0 %v698
    %1248 = vmatmul.mubr.bf16.gmra.mxu0 %v697
    %v1249 = vpop.f32.mrf.mxu0
    %v1250 = vadd.f32 %v778, %v1249
    %v1251 = vpop.f32.mrf.mxu0
    %v1252 = vadd.f32 %v782, %v1251
    %v1253 = vpop.f32.mrf.mxu0
    %v1254 = vadd.f32 %v778, %v1253
    %v1255 = vpop.f32.mrf.mxu0
    %v1256 = vadd.f32 %v782, %v1255
    %1257 = vmatprep.mubr.bf16.mxu0 %v700
    %1258 = vmatmul.mubr.bf16.gmra.mxu0 %v699
    %v1259 = vpop.f32.mrf.mxu0
    %v1260 = vadd.f32 %v778, %v1259
    %v1261 = vpop.f32.mrf.mxu0
    %v1262 = vadd.f32 %v782, %v1261
    %v1263 = vpop.f32.mrf.mxu0
    %v1264 = vadd.f32 %v778, %v1263
    %v1265 = vpop.f32.mrf.mxu0
    %v1266 = vadd.f32 %v782, %v1265
    %1267 = vmatprep.mubr.bf16.mxu0 %v702
    %1268 = vmatmul.mubr.bf16.gmra.mxu0 %v701
    %v1269 = vpop.f32.mrf.mxu0
    %v1270 = vadd.f32 %v778, %v1269
    %v1271 = vpop.f32.mrf.mxu0
    %v1272 = vadd.f32 %v782, %v1271
    %v1273 = vpop.f32.mrf.mxu0
    %v1274 = vadd.f32 %v778, %v1273
    %v1275 = vpop.f32.mrf.mxu0
    %v1276 = vadd.f32 %v782, %v1275
    %1277 = vmatprep.mubr.bf16.mxu0 %v704
    %1278 = vmatmul.mubr.bf16.gmra.mxu0 %v703
    %v1279 = vpop.f32.mrf.mxu0
    %v1280 = vadd.f32 %v778, %v1279
    %v1281 = vpop.f32.mrf.mxu0
    %v1282 = vadd.f32 %v782, %v1281
    %v1283 = vpop.f32.mrf.mxu0
    %v1284 = vadd.f32 %v778, %v1283
    %v1285 = vpop.f32.mrf.mxu0
    %v1286 = vadd.f32 %v782, %v1285
    %1287 = vmatprep.mubr.bf16.mxu0 %v706
    %1288 = vmatmul.mubr.bf16.gmra.mxu0 %v705
    %v1289 = vpop.f32.mrf.mxu0
    %v1290 = vadd.f32 %v778, %v1289
    %v1291 = vpop.f32.mrf.mxu0
    %v1292 = vadd.f32 %v782, %v1291
    %v1293 = vpop.f32.mrf.mxu0
    %v1294 = vadd.f32 %v778, %v1293
    %v1295 = vpop.f32.mrf.mxu0
    %v1296 = vadd.f32 %v782, %v1295
    %1297 = vmatprep.mubr.bf16.mxu0 %v708
    %1298 = vmatmul.mubr.bf16.gmra.mxu0 %v707
    %v1299 = vpop.f32.mrf.mxu0
    %v1300 = vadd.f32 %v778, %v1299
    %v1301 = vpop.f32.mrf.mxu0
    %v1302 = vadd.f32 %v782, %v1301
    %v1303 = vpop.f32.mrf.mxu0
    %v1304 = vadd.f32 %v778, %v1303
    %v1305 = vpop.f32.mrf.mxu0
    %v1306 = vadd.f32 %v782, %v1305
    %1307 = vdwg.mxu0
    %1308 = vmatprep.subr.bf16.mxu0 %v1018
    %1309 = vmatpush1.bf16.msra.mxu0 %v1017
    %1310 = vmatprep.subr.bf16.mxu0 %v1014
    %1311 = vmatpush1.bf16.msra.mxu0 %v1013
    %1312 = vmatprep.subr.bf16.mxu0 %v1010
    %1313 = vmatpush1.bf16.msra.mxu0 %v1009
    %1314 = vmatprep.subr.bf16.mxu0 %v1006
    %1315 = vmatpush1.bf16.msra.mxu0 %v1005
    %1316 = vmatprep.subr.bf16.mxu0 %v1002
    %1317 = vmatpush1.bf16.msra.mxu0 %v1001
    %1318 = vmatprep.subr.bf16.mxu0 %v998
    %1319 = vmatpush1.bf16.msra.mxu0 %v997
    %1320 = vmatprep.subr.bf16.mxu0 %v994
    %1321 = vmatpush1.bf16.msra.mxu0 %v993
    %1322 = vmatprep.subr.bf16.mxu0 %v990
    %1323 = vmatpush1.bf16.msra.mxu0 %v989
    %1324 = vmatprep.subr.bf16.mxu0 %v1050
    %1325 = vmatpush2.bf16.msra.mxu0 %v1049
    %1326 = vmatprep.subr.bf16.mxu0 %v1046
    %1327 = vmatpush2.bf16.msra.mxu0 %v1045
    %1328 = vmatprep.subr.bf16.mxu0 %v1042
    %1329 = vmatpush2.bf16.msra.mxu0 %v1041
    %1330 = vmatprep.subr.bf16.mxu0 %v1038
    %1331 = vmatpush2.bf16.msra.mxu0 %v1037
    %1332 = vmatprep.subr.bf16.mxu0 %v1034
    %1333 = vmatpush2.bf16.msra.mxu0 %v1033
    %1334 = vmatprep.subr.bf16.mxu0 %v1030
    %1335 = vmatpush2.bf16.msra.mxu0 %v1029
    %1336 = vmatprep.subr.bf16.mxu0 %v1026
    %1337 = vmatpush2.bf16.msra.mxu0 %v1025
    %1338 = vmatprep.subr.bf16.mxu0 %v1022
    %1339 = vmatpush2.bf16.msra.mxu0 %v1021
    %1340 = vmatprep.mubr.bf16.mxu0 %v678
    %1341 = vmatmul.mubr.bf16.gmra.mxu0 %v677
    %v1342 = vpop.f32.mrf.mxu0
    %v1343 = vadd.f32 %v786, %v1342
    %v1344 = vpop.f32.mrf.mxu0
    %v1345 = vadd.f32 %v790, %v1344
    %v1346 = vpop.f32.mrf.mxu0
    %v1347 = vadd.f32 %v786, %v1346
    %v1348 = vpop.f32.mrf.mxu0
    %v1349 = vadd.f32 %v790, %v1348
    %1350 = vmatprep.mubr.bf16.mxu0 %v680
    %1351 = vmatmul.mubr.bf16.gmra.mxu0 %v679
    %v1352 = vpop.f32.mrf.mxu0
    %v1353 = vadd.f32 %v786, %v1352
    %v1354 = vpop.f32.mrf.mxu0
    %v1355 = vadd.f32 %v790, %v1354
    %v1356 = vpop.f32.mrf.mxu0
    %v1357 = vadd.f32 %v786, %v1356
    %v1358 = vpop.f32.mrf.mxu0
    %v1359 = vadd.f32 %v790, %v1358
    %1360 = vmatprep.mubr.bf16.mxu0 %v682
    %1361 = vmatmul.mubr.bf16.gmra.mxu0 %v681
    %v1362 = vpop.f32.mrf.mxu0
    %v1363 = vadd.f32 %v786, %v1362
    %v1364 = vpop.f32.mrf.mxu0
    %v1365 = vadd.f32 %v790, %v1364
    %v1366 = vpop.f32.mrf.mxu0
    %v1367 = vadd.f32 %v786, %v1366
    %v1368 = vpop.f32.mrf.mxu0
    %v1369 = vadd.f32 %v790, %v1368
    %1370 = vmatprep.mubr.bf16.mxu0 %v684
    %1371 = vmatmul.mubr.bf16.gmra.mxu0 %v683
    %v1372 = vpop.f32.mrf.mxu0
    %v1373 = vadd.f32 %v786, %v1372
    %v1374 = vpop.f32.mrf.mxu0
    %v1375 = vadd.f32 %v790, %v1374
    %v1376 = vpop.f32.mrf.mxu0
    %v1377 = vadd.f32 %v786, %v1376
    %v1378 = vpop.f32.mrf.mxu0
    %v1379 = vadd.f32 %v790, %v1378
    %1380 = vmatprep.mubr.bf16.mxu0 %v686
    %1381 = vmatmul.mubr.bf16.gmra.mxu0 %v685
    %v1382 = vpop.f32.mrf.mxu0
    %v1383 = vadd.f32 %v786, %v1382
    %v1384 = vpop.f32.mrf.mxu0
    %v1385 = vadd.f32 %v790, %v1384
    %v1386 = vpop.f32.mrf.mxu0
    %v1387 = vadd.f32 %v786, %v1386
    %v1388 = vpop.f32.mrf.mxu0
    %v1389 = vadd.f32 %v790, %v1388
    %1390 = vmatprep.mubr.bf16.mxu0 %v688
    %1391 = vmatmul.mubr.bf16.gmra.mxu0 %v687
    %v1392 = vpop.f32.mrf.mxu0
    %v1393 = vadd.f32 %v786, %v1392
    %v1394 = vpop.f32.mrf.mxu0
    %v1395 = vadd.f32 %v790, %v1394
    %v1396 = vpop.f32.mrf.mxu0
    %v1397 = vadd.f32 %v786, %v1396
    %v1398 = vpop.f32.mrf.mxu0
    %v1399 = vadd.f32 %v790, %v1398
    %1400 = vmatprep.mubr.bf16.mxu0 %v690
    %1401 = vmatmul.mubr.bf16.gmra.mxu0 %v689
    %v1402 = vpop.f32.mrf.mxu0
    %v1403 = vadd.f32 %v786, %v1402
    %v1404 = vpop.f32.mrf.mxu0
    %v1405 = vadd.f32 %v790, %v1404
    %v1406 = vpop.f32.mrf.mxu0
    %v1407 = vadd.f32 %v786, %v1406
    %v1408 = vpop.f32.mrf.mxu0
    %v1409 = vadd.f32 %v790, %v1408
    %1410 = vmatprep.mubr.bf16.mxu0 %v692
    %1411 = vmatmul.mubr.bf16.gmra.mxu0 %v691
    %v1412 = vpop.f32.mrf.mxu0
    %v1413 = vadd.f32 %v786, %v1412
    %v1414 = vpop.f32.mrf.mxu0
    %v1415 = vadd.f32 %v790, %v1414
    %v1416 = vpop.f32.mrf.mxu0
    %v1417 = vadd.f32 %v786, %v1416
    %v1418 = vpop.f32.mrf.mxu0
    %v1419 = vadd.f32 %v790, %v1418
    %1420 = vmatprep.mubr.bf16.mxu0 %v694
    %1421 = vmatmul.mubr.bf16.gmra.mxu0 %v693
    %v1422 = vpop.f32.mrf.mxu0
    %v1423 = vadd.f32 %v786, %v1422
    %v1424 = vpop.f32.mrf.mxu0
    %v1425 = vadd.f32 %v790, %v1424
    %v1426 = vpop.f32.mrf.mxu0
    %v1427 = vadd.f32 %v786, %v1426
    %v1428 = vpop.f32.mrf.mxu0
    %v1429 = vadd.f32 %v790, %v1428
    %1430 = vmatprep.mubr.bf16.mxu0 %v696
    %1431 = vmatmul.mubr.bf16.gmra.mxu0 %v695
    %v1432 = vpop.f32.mrf.mxu0
    %v1433 = vadd.f32 %v786, %v1432
    %v1434 = vpop.f32.mrf.mxu0
    %v1435 = vadd.f32 %v790, %v1434
    %v1436 = vpop.f32.mrf.mxu0
    %v1437 = vadd.f32 %v786, %v1436
    %v1438 = vpop.f32.mrf.mxu0
    %v1439 = vadd.f32 %v790, %v1438
    %1440 = vmatprep.mubr.bf16.mxu0 %v698
    %1441 = vmatmul.mubr.bf16.gmra.mxu0 %v697
    %v1442 = vpop.f32.mrf.mxu0
    %v1443 = vadd.f32 %v786, %v1442
    %v1444 = vpop.f32.mrf.mxu0
    %v1445 = vadd.f32 %v790, %v1444
    %v1446 = vpop.f32.mrf.mxu0
    %v1447 = vadd.f32 %v786, %v1446
    %v1448 = vpop.f32.mrf.mxu0
    %v1449 = vadd.f32 %v790, %v1448
    %1450 = vmatprep.mubr.bf16.mxu0 %v700
    %1451 = vmatmul.mubr.bf16.gmra.mxu0 %v699
    %v1452 = vpop.f32.mrf.mxu0
    %v1453 = vadd.f32 %v786, %v1452
    %v1454 = vpop.f32.mrf.mxu0
    %v1455 = vadd.f32 %v790, %v1454
    %v1456 = vpop.f32.mrf.mxu0
    %v1457 = vadd.f32 %v786, %v1456
    %v1458 = vpop.f32.mrf.mxu0
    %v1459 = vadd.f32 %v790, %v1458
    %1460 = vmatprep.mubr.bf16.mxu0 %v702
    %1461 = vmatmul.mubr.bf16.gmra.mxu0 %v701
    %v1462 = vpop.f32.mrf.mxu0
    %v1463 = vadd.f32 %v786, %v1462
    %v1464 = vpop.f32.mrf.mxu0
    %v1465 = vadd.f32 %v790, %v1464
    %v1466 = vpop.f32.mrf.mxu0
    %v1467 = vadd.f32 %v786, %v1466
    %v1468 = vpop.f32.mrf.mxu0
    %v1469 = vadd.f32 %v790, %v1468
    %1470 = vmatprep.mubr.bf16.mxu0 %v704
    %1471 = vmatmul.mubr.bf16.gmra.mxu0 %v703
    %v1472 = vpop.f32.mrf.mxu0
    %v1473 = vadd.f32 %v786, %v1472
    %v1474 = vpop.f32.mrf.mxu0
    %v1475 = vadd.f32 %v790, %v1474
    %v1476 = vpop.f32.mrf.mxu0
    %v1477 = vadd.f32 %v786, %v1476
    %v1478 = vpop.f32.mrf.mxu0
    %v1479 = vadd.f32 %v790, %v1478
    %1480 = vmatprep.mubr.bf16.mxu0 %v706
    %1481 = vmatmul.mubr.bf16.gmra.mxu0 %v705
    %v1482 = vpop.f32.mrf.mxu0
    %v1483 = vadd.f32 %v786, %v1482
    %v1484 = vpop.f32.mrf.mxu0
    %v1485 = vadd.f32 %v790, %v1484
    %v1486 = vpop.f32.mrf.mxu0
    %v1487 = vadd.f32 %v786, %v1486
    %v1488 = vpop.f32.mrf.mxu0
    %v1489 = vadd.f32 %v790, %v1488
    %1490 = vmatprep.mubr.bf16.mxu0 %v708
    %1491 = vmatmul.mubr.bf16.gmra.mxu0 %v707
    %v1492 = vpop.f32.mrf.mxu0
    %v1493 = vadd.f32 %v786, %v1492
    %v1494 = vpop.f32.mrf.mxu0
    %v1495 = vadd.f32 %v790, %v1494
    %v1496 = vpop.f32.mrf.mxu0
    %v1497 = vadd.f32 %v786, %v1496
    %v1498 = vpop.f32.mrf.mxu0
    %v1499 = vadd.f32 %v790, %v1498
    %1500 = vdwg.mxu0
    %v1501 = vmul.f32 %v1150, 0.2
    %v1502 = vmul.f32 %v1152, 0.2
    %v1503 = vmul.f32 %v1343, 0.2
    %v1504 = vmul.f32 %v1345, 0.2
    %v1505 = vmul.f32 %v1154, 0.2
    %v1506 = vmul.f32 %v1156, 0.2
    %v1507 = vmul.f32 %v1347, 0.2
    %v1508 = vmul.f32 %v1349, 0.2
    %v1509 = vmul.f32 %v1160, 0.2
    %v1510 = vmul.f32 %v1162, 0.2
    %v1511 = vmul.f32 %v1353, 0.2
    %v1512 = vmul.f32 %v1355, 0.2
    %v1513 = vmul.f32 %v1164, 0.2
    %v1514 = vmul.f32 %v1166, 0.2
    %v1515 = vmul.f32 %v1357, 0.2
    %v1516 = vmul.f32 %v1359, 0.2
    %v1517 = vmul.f32 %v1170, 0.2
    %v1518 = vmul.f32 %v1172, 0.2
    %v1519 = vmul.f32 %v1363, 0.2
    %v1520 = vmul.f32 %v1365, 0.2
    %v1521 = vmul.f32 %v1174, 0.2
    %v1522 = vmul.f32 %v1176, 0.2
    %v1523 = vmul.f32 %v1367, 0.2
    %v1524 = vmul.f32 %v1369, 0.2
    %v1525 = vmul.f32 %v1180, 0.2
    %v1526 = vmul.f32 %v1182, 0.2
    %v1527 = vmul.f32 %v1373, 0.2
    %v1528 = vmul.f32 %v1375, 0.2
    %v1529 = vmul.f32 %v1184, 0.2
    %v1530 = vmul.f32 %v1186, 0.2
    %v1531 = vmul.f32 %v1377, 0.2
    %v1532 = vmul.f32 %v1379, 0.2
    %v1533 = vmul.f32 %v1190, 0.2
    %v1534 = vmul.f32 %v1192, 0.2
    %v1535 = vmul.f32 %v1383, 0.2
    %v1536 = vmul.f32 %v1385, 0.2
    %v1537 = vmul.f32 %v1194, 0.2
    %v1538 = vmul.f32 %v1196, 0.2
    %v1539 = vmul.f32 %v1387, 0.2
    %v1540 = vmul.f32 %v1389, 0.2
    %v1541 = vmul.f32 %v1200, 0.2
    %v1542 = vmul.f32 %v1202, 0.2
    %v1543 = vmul.f32 %v1393, 0.2
    %v1544 = vmul.f32 %v1395, 0.2
    %v1545 = vmul.f32 %v1204, 0.2
    %v1546 = vmul.f32 %v1206, 0.2
    %v1547 = vmul.f32 %v1397, 0.2
    %v1548 = vmul.f32 %v1399, 0.2
    %v1549 = vmul.f32 %v1210, 0.2
    %v1550 = vmul.f32 %v1212, 0.2
    %v1551 = vmul.f32 %v1403, 0.2
    %v1552 = vmul.f32 %v1405, 0.2
    %v1553 = vmul.f32 %v1214, 0.2
    %v1554 = vmul.f32 %v1216, 0.2
    %v1555 = vmul.f32 %v1407, 0.2
    %v1556 = vmul.f32 %v1409, 0.2
    %v1557 = vmul.f32 %v1220, 0.2
    %v1558 = vmul.f32 %v1222, 0.2
    %v1559 = vmul.f32 %v1413, 0.2
    %v1560 = vmul.f32 %v1415, 0.2
    %v1561 = vmul.f32 %v1224, 0.2
    %v1562 = vmul.f32 %v1226, 0.2
    %v1563 = vmul.f32 %v1417, 0.2
    %v1564 = vmul.f32 %v1419, 0.2
    %v1565 = vmul.f32 %v1230, 0.2
    %v1566 = vmul.f32 %v1232, 0.2
    %v1567 = vmul.f32 %v1423, 0.2
    %v1568 = vmul.f32 %v1425, 0.2
    %v1569 = vmul.f32 %v1234, 0.2
    %v1570 = vmul.f32 %v1236, 0.2
    %v1571 = vmul.f32 %v1427, 0.2
    %v1572 = vmul.f32 %v1429, 0.2
    %v1573 = vmul.f32 %v1240, 0.2
    %v1574 = vmul.f32 %v1242, 0.2
    %v1575 = vmul.f32 %v1433, 0.2
    %v1576 = vmul.f32 %v1435, 0.2
    %v1577 = vmul.f32 %v1244, 0.2
    %v1578 = vmul.f32 %v1246, 0.2
    %v1579 = vmul.f32 %v1437, 0.2
    %v1580 = vmul.f32 %v1439, 0.2
    %v1581 = vmul.f32 %v1250, 0.2
    %v1582 = vmul.f32 %v1252, 0.2
    %v1583 = vmul.f32 %v1443, 0.2
    %v1584 = vmul.f32 %v1445, 0.2
    %v1585 = vmul.f32 %v1254, 0.2
    %v1586 = vmul.f32 %v1256, 0.2
    %v1587 = vmul.f32 %v1447, 0.2
    %v1588 = vmul.f32 %v1449, 0.2
    %v1589 = vmul.f32 %v1260, 0.2
    %v1590 = vmul.f32 %v1262, 0.2
    %v1591 = vmul.f32 %v1453, 0.2
    %v1592 = vmul.f32 %v1455, 0.2
    %v1593 = vmul.f32 %v1264, 0.2
    %v1594 = vmul.f32 %v1266, 0.2
    %v1595 = vmul.f32 %v1457, 0.2
    %v1596 = vmul.f32 %v1459, 0.2
    %v1597 = vmul.f32 %v1270, 0.2
    %v1598 = vmul.f32 %v1272, 0.2
    %v1599 = vmul.f32 %v1463, 0.2
    %v1600 = vmul.f32 %v1465, 0.2
    %v1601 = vmul.f32 %v1274, 0.2
    %v1602 = vmul.f32 %v1276, 0.2
    %v1603 = vmul.f32 %v1467, 0.2
    %v1604 = vmul.f32 %v1469, 0.2
    %v1605 = vmul.f32 %v1280, 0.2
    %v1606 = vmul.f32 %v1282, 0.2
    %v1607 = vmul.f32 %v1473, 0.2
    %v1608 = vmul.f32 %v1475, 0.2
    %v1609 = vmul.f32 %v1284, 0.2
    %v1610 = vmul.f32 %v1286, 0.2
    %v1611 = vmul.f32 %v1477, 0.2
    %v1612 = vmul.f32 %v1479, 0.2
    %v1613 = vmul.f32 %v1290, 0.2
    %v1614 = vmul.f32 %v1292, 0.2
    %v1615 = vmul.f32 %v1483, 0.2
    %v1616 = vmul.f32 %v1485, 0.2
    %v1617 = vmul.f32 %v1294, 0.2
    %v1618 = vmul.f32 %v1296, 0.2
    %v1619 = vmul.f32 %v1487, 0.2
    %v1620 = vmul.f32 %v1489, 0.2
    %v1621 = vmul.f32 %v1300, 0.2
    %v1622 = vmul.f32 %v1302, 0.2
    %v1623 = vmul.f32 %v1493, 0.2
    %v1624 = vmul.f32 %v1495, 0.2
    %v1625 = vmul.f32 %v1304, 0.2
    %v1626 = vmul.f32 %v1306, 0.2
    %v1627 = vmul.f32 %v1497, 0.2
    %v1628 = vmul.f32 %v1499, 0.2
    %v1629 = vmax.f32 %v1150, %v1501
    %v1630 = vmax.f32 %v1152, %v1502
    %v1631 = vmax.f32 %v1343, %v1503
    %v1632 = vmax.f32 %v1345, %v1504
    %v1633 = vmax.f32 %v1154, %v1505
    %v1634 = vmax.f32 %v1156, %v1506
    %v1635 = vmax.f32 %v1347, %v1507
    %v1636 = vmax.f32 %v1349, %v1508
    %v1637 = vmax.f32 %v1160, %v1509
    %v1638 = vmax.f32 %v1162, %v1510
    %v1639 = vmax.f32 %v1353, %v1511
    %v1640 = vmax.f32 %v1355, %v1512
    %v1641 = vmax.f32 %v1164, %v1513
    %v1642 = vmax.f32 %v1166, %v1514
    %v1643 = vmax.f32 %v1357, %v1515
    %v1644 = vmax.f32 %v1359, %v1516
    %v1645 = vmax.f32 %v1170, %v1517
    %v1646 = vmax.f32 %v1172, %v1518
    %v1647 = vmax.f32 %v1363, %v1519
    %v1648 = vmax.f32 %v1365, %v1520
    %v1649 = vmax.f32 %v1174, %v1521
    %v1650 = vmax.f32 %v1176, %v1522
    %v1651 = vmax.f32 %v1367, %v1523
    %v1652 = vmax.f32 %v1369, %v1524
    %v1653 = vmax.f32 %v1180, %v1525
    %v1654 = vmax.f32 %v1182, %v1526
    %v1655 = vmax.f32 %v1373, %v1527
    %v1656 = vmax.f32 %v1375, %v1528
    %v1657 = vmax.f32 %v1184, %v1529
    %v1658 = vmax.f32 %v1186, %v1530
    %v1659 = vmax.f32 %v1377, %v1531
    %v1660 = vmax.f32 %v1379, %v1532
    %v1661 = vmax.f32 %v1190, %v1533
    %v1662 = vmax.f32 %v1192, %v1534
    %v1663 = vmax.f32 %v1383, %v1535
    %v1664 = vmax.f32 %v1385, %v1536
    %v1665 = vmax.f32 %v1194, %v1537
    %v1666 = vmax.f32 %v1196, %v1538
    %v1667 = vmax.f32 %v1387, %v1539
    %v1668 = vmax.f32 %v1389, %v1540
    %v1669 = vmax.f32 %v1200, %v1541
    %v1670 = vmax.f32 %v1202, %v1542
    %v1671 = vmax.f32 %v1393, %v1543
    %v1672 = vmax.f32 %v1395, %v1544
    %v1673 = vmax.f32 %v1204, %v1545
    %v1674 = vmax.f32 %v1206, %v1546
    %v1675 = vmax.f32 %v1397, %v1547
    %v1676 = vmax.f32 %v1399, %v1548
    %v1677 = vmax.f32 %v1210, %v1549
    %v1678 = vmax.f32 %v1212, %v1550
    %v1679 = vmax.f32 %v1403, %v1551
    %v1680 = vmax.f32 %v1405, %v1552
    %v1681 = vmax.f32 %v1214, %v1553
    %v1682 = vmax.f32 %v1216, %v1554
    %v1683 = vmax.f32 %v1407, %v1555
    %v1684 = vmax.f32 %v1409, %v1556
    %v1685 = vmax.f32 %v1220, %v1557
    %v1686 = vmax.f32 %v1222, %v1558
    %v1687 = vmax.f32 %v1413, %v1559
    %v1688 = vmax.f32 %v1415, %v1560
    %v1689 = vmax.f32 %v1224, %v1561
    %v1690 = vmax.f32 %v1226, %v1562
    %v1691 = vmax.f32 %v1417, %v1563
    %v1692 = vmax.f32 %v1419, %v1564
    %v1693 = vmax.f32 %v1230, %v1565
    %v1694 = vmax.f32 %v1232, %v1566
    %v1695 = vmax.f32 %v1423, %v1567
    %v1696 = vmax.f32 %v1425, %v1568
    %v1697 = vmax.f32 %v1234, %v1569
    %v1698 = vmax.f32 %v1236, %v1570
    %v1699 = vmax.f32 %v1427, %v1571
    %v1700 = vmax.f32 %v1429, %v1572
    %v1701 = vmax.f32 %v1240, %v1573
    %v1702 = vmax.f32 %v1242, %v1574
    %v1703 = vmax.f32 %v1433, %v1575
    %v1704 = vmax.f32 %v1435, %v1576
    %v1705 = vmax.f32 %v1244, %v1577
    %v1706 = vmax.f32 %v1246, %v1578
    %v1707 = vmax.f32 %v1437, %v1579
    %v1708 = vmax.f32 %v1439, %v1580
    %v1709 = vmax.f32 %v1250, %v1581
    %v1710 = vmax.f32 %v1252, %v1582
    %v1711 = vmax.f32 %v1443, %v1583
    %v1712 = vmax.f32 %v1445, %v1584
    %v1713 = vmax.f32 %v1254, %v1585
    %v1714 = vmax.f32 %v1256, %v1586
    %v1715 = vmax.f32 %v1447, %v1587
    %v1716 = vmax.f32 %v1449, %v1588
    %v1717 = vmax.f32 %v1260, %v1589
    %v1718 = vmax.f32 %v1262, %v1590
    %v1719 = vmax.f32 %v1453, %v1591
    %v1720 = vmax.f32 %v1455, %v1592
    %v1721 = vmax.f32 %v1264, %v1593
    %v1722 = vmax.f32 %v1266, %v1594
    %v1723 = vmax.f32 %v1457, %v1595
    %v1724 = vmax.f32 %v1459, %v1596
    %v1725 = vmax.f32 %v1270, %v1597
    %v1726 = vmax.f32 %v1272, %v1598
    %v1727 = vmax.f32 %v1463, %v1599
    %v1728 = vmax.f32 %v1465, %v1600
    %v1729 = vmax.f32 %v1274, %v1601
    %v1730 = vmax.f32 %v1276, %v1602
    %v1731 = vmax.f32 %v1467, %v1603
    %v1732 = vmax.f32 %v1469, %v1604
    %v1733 = vmax.f32 %v1280, %v1605
    %v1734 = vmax.f32 %v1282, %v1606
    %v1735 = vmax.f32 %v1473, %v1607
    %v1736 = vmax.f32 %v1475, %v1608
    %v1737 = vmax.f32 %v1284, %v1609
    %v1738 = vmax.f32 %v1286, %v1610
    %v1739 = vmax.f32 %v1477, %v1611
    %v1740 = vmax.f32 %v1479, %v1612
    %v1741 = vmax.f32 %v1290, %v1613
    %v1742 = vmax.f32 %v1292, %v1614
    %v1743 = vmax.f32 %v1483, %v1615
    %v1744 = vmax.f32 %v1485, %v1616
    %v1745 = vmax.f32 %v1294, %v1617
    %v1746 = vmax.f32 %v1296, %v1618
    %v1747 = vmax.f32 %v1487, %v1619
    %v1748 = vmax.f32 %v1489, %v1620
    %v1749 = vmax.f32 %v1300, %v1621
    %v1750 = vmax.f32 %v1302, %v1622
    %v1751 = vmax.f32 %v1493, %v1623
    %v1752 = vmax.f32 %v1495, %v1624
    %v1753 = vmax.f32 %v1304, %v1625
    %v1754 = vmax.f32 %v1306, %v1626
    %v1755 = vmax.f32 %v1497, %v1627
    %v1756 = vmax.f32 %v1499, %v1628
    %v1757 = vpack.c.bf16 %v1633, %v1629
    %v1758 = vpack.c.bf16 %v1634, %v1630
    %v1759 = vpack.c.bf16 %v1635, %v1631
    %v1760 = vpack.c.bf16 %v1636, %v1632
    %v1761 = vpack.c.bf16 %v1641, %v1637
    %v1762 = vpack.c.bf16 %v1642, %v1638
    %v1763 = vpack.c.bf16 %v1643, %v1639
    %v1764 = vpack.c.bf16 %v1644, %v1640
    %v1765 = vpack.c.bf16 %v1649, %v1645
    %v1766 = vpack.c.bf16 %v1650, %v1646
    %v1767 = vpack.c.bf16 %v1651, %v1647
    %v1768 = vpack.c.bf16 %v1652, %v1648
    %v1769 = vpack.c.bf16 %v1657, %v1653
    %v1770 = vpack.c.bf16 %v1658, %v1654
    %v1771 = vpack.c.bf16 %v1659, %v1655
    %v1772 = vpack.c.bf16 %v1660, %v1656
    %v1773 = vpack.c.bf16 %v1665, %v1661
    %v1774 = vpack.c.bf16 %v1666, %v1662
    %v1775 = vpack.c.bf16 %v1667, %v1663
    %v1776 = vpack.c.bf16 %v1668, %v1664
    %v1777 = vpack.c.bf16 %v1673, %v1669
    %v1778 = vpack.c.bf16 %v1674, %v1670
    %v1779 = vpack.c.bf16 %v1675, %v1671
    %v1780 = vpack.c.bf16 %v1676, %v1672
    %v1781 = vpack.c.bf16 %v1681, %v1677
    %v1782 = vpack.c.bf16 %v1682, %v1678
    %v1783 = vpack.c.bf16 %v1683, %v1679
    %v1784 = vpack.c.bf16 %v1684, %v1680
    %v1785 = vpack.c.bf16 %v1689, %v1685
    %v1786 = vpack.c.bf16 %v1690, %v1686
    %v1787 = vpack.c.bf16 %v1691, %v1687
    %v1788 = vpack.c.bf16 %v1692, %v1688
    %v1789 = vpack.c.bf16 %v1697, %v1693
    %v1790 = vpack.c.bf16 %v1698, %v1694
    %v1791 = vpack.c.bf16 %v1699, %v1695
    %v1792 = vpack.c.bf16 %v1700, %v1696
    %v1793 = vpack.c.bf16 %v1705, %v1701
    %v1794 = vpack.c.bf16 %v1706, %v1702
    %v1795 = vpack.c.bf16 %v1707, %v1703
    %v1796 = vpack.c.bf16 %v1708, %v1704
    %v1797 = vpack.c.bf16 %v1713, %v1709
    %v1798 = vpack.c.bf16 %v1714, %v1710
    %v1799 = vpack.c.bf16 %v1715, %v1711
    %v1800 = vpack.c.bf16 %v1716, %v1712
    %v1801 = vpack.c.bf16 %v1721, %v1717
    %v1802 = vpack.c.bf16 %v1722, %v1718
    %v1803 = vpack.c.bf16 %v1723, %v1719
    %v1804 = vpack.c.bf16 %v1724, %v1720
    %v1805 = vpack.c.bf16 %v1729, %v1725
    %v1806 = vpack.c.bf16 %v1730, %v1726
    %v1807 = vpack.c.bf16 %v1731, %v1727
    %v1808 = vpack.c.bf16 %v1732, %v1728
    %v1809 = vpack.c.bf16 %v1737, %v1733
    %v1810 = vpack.c.bf16 %v1738, %v1734
    %v1811 = vpack.c.bf16 %v1739, %v1735
    %v1812 = vpack.c.bf16 %v1740, %v1736
    %v1813 = vpack.c.bf16 %v1745, %v1741
    %v1814 = vpack.c.bf16 %v1746, %v1742
    %v1815 = vpack.c.bf16 %v1747, %v1743
    %v1816 = vpack.c.bf16 %v1748, %v1744
    %v1817 = vpack.c.bf16 %v1753, %v1749
    %v1818 = vpack.c.bf16 %v1754, %v1750
    %v1819 = vpack.c.bf16 %v1755, %v1751
    %v1820 = vpack.c.bf16 %v1756, %v1752
    %v1821 = vld [vmem:[#allocation10] sm:$0xff]
    %v1822 = vld [vmem:[#allocation10 + $0x8] sm:$0xff]
    %v1823 = vld [vmem:[#allocation10 + $0x10] sm:$0xff]
    %v1824 = vld [vmem:[#allocation10 + $0x18] sm:$0xff]
    %v1825 = vld [vmem:[#allocation10 + $0x20] sm:$0xff]
    %v1826 = vld [vmem:[#allocation10 + $0x28] sm:$0xff]
    %v1827 = vld [vmem:[#allocation10 + $0x30] sm:$0xff]
    %v1828 = vld [vmem:[#allocation10 + $0x38] sm:$0xff]
    %v1829 = vld [vmem:[#allocation10 + $0x40] sm:$0xff]
    %v1830 = vld [vmem:[#allocation10 + $0x48] sm:$0xff]
    %v1831 = vld [vmem:[#allocation10 + $0x50] sm:$0xff]
    %v1832 = vld [vmem:[#allocation10 + $0x58] sm:$0xff]
    %v1833 = vld [vmem:[#allocation10 + $0x60] sm:$0xff]
    %v1834 = vld [vmem:[#allocation10 + $0x68] sm:$0xff]
    %v1835 = vld [vmem:[#allocation10 + $0x70] sm:$0xff]
    %v1836 = vld [vmem:[#allocation10 + $0x78] sm:$0xff]
    %v1837 = vld [vmem:[#allocation10 + $0x80] sm:$0xff]
    %v1838 = vld [vmem:[#allocation10 + $0x88] sm:$0xff]
    %v1839 = vld [vmem:[#allocation10 + $0x90] sm:$0xff]
    %v1840 = vld [vmem:[#allocation10 + $0x98] sm:$0xff]
    %v1841 = vld [vmem:[#allocation10 + $0xa0] sm:$0xff]
    %v1842 = vld [vmem:[#allocation10 + $0xa8] sm:$0xff]
    %v1843 = vld [vmem:[#allocation10 + $0xb0] sm:$0xff]
    %v1844 = vld [vmem:[#allocation10 + $0xb8] sm:$0xff]
    %v1845 = vld [vmem:[#allocation10 + $0xc0] sm:$0xff]
    %v1846 = vld [vmem:[#allocation10 + $0xc8] sm:$0xff]
    %v1847 = vld [vmem:[#allocation10 + $0xd0] sm:$0xff]
    %v1848 = vld [vmem:[#allocation10 + $0xd8] sm:$0xff]
    %v1849 = vld [vmem:[#allocation10 + $0xe0] sm:$0xff]
    %v1850 = vld [vmem:[#allocation10 + $0xe8] sm:$0xff]
    %v1851 = vld [vmem:[#allocation10 + $0xf0] sm:$0xff]
    %v1852 = vld [vmem:[#allocation10 + $0xf8] sm:$0xff]
    %v1853 = vld [vmem:[#allocation10 + $0x100] sm:$0xff]
    %v1854 = vld [vmem:[#allocation10 + $0x108] sm:$0xff]
    %v1855 = vld [vmem:[#allocation10 + $0x110] sm:$0xff]
    %v1856 = vld [vmem:[#allocation10 + $0x118] sm:$0xff]
    %v1857 = vld [vmem:[#allocation10 + $0x120] sm:$0xff]
    %v1858 = vld [vmem:[#allocation10 + $0x128] sm:$0xff]
    %v1859 = vld [vmem:[#allocation10 + $0x130] sm:$0xff]
    %v1860 = vld [vmem:[#allocation10 + $0x138] sm:$0xff]
    %v1861 = vld [vmem:[#allocation10 + $0x140] sm:$0xff]
    %v1862 = vld [vmem:[#allocation10 + $0x148] sm:$0xff]
    %v1863 = vld [vmem:[#allocation10 + $0x150] sm:$0xff]
    %v1864 = vld [vmem:[#allocation10 + $0x158] sm:$0xff]
    %v1865 = vld [vmem:[#allocation10 + $0x160] sm:$0xff]
    %v1866 = vld [vmem:[#allocation10 + $0x168] sm:$0xff]
    %v1867 = vld [vmem:[#allocation10 + $0x170] sm:$0xff]
    %v1868 = vld [vmem:[#allocation10 + $0x178] sm:$0xff]
    %v1869 = vld [vmem:[#allocation10 + $0x180] sm:$0xff]
    %v1870 = vld [vmem:[#allocation10 + $0x188] sm:$0xff]
    %v1871 = vld [vmem:[#allocation10 + $0x190] sm:$0xff]
    %v1872 = vld [vmem:[#allocation10 + $0x198] sm:$0xff]
    %v1873 = vld [vmem:[#allocation10 + $0x1a0] sm:$0xff]
    %v1874 = vld [vmem:[#allocation10 + $0x1a8] sm:$0xff]
    %v1875 = vld [vmem:[#allocation10 + $0x1b0] sm:$0xff]
    %v1876 = vld [vmem:[#allocation10 + $0x1b8] sm:$0xff]
    %v1877 = vld [vmem:[#allocation10 + $0x1c0] sm:$0xff]
    %v1878 = vld [vmem:[#allocation10 + $0x1c8] sm:$0xff]
    %v1879 = vld [vmem:[#allocation10 + $0x1d0] sm:$0xff]
    %v1880 = vld [vmem:[#allocation10 + $0x1d8] sm:$0xff]
    %v1881 = vld [vmem:[#allocation10 + $0x1e0] sm:$0xff]
    %v1882 = vld [vmem:[#allocation10 + $0x1e8] sm:$0xff]
    %v1883 = vld [vmem:[#allocation10 + $0x1f0] sm:$0xff]
    %v1884 = vld [vmem:[#allocation10 + $0x1f8] sm:$0xff]
    %v1885 = vld [vmem:[#allocation10 + $0x200] sm:$0xff]
    %v1886 = vld [vmem:[#allocation10 + $0x208] sm:$0xff]
    %v1887 = vld [vmem:[#allocation10 + $0x210] sm:$0xff]
    %v1888 = vld [vmem:[#allocation10 + $0x218] sm:$0xff]
    %v1889 = vld [vmem:[#allocation10 + $0x220] sm:$0xff]
    %v1890 = vld [vmem:[#allocation10 + $0x228] sm:$0xff]
    %v1891 = vld [vmem:[#allocation10 + $0x230] sm:$0xff]
    %v1892 = vld [vmem:[#allocation10 + $0x238] sm:$0xff]
    %v1893 = vld [vmem:[#allocation10 + $0x240] sm:$0xff]
    %v1894 = vld [vmem:[#allocation10 + $0x248] sm:$0xff]
    %v1895 = vld [vmem:[#allocation10 + $0x250] sm:$0xff]
    %v1896 = vld [vmem:[#allocation10 + $0x258] sm:$0xff]
    %v1897 = vld [vmem:[#allocation10 + $0x260] sm:$0xff]
    %v1898 = vld [vmem:[#allocation10 + $0x268] sm:$0xff]
    %v1899 = vld [vmem:[#allocation10 + $0x270] sm:$0xff]
    %v1900 = vld [vmem:[#allocation10 + $0x278] sm:$0xff]
    %v1901 = vld [vmem:[#allocation10 + $0x280] sm:$0xff]
    %v1902 = vld [vmem:[#allocation10 + $0x288] sm:$0xff]
    %v1903 = vld [vmem:[#allocation10 + $0x290] sm:$0xff]
    %v1904 = vld [vmem:[#allocation10 + $0x298] sm:$0xff]
    %v1905 = vld [vmem:[#allocation10 + $0x2a0] sm:$0xff]
    %v1906 = vld [vmem:[#allocation10 + $0x2a8] sm:$0xff]
    %v1907 = vld [vmem:[#allocation10 + $0x2b0] sm:$0xff]
    %v1908 = vld [vmem:[#allocation10 + $0x2b8] sm:$0xff]
    %v1909 = vld [vmem:[#allocation10 + $0x2c0] sm:$0xff]
    %v1910 = vld [vmem:[#allocation10 + $0x2c8] sm:$0xff]
    %v1911 = vld [vmem:[#allocation10 + $0x2d0] sm:$0xff]
    %v1912 = vld [vmem:[#allocation10 + $0x2d8] sm:$0xff]
    %v1913 = vld [vmem:[#allocation10 + $0x2e0] sm:$0xff]
    %v1914 = vld [vmem:[#allocation10 + $0x2e8] sm:$0xff]
    %v1915 = vld [vmem:[#allocation10 + $0x2f0] sm:$0xff]
    %v1916 = vld [vmem:[#allocation10 + $0x2f8] sm:$0xff]
    %v1917 = vld [vmem:[#allocation10 + $0x300] sm:$0xff]
    %v1918 = vld [vmem:[#allocation10 + $0x308] sm:$0xff]
    %v1919 = vld [vmem:[#allocation10 + $0x310] sm:$0xff]
    %v1920 = vld [vmem:[#allocation10 + $0x318] sm:$0xff]
    %v1921 = vld [vmem:[#allocation10 + $0x320] sm:$0xff]
    %v1922 = vld [vmem:[#allocation10 + $0x328] sm:$0xff]
    %v1923 = vld [vmem:[#allocation10 + $0x330] sm:$0xff]
    %v1924 = vld [vmem:[#allocation10 + $0x338] sm:$0xff]
    %v1925 = vld [vmem:[#allocation10 + $0x340] sm:$0xff]
    %v1926 = vld [vmem:[#allocation10 + $0x348] sm:$0xff]
    %v1927 = vld [vmem:[#allocation10 + $0x350] sm:$0xff]
    %v1928 = vld [vmem:[#allocation10 + $0x358] sm:$0xff]
    %v1929 = vld [vmem:[#allocation10 + $0x360] sm:$0xff]
    %v1930 = vld [vmem:[#allocation10 + $0x368] sm:$0xff]
    %v1931 = vld [vmem:[#allocation10 + $0x370] sm:$0xff]
    %v1932 = vld [vmem:[#allocation10 + $0x378] sm:$0xff]
    %v1933 = vld [vmem:[#allocation10 + $0x380] sm:$0xff]
    %v1934 = vld [vmem:[#allocation10 + $0x388] sm:$0xff]
    %v1935 = vld [vmem:[#allocation10 + $0x390] sm:$0xff]
    %v1936 = vld [vmem:[#allocation10 + $0x398] sm:$0xff]
    %v1937 = vld [vmem:[#allocation10 + $0x3a0] sm:$0xff]
    %v1938 = vld [vmem:[#allocation10 + $0x3a8] sm:$0xff]
    %v1939 = vld [vmem:[#allocation10 + $0x3b0] sm:$0xff]
    %v1940 = vld [vmem:[#allocation10 + $0x3b8] sm:$0xff]
    %v1941 = vld [vmem:[#allocation10 + $0x3c0] sm:$0xff]
    %v1942 = vld [vmem:[#allocation10 + $0x3c8] sm:$0xff]
    %v1943 = vld [vmem:[#allocation10 + $0x3d0] sm:$0xff]
    %v1944 = vld [vmem:[#allocation10 + $0x3d8] sm:$0xff]
    %v1945 = vld [vmem:[#allocation10 + $0x3e0] sm:$0xff]
    %v1946 = vld [vmem:[#allocation10 + $0x3e8] sm:$0xff]
    %v1947 = vld [vmem:[#allocation10 + $0x3f0] sm:$0xff]
    %v1948 = vld [vmem:[#allocation10 + $0x3f8] sm:$0xff]
    %v1949 = vld [vmem:[#allocation10 + $0x400] sm:$0xff]
    %v1950 = vld [vmem:[#allocation10 + $0x408] sm:$0xff]
    %v1951 = vld [vmem:[#allocation10 + $0x410] sm:$0xff]
    %v1952 = vld [vmem:[#allocation10 + $0x418] sm:$0xff]
    %v1953 = vld [vmem:[#allocation10 + $0x420] sm:$0xff]
    %v1954 = vld [vmem:[#allocation10 + $0x428] sm:$0xff]
    %v1955 = vld [vmem:[#allocation10 + $0x430] sm:$0xff]
    %v1956 = vld [vmem:[#allocation10 + $0x438] sm:$0xff]
    %v1957 = vld [vmem:[#allocation10 + $0x440] sm:$0xff]
    %v1958 = vld [vmem:[#allocation10 + $0x448] sm:$0xff]
    %v1959 = vld [vmem:[#allocation10 + $0x450] sm:$0xff]
    %v1960 = vld [vmem:[#allocation10 + $0x458] sm:$0xff]
    %v1961 = vld [vmem:[#allocation10 + $0x460] sm:$0xff]
    %v1962 = vld [vmem:[#allocation10 + $0x468] sm:$0xff]
    %v1963 = vld [vmem:[#allocation10 + $0x470] sm:$0xff]
    %v1964 = vld [vmem:[#allocation10 + $0x478] sm:$0xff]
    %v1965 = vld [vmem:[#allocation10 + $0x480] sm:$0xff]
    %v1966 = vld [vmem:[#allocation10 + $0x488] sm:$0xff]
    %v1967 = vld [vmem:[#allocation10 + $0x490] sm:$0xff]
    %v1968 = vld [vmem:[#allocation10 + $0x498] sm:$0xff]
    %v1969 = vld [vmem:[#allocation10 + $0x4a0] sm:$0xff]
    %v1970 = vld [vmem:[#allocation10 + $0x4a8] sm:$0xff]
    %v1971 = vld [vmem:[#allocation10 + $0x4b0] sm:$0xff]
    %v1972 = vld [vmem:[#allocation10 + $0x4b8] sm:$0xff]
    %v1973 = vld [vmem:[#allocation10 + $0x4c0] sm:$0xff]
    %v1974 = vld [vmem:[#allocation10 + $0x4c8] sm:$0xff]
    %v1975 = vld [vmem:[#allocation10 + $0x4d0] sm:$0xff]
    %v1976 = vld [vmem:[#allocation10 + $0x4d8] sm:$0xff]
    %v1977 = vld [vmem:[#allocation10 + $0x4e0] sm:$0xff]
    %v1978 = vld [vmem:[#allocation10 + $0x4e8] sm:$0xff]
    %v1979 = vld [vmem:[#allocation10 + $0x4f0] sm:$0xff]
    %v1980 = vld [vmem:[#allocation10 + $0x4f8] sm:$0xff]
    %v1981 = vld [vmem:[#allocation10 + $0x500] sm:$0xff]
    %v1982 = vld [vmem:[#allocation10 + $0x508] sm:$0xff]
    %v1983 = vld [vmem:[#allocation10 + $0x510] sm:$0xff]
    %v1984 = vld [vmem:[#allocation10 + $0x518] sm:$0xff]
    %v1985 = vld [vmem:[#allocation10 + $0x520] sm:$0xff]
    %v1986 = vld [vmem:[#allocation10 + $0x528] sm:$0xff]
    %v1987 = vld [vmem:[#allocation10 + $0x530] sm:$0xff]
    %v1988 = vld [vmem:[#allocation10 + $0x538] sm:$0xff]
    %v1989 = vld [vmem:[#allocation10 + $0x540] sm:$0xff]
    %v1990 = vld [vmem:[#allocation10 + $0x548] sm:$0xff]
    %v1991 = vld [vmem:[#allocation10 + $0x550] sm:$0xff]
    %v1992 = vld [vmem:[#allocation10 + $0x558] sm:$0xff]
    %v1993 = vld [vmem:[#allocation10 + $0x560] sm:$0xff]
    %v1994 = vld [vmem:[#allocation10 + $0x568] sm:$0xff]
    %v1995 = vld [vmem:[#allocation10 + $0x570] sm:$0xff]
    %v1996 = vld [vmem:[#allocation10 + $0x578] sm:$0xff]
    %v1997 = vld [vmem:[#allocation10 + $0x580] sm:$0xff]
    %v1998 = vld [vmem:[#allocation10 + $0x588] sm:$0xff]
    %v1999 = vld [vmem:[#allocation10 + $0x590] sm:$0xff]
    %v2000 = vld [vmem:[#allocation10 + $0x598] sm:$0xff]
    %v2001 = vld [vmem:[#allocation10 + $0x5a0] sm:$0xff]
    %v2002 = vld [vmem:[#allocation10 + $0x5a8] sm:$0xff]
    %v2003 = vld [vmem:[#allocation10 + $0x5b0] sm:$0xff]
    %v2004 = vld [vmem:[#allocation10 + $0x5b8] sm:$0xff]
    %v2005 = vld [vmem:[#allocation10 + $0x5c0] sm:$0xff]
    %v2006 = vld [vmem:[#allocation10 + $0x5c8] sm:$0xff]
    %v2007 = vld [vmem:[#allocation10 + $0x5d0] sm:$0xff]
    %v2008 = vld [vmem:[#allocation10 + $0x5d8] sm:$0xff]
    %v2009 = vld [vmem:[#allocation10 + $0x5e0] sm:$0xff]
    %v2010 = vld [vmem:[#allocation10 + $0x5e8] sm:$0xff]
    %v2011 = vld [vmem:[#allocation10 + $0x5f0] sm:$0xff]
    %v2012 = vld [vmem:[#allocation10 + $0x5f8] sm:$0xff]
    %v2013 = vld [vmem:[#allocation10 + $0x600] sm:$0xff]
    %v2014 = vld [vmem:[#allocation10 + $0x608] sm:$0xff]
    %v2015 = vld [vmem:[#allocation10 + $0x610] sm:$0xff]
    %v2016 = vld [vmem:[#allocation10 + $0x618] sm:$0xff]
    %v2017 = vld [vmem:[#allocation10 + $0x620] sm:$0xff]
    %v2018 = vld [vmem:[#allocation10 + $0x628] sm:$0xff]
    %v2019 = vld [vmem:[#allocation10 + $0x630] sm:$0xff]
    %v2020 = vld [vmem:[#allocation10 + $0x638] sm:$0xff]
    %v2021 = vld [vmem:[#allocation10 + $0x640] sm:$0xff]
    %v2022 = vld [vmem:[#allocation10 + $0x648] sm:$0xff]
    %v2023 = vld [vmem:[#allocation10 + $0x650] sm:$0xff]
    %v2024 = vld [vmem:[#allocation10 + $0x658] sm:$0xff]
    %v2025 = vld [vmem:[#allocation10 + $0x660] sm:$0xff]
    %v2026 = vld [vmem:[#allocation10 + $0x668] sm:$0xff]
    %v2027 = vld [vmem:[#allocation10 + $0x670] sm:$0xff]
    %v2028 = vld [vmem:[#allocation10 + $0x678] sm:$0xff]
    %v2029 = vld [vmem:[#allocation10 + $0x680] sm:$0xff]
    %v2030 = vld [vmem:[#allocation10 + $0x688] sm:$0xff]
    %v2031 = vld [vmem:[#allocation10 + $0x690] sm:$0xff]
    %v2032 = vld [vmem:[#allocation10 + $0x698] sm:$0xff]
    %v2033 = vld [vmem:[#allocation10 + $0x6a0] sm:$0xff]
    %v2034 = vld [vmem:[#allocation10 + $0x6a8] sm:$0xff]
    %v2035 = vld [vmem:[#allocation10 + $0x6b0] sm:$0xff]
    %v2036 = vld [vmem:[#allocation10 + $0x6b8] sm:$0xff]
    %v2037 = vld [vmem:[#allocation10 + $0x6c0] sm:$0xff]
    %v2038 = vld [vmem:[#allocation10 + $0x6c8] sm:$0xff]
    %v2039 = vld [vmem:[#allocation10 + $0x6d0] sm:$0xff]
    %v2040 = vld [vmem:[#allocation10 + $0x6d8] sm:$0xff]
    %v2041 = vld [vmem:[#allocation10 + $0x6e0] sm:$0xff]
    %v2042 = vld [vmem:[#allocation10 + $0x6e8] sm:$0xff]
    %v2043 = vld [vmem:[#allocation10 + $0x6f0] sm:$0xff]
    %v2044 = vld [vmem:[#allocation10 + $0x6f8] sm:$0xff]
    %v2045 = vld [vmem:[#allocation10 + $0x700] sm:$0xff]
    %v2046 = vld [vmem:[#allocation10 + $0x708] sm:$0xff]
    %v2047 = vld [vmem:[#allocation10 + $0x710] sm:$0xff]
    %v2048 = vld [vmem:[#allocation10 + $0x718] sm:$0xff]
    %v2049 = vld [vmem:[#allocation10 + $0x720] sm:$0xff]
    %v2050 = vld [vmem:[#allocation10 + $0x728] sm:$0xff]
    %v2051 = vld [vmem:[#allocation10 + $0x730] sm:$0xff]
    %v2052 = vld [vmem:[#allocation10 + $0x738] sm:$0xff]
    %v2053 = vld [vmem:[#allocation10 + $0x740] sm:$0xff]
    %v2054 = vld [vmem:[#allocation10 + $0x748] sm:$0xff]
    %v2055 = vld [vmem:[#allocation10 + $0x750] sm:$0xff]
    %v2056 = vld [vmem:[#allocation10 + $0x758] sm:$0xff]
    %v2057 = vld [vmem:[#allocation10 + $0x760] sm:$0xff]
    %v2058 = vld [vmem:[#allocation10 + $0x768] sm:$0xff]
    %v2059 = vld [vmem:[#allocation10 + $0x770] sm:$0xff]
    %v2060 = vld [vmem:[#allocation10 + $0x778] sm:$0xff]
    %v2061 = vld [vmem:[#allocation10 + $0x780] sm:$0xff]
    %v2062 = vld [vmem:[#allocation10 + $0x788] sm:$0xff]
    %v2063 = vld [vmem:[#allocation10 + $0x790] sm:$0xff]
    %v2064 = vld [vmem:[#allocation10 + $0x798] sm:$0xff]
    %v2065 = vld [vmem:[#allocation10 + $0x7a0] sm:$0xff]
    %v2066 = vld [vmem:[#allocation10 + $0x7a8] sm:$0xff]
    %v2067 = vld [vmem:[#allocation10 + $0x7b0] sm:$0xff]
    %v2068 = vld [vmem:[#allocation10 + $0x7b8] sm:$0xff]
    %v2069 = vld [vmem:[#allocation10 + $0x7c0] sm:$0xff]
    %v2070 = vld [vmem:[#allocation10 + $0x7c8] sm:$0xff]
    %v2071 = vld [vmem:[#allocation10 + $0x7d0] sm:$0xff]
    %v2072 = vld [vmem:[#allocation10 + $0x7d8] sm:$0xff]
    %v2073 = vld [vmem:[#allocation10 + $0x7e0] sm:$0xff]
    %v2074 = vld [vmem:[#allocation10 + $0x7e8] sm:$0xff]
    %v2075 = vld [vmem:[#allocation10 + $0x7f0] sm:$0xff]
    %v2076 = vld [vmem:[#allocation10 + $0x7f8] sm:$0xff]
    %v2077 = vld [vmem:[#allocation11] sm:$0xff]
    %v2079 = vlaneseq
    %v2080 = vshrl.u32 %v2079, 7
    %v2081 = vsub.s32 0, %v2080
    %v2082 = vrot.slane %v2077, %v2081
    %v2083 = vlaneseq
    %v2084 = vshrl.u32 %v2083, 7
    %v2085 = vsub.s32 1, %v2084
    %v2086 = vrot.slane %v2077, %v2085
    %v2087 = vlaneseq
    %v2088 = vshrl.u32 %v2087, 7
    %v2089 = vsub.s32 2, %v2088
    %v2090 = vrot.slane %v2077, %v2089
    %v2091 = vlaneseq
    %v2092 = vshrl.u32 %v2091, 7
    %v2093 = vsub.s32 3, %v2092
    %v2094 = vrot.slane %v2077, %v2093
    %v2095 = vlaneseq
    %v2096 = vshrl.u32 %v2095, 7
    %v2097 = vsub.s32 4, %v2096
    %v2098 = vrot.slane %v2077, %v2097
    %v2099 = vlaneseq
    %v2100 = vshrl.u32 %v2099, 7
    %v2101 = vsub.s32 5, %v2100
    %v2102 = vrot.slane %v2077, %v2101
    %v2103 = vlaneseq
    %v2104 = vshrl.u32 %v2103, 7
    %v2105 = vsub.s32 6, %v2104
    %v2106 = vrot.slane %v2077, %v2105
    %v2107 = vlaneseq
    %v2108 = vshrl.u32 %v2107, 7
    %v2109 = vsub.s32 7, %v2108
    %v2110 = vrot.slane %v2077, %v2109
    %v2375 = vunpack.c.l.b16 %v1821
    %v2376 = vunpack.c.h.b16 %v1821
    %v2377 = vunpack.c.l.b16 %v1822
    %v2378 = vunpack.c.h.b16 %v1822
    %v2379 = vunpack.c.l.b16 %v1823
    %v2380 = vunpack.c.h.b16 %v1823
    %v2381 = vunpack.c.l.b16 %v1824
    %v2382 = vunpack.c.h.b16 %v1824
    %v2383 = vunpack.c.l.b16 %v1825
    %v2384 = vunpack.c.h.b16 %v1825
    %v2385 = vunpack.c.l.b16 %v1826
    %v2386 = vunpack.c.h.b16 %v1826
    %v2387 = vunpack.c.l.b16 %v1827
    %v2388 = vunpack.c.h.b16 %v1827
    %v2389 = vunpack.c.l.b16 %v1828
    %v2390 = vunpack.c.h.b16 %v1828
    %v2391 = vunpack.c.l.b16 %v1829
    %v2392 = vunpack.c.h.b16 %v1829
    %v2393 = vunpack.c.l.b16 %v1830
    %v2394 = vunpack.c.h.b16 %v1830
    %v2395 = vunpack.c.l.b16 %v1831
    %v2396 = vunpack.c.h.b16 %v1831
    %v2397 = vunpack.c.l.b16 %v1832
    %v2398 = vunpack.c.h.b16 %v1832
    %v2399 = vunpack.c.l.b16 %v1833
    %v2400 = vunpack.c.h.b16 %v1833
    %v2401 = vunpack.c.l.b16 %v1834
    %v2402 = vunpack.c.h.b16 %v1834
    %v2403 = vunpack.c.l.b16 %v1835
    %v2404 = vunpack.c.h.b16 %v1835
    %v2405 = vunpack.c.l.b16 %v1836
    %v2406 = vunpack.c.h.b16 %v1836
    %v2407 = vunpack.c.l.b16 %v1837
    %v2408 = vunpack.c.h.b16 %v1837
    %v2409 = vunpack.c.l.b16 %v1838
    %v2410 = vunpack.c.h.b16 %v1838
    %v2411 = vunpack.c.l.b16 %v1839
    %v2412 = vunpack.c.h.b16 %v1839
    %v2413 = vunpack.c.l.b16 %v1840
    %v2414 = vunpack.c.h.b16 %v1840
    %v2415 = vunpack.c.l.b16 %v1841
    %v2416 = vunpack.c.h.b16 %v1841
    %v2417 = vunpack.c.l.b16 %v1842
    %v2418 = vunpack.c.h.b16 %v1842
    %v2419 = vunpack.c.l.b16 %v1843
    %v2420 = vunpack.c.h.b16 %v1843
    %v2421 = vunpack.c.l.b16 %v1844
    %v2422 = vunpack.c.h.b16 %v1844
    %v2423 = vunpack.c.l.b16 %v1845
    %v2424 = vunpack.c.h.b16 %v1845
    %v2425 = vunpack.c.l.b16 %v1846
    %v2426 = vunpack.c.h.b16 %v1846
    %v2427 = vunpack.c.l.b16 %v1847
    %v2428 = vunpack.c.h.b16 %v1847
    %v2429 = vunpack.c.l.b16 %v1848
    %v2430 = vunpack.c.h.b16 %v1848
    %v2431 = vunpack.c.l.b16 %v1849
    %v2432 = vunpack.c.h.b16 %v1849
    %v2433 = vunpack.c.l.b16 %v1850
    %v2434 = vunpack.c.h.b16 %v1850
    %v2435 = vunpack.c.l.b16 %v1851
    %v2436 = vunpack.c.h.b16 %v1851
    %v2437 = vunpack.c.l.b16 %v1852
    %v2438 = vunpack.c.h.b16 %v1852
    %v2439 = vunpack.c.l.b16 %v1853
    %v2440 = vunpack.c.h.b16 %v1853
    %v2441 = vunpack.c.l.b16 %v1854
    %v2442 = vunpack.c.h.b16 %v1854
    %v2443 = vunpack.c.l.b16 %v1855
    %v2444 = vunpack.c.h.b16 %v1855
    %v2445 = vunpack.c.l.b16 %v1856
    %v2446 = vunpack.c.h.b16 %v1856
    %v2447 = vunpack.c.l.b16 %v1857
    %v2448 = vunpack.c.h.b16 %v1857
    %v2449 = vunpack.c.l.b16 %v1858
    %v2450 = vunpack.c.h.b16 %v1858
    %v2451 = vunpack.c.l.b16 %v1859
    %v2452 = vunpack.c.h.b16 %v1859
    %v2453 = vunpack.c.l.b16 %v1860
    %v2454 = vunpack.c.h.b16 %v1860
    %v2455 = vunpack.c.l.b16 %v1861
    %v2456 = vunpack.c.h.b16 %v1861
    %v2457 = vunpack.c.l.b16 %v1862
    %v2458 = vunpack.c.h.b16 %v1862
    %v2459 = vunpack.c.l.b16 %v1863
    %v2460 = vunpack.c.h.b16 %v1863
    %v2461 = vunpack.c.l.b16 %v1864
    %v2462 = vunpack.c.h.b16 %v1864
    %v2463 = vunpack.c.l.b16 %v1865
    %v2464 = vunpack.c.h.b16 %v1865
    %v2465 = vunpack.c.l.b16 %v1866
    %v2466 = vunpack.c.h.b16 %v1866
    %v2467 = vunpack.c.l.b16 %v1867
    %v2468 = vunpack.c.h.b16 %v1867
    %v2469 = vunpack.c.l.b16 %v1868
    %v2470 = vunpack.c.h.b16 %v1868
    %v2471 = vunpack.c.l.b16 %v1869
    %v2472 = vunpack.c.h.b16 %v1869
    %v2473 = vunpack.c.l.b16 %v1870
    %v2474 = vunpack.c.h.b16 %v1870
    %v2475 = vunpack.c.l.b16 %v1871
    %v2476 = vunpack.c.h.b16 %v1871
    %v2477 = vunpack.c.l.b16 %v1872
    %v2478 = vunpack.c.h.b16 %v1872
    %v2479 = vunpack.c.l.b16 %v1873
    %v2480 = vunpack.c.h.b16 %v1873
    %v2481 = vunpack.c.l.b16 %v1874
    %v2482 = vunpack.c.h.b16 %v1874
    %v2483 = vunpack.c.l.b16 %v1875
    %v2484 = vunpack.c.h.b16 %v1875
    %v2485 = vunpack.c.l.b16 %v1876
    %v2486 = vunpack.c.h.b16 %v1876
    %v2487 = vunpack.c.l.b16 %v1877
    %v2488 = vunpack.c.h.b16 %v1877
    %v2489 = vunpack.c.l.b16 %v1878
    %v2490 = vunpack.c.h.b16 %v1878
    %v2491 = vunpack.c.l.b16 %v1879
    %v2492 = vunpack.c.h.b16 %v1879
    %v2493 = vunpack.c.l.b16 %v1880
    %v2494 = vunpack.c.h.b16 %v1880
    %v2495 = vunpack.c.l.b16 %v1881
    %v2496 = vunpack.c.h.b16 %v1881
    %v2497 = vunpack.c.l.b16 %v1882
    %v2498 = vunpack.c.h.b16 %v1882
    %v2499 = vunpack.c.l.b16 %v1883
    %v2500 = vunpack.c.h.b16 %v1883
    %v2501 = vunpack.c.l.b16 %v1884
    %v2502 = vunpack.c.h.b16 %v1884
    %v2503 = vunpack.c.l.b16 %v1885
    %v2504 = vunpack.c.h.b16 %v1885
    %v2505 = vunpack.c.l.b16 %v1886
    %v2506 = vunpack.c.h.b16 %v1886
    %v2507 = vunpack.c.l.b16 %v1887
    %v2508 = vunpack.c.h.b16 %v1887
    %v2509 = vunpack.c.l.b16 %v1888
    %v2510 = vunpack.c.h.b16 %v1888
    %v2511 = vunpack.c.l.b16 %v1889
    %v2512 = vunpack.c.h.b16 %v1889
    %v2513 = vunpack.c.l.b16 %v1890
    %v2514 = vunpack.c.h.b16 %v1890
    %v2515 = vunpack.c.l.b16 %v1891
    %v2516 = vunpack.c.h.b16 %v1891
    %v2517 = vunpack.c.l.b16 %v1892
    %v2518 = vunpack.c.h.b16 %v1892
    %v2519 = vunpack.c.l.b16 %v1893
    %v2520 = vunpack.c.h.b16 %v1893
    %v2521 = vunpack.c.l.b16 %v1894
    %v2522 = vunpack.c.h.b16 %v1894
    %v2523 = vunpack.c.l.b16 %v1895
    %v2524 = vunpack.c.h.b16 %v1895
    %v2525 = vunpack.c.l.b16 %v1896
    %v2526 = vunpack.c.h.b16 %v1896
    %v2527 = vunpack.c.l.b16 %v1897
    %v2528 = vunpack.c.h.b16 %v1897
    %v2529 = vunpack.c.l.b16 %v1898
    %v2530 = vunpack.c.h.b16 %v1898
    %v2531 = vunpack.c.l.b16 %v1899
    %v2532 = vunpack.c.h.b16 %v1899
    %v2533 = vunpack.c.l.b16 %v1900
    %v2534 = vunpack.c.h.b16 %v1900
    %v2535 = vunpack.c.l.b16 %v1901
    %v2536 = vunpack.c.h.b16 %v1901
    %v2537 = vunpack.c.l.b16 %v1902
    %v2538 = vunpack.c.h.b16 %v1902
    %v2539 = vunpack.c.l.b16 %v1903
    %v2540 = vunpack.c.h.b16 %v1903
    %v2541 = vunpack.c.l.b16 %v1904
    %v2542 = vunpack.c.h.b16 %v1904
    %v2543 = vunpack.c.l.b16 %v1905
    %v2544 = vunpack.c.h.b16 %v1905
    %v2545 = vunpack.c.l.b16 %v1906
    %v2546 = vunpack.c.h.b16 %v1906
    %v2547 = vunpack.c.l.b16 %v1907
    %v2548 = vunpack.c.h.b16 %v1907
    %v2549 = vunpack.c.l.b16 %v1908
    %v2550 = vunpack.c.h.b16 %v1908
    %v2551 = vunpack.c.l.b16 %v1909
    %v2552 = vunpack.c.h.b16 %v1909
    %v2553 = vunpack.c.l.b16 %v1910
    %v2554 = vunpack.c.h.b16 %v1910
    %v2555 = vunpack.c.l.b16 %v1911
    %v2556 = vunpack.c.h.b16 %v1911
    %v2557 = vunpack.c.l.b16 %v1912
    %v2558 = vunpack.c.h.b16 %v1912
    %v2559 = vunpack.c.l.b16 %v1913
    %v2560 = vunpack.c.h.b16 %v1913
    %v2561 = vunpack.c.l.b16 %v1914
    %v2562 = vunpack.c.h.b16 %v1914
    %v2563 = vunpack.c.l.b16 %v1915
    %v2564 = vunpack.c.h.b16 %v1915
    %v2565 = vunpack.c.l.b16 %v1916
    %v2566 = vunpack.c.h.b16 %v1916
    %v2567 = vunpack.c.l.b16 %v1917
    %v2568 = vunpack.c.h.b16 %v1917
    %v2569 = vunpack.c.l.b16 %v1918
    %v2570 = vunpack.c.h.b16 %v1918
    %v2571 = vunpack.c.l.b16 %v1919
    %v2572 = vunpack.c.h.b16 %v1919
    %v2573 = vunpack.c.l.b16 %v1920
    %v2574 = vunpack.c.h.b16 %v1920
    %v2575 = vunpack.c.l.b16 %v1921
    %v2576 = vunpack.c.h.b16 %v1921
    %v2577 = vunpack.c.l.b16 %v1922
    %v2578 = vunpack.c.h.b16 %v1922
    %v2579 = vunpack.c.l.b16 %v1923
    %v2580 = vunpack.c.h.b16 %v1923
    %v2581 = vunpack.c.l.b16 %v1924
    %v2582 = vunpack.c.h.b16 %v1924
    %v2583 = vunpack.c.l.b16 %v1925
    %v2584 = vunpack.c.h.b16 %v1925
    %v2585 = vunpack.c.l.b16 %v1926
    %v2586 = vunpack.c.h.b16 %v1926
    %v2587 = vunpack.c.l.b16 %v1927
    %v2588 = vunpack.c.h.b16 %v1927
    %v2589 = vunpack.c.l.b16 %v1928
    %v2590 = vunpack.c.h.b16 %v1928
    %v2591 = vunpack.c.l.b16 %v1929
    %v2592 = vunpack.c.h.b16 %v1929
    %v2593 = vunpack.c.l.b16 %v1930
    %v2594 = vunpack.c.h.b16 %v1930
    %v2595 = vunpack.c.l.b16 %v1931
    %v2596 = vunpack.c.h.b16 %v1931
    %v2597 = vunpack.c.l.b16 %v1932
    %v2598 = vunpack.c.h.b16 %v1932
    %v2599 = vunpack.c.l.b16 %v1933
    %v2600 = vunpack.c.h.b16 %v1933
    %v2601 = vunpack.c.l.b16 %v1934
    %v2602 = vunpack.c.h.b16 %v1934
    %v2603 = vunpack.c.l.b16 %v1935
    %v2604 = vunpack.c.h.b16 %v1935
    %v2605 = vunpack.c.l.b16 %v1936
    %v2606 = vunpack.c.h.b16 %v1936
    %v2607 = vunpack.c.l.b16 %v1937
    %v2608 = vunpack.c.h.b16 %v1937
    %v2609 = vunpack.c.l.b16 %v1938
    %v2610 = vunpack.c.h.b16 %v1938
    %v2611 = vunpack.c.l.b16 %v1939
    %v2612 = vunpack.c.h.b16 %v1939
    %v2613 = vunpack.c.l.b16 %v1940
    %v2614 = vunpack.c.h.b16 %v1940
    %v2615 = vunpack.c.l.b16 %v1941
    %v2616 = vunpack.c.h.b16 %v1941
    %v2617 = vunpack.c.l.b16 %v1942
    %v2618 = vunpack.c.h.b16 %v1942
    %v2619 = vunpack.c.l.b16 %v1943
    %v2620 = vunpack.c.h.b16 %v1943
    %v2621 = vunpack.c.l.b16 %v1944
    %v2622 = vunpack.c.h.b16 %v1944
    %v2623 = vunpack.c.l.b16 %v1945
    %v2624 = vunpack.c.h.b16 %v1945
    %v2625 = vunpack.c.l.b16 %v1946
    %v2626 = vunpack.c.h.b16 %v1946
    %v2627 = vunpack.c.l.b16 %v1947
    %v2628 = vunpack.c.h.b16 %v1947
    %v2629 = vunpack.c.l.b16 %v1948
    %v2630 = vunpack.c.h.b16 %v1948
    %v2631 = vunpack.c.l.b16 %v1949
    %v2632 = vunpack.c.h.b16 %v1949
    %v2633 = vunpack.c.l.b16 %v1950
    %v2634 = vunpack.c.h.b16 %v1950
    %v2635 = vunpack.c.l.b16 %v1951
    %v2636 = vunpack.c.h.b16 %v1951
    %v2637 = vunpack.c.l.b16 %v1952
    %v2638 = vunpack.c.h.b16 %v1952
    %v2639 = vunpack.c.l.b16 %v1953
    %v2640 = vunpack.c.h.b16 %v1953
    %v2641 = vunpack.c.l.b16 %v1954
    %v2642 = vunpack.c.h.b16 %v1954
    %v2643 = vunpack.c.l.b16 %v1955
    %v2644 = vunpack.c.h.b16 %v1955
    %v2645 = vunpack.c.l.b16 %v1956
    %v2646 = vunpack.c.h.b16 %v1956
    %v2647 = vunpack.c.l.b16 %v1957
    %v2648 = vunpack.c.h.b16 %v1957
    %v2649 = vunpack.c.l.b16 %v1958
    %v2650 = vunpack.c.h.b16 %v1958
    %v2651 = vunpack.c.l.b16 %v1959
    %v2652 = vunpack.c.h.b16 %v1959
    %v2653 = vunpack.c.l.b16 %v1960
    %v2654 = vunpack.c.h.b16 %v1960
    %v2655 = vunpack.c.l.b16 %v1961
    %v2656 = vunpack.c.h.b16 %v1961
    %v2657 = vunpack.c.l.b16 %v1962
    %v2658 = vunpack.c.h.b16 %v1962
    %v2659 = vunpack.c.l.b16 %v1963
    %v2660 = vunpack.c.h.b16 %v1963
    %v2661 = vunpack.c.l.b16 %v1964
    %v2662 = vunpack.c.h.b16 %v1964
    %v2663 = vunpack.c.l.b16 %v1965
    %v2664 = vunpack.c.h.b16 %v1965
    %v2665 = vunpack.c.l.b16 %v1966
    %v2666 = vunpack.c.h.b16 %v1966
    %v2667 = vunpack.c.l.b16 %v1967
    %v2668 = vunpack.c.h.b16 %v1967
    %v2669 = vunpack.c.l.b16 %v1968
    %v2670 = vunpack.c.h.b16 %v1968
    %v2671 = vunpack.c.l.b16 %v1969
    %v2672 = vunpack.c.h.b16 %v1969
    %v2673 = vunpack.c.l.b16 %v1970
    %v2674 = vunpack.c.h.b16 %v1970
    %v2675 = vunpack.c.l.b16 %v1971
    %v2676 = vunpack.c.h.b16 %v1971
    %v2677 = vunpack.c.l.b16 %v1972
    %v2678 = vunpack.c.h.b16 %v1972
    %v2679 = vunpack.c.l.b16 %v1973
    %v2680 = vunpack.c.h.b16 %v1973
    %v2681 = vunpack.c.l.b16 %v1974
    %v2682 = vunpack.c.h.b16 %v1974
    %v2683 = vunpack.c.l.b16 %v1975
    %v2684 = vunpack.c.h.b16 %v1975
    %v2685 = vunpack.c.l.b16 %v1976
    %v2686 = vunpack.c.h.b16 %v1976
    %v2687 = vunpack.c.l.b16 %v1977
    %v2688 = vunpack.c.h.b16 %v1977
    %v2689 = vunpack.c.l.b16 %v1978
    %v2690 = vunpack.c.h.b16 %v1978
    %v2691 = vunpack.c.l.b16 %v1979
    %v2692 = vunpack.c.h.b16 %v1979
    %v2693 = vunpack.c.l.b16 %v1980
    %v2694 = vunpack.c.h.b16 %v1980
    %v2695 = vunpack.c.l.b16 %v1981
    %v2696 = vunpack.c.h.b16 %v1981
    %v2697 = vunpack.c.l.b16 %v1982
    %v2698 = vunpack.c.h.b16 %v1982
    %v2699 = vunpack.c.l.b16 %v1983
    %v2700 = vunpack.c.h.b16 %v1983
    %v2701 = vunpack.c.l.b16 %v1984
    %v2702 = vunpack.c.h.b16 %v1984
    %v2703 = vunpack.c.l.b16 %v1985
    %v2704 = vunpack.c.h.b16 %v1985
    %v2705 = vunpack.c.l.b16 %v1986
    %v2706 = vunpack.c.h.b16 %v1986
    %v2707 = vunpack.c.l.b16 %v1987
    %v2708 = vunpack.c.h.b16 %v1987
    %v2709 = vunpack.c.l.b16 %v1988
    %v2710 = vunpack.c.h.b16 %v1988
    %v2711 = vunpack.c.l.b16 %v1989
    %v2712 = vunpack.c.h.b16 %v1989
    %v2713 = vunpack.c.l.b16 %v1990
    %v2714 = vunpack.c.h.b16 %v1990
    %v2715 = vunpack.c.l.b16 %v1991
    %v2716 = vunpack.c.h.b16 %v1991
    %v2717 = vunpack.c.l.b16 %v1992
    %v2718 = vunpack.c.h.b16 %v1992
    %v2719 = vunpack.c.l.b16 %v1993
    %v2720 = vunpack.c.h.b16 %v1993
    %v2721 = vunpack.c.l.b16 %v1994
    %v2722 = vunpack.c.h.b16 %v1994
    %v2723 = vunpack.c.l.b16 %v1995
    %v2724 = vunpack.c.h.b16 %v1995
    %v2725 = vunpack.c.l.b16 %v1996
    %v2726 = vunpack.c.h.b16 %v1996
    %v2727 = vunpack.c.l.b16 %v1997
    %v2728 = vunpack.c.h.b16 %v1997
    %v2729 = vunpack.c.l.b16 %v1998
    %v2730 = vunpack.c.h.b16 %v1998
    %v2731 = vunpack.c.l.b16 %v1999
    %v2732 = vunpack.c.h.b16 %v1999
    %v2733 = vunpack.c.l.b16 %v2000
    %v2734 = vunpack.c.h.b16 %v2000
    %v2735 = vunpack.c.l.b16 %v2001
    %v2736 = vunpack.c.h.b16 %v2001
    %v2737 = vunpack.c.l.b16 %v2002
    %v2738 = vunpack.c.h.b16 %v2002
    %v2739 = vunpack.c.l.b16 %v2003
    %v2740 = vunpack.c.h.b16 %v2003
    %v2741 = vunpack.c.l.b16 %v2004
    %v2742 = vunpack.c.h.b16 %v2004
    %v2743 = vunpack.c.l.b16 %v2005
    %v2744 = vunpack.c.h.b16 %v2005
    %v2745 = vunpack.c.l.b16 %v2006
    %v2746 = vunpack.c.h.b16 %v2006
    %v2747 = vunpack.c.l.b16 %v2007
    %v2748 = vunpack.c.h.b16 %v2007
    %v2749 = vunpack.c.l.b16 %v2008
    %v2750 = vunpack.c.h.b16 %v2008
    %v2751 = vunpack.c.l.b16 %v2009
    %v2752 = vunpack.c.h.b16 %v2009
    %v2753 = vunpack.c.l.b16 %v2010
    %v2754 = vunpack.c.h.b16 %v2010
    %v2755 = vunpack.c.l.b16 %v2011
    %v2756 = vunpack.c.h.b16 %v2011
    %v2757 = vunpack.c.l.b16 %v2012
    %v2758 = vunpack.c.h.b16 %v2012
    %v2759 = vunpack.c.l.b16 %v2013
    %v2760 = vunpack.c.h.b16 %v2013
    %v2761 = vunpack.c.l.b16 %v2014
    %v2762 = vunpack.c.h.b16 %v2014
    %v2763 = vunpack.c.l.b16 %v2015
    %v2764 = vunpack.c.h.b16 %v2015
    %v2765 = vunpack.c.l.b16 %v2016
    %v2766 = vunpack.c.h.b16 %v2016
    %v2767 = vunpack.c.l.b16 %v2017
    %v2768 = vunpack.c.h.b16 %v2017
    %v2769 = vunpack.c.l.b16 %v2018
    %v2770 = vunpack.c.h.b16 %v2018
    %v2771 = vunpack.c.l.b16 %v2019
    %v2772 = vunpack.c.h.b16 %v2019
    %v2773 = vunpack.c.l.b16 %v2020
    %v2774 = vunpack.c.h.b16 %v2020
    %v2775 = vunpack.c.l.b16 %v2021
    %v2776 = vunpack.c.h.b16 %v2021
    %v2777 = vunpack.c.l.b16 %v2022
    %v2778 = vunpack.c.h.b16 %v2022
    %v2779 = vunpack.c.l.b16 %v2023
    %v2780 = vunpack.c.h.b16 %v2023
    %v2781 = vunpack.c.l.b16 %v2024
    %v2782 = vunpack.c.h.b16 %v2024
    %v2783 = vunpack.c.l.b16 %v2025
    %v2784 = vunpack.c.h.b16 %v2025
    %v2785 = vunpack.c.l.b16 %v2026
    %v2786 = vunpack.c.h.b16 %v2026
    %v2787 = vunpack.c.l.b16 %v2027
    %v2788 = vunpack.c.h.b16 %v2027
    %v2789 = vunpack.c.l.b16 %v2028
    %v2790 = vunpack.c.h.b16 %v2028
    %v2791 = vunpack.c.l.b16 %v2029
    %v2792 = vunpack.c.h.b16 %v2029
    %v2793 = vunpack.c.l.b16 %v2030
    %v2794 = vunpack.c.h.b16 %v2030
    %v2795 = vunpack.c.l.b16 %v2031
    %v2796 = vunpack.c.h.b16 %v2031
    %v2797 = vunpack.c.l.b16 %v2032
    %v2798 = vunpack.c.h.b16 %v2032
    %v2799 = vunpack.c.l.b16 %v2033
    %v2800 = vunpack.c.h.b16 %v2033
    %v2801 = vunpack.c.l.b16 %v2034
    %v2802 = vunpack.c.h.b16 %v2034
    %v2803 = vunpack.c.l.b16 %v2035
    %v2804 = vunpack.c.h.b16 %v2035
    %v2805 = vunpack.c.l.b16 %v2036
    %v2806 = vunpack.c.h.b16 %v2036
    %v2807 = vunpack.c.l.b16 %v2037
    %v2808 = vunpack.c.h.b16 %v2037
    %v2809 = vunpack.c.l.b16 %v2038
    %v2810 = vunpack.c.h.b16 %v2038
    %v2811 = vunpack.c.l.b16 %v2039
    %v2812 = vunpack.c.h.b16 %v2039
    %v2813 = vunpack.c.l.b16 %v2040
    %v2814 = vunpack.c.h.b16 %v2040
    %v2815 = vunpack.c.l.b16 %v2041
    %v2816 = vunpack.c.h.b16 %v2041
    %v2817 = vunpack.c.l.b16 %v2042
    %v2818 = vunpack.c.h.b16 %v2042
    %v2819 = vunpack.c.l.b16 %v2043
    %v2820 = vunpack.c.h.b16 %v2043
    %v2821 = vunpack.c.l.b16 %v2044
    %v2822 = vunpack.c.h.b16 %v2044
    %v2823 = vunpack.c.l.b16 %v2045
    %v2824 = vunpack.c.h.b16 %v2045
    %v2825 = vunpack.c.l.b16 %v2046
    %v2826 = vunpack.c.h.b16 %v2046
    %v2827 = vunpack.c.l.b16 %v2047
    %v2828 = vunpack.c.h.b16 %v2047
    %v2829 = vunpack.c.l.b16 %v2048
    %v2830 = vunpack.c.h.b16 %v2048
    %v2831 = vunpack.c.l.b16 %v2049
    %v2832 = vunpack.c.h.b16 %v2049
    %v2833 = vunpack.c.l.b16 %v2050
    %v2834 = vunpack.c.h.b16 %v2050
    %v2835 = vunpack.c.l.b16 %v2051
    %v2836 = vunpack.c.h.b16 %v2051
    %v2837 = vunpack.c.l.b16 %v2052
    %v2838 = vunpack.c.h.b16 %v2052
    %v2839 = vunpack.c.l.b16 %v2053
    %v2840 = vunpack.c.h.b16 %v2053
    %v2841 = vunpack.c.l.b16 %v2054
    %v2842 = vunpack.c.h.b16 %v2054
    %v2843 = vunpack.c.l.b16 %v2055
    %v2844 = vunpack.c.h.b16 %v2055
    %v2845 = vunpack.c.l.b16 %v2056
    %v2846 = vunpack.c.h.b16 %v2056
    %v2847 = vunpack.c.l.b16 %v2057
    %v2848 = vunpack.c.h.b16 %v2057
    %v2849 = vunpack.c.l.b16 %v2058
    %v2850 = vunpack.c.h.b16 %v2058
    %v2851 = vunpack.c.l.b16 %v2059
    %v2852 = vunpack.c.h.b16 %v2059
    %v2853 = vunpack.c.l.b16 %v2060
    %v2854 = vunpack.c.h.b16 %v2060
    %v2855 = vunpack.c.l.b16 %v2061
    %v2856 = vunpack.c.h.b16 %v2061
    %v2857 = vunpack.c.l.b16 %v2062
    %v2858 = vunpack.c.h.b16 %v2062
    %v2859 = vunpack.c.l.b16 %v2063
    %v2860 = vunpack.c.h.b16 %v2063
    %v2861 = vunpack.c.l.b16 %v2064
    %v2862 = vunpack.c.h.b16 %v2064
    %v2863 = vunpack.c.l.b16 %v2065
    %v2864 = vunpack.c.h.b16 %v2065
    %v2865 = vunpack.c.l.b16 %v2066
    %v2866 = vunpack.c.h.b16 %v2066
    %v2867 = vunpack.c.l.b16 %v2067
    %v2868 = vunpack.c.h.b16 %v2067
    %v2869 = vunpack.c.l.b16 %v2068
    %v2870 = vunpack.c.h.b16 %v2068
    %v2871 = vunpack.c.l.b16 %v2069
    %v2872 = vunpack.c.h.b16 %v2069
    %v2873 = vunpack.c.l.b16 %v2070
    %v2874 = vunpack.c.h.b16 %v2070
    %v2875 = vunpack.c.l.b16 %v2071
    %v2876 = vunpack.c.h.b16 %v2071
    %v2877 = vunpack.c.l.b16 %v2072
    %v2878 = vunpack.c.h.b16 %v2072
    %v2879 = vunpack.c.l.b16 %v2073
    %v2880 = vunpack.c.h.b16 %v2073
    %v2881 = vunpack.c.l.b16 %v2074
    %v2882 = vunpack.c.h.b16 %v2074
    %v2883 = vunpack.c.l.b16 %v2075
    %v2884 = vunpack.c.h.b16 %v2075
    %v2885 = vunpack.c.l.b16 %v2076
    %v2886 = vunpack.c.h.b16 %v2076
    %v2887 = vpack.c.b16 %v2383, %v2375
    %v2888 = vpack.c.b16 %v2384, %v2376
    %v2889 = vpack.c.b16 %v2385, %v2377
    %v2890 = vpack.c.b16 %v2386, %v2378
    %v2891 = vpack.c.b16 %v2387, %v2379
    %v2892 = vpack.c.b16 %v2388, %v2380
    %v2893 = vpack.c.b16 %v2389, %v2381
    %v2894 = vpack.c.b16 %v2390, %v2382
    %v2895 = vpack.c.b16 %v2399, %v2391
    %v2896 = vpack.c.b16 %v2400, %v2392
    %v2897 = vpack.c.b16 %v2401, %v2393
    %v2898 = vpack.c.b16 %v2402, %v2394
    %v2899 = vpack.c.b16 %v2403, %v2395
    %v2900 = vpack.c.b16 %v2404, %v2396
    %v2901 = vpack.c.b16 %v2405, %v2397
    %v2902 = vpack.c.b16 %v2406, %v2398
    %v2903 = vpack.c.b16 %v2415, %v2407
    %v2904 = vpack.c.b16 %v2416, %v2408
    %v2905 = vpack.c.b16 %v2417, %v2409
    %v2906 = vpack.c.b16 %v2418, %v2410
    %v2907 = vpack.c.b16 %v2419, %v2411
    %v2908 = vpack.c.b16 %v2420, %v2412
    %v2909 = vpack.c.b16 %v2421, %v2413
    %v2910 = vpack.c.b16 %v2422, %v2414
    %v2911 = vpack.c.b16 %v2431, %v2423
    %v2912 = vpack.c.b16 %v2432, %v2424
    %v2913 = vpack.c.b16 %v2433, %v2425
    %v2914 = vpack.c.b16 %v2434, %v2426
    %v2915 = vpack.c.b16 %v2435, %v2427
    %v2916 = vpack.c.b16 %v2436, %v2428
    %v2917 = vpack.c.b16 %v2437, %v2429
    %v2918 = vpack.c.b16 %v2438, %v2430
    %v2919 = vpack.c.b16 %v2447, %v2439
    %v2920 = vpack.c.b16 %v2448, %v2440
    %v2921 = vpack.c.b16 %v2449, %v2441
    %v2922 = vpack.c.b16 %v2450, %v2442
    %v2923 = vpack.c.b16 %v2451, %v2443
    %v2924 = vpack.c.b16 %v2452, %v2444
    %v2925 = vpack.c.b16 %v2453, %v2445
    %v2926 = vpack.c.b16 %v2454, %v2446
    %v2927 = vpack.c.b16 %v2463, %v2455
    %v2928 = vpack.c.b16 %v2464, %v2456
    %v2929 = vpack.c.b16 %v2465, %v2457
    %v2930 = vpack.c.b16 %v2466, %v2458
    %v2931 = vpack.c.b16 %v2467, %v2459
    %v2932 = vpack.c.b16 %v2468, %v2460
    %v2933 = vpack.c.b16 %v2469, %v2461
    %v2934 = vpack.c.b16 %v2470, %v2462
    %v2935 = vpack.c.b16 %v2479, %v2471
    %v2936 = vpack.c.b16 %v2480, %v2472
    %v2937 = vpack.c.b16 %v2481, %v2473
    %v2938 = vpack.c.b16 %v2482, %v2474
    %v2939 = vpack.c.b16 %v2483, %v2475
    %v2940 = vpack.c.b16 %v2484, %v2476
    %v2941 = vpack.c.b16 %v2485, %v2477
    %v2942 = vpack.c.b16 %v2486, %v2478
    %v2943 = vpack.c.b16 %v2495, %v2487
    %v2944 = vpack.c.b16 %v2496, %v2488
    %v2945 = vpack.c.b16 %v2497, %v2489
    %v2946 = vpack.c.b16 %v2498, %v2490
    %v2947 = vpack.c.b16 %v2499, %v2491
    %v2948 = vpack.c.b16 %v2500, %v2492
    %v2949 = vpack.c.b16 %v2501, %v2493
    %v2950 = vpack.c.b16 %v2502, %v2494
    %v2951 = vpack.c.b16 %v2511, %v2503
    %v2952 = vpack.c.b16 %v2512, %v2504
    %v2953 = vpack.c.b16 %v2513, %v2505
    %v2954 = vpack.c.b16 %v2514, %v2506
    %v2955 = vpack.c.b16 %v2515, %v2507
    %v2956 = vpack.c.b16 %v2516, %v2508
    %v2957 = vpack.c.b16 %v2517, %v2509
    %v2958 = vpack.c.b16 %v2518, %v2510
    %v2959 = vpack.c.b16 %v2527, %v2519
    %v2960 = vpack.c.b16 %v2528, %v2520
    %v2961 = vpack.c.b16 %v2529, %v2521
    %v2962 = vpack.c.b16 %v2530, %v2522
    %v2963 = vpack.c.b16 %v2531, %v2523
    %v2964 = vpack.c.b16 %v2532, %v2524
    %v2965 = vpack.c.b16 %v2533, %v2525
    %v2966 = vpack.c.b16 %v2534, %v2526
    %v2967 = vpack.c.b16 %v2543, %v2535
    %v2968 = vpack.c.b16 %v2544, %v2536
    %v2969 = vpack.c.b16 %v2545, %v2537
    %v2970 = vpack.c.b16 %v2546, %v2538
    %v2971 = vpack.c.b16 %v2547, %v2539
    %v2972 = vpack.c.b16 %v2548, %v2540
    %v2973 = vpack.c.b16 %v2549, %v2541
    %v2974 = vpack.c.b16 %v2550, %v2542
    %v2975 = vpack.c.b16 %v2559, %v2551
    %v2976 = vpack.c.b16 %v2560, %v2552
    %v2977 = vpack.c.b16 %v2561, %v2553
    %v2978 = vpack.c.b16 %v2562, %v2554
    %v2979 = vpack.c.b16 %v2563, %v2555
    %v2980 = vpack.c.b16 %v2564, %v2556
    %v2981 = vpack.c.b16 %v2565, %v2557
    %v2982 = vpack.c.b16 %v2566, %v2558
    %v2983 = vpack.c.b16 %v2575, %v2567
    %v2984 = vpack.c.b16 %v2576, %v2568
    %v2985 = vpack.c.b16 %v2577, %v2569
    %v2986 = vpack.c.b16 %v2578, %v2570
    %v2987 = vpack.c.b16 %v2579, %v2571
    %v2988 = vpack.c.b16 %v2580, %v2572
    %v2989 = vpack.c.b16 %v2581, %v2573
    %v2990 = vpack.c.b16 %v2582, %v2574
    %v2991 = vpack.c.b16 %v2591, %v2583
    %v2992 = vpack.c.b16 %v2592, %v2584
    %v2993 = vpack.c.b16 %v2593, %v2585
    %v2994 = vpack.c.b16 %v2594, %v2586
    %v2995 = vpack.c.b16 %v2595, %v2587
    %v2996 = vpack.c.b16 %v2596, %v2588
    %v2997 = vpack.c.b16 %v2597, %v2589
    %v2998 = vpack.c.b16 %v2598, %v2590
    %v2999 = vpack.c.b16 %v2607, %v2599
    %v3000 = vpack.c.b16 %v2608, %v2600
    %v3001 = vpack.c.b16 %v2609, %v2601
    %v3002 = vpack.c.b16 %v2610, %v2602
    %v3003 = vpack.c.b16 %v2611, %v2603
    %v3004 = vpack.c.b16 %v2612, %v2604
    %v3005 = vpack.c.b16 %v2613, %v2605
    %v3006 = vpack.c.b16 %v2614, %v2606
    %v3007 = vpack.c.b16 %v2623, %v2615
    %v3008 = vpack.c.b16 %v2624, %v2616
    %v3009 = vpack.c.b16 %v2625, %v2617
    %v3010 = vpack.c.b16 %v2626, %v2618
    %v3011 = vpack.c.b16 %v2627, %v2619
    %v3012 = vpack.c.b16 %v2628, %v2620
    %v3013 = vpack.c.b16 %v2629, %v2621
    %v3014 = vpack.c.b16 %v2630, %v2622
    %v3015 = vpack.c.b16 %v2639, %v2631
    %v3016 = vpack.c.b16 %v2640, %v2632
    %v3017 = vpack.c.b16 %v2641, %v2633
    %v3018 = vpack.c.b16 %v2642, %v2634
    %v3019 = vpack.c.b16 %v2643, %v2635
    %v3020 = vpack.c.b16 %v2644, %v2636
    %v3021 = vpack.c.b16 %v2645, %v2637
    %v3022 = vpack.c.b16 %v2646, %v2638
    %v3023 = vpack.c.b16 %v2655, %v2647
    %v3024 = vpack.c.b16 %v2656, %v2648
    %v3025 = vpack.c.b16 %v2657, %v2649
    %v3026 = vpack.c.b16 %v2658, %v2650
    %v3027 = vpack.c.b16 %v2659, %v2651
    %v3028 = vpack.c.b16 %v2660, %v2652
    %v3029 = vpack.c.b16 %v2661, %v2653
    %v3030 = vpack.c.b16 %v2662, %v2654
    %v3031 = vpack.c.b16 %v2671, %v2663
    %v3032 = vpack.c.b16 %v2672, %v2664
    %v3033 = vpack.c.b16 %v2673, %v2665
    %v3034 = vpack.c.b16 %v2674, %v2666
    %v3035 = vpack.c.b16 %v2675, %v2667
    %v3036 = vpack.c.b16 %v2676, %v2668
    %v3037 = vpack.c.b16 %v2677, %v2669
    %v3038 = vpack.c.b16 %v2678, %v2670
    %v3039 = vpack.c.b16 %v2687, %v2679
    %v3040 = vpack.c.b16 %v2688, %v2680
    %v3041 = vpack.c.b16 %v2689, %v2681
    %v3042 = vpack.c.b16 %v2690, %v2682
    %v3043 = vpack.c.b16 %v2691, %v2683
    %v3044 = vpack.c.b16 %v2692, %v2684
    %v3045 = vpack.c.b16 %v2693, %v2685
    %v3046 = vpack.c.b16 %v2694, %v2686
    %v3047 = vpack.c.b16 %v2703, %v2695
    %v3048 = vpack.c.b16 %v2704, %v2696
    %v3049 = vpack.c.b16 %v2705, %v2697
    %v3050 = vpack.c.b16 %v2706, %v2698
    %v3051 = vpack.c.b16 %v2707, %v2699
    %v3052 = vpack.c.b16 %v2708, %v2700
    %v3053 = vpack.c.b16 %v2709, %v2701
    %v3054 = vpack.c.b16 %v2710, %v2702
    %v3055 = vpack.c.b16 %v2719, %v2711
    %v3056 = vpack.c.b16 %v2720, %v2712
    %v3057 = vpack.c.b16 %v2721, %v2713
    %v3058 = vpack.c.b16 %v2722, %v2714
    %v3059 = vpack.c.b16 %v2723, %v2715
    %v3060 = vpack.c.b16 %v2724, %v2716
    %v3061 = vpack.c.b16 %v2725, %v2717
    %v3062 = vpack.c.b16 %v2726, %v2718
    %v3063 = vpack.c.b16 %v2735, %v2727
    %v3064 = vpack.c.b16 %v2736, %v2728
    %v3065 = vpack.c.b16 %v2737, %v2729
    %v3066 = vpack.c.b16 %v2738, %v2730
    %v3067 = vpack.c.b16 %v2739, %v2731
    %v3068 = vpack.c.b16 %v2740, %v2732
    %v3069 = vpack.c.b16 %v2741, %v2733
    %v3070 = vpack.c.b16 %v2742, %v2734
    %v3071 = vpack.c.b16 %v2751, %v2743
    %v3072 = vpack.c.b16 %v2752, %v2744
    %v3073 = vpack.c.b16 %v2753, %v2745
    %v3074 = vpack.c.b16 %v2754, %v2746
    %v3075 = vpack.c.b16 %v2755, %v2747
    %v3076 = vpack.c.b16 %v2756, %v2748
    %v3077 = vpack.c.b16 %v2757, %v2749
    %v3078 = vpack.c.b16 %v2758, %v2750
    %v3079 = vpack.c.b16 %v2767, %v2759
    %v3080 = vpack.c.b16 %v2768, %v2760
    %v3081 = vpack.c.b16 %v2769, %v2761
    %v3082 = vpack.c.b16 %v2770, %v2762
    %v3083 = vpack.c.b16 %v2771, %v2763
    %v3084 = vpack.c.b16 %v2772, %v2764
    %v3085 = vpack.c.b16 %v2773, %v2765
    %v3086 = vpack.c.b16 %v2774, %v2766
    %v3087 = vpack.c.b16 %v2783, %v2775
    %v3088 = vpack.c.b16 %v2784, %v2776
    %v3089 = vpack.c.b16 %v2785, %v2777
    %v3090 = vpack.c.b16 %v2786, %v2778
    %v3091 = vpack.c.b16 %v2787, %v2779
    %v3092 = vpack.c.b16 %v2788, %v2780
    %v3093 = vpack.c.b16 %v2789, %v2781
    %v3094 = vpack.c.b16 %v2790, %v2782
    %v3095 = vpack.c.b16 %v2799, %v2791
    %v3096 = vpack.c.b16 %v2800, %v2792
    %v3097 = vpack.c.b16 %v2801, %v2793
    %v3098 = vpack.c.b16 %v2802, %v2794
    %v3099 = vpack.c.b16 %v2803, %v2795
    %v3100 = vpack.c.b16 %v2804, %v2796
    %v3101 = vpack.c.b16 %v2805, %v2797
    %v3102 = vpack.c.b16 %v2806, %v2798
    %v3103 = vpack.c.b16 %v2815, %v2807
    %v3104 = vpack.c.b16 %v2816, %v2808
    %v3105 = vpack.c.b16 %v2817, %v2809
    %v3106 = vpack.c.b16 %v2818, %v2810
    %v3107 = vpack.c.b16 %v2819, %v2811
    %v3108 = vpack.c.b16 %v2820, %v2812
    %v3109 = vpack.c.b16 %v2821, %v2813
    %v3110 = vpack.c.b16 %v2822, %v2814
    %v3111 = vpack.c.b16 %v2831, %v2823
    %v3112 = vpack.c.b16 %v2832, %v2824
    %v3113 = vpack.c.b16 %v2833, %v2825
    %v3114 = vpack.c.b16 %v2834, %v2826
    %v3115 = vpack.c.b16 %v2835, %v2827
    %v3116 = vpack.c.b16 %v2836, %v2828
    %v3117 = vpack.c.b16 %v2837, %v2829
    %v3118 = vpack.c.b16 %v2838, %v2830
    %v3119 = vpack.c.b16 %v2847, %v2839
    %v3120 = vpack.c.b16 %v2848, %v2840
    %v3121 = vpack.c.b16 %v2849, %v2841
    %v3122 = vpack.c.b16 %v2850, %v2842
    %v3123 = vpack.c.b16 %v2851, %v2843
    %v3124 = vpack.c.b16 %v2852, %v2844
    %v3125 = vpack.c.b16 %v2853, %v2845
    %v3126 = vpack.c.b16 %v2854, %v2846
    %v3127 = vpack.c.b16 %v2863, %v2855
    %v3128 = vpack.c.b16 %v2864, %v2856
    %v3129 = vpack.c.b16 %v2865, %v2857
    %v3130 = vpack.c.b16 %v2866, %v2858
    %v3131 = vpack.c.b16 %v2867, %v2859
    %v3132 = vpack.c.b16 %v2868, %v2860
    %v3133 = vpack.c.b16 %v2869, %v2861
    %v3134 = vpack.c.b16 %v2870, %v2862
    %v3135 = vpack.c.b16 %v2879, %v2871
    %v3136 = vpack.c.b16 %v2880, %v2872
    %v3137 = vpack.c.b16 %v2881, %v2873
    %v3138 = vpack.c.b16 %v2882, %v2874
    %v3139 = vpack.c.b16 %v2883, %v2875
    %v3140 = vpack.c.b16 %v2884, %v2876
    %v3141 = vpack.c.b16 %v2885, %v2877
    %v3142 = vpack.c.b16 %v2886, %v2878
    %3399 = vmatprep.subr.bf16.mxu0 %v2944
    %3400 = vmatpush1.bf16.msra.mxu0 %v2943
    %3401 = vmatprep.subr.bf16.mxu0 %v2936
    %3402 = vmatpush1.bf16.msra.mxu0 %v2935
    %3403 = vmatprep.subr.bf16.mxu0 %v2928
    %3404 = vmatpush1.bf16.msra.mxu0 %v2927
    %3405 = vmatprep.subr.bf16.mxu0 %v2920
    %3406 = vmatpush1.bf16.msra.mxu0 %v2919
    %3407 = vmatprep.subr.bf16.mxu0 %v2912
    %3408 = vmatpush1.bf16.msra.mxu0 %v2911
    %3409 = vmatprep.subr.bf16.mxu0 %v2904
    %3410 = vmatpush1.bf16.msra.mxu0 %v2903
    %3411 = vmatprep.subr.bf16.mxu0 %v2896
    %3412 = vmatpush1.bf16.msra.mxu0 %v2895
    %3413 = vmatprep.subr.bf16.mxu0 %v2888
    %3414 = vmatpush1.bf16.msra.mxu0 %v2887
    %3415 = vmatprep.subr.bf16.mxu0 %v3008
    %3416 = vmatpush2.bf16.msra.mxu0 %v3007
    %3417 = vmatprep.subr.bf16.mxu0 %v3000
    %3418 = vmatpush2.bf16.msra.mxu0 %v2999
    %3419 = vmatprep.subr.bf16.mxu0 %v2992
    %3420 = vmatpush2.bf16.msra.mxu0 %v2991
    %3421 = vmatprep.subr.bf16.mxu0 %v2984
    %3422 = vmatpush2.bf16.msra.mxu0 %v2983
    %3423 = vmatprep.subr.bf16.mxu0 %v2976
    %3424 = vmatpush2.bf16.msra.mxu0 %v2975
    %3425 = vmatprep.subr.bf16.mxu0 %v2968
    %3426 = vmatpush2.bf16.msra.mxu0 %v2967
    %3427 = vmatprep.subr.bf16.mxu0 %v2960
    %3428 = vmatpush2.bf16.msra.mxu0 %v2959
    %3429 = vmatprep.subr.bf16.mxu0 %v2952
    %3430 = vmatpush2.bf16.msra.mxu0 %v2951
    %3431 = vmatprep.mubr.bf16.mxu0 %v1758
    %3432 = vmatmul.mubr.bf16.gmra.mxu0 %v1757
    %v3433 = vpop.f32.mrf.mxu0
    %v3434 = vadd.f32 %v2082, %v3433
    %v3435 = vpop.f32.mrf.mxu0
    %v3436 = vadd.f32 %v2086, %v3435
    %v3437 = vpop.f32.mrf.mxu0
    %v3438 = vadd.f32 %v2082, %v3437
    %v3439 = vpop.f32.mrf.mxu0
    %v3440 = vadd.f32 %v2086, %v3439
    %3441 = vmatprep.mubr.bf16.mxu0 %v1762
    %3442 = vmatmul.mubr.bf16.gmra.mxu0 %v1761
    %v3443 = vpop.f32.mrf.mxu0
    %v3444 = vadd.f32 %v2082, %v3443
    %v3445 = vpop.f32.mrf.mxu0
    %v3446 = vadd.f32 %v2086, %v3445
    %v3447 = vpop.f32.mrf.mxu0
    %v3448 = vadd.f32 %v2082, %v3447
    %v3449 = vpop.f32.mrf.mxu0
    %v3450 = vadd.f32 %v2086, %v3449
    %3451 = vmatprep.mubr.bf16.mxu0 %v1766
    %3452 = vmatmul.mubr.bf16.gmra.mxu0 %v1765
    %v3453 = vpop.f32.mrf.mxu0
    %v3454 = vadd.f32 %v2082, %v3453
    %v3455 = vpop.f32.mrf.mxu0
    %v3456 = vadd.f32 %v2086, %v3455
    %v3457 = vpop.f32.mrf.mxu0
    %v3458 = vadd.f32 %v2082, %v3457
    %v3459 = vpop.f32.mrf.mxu0
    %v3460 = vadd.f32 %v2086, %v3459
    %3461 = vmatprep.mubr.bf16.mxu0 %v1770
    %3462 = vmatmul.mubr.bf16.gmra.mxu0 %v1769
    %v3463 = vpop.f32.mrf.mxu0
    %v3464 = vadd.f32 %v2082, %v3463
    %v3465 = vpop.f32.mrf.mxu0
    %v3466 = vadd.f32 %v2086, %v3465
    %v3467 = vpop.f32.mrf.mxu0
    %v3468 = vadd.f32 %v2082, %v3467
    %v3469 = vpop.f32.mrf.mxu0
    %v3470 = vadd.f32 %v2086, %v3469
    %3471 = vmatprep.mubr.bf16.mxu0 %v1774
    %3472 = vmatmul.mubr.bf16.gmra.mxu0 %v1773
    %v3473 = vpop.f32.mrf.mxu0
    %v3474 = vadd.f32 %v2082, %v3473
    %v3475 = vpop.f32.mrf.mxu0
    %v3476 = vadd.f32 %v2086, %v3475
    %v3477 = vpop.f32.mrf.mxu0
    %v3478 = vadd.f32 %v2082, %v3477
    %v3479 = vpop.f32.mrf.mxu0
    %v3480 = vadd.f32 %v2086, %v3479
    %3481 = vmatprep.mubr.bf16.mxu0 %v1778
    %3482 = vmatmul.mubr.bf16.gmra.mxu0 %v1777
    %v3483 = vpop.f32.mrf.mxu0
    %v3484 = vadd.f32 %v2082, %v3483
    %v3485 = vpop.f32.mrf.mxu0
    %v3486 = vadd.f32 %v2086, %v3485
    %v3487 = vpop.f32.mrf.mxu0
    %v3488 = vadd.f32 %v2082, %v3487
    %v3489 = vpop.f32.mrf.mxu0
    %v3490 = vadd.f32 %v2086, %v3489
    %3491 = vmatprep.mubr.bf16.mxu0 %v1782
    %3492 = vmatmul.mubr.bf16.gmra.mxu0 %v1781
    %v3493 = vpop.f32.mrf.mxu0
    %v3494 = vadd.f32 %v2082, %v3493
    %v3495 = vpop.f32.mrf.mxu0
    %v3496 = vadd.f32 %v2086, %v3495
    %v3497 = vpop.f32.mrf.mxu0
    %v3498 = vadd.f32 %v2082, %v3497
    %v3499 = vpop.f32.mrf.mxu0
    %v3500 = vadd.f32 %v2086, %v3499
    %3501 = vmatprep.mubr.bf16.mxu0 %v1786
    %3502 = vmatmul.mubr.bf16.gmra.mxu0 %v1785
    %v3503 = vpop.f32.mrf.mxu0
    %v3504 = vadd.f32 %v2082, %v3503
    %v3505 = vpop.f32.mrf.mxu0
    %v3506 = vadd.f32 %v2086, %v3505
    %v3507 = vpop.f32.mrf.mxu0
    %v3508 = vadd.f32 %v2082, %v3507
    %v3509 = vpop.f32.mrf.mxu0
    %v3510 = vadd.f32 %v2086, %v3509
    %3511 = vmatprep.mubr.bf16.mxu0 %v1790
    %3512 = vmatmul.mubr.bf16.gmra.mxu0 %v1789
    %v3513 = vpop.f32.mrf.mxu0
    %v3514 = vadd.f32 %v2082, %v3513
    %v3515 = vpop.f32.mrf.mxu0
    %v3516 = vadd.f32 %v2086, %v3515
    %v3517 = vpop.f32.mrf.mxu0
    %v3518 = vadd.f32 %v2082, %v3517
    %v3519 = vpop.f32.mrf.mxu0
    %v3520 = vadd.f32 %v2086, %v3519
    %3521 = vmatprep.mubr.bf16.mxu0 %v1794
    %3522 = vmatmul.mubr.bf16.gmra.mxu0 %v1793
    %v3523 = vpop.f32.mrf.mxu0
    %v3524 = vadd.f32 %v2082, %v3523
    %v3525 = vpop.f32.mrf.mxu0
    %v3526 = vadd.f32 %v2086, %v3525
    %v3527 = vpop.f32.mrf.mxu0
    %v3528 = vadd.f32 %v2082, %v3527
    %v3529 = vpop.f32.mrf.mxu0
    %v3530 = vadd.f32 %v2086, %v3529
    %3531 = vmatprep.mubr.bf16.mxu0 %v1798
    %3532 = vmatmul.mubr.bf16.gmra.mxu0 %v1797
    %v3533 = vpop.f32.mrf.mxu0
    %v3534 = vadd.f32 %v2082, %v3533
    %v3535 = vpop.f32.mrf.mxu0
    %v3536 = vadd.f32 %v2086, %v3535
    %v3537 = vpop.f32.mrf.mxu0
    %v3538 = vadd.f32 %v2082, %v3537
    %v3539 = vpop.f32.mrf.mxu0
    %v3540 = vadd.f32 %v2086, %v3539
    %3541 = vmatprep.mubr.bf16.mxu0 %v1802
    %3542 = vmatmul.mubr.bf16.gmra.mxu0 %v1801
    %v3543 = vpop.f32.mrf.mxu0
    %v3544 = vadd.f32 %v2082, %v3543
    %v3545 = vpop.f32.mrf.mxu0
    %v3546 = vadd.f32 %v2086, %v3545
    %v3547 = vpop.f32.mrf.mxu0
    %v3548 = vadd.f32 %v2082, %v3547
    %v3549 = vpop.f32.mrf.mxu0
    %v3550 = vadd.f32 %v2086, %v3549
    %3551 = vmatprep.mubr.bf16.mxu0 %v1806
    %3552 = vmatmul.mubr.bf16.gmra.mxu0 %v1805
    %v3553 = vpop.f32.mrf.mxu0
    %v3554 = vadd.f32 %v2082, %v3553
    %v3555 = vpop.f32.mrf.mxu0
    %v3556 = vadd.f32 %v2086, %v3555
    %v3557 = vpop.f32.mrf.mxu0
    %v3558 = vadd.f32 %v2082, %v3557
    %v3559 = vpop.f32.mrf.mxu0
    %v3560 = vadd.f32 %v2086, %v3559
    %3561 = vmatprep.mubr.bf16.mxu0 %v1810
    %3562 = vmatmul.mubr.bf16.gmra.mxu0 %v1809
    %v3563 = vpop.f32.mrf.mxu0
    %v3564 = vadd.f32 %v2082, %v3563
    %v3565 = vpop.f32.mrf.mxu0
    %v3566 = vadd.f32 %v2086, %v3565
    %v3567 = vpop.f32.mrf.mxu0
    %v3568 = vadd.f32 %v2082, %v3567
    %v3569 = vpop.f32.mrf.mxu0
    %v3570 = vadd.f32 %v2086, %v3569
    %3571 = vmatprep.mubr.bf16.mxu0 %v1814
    %3572 = vmatmul.mubr.bf16.gmra.mxu0 %v1813
    %v3573 = vpop.f32.mrf.mxu0
    %v3574 = vadd.f32 %v2082, %v3573
    %v3575 = vpop.f32.mrf.mxu0
    %v3576 = vadd.f32 %v2086, %v3575
    %v3577 = vpop.f32.mrf.mxu0
    %v3578 = vadd.f32 %v2082, %v3577
    %v3579 = vpop.f32.mrf.mxu0
    %v3580 = vadd.f32 %v2086, %v3579
    %3581 = vmatprep.mubr.bf16.mxu0 %v1818
    %3582 = vmatmul.mubr.bf16.gmra.mxu0 %v1817
    %v3583 = vpop.f32.mrf.mxu0
    %v3584 = vadd.f32 %v2082, %v3583
    %v3585 = vpop.f32.mrf.mxu0
    %v3586 = vadd.f32 %v2086, %v3585
    %v3587 = vpop.f32.mrf.mxu0
    %v3588 = vadd.f32 %v2082, %v3587
    %v3589 = vpop.f32.mrf.mxu0
    %v3590 = vadd.f32 %v2086, %v3589
    %3591 = vdwg.mxu0
    %3592 = vmatprep.subr.bf16.mxu0 %v3072
    %3593 = vmatpush1.bf16.msra.mxu0 %v3071
    %3594 = vmatprep.subr.bf16.mxu0 %v3064
    %3595 = vmatpush1.bf16.msra.mxu0 %v3063
    %3596 = vmatprep.subr.bf16.mxu0 %v3056
    %3597 = vmatpush1.bf16.msra.mxu0 %v3055
    %3598 = vmatprep.subr.bf16.mxu0 %v3048
    %3599 = vmatpush1.bf16.msra.mxu0 %v3047
    %3600 = vmatprep.subr.bf16.mxu0 %v3040
    %3601 = vmatpush1.bf16.msra.mxu0 %v3039
    %3602 = vmatprep.subr.bf16.mxu0 %v3032
    %3603 = vmatpush1.bf16.msra.mxu0 %v3031
    %3604 = vmatprep.subr.bf16.mxu0 %v3024
    %3605 = vmatpush1.bf16.msra.mxu0 %v3023
    %3606 = vmatprep.subr.bf16.mxu0 %v3016
    %3607 = vmatpush1.bf16.msra.mxu0 %v3015
    %3608 = vmatprep.subr.bf16.mxu0 %v3136
    %3609 = vmatpush2.bf16.msra.mxu0 %v3135
    %3610 = vmatprep.subr.bf16.mxu0 %v3128
    %3611 = vmatpush2.bf16.msra.mxu0 %v3127
    %3612 = vmatprep.subr.bf16.mxu0 %v3120
    %3613 = vmatpush2.bf16.msra.mxu0 %v3119
    %3614 = vmatprep.subr.bf16.mxu0 %v3112
    %3615 = vmatpush2.bf16.msra.mxu0 %v3111
    %3616 = vmatprep.subr.bf16.mxu0 %v3104
    %3617 = vmatpush2.bf16.msra.mxu0 %v3103
    %3618 = vmatprep.subr.bf16.mxu0 %v3096
    %3619 = vmatpush2.bf16.msra.mxu0 %v3095
    %3620 = vmatprep.subr.bf16.mxu0 %v3088
    %3621 = vmatpush2.bf16.msra.mxu0 %v3087
    %3622 = vmatprep.subr.bf16.mxu0 %v3080
    %3623 = vmatpush2.bf16.msra.mxu0 %v3079
    %3624 = vmatprep.mubr.bf16.mxu0 %v1760
    %3625 = vmatmul.mubr.bf16.gmra.mxu0 %v1759
    %v3626 = vpop.f32.mrf.mxu0
    %v3627 = vadd.f32 %v3434, %v3626
    %v3628 = vpop.f32.mrf.mxu0
    %v3629 = vadd.f32 %v3436, %v3628
    %v3630 = vpop.f32.mrf.mxu0
    %v3631 = vadd.f32 %v3438, %v3630
    %v3632 = vpop.f32.mrf.mxu0
    %v3633 = vadd.f32 %v3440, %v3632
    %3634 = vmatprep.mubr.bf16.mxu0 %v1764
    %3635 = vmatmul.mubr.bf16.gmra.mxu0 %v1763
    %v3636 = vpop.f32.mrf.mxu0
    %v3637 = vadd.f32 %v3444, %v3636
    %v3638 = vpop.f32.mrf.mxu0
    %v3639 = vadd.f32 %v3446, %v3638
    %v3640 = vpop.f32.mrf.mxu0
    %v3641 = vadd.f32 %v3448, %v3640
    %v3642 = vpop.f32.mrf.mxu0
    %v3643 = vadd.f32 %v3450, %v3642
    %3644 = vmatprep.mubr.bf16.mxu0 %v1768
    %3645 = vmatmul.mubr.bf16.gmra.mxu0 %v1767
    %v3646 = vpop.f32.mrf.mxu0
    %v3647 = vadd.f32 %v3454, %v3646
    %v3648 = vpop.f32.mrf.mxu0
    %v3649 = vadd.f32 %v3456, %v3648
    %v3650 = vpop.f32.mrf.mxu0
    %v3651 = vadd.f32 %v3458, %v3650
    %v3652 = vpop.f32.mrf.mxu0
    %v3653 = vadd.f32 %v3460, %v3652
    %3654 = vmatprep.mubr.bf16.mxu0 %v1772
    %3655 = vmatmul.mubr.bf16.gmra.mxu0 %v1771
    %v3656 = vpop.f32.mrf.mxu0
    %v3657 = vadd.f32 %v3464, %v3656
    %v3658 = vpop.f32.mrf.mxu0
    %v3659 = vadd.f32 %v3466, %v3658
    %v3660 = vpop.f32.mrf.mxu0
    %v3661 = vadd.f32 %v3468, %v3660
    %v3662 = vpop.f32.mrf.mxu0
    %v3663 = vadd.f32 %v3470, %v3662
    %3664 = vmatprep.mubr.bf16.mxu0 %v1776
    %3665 = vmatmul.mubr.bf16.gmra.mxu0 %v1775
    %v3666 = vpop.f32.mrf.mxu0
    %v3667 = vadd.f32 %v3474, %v3666
    %v3668 = vpop.f32.mrf.mxu0
    %v3669 = vadd.f32 %v3476, %v3668
    %v3670 = vpop.f32.mrf.mxu0
    %v3671 = vadd.f32 %v3478, %v3670
    %v3672 = vpop.f32.mrf.mxu0
    %v3673 = vadd.f32 %v3480, %v3672
    %3674 = vmatprep.mubr.bf16.mxu0 %v1780
    %3675 = vmatmul.mubr.bf16.gmra.mxu0 %v1779
    %v3676 = vpop.f32.mrf.mxu0
    %v3677 = vadd.f32 %v3484, %v3676
    %v3678 = vpop.f32.mrf.mxu0
    %v3679 = vadd.f32 %v3486, %v3678
    %v3680 = vpop.f32.mrf.mxu0
    %v3681 = vadd.f32 %v3488, %v3680
    %v3682 = vpop.f32.mrf.mxu0
    %v3683 = vadd.f32 %v3490, %v3682
    %3684 = vmatprep.mubr.bf16.mxu0 %v1784
    %3685 = vmatmul.mubr.bf16.gmra.mxu0 %v1783
    %v3686 = vpop.f32.mrf.mxu0
    %v3687 = vadd.f32 %v3494, %v3686
    %v3688 = vpop.f32.mrf.mxu0
    %v3689 = vadd.f32 %v3496, %v3688
    %v3690 = vpop.f32.mrf.mxu0
    %v3691 = vadd.f32 %v3498, %v3690
    %v3692 = vpop.f32.mrf.mxu0
    %v3693 = vadd.f32 %v3500, %v3692
    %3694 = vmatprep.mubr.bf16.mxu0 %v1788
    %3695 = vmatmul.mubr.bf16.gmra.mxu0 %v1787
    %v3696 = vpop.f32.mrf.mxu0
    %v3697 = vadd.f32 %v3504, %v3696
    %v3698 = vpop.f32.mrf.mxu0
    %v3699 = vadd.f32 %v3506, %v3698
    %v3700 = vpop.f32.mrf.mxu0
    %v3701 = vadd.f32 %v3508, %v3700
    %v3702 = vpop.f32.mrf.mxu0
    %v3703 = vadd.f32 %v3510, %v3702
    %3704 = vmatprep.mubr.bf16.mxu0 %v1792
    %3705 = vmatmul.mubr.bf16.gmra.mxu0 %v1791
    %v3706 = vpop.f32.mrf.mxu0
    %v3707 = vadd.f32 %v3514, %v3706
    %v3708 = vpop.f32.mrf.mxu0
    %v3709 = vadd.f32 %v3516, %v3708
    %v3710 = vpop.f32.mrf.mxu0
    %v3711 = vadd.f32 %v3518, %v3710
    %v3712 = vpop.f32.mrf.mxu0
    %v3713 = vadd.f32 %v3520, %v3712
    %3714 = vmatprep.mubr.bf16.mxu0 %v1796
    %3715 = vmatmul.mubr.bf16.gmra.mxu0 %v1795
    %v3716 = vpop.f32.mrf.mxu0
    %v3717 = vadd.f32 %v3524, %v3716
    %v3718 = vpop.f32.mrf.mxu0
    %v3719 = vadd.f32 %v3526, %v3718
    %v3720 = vpop.f32.mrf.mxu0
    %v3721 = vadd.f32 %v3528, %v3720
    %v3722 = vpop.f32.mrf.mxu0
    %v3723 = vadd.f32 %v3530, %v3722
    %3724 = vmatprep.mubr.bf16.mxu0 %v1800
    %3725 = vmatmul.mubr.bf16.gmra.mxu0 %v1799
    %v3726 = vpop.f32.mrf.mxu0
    %v3727 = vadd.f32 %v3534, %v3726
    %v3728 = vpop.f32.mrf.mxu0
    %v3729 = vadd.f32 %v3536, %v3728
    %v3730 = vpop.f32.mrf.mxu0
    %v3731 = vadd.f32 %v3538, %v3730
    %v3732 = vpop.f32.mrf.mxu0
    %v3733 = vadd.f32 %v3540, %v3732
    %3734 = vmatprep.mubr.bf16.mxu0 %v1804
    %3735 = vmatmul.mubr.bf16.gmra.mxu0 %v1803
    %v3736 = vpop.f32.mrf.mxu0
    %v3737 = vadd.f32 %v3544, %v3736
    %v3738 = vpop.f32.mrf.mxu0
    %v3739 = vadd.f32 %v3546, %v3738
    %v3740 = vpop.f32.mrf.mxu0
    %v3741 = vadd.f32 %v3548, %v3740
    %v3742 = vpop.f32.mrf.mxu0
    %v3743 = vadd.f32 %v3550, %v3742
    %3744 = vmatprep.mubr.bf16.mxu0 %v1808
    %3745 = vmatmul.mubr.bf16.gmra.mxu0 %v1807
    %v3746 = vpop.f32.mrf.mxu0
    %v3747 = vadd.f32 %v3554, %v3746
    %v3748 = vpop.f32.mrf.mxu0
    %v3749 = vadd.f32 %v3556, %v3748
    %v3750 = vpop.f32.mrf.mxu0
    %v3751 = vadd.f32 %v3558, %v3750
    %v3752 = vpop.f32.mrf.mxu0
    %v3753 = vadd.f32 %v3560, %v3752
    %3754 = vmatprep.mubr.bf16.mxu0 %v1812
    %3755 = vmatmul.mubr.bf16.gmra.mxu0 %v1811
    %v3756 = vpop.f32.mrf.mxu0
    %v3757 = vadd.f32 %v3564, %v3756
    %v3758 = vpop.f32.mrf.mxu0
    %v3759 = vadd.f32 %v3566, %v3758
    %v3760 = vpop.f32.mrf.mxu0
    %v3761 = vadd.f32 %v3568, %v3760
    %v3762 = vpop.f32.mrf.mxu0
    %v3763 = vadd.f32 %v3570, %v3762
    %3764 = vmatprep.mubr.bf16.mxu0 %v1816
    %3765 = vmatmul.mubr.bf16.gmra.mxu0 %v1815
    %v3766 = vpop.f32.mrf.mxu0
    %v3767 = vadd.f32 %v3574, %v3766
    %v3768 = vpop.f32.mrf.mxu0
    %v3769 = vadd.f32 %v3576, %v3768
    %v3770 = vpop.f32.mrf.mxu0
    %v3771 = vadd.f32 %v3578, %v3770
    %v3772 = vpop.f32.mrf.mxu0
    %v3773 = vadd.f32 %v3580, %v3772
    %3774 = vmatprep.mubr.bf16.mxu0 %v1820
    %3775 = vmatmul.mubr.bf16.gmra.mxu0 %v1819
    %v3776 = vpop.f32.mrf.mxu0
    %v3777 = vadd.f32 %v3584, %v3776
    %v3778 = vpop.f32.mrf.mxu0
    %v3779 = vadd.f32 %v3586, %v3778
    %v3780 = vpop.f32.mrf.mxu0
    %v3781 = vadd.f32 %v3588, %v3780
    %v3782 = vpop.f32.mrf.mxu0
    %v3783 = vadd.f32 %v3590, %v3782
    %3784 = vdwg.mxu0
    %3785 = vmatprep.subr.bf16.mxu0 %v2946
    %3786 = vmatpush1.bf16.msra.mxu0 %v2945
    %3787 = vmatprep.subr.bf16.mxu0 %v2938
    %3788 = vmatpush1.bf16.msra.mxu0 %v2937
    %3789 = vmatprep.subr.bf16.mxu0 %v2930
    %3790 = vmatpush1.bf16.msra.mxu0 %v2929
    %3791 = vmatprep.subr.bf16.mxu0 %v2922
    %3792 = vmatpush1.bf16.msra.mxu0 %v2921
    %3793 = vmatprep.subr.bf16.mxu0 %v2914
    %3794 = vmatpush1.bf16.msra.mxu0 %v2913
    %3795 = vmatprep.subr.bf16.mxu0 %v2906
    %3796 = vmatpush1.bf16.msra.mxu0 %v2905
    %3797 = vmatprep.subr.bf16.mxu0 %v2898
    %3798 = vmatpush1.bf16.msra.mxu0 %v2897
    %3799 = vmatprep.subr.bf16.mxu0 %v2890
    %3800 = vmatpush1.bf16.msra.mxu0 %v2889
    %3801 = vmatprep.subr.bf16.mxu0 %v3010
    %3802 = vmatpush2.bf16.msra.mxu0 %v3009
    %3803 = vmatprep.subr.bf16.mxu0 %v3002
    %3804 = vmatpush2.bf16.msra.mxu0 %v3001
    %3805 = vmatprep.subr.bf16.mxu0 %v2994
    %3806 = vmatpush2.bf16.msra.mxu0 %v2993
    %3807 = vmatprep.subr.bf16.mxu0 %v2986
    %3808 = vmatpush2.bf16.msra.mxu0 %v2985
    %3809 = vmatprep.subr.bf16.mxu0 %v2978
    %3810 = vmatpush2.bf16.msra.mxu0 %v2977
    %3811 = vmatprep.subr.bf16.mxu0 %v2970
    %3812 = vmatpush2.bf16.msra.mxu0 %v2969
    %3813 = vmatprep.subr.bf16.mxu0 %v2962
    %3814 = vmatpush2.bf16.msra.mxu0 %v2961
    %3815 = vmatprep.subr.bf16.mxu0 %v2954
    %3816 = vmatpush2.bf16.msra.mxu0 %v2953
    %3817 = vmatprep.mubr.bf16.mxu0 %v1758
    %3818 = vmatmul.mubr.bf16.gmra.mxu0 %v1757
    %v3819 = vpop.f32.mrf.mxu0
    %v3820 = vadd.f32 %v2090, %v3819
    %v3821 = vpop.f32.mrf.mxu0
    %v3822 = vadd.f32 %v2094, %v3821
    %v3823 = vpop.f32.mrf.mxu0
    %v3824 = vadd.f32 %v2090, %v3823
    %v3825 = vpop.f32.mrf.mxu0
    %v3826 = vadd.f32 %v2094, %v3825
    %3827 = vmatprep.mubr.bf16.mxu0 %v1762
    %3828 = vmatmul.mubr.bf16.gmra.mxu0 %v1761
    %v3829 = vpop.f32.mrf.mxu0
    %v3830 = vadd.f32 %v2090, %v3829
    %v3831 = vpop.f32.mrf.mxu0
    %v3832 = vadd.f32 %v2094, %v3831
    %v3833 = vpop.f32.mrf.mxu0
    %v3834 = vadd.f32 %v2090, %v3833
    %v3835 = vpop.f32.mrf.mxu0
    %v3836 = vadd.f32 %v2094, %v3835
    %3837 = vmatprep.mubr.bf16.mxu0 %v1766
    %3838 = vmatmul.mubr.bf16.gmra.mxu0 %v1765
    %v3839 = vpop.f32.mrf.mxu0
    %v3840 = vadd.f32 %v2090, %v3839
    %v3841 = vpop.f32.mrf.mxu0
    %v3842 = vadd.f32 %v2094, %v3841
    %v3843 = vpop.f32.mrf.mxu0
    %v3844 = vadd.f32 %v2090, %v3843
    %v3845 = vpop.f32.mrf.mxu0
    %v3846 = vadd.f32 %v2094, %v3845
    %3847 = vmatprep.mubr.bf16.mxu0 %v1770
    %3848 = vmatmul.mubr.bf16.gmra.mxu0 %v1769
    %v3849 = vpop.f32.mrf.mxu0
    %v3850 = vadd.f32 %v2090, %v3849
    %v3851 = vpop.f32.mrf.mxu0
    %v3852 = vadd.f32 %v2094, %v3851
    %v3853 = vpop.f32.mrf.mxu0
    %v3854 = vadd.f32 %v2090, %v3853
    %v3855 = vpop.f32.mrf.mxu0
    %v3856 = vadd.f32 %v2094, %v3855
    %3857 = vmatprep.mubr.bf16.mxu0 %v1774
    %3858 = vmatmul.mubr.bf16.gmra.mxu0 %v1773
    %v3859 = vpop.f32.mrf.mxu0
    %v3860 = vadd.f32 %v2090, %v3859
    %v3861 = vpop.f32.mrf.mxu0
    %v3862 = vadd.f32 %v2094, %v3861
    %v3863 = vpop.f32.mrf.mxu0
    %v3864 = vadd.f32 %v2090, %v3863
    %v3865 = vpop.f32.mrf.mxu0
    %v3866 = vadd.f32 %v2094, %v3865
    %3867 = vmatprep.mubr.bf16.mxu0 %v1778
    %3868 = vmatmul.mubr.bf16.gmra.mxu0 %v1777
    %v3869 = vpop.f32.mrf.mxu0
    %v3870 = vadd.f32 %v2090, %v3869
    %v3871 = vpop.f32.mrf.mxu0
    %v3872 = vadd.f32 %v2094, %v3871
    %v3873 = vpop.f32.mrf.mxu0
    %v3874 = vadd.f32 %v2090, %v3873
    %v3875 = vpop.f32.mrf.mxu0
    %v3876 = vadd.f32 %v2094, %v3875
    %3877 = vmatprep.mubr.bf16.mxu0 %v1782
    %3878 = vmatmul.mubr.bf16.gmra.mxu0 %v1781
    %v3879 = vpop.f32.mrf.mxu0
    %v3880 = vadd.f32 %v2090, %v3879
    %v3881 = vpop.f32.mrf.mxu0
    %v3882 = vadd.f32 %v2094, %v3881
    %v3883 = vpop.f32.mrf.mxu0
    %v3884 = vadd.f32 %v2090, %v3883
    %v3885 = vpop.f32.mrf.mxu0
    %v3886 = vadd.f32 %v2094, %v3885
    %3887 = vmatprep.mubr.bf16.mxu0 %v1786
    %3888 = vmatmul.mubr.bf16.gmra.mxu0 %v1785
    %v3889 = vpop.f32.mrf.mxu0
    %v3890 = vadd.f32 %v2090, %v3889
    %v3891 = vpop.f32.mrf.mxu0
    %v3892 = vadd.f32 %v2094, %v3891
    %v3893 = vpop.f32.mrf.mxu0
    %v3894 = vadd.f32 %v2090, %v3893
    %v3895 = vpop.f32.mrf.mxu0
    %v3896 = vadd.f32 %v2094, %v3895
    %3897 = vmatprep.mubr.bf16.mxu0 %v1790
    %3898 = vmatmul.mubr.bf16.gmra.mxu0 %v1789
    %v3899 = vpop.f32.mrf.mxu0
    %v3900 = vadd.f32 %v2090, %v3899
    %v3901 = vpop.f32.mrf.mxu0
    %v3902 = vadd.f32 %v2094, %v3901
    %v3903 = vpop.f32.mrf.mxu0
    %v3904 = vadd.f32 %v2090, %v3903
    %v3905 = vpop.f32.mrf.mxu0
    %v3906 = vadd.f32 %v2094, %v3905
    %3907 = vmatprep.mubr.bf16.mxu0 %v1794
    %3908 = vmatmul.mubr.bf16.gmra.mxu0 %v1793
    %v3909 = vpop.f32.mrf.mxu0
    %v3910 = vadd.f32 %v2090, %v3909
    %v3911 = vpop.f32.mrf.mxu0
    %v3912 = vadd.f32 %v2094, %v3911
    %v3913 = vpop.f32.mrf.mxu0
    %v3914 = vadd.f32 %v2090, %v3913
    %v3915 = vpop.f32.mrf.mxu0
    %v3916 = vadd.f32 %v2094, %v3915
    %3917 = vmatprep.mubr.bf16.mxu0 %v1798
    %3918 = vmatmul.mubr.bf16.gmra.mxu0 %v1797
    %v3919 = vpop.f32.mrf.mxu0
    %v3920 = vadd.f32 %v2090, %v3919
    %v3921 = vpop.f32.mrf.mxu0
    %v3922 = vadd.f32 %v2094, %v3921
    %v3923 = vpop.f32.mrf.mxu0
    %v3924 = vadd.f32 %v2090, %v3923
    %v3925 = vpop.f32.mrf.mxu0
    %v3926 = vadd.f32 %v2094, %v3925
    %3927 = vmatprep.mubr.bf16.mxu0 %v1802
    %3928 = vmatmul.mubr.bf16.gmra.mxu0 %v1801
    %v3929 = vpop.f32.mrf.mxu0
    %v3930 = vadd.f32 %v2090, %v3929
    %v3931 = vpop.f32.mrf.mxu0
    %v3932 = vadd.f32 %v2094, %v3931
    %v3933 = vpop.f32.mrf.mxu0
    %v3934 = vadd.f32 %v2090, %v3933
    %v3935 = vpop.f32.mrf.mxu0
    %v3936 = vadd.f32 %v2094, %v3935
    %3937 = vmatprep.mubr.bf16.mxu0 %v1806
    %3938 = vmatmul.mubr.bf16.gmra.mxu0 %v1805
    %v3939 = vpop.f32.mrf.mxu0
    %v3940 = vadd.f32 %v2090, %v3939
    %v3941 = vpop.f32.mrf.mxu0
    %v3942 = vadd.f32 %v2094, %v3941
    %v3943 = vpop.f32.mrf.mxu0
    %v3944 = vadd.f32 %v2090, %v3943
    %v3945 = vpop.f32.mrf.mxu0
    %v3946 = vadd.f32 %v2094, %v3945
    %3947 = vmatprep.mubr.bf16.mxu0 %v1810
    %3948 = vmatmul.mubr.bf16.gmra.mxu0 %v1809
    %v3949 = vpop.f32.mrf.mxu0
    %v3950 = vadd.f32 %v2090, %v3949
    %v3951 = vpop.f32.mrf.mxu0
    %v3952 = vadd.f32 %v2094, %v3951
    %v3953 = vpop.f32.mrf.mxu0
    %v3954 = vadd.f32 %v2090, %v3953
    %v3955 = vpop.f32.mrf.mxu0
    %v3956 = vadd.f32 %v2094, %v3955
    %3957 = vmatprep.mubr.bf16.mxu0 %v1814
    %3958 = vmatmul.mubr.bf16.gmra.mxu0 %v1813
    %v3959 = vpop.f32.mrf.mxu0
    %v3960 = vadd.f32 %v2090, %v3959
    %v3961 = vpop.f32.mrf.mxu0
    %v3962 = vadd.f32 %v2094, %v3961
    %v3963 = vpop.f32.mrf.mxu0
    %v3964 = vadd.f32 %v2090, %v3963
    %v3965 = vpop.f32.mrf.mxu0
    %v3966 = vadd.f32 %v2094, %v3965
    %3967 = vmatprep.mubr.bf16.mxu0 %v1818
    %3968 = vmatmul.mubr.bf16.gmra.mxu0 %v1817
    %v3969 = vpop.f32.mrf.mxu0
    %v3970 = vadd.f32 %v2090, %v3969
    %v3971 = vpop.f32.mrf.mxu0
    %v3972 = vadd.f32 %v2094, %v3971
    %v3973 = vpop.f32.mrf.mxu0
    %v3974 = vadd.f32 %v2090, %v3973
    %v3975 = vpop.f32.mrf.mxu0
    %v3976 = vadd.f32 %v2094, %v3975
    %3977 = vdwg.mxu0
    %3978 = vmatprep.subr.bf16.mxu0 %v3074
    %3979 = vmatpush1.bf16.msra.mxu0 %v3073
    %3980 = vmatprep.subr.bf16.mxu0 %v3066
    %3981 = vmatpush1.bf16.msra.mxu0 %v3065
    %3982 = vmatprep.subr.bf16.mxu0 %v3058
    %3983 = vmatpush1.bf16.msra.mxu0 %v3057
    %3984 = vmatprep.subr.bf16.mxu0 %v3050
    %3985 = vmatpush1.bf16.msra.mxu0 %v3049
    %3986 = vmatprep.subr.bf16.mxu0 %v3042
    %3987 = vmatpush1.bf16.msra.mxu0 %v3041
    %3988 = vmatprep.subr.bf16.mxu0 %v3034
    %3989 = vmatpush1.bf16.msra.mxu0 %v3033
    %3990 = vmatprep.subr.bf16.mxu0 %v3026
    %3991 = vmatpush1.bf16.msra.mxu0 %v3025
    %3992 = vmatprep.subr.bf16.mxu0 %v3018
    %3993 = vmatpush1.bf16.msra.mxu0 %v3017
    %3994 = vmatprep.subr.bf16.mxu0 %v3138
    %3995 = vmatpush2.bf16.msra.mxu0 %v3137
    %3996 = vmatprep.subr.bf16.mxu0 %v3130
    %3997 = vmatpush2.bf16.msra.mxu0 %v3129
    %3998 = vmatprep.subr.bf16.mxu0 %v3122
    %3999 = vmatpush2.bf16.msra.mxu0 %v3121
    %4000 = vmatprep.subr.bf16.mxu0 %v3114
    %4001 = vmatpush2.bf16.msra.mxu0 %v3113
    %4002 = vmatprep.subr.bf16.mxu0 %v3106
    %4003 = vmatpush2.bf16.msra.mxu0 %v3105
    %4004 = vmatprep.subr.bf16.mxu0 %v3098
    %4005 = vmatpush2.bf16.msra.mxu0 %v3097
    %4006 = vmatprep.subr.bf16.mxu0 %v3090
    %4007 = vmatpush2.bf16.msra.mxu0 %v3089
    %4008 = vmatprep.subr.bf16.mxu0 %v3082
    %4009 = vmatpush2.bf16.msra.mxu0 %v3081
    %4010 = vmatprep.mubr.bf16.mxu0 %v1760
    %4011 = vmatmul.mubr.bf16.gmra.mxu0 %v1759
    %v4012 = vpop.f32.mrf.mxu0
    %v4013 = vadd.f32 %v3820, %v4012
    %v4014 = vpop.f32.mrf.mxu0
    %v4015 = vadd.f32 %v3822, %v4014
    %v4016 = vpop.f32.mrf.mxu0
    %v4017 = vadd.f32 %v3824, %v4016
    %v4018 = vpop.f32.mrf.mxu0
    %v4019 = vadd.f32 %v3826, %v4018
    %4020 = vmatprep.mubr.bf16.mxu0 %v1764
    %4021 = vmatmul.mubr.bf16.gmra.mxu0 %v1763
    %v4022 = vpop.f32.mrf.mxu0
    %v4023 = vadd.f32 %v3830, %v4022
    %v4024 = vpop.f32.mrf.mxu0
    %v4025 = vadd.f32 %v3832, %v4024
    %v4026 = vpop.f32.mrf.mxu0
    %v4027 = vadd.f32 %v3834, %v4026
    %v4028 = vpop.f32.mrf.mxu0
    %v4029 = vadd.f32 %v3836, %v4028
    %4030 = vmatprep.mubr.bf16.mxu0 %v1768
    %4031 = vmatmul.mubr.bf16.gmra.mxu0 %v1767
    %v4032 = vpop.f32.mrf.mxu0
    %v4033 = vadd.f32 %v3840, %v4032
    %v4034 = vpop.f32.mrf.mxu0
    %v4035 = vadd.f32 %v3842, %v4034
    %v4036 = vpop.f32.mrf.mxu0
    %v4037 = vadd.f32 %v3844, %v4036
    %v4038 = vpop.f32.mrf.mxu0
    %v4039 = vadd.f32 %v3846, %v4038
    %4040 = vmatprep.mubr.bf16.mxu0 %v1772
    %4041 = vmatmul.mubr.bf16.gmra.mxu0 %v1771
    %v4042 = vpop.f32.mrf.mxu0
    %v4043 = vadd.f32 %v3850, %v4042
    %v4044 = vpop.f32.mrf.mxu0
    %v4045 = vadd.f32 %v3852, %v4044
    %v4046 = vpop.f32.mrf.mxu0
    %v4047 = vadd.f32 %v3854, %v4046
    %v4048 = vpop.f32.mrf.mxu0
    %v4049 = vadd.f32 %v3856, %v4048
    %4050 = vmatprep.mubr.bf16.mxu0 %v1776
    %4051 = vmatmul.mubr.bf16.gmra.mxu0 %v1775
    %v4052 = vpop.f32.mrf.mxu0
    %v4053 = vadd.f32 %v3860, %v4052
    %v4054 = vpop.f32.mrf.mxu0
    %v4055 = vadd.f32 %v3862, %v4054
    %v4056 = vpop.f32.mrf.mxu0
    %v4057 = vadd.f32 %v3864, %v4056
    %v4058 = vpop.f32.mrf.mxu0
    %v4059 = vadd.f32 %v3866, %v4058
    %4060 = vmatprep.mubr.bf16.mxu0 %v1780
    %4061 = vmatmul.mubr.bf16.gmra.mxu0 %v1779
    %v4062 = vpop.f32.mrf.mxu0
    %v4063 = vadd.f32 %v3870, %v4062
    %v4064 = vpop.f32.mrf.mxu0
    %v4065 = vadd.f32 %v3872, %v4064
    %v4066 = vpop.f32.mrf.mxu0
    %v4067 = vadd.f32 %v3874, %v4066
    %v4068 = vpop.f32.mrf.mxu0
    %v4069 = vadd.f32 %v3876, %v4068
    %4070 = vmatprep.mubr.bf16.mxu0 %v1784
    %4071 = vmatmul.mubr.bf16.gmra.mxu0 %v1783
    %v4072 = vpop.f32.mrf.mxu0
    %v4073 = vadd.f32 %v3880, %v4072
    %v4074 = vpop.f32.mrf.mxu0
    %v4075 = vadd.f32 %v3882, %v4074
    %v4076 = vpop.f32.mrf.mxu0
    %v4077 = vadd.f32 %v3884, %v4076
    %v4078 = vpop.f32.mrf.mxu0
    %v4079 = vadd.f32 %v3886, %v4078
    %4080 = vmatprep.mubr.bf16.mxu0 %v1788
    %4081 = vmatmul.mubr.bf16.gmra.mxu0 %v1787
    %v4082 = vpop.f32.mrf.mxu0
    %v4083 = vadd.f32 %v3890, %v4082
    %v4084 = vpop.f32.mrf.mxu0
    %v4085 = vadd.f32 %v3892, %v4084
    %v4086 = vpop.f32.mrf.mxu0
    %v4087 = vadd.f32 %v3894, %v4086
    %v4088 = vpop.f32.mrf.mxu0
    %v4089 = vadd.f32 %v3896, %v4088
    %4090 = vmatprep.mubr.bf16.mxu0 %v1792
    %4091 = vmatmul.mubr.bf16.gmra.mxu0 %v1791
    %v4092 = vpop.f32.mrf.mxu0
    %v4093 = vadd.f32 %v3900, %v4092
    %v4094 = vpop.f32.mrf.mxu0
    %v4095 = vadd.f32 %v3902, %v4094
    %v4096 = vpop.f32.mrf.mxu0
    %v4097 = vadd.f32 %v3904, %v4096
    %v4098 = vpop.f32.mrf.mxu0
    %v4099 = vadd.f32 %v3906, %v4098
    %4100 = vmatprep.mubr.bf16.mxu0 %v1796
    %4101 = vmatmul.mubr.bf16.gmra.mxu0 %v1795
    %v4102 = vpop.f32.mrf.mxu0
    %v4103 = vadd.f32 %v3910, %v4102
    %v4104 = vpop.f32.mrf.mxu0
    %v4105 = vadd.f32 %v3912, %v4104
    %v4106 = vpop.f32.mrf.mxu0
    %v4107 = vadd.f32 %v3914, %v4106
    %v4108 = vpop.f32.mrf.mxu0
    %v4109 = vadd.f32 %v3916, %v4108
    %4110 = vmatprep.mubr.bf16.mxu0 %v1800
    %4111 = vmatmul.mubr.bf16.gmra.mxu0 %v1799
    %v4112 = vpop.f32.mrf.mxu0
    %v4113 = vadd.f32 %v3920, %v4112
    %v4114 = vpop.f32.mrf.mxu0
    %v4115 = vadd.f32 %v3922, %v4114
    %v4116 = vpop.f32.mrf.mxu0
    %v4117 = vadd.f32 %v3924, %v4116
    %v4118 = vpop.f32.mrf.mxu0
    %v4119 = vadd.f32 %v3926, %v4118
    %4120 = vmatprep.mubr.bf16.mxu0 %v1804
    %4121 = vmatmul.mubr.bf16.gmra.mxu0 %v1803
    %v4122 = vpop.f32.mrf.mxu0
    %v4123 = vadd.f32 %v3930, %v4122
    %v4124 = vpop.f32.mrf.mxu0
    %v4125 = vadd.f32 %v3932, %v4124
    %v4126 = vpop.f32.mrf.mxu0
    %v4127 = vadd.f32 %v3934, %v4126
    %v4128 = vpop.f32.mrf.mxu0
    %v4129 = vadd.f32 %v3936, %v4128
    %4130 = vmatprep.mubr.bf16.mxu0 %v1808
    %4131 = vmatmul.mubr.bf16.gmra.mxu0 %v1807
    %v4132 = vpop.f32.mrf.mxu0
    %v4133 = vadd.f32 %v3940, %v4132
    %v4134 = vpop.f32.mrf.mxu0
    %v4135 = vadd.f32 %v3942, %v4134
    %v4136 = vpop.f32.mrf.mxu0
    %v4137 = vadd.f32 %v3944, %v4136
    %v4138 = vpop.f32.mrf.mxu0
    %v4139 = vadd.f32 %v3946, %v4138
    %4140 = vmatprep.mubr.bf16.mxu0 %v1812
    %4141 = vmatmul.mubr.bf16.gmra.mxu0 %v1811
    %v4142 = vpop.f32.mrf.mxu0
    %v4143 = vadd.f32 %v3950, %v4142
    %v4144 = vpop.f32.mrf.mxu0
    %v4145 = vadd.f32 %v3952, %v4144
    %v4146 = vpop.f32.mrf.mxu0
    %v4147 = vadd.f32 %v3954, %v4146
    %v4148 = vpop.f32.mrf.mxu0
    %v4149 = vadd.f32 %v3956, %v4148
    %4150 = vmatprep.mubr.bf16.mxu0 %v1816
    %4151 = vmatmul.mubr.bf16.gmra.mxu0 %v1815
    %v4152 = vpop.f32.mrf.mxu0
    %v4153 = vadd.f32 %v3960, %v4152
    %v4154 = vpop.f32.mrf.mxu0
    %v4155 = vadd.f32 %v3962, %v4154
    %v4156 = vpop.f32.mrf.mxu0
    %v4157 = vadd.f32 %v3964, %v4156
    %v4158 = vpop.f32.mrf.mxu0
    %v4159 = vadd.f32 %v3966, %v4158
    %4160 = vmatprep.mubr.bf16.mxu0 %v1820
    %4161 = vmatmul.mubr.bf16.gmra.mxu0 %v1819
    %v4162 = vpop.f32.mrf.mxu0
    %v4163 = vadd.f32 %v3970, %v4162
    %v4164 = vpop.f32.mrf.mxu0
    %v4165 = vadd.f32 %v3972, %v4164
    %v4166 = vpop.f32.mrf.mxu0
    %v4167 = vadd.f32 %v3974, %v4166
    %v4168 = vpop.f32.mrf.mxu0
    %v4169 = vadd.f32 %v3976, %v4168
    %4170 = vdwg.mxu0
    %4171 = vmatprep.subr.bf16.mxu0 %v2948
    %4172 = vmatpush1.bf16.msra.mxu0 %v2947
    %4173 = vmatprep.subr.bf16.mxu0 %v2940
    %4174 = vmatpush1.bf16.msra.mxu0 %v2939
    %4175 = vmatprep.subr.bf16.mxu0 %v2932
    %4176 = vmatpush1.bf16.msra.mxu0 %v2931
    %4177 = vmatprep.subr.bf16.mxu0 %v2924
    %4178 = vmatpush1.bf16.msra.mxu0 %v2923
    %4179 = vmatprep.subr.bf16.mxu0 %v2916
    %4180 = vmatpush1.bf16.msra.mxu0 %v2915
    %4181 = vmatprep.subr.bf16.mxu0 %v2908
    %4182 = vmatpush1.bf16.msra.mxu0 %v2907
    %4183 = vmatprep.subr.bf16.mxu0 %v2900
    %4184 = vmatpush1.bf16.msra.mxu0 %v2899
    %4185 = vmatprep.subr.bf16.mxu0 %v2892
    %4186 = vmatpush1.bf16.msra.mxu0 %v2891
    %4187 = vmatprep.subr.bf16.mxu0 %v3012
    %4188 = vmatpush2.bf16.msra.mxu0 %v3011
    %4189 = vmatprep.subr.bf16.mxu0 %v3004
    %4190 = vmatpush2.bf16.msra.mxu0 %v3003
    %4191 = vmatprep.subr.bf16.mxu0 %v2996
    %4192 = vmatpush2.bf16.msra.mxu0 %v2995
    %4193 = vmatprep.subr.bf16.mxu0 %v2988
    %4194 = vmatpush2.bf16.msra.mxu0 %v2987
    %4195 = vmatprep.subr.bf16.mxu0 %v2980
    %4196 = vmatpush2.bf16.msra.mxu0 %v2979
    %4197 = vmatprep.subr.bf16.mxu0 %v2972
    %4198 = vmatpush2.bf16.msra.mxu0 %v2971
    %4199 = vmatprep.subr.bf16.mxu0 %v2964
    %4200 = vmatpush2.bf16.msra.mxu0 %v2963
    %4201 = vmatprep.subr.bf16.mxu0 %v2956
    %4202 = vmatpush2.bf16.msra.mxu0 %v2955
    %4203 = vmatprep.mubr.bf16.mxu0 %v1758
    %4204 = vmatmul.mubr.bf16.gmra.mxu0 %v1757
    %v4205 = vpop.f32.mrf.mxu0
    %v4206 = vadd.f32 %v2098, %v4205
    %v4207 = vpop.f32.mrf.mxu0
    %v4208 = vadd.f32 %v2102, %v4207
    %v4209 = vpop.f32.mrf.mxu0
    %v4210 = vadd.f32 %v2098, %v4209
    %v4211 = vpop.f32.mrf.mxu0
    %v4212 = vadd.f32 %v2102, %v4211
    %4213 = vmatprep.mubr.bf16.mxu0 %v1762
    %4214 = vmatmul.mubr.bf16.gmra.mxu0 %v1761
    %v4215 = vpop.f32.mrf.mxu0
    %v4216 = vadd.f32 %v2098, %v4215
    %v4217 = vpop.f32.mrf.mxu0
    %v4218 = vadd.f32 %v2102, %v4217
    %v4219 = vpop.f32.mrf.mxu0
    %v4220 = vadd.f32 %v2098, %v4219
    %v4221 = vpop.f32.mrf.mxu0
    %v4222 = vadd.f32 %v2102, %v4221
    %4223 = vmatprep.mubr.bf16.mxu0 %v1766
    %4224 = vmatmul.mubr.bf16.gmra.mxu0 %v1765
    %v4225 = vpop.f32.mrf.mxu0
    %v4226 = vadd.f32 %v2098, %v4225
    %v4227 = vpop.f32.mrf.mxu0
    %v4228 = vadd.f32 %v2102, %v4227
    %v4229 = vpop.f32.mrf.mxu0
    %v4230 = vadd.f32 %v2098, %v4229
    %v4231 = vpop.f32.mrf.mxu0
    %v4232 = vadd.f32 %v2102, %v4231
    %4233 = vmatprep.mubr.bf16.mxu0 %v1770
    %4234 = vmatmul.mubr.bf16.gmra.mxu0 %v1769
    %v4235 = vpop.f32.mrf.mxu0
    %v4236 = vadd.f32 %v2098, %v4235
    %v4237 = vpop.f32.mrf.mxu0
    %v4238 = vadd.f32 %v2102, %v4237
    %v4239 = vpop.f32.mrf.mxu0
    %v4240 = vadd.f32 %v2098, %v4239
    %v4241 = vpop.f32.mrf.mxu0
    %v4242 = vadd.f32 %v2102, %v4241
    %4243 = vmatprep.mubr.bf16.mxu0 %v1774
    %4244 = vmatmul.mubr.bf16.gmra.mxu0 %v1773
    %v4245 = vpop.f32.mrf.mxu0
    %v4246 = vadd.f32 %v2098, %v4245
    %v4247 = vpop.f32.mrf.mxu0
    %v4248 = vadd.f32 %v2102, %v4247
    %v4249 = vpop.f32.mrf.mxu0
    %v4250 = vadd.f32 %v2098, %v4249
    %v4251 = vpop.f32.mrf.mxu0
    %v4252 = vadd.f32 %v2102, %v4251
    %4253 = vmatprep.mubr.bf16.mxu0 %v1778
    %4254 = vmatmul.mubr.bf16.gmra.mxu0 %v1777
    %v4255 = vpop.f32.mrf.mxu0
    %v4256 = vadd.f32 %v2098, %v4255
    %v4257 = vpop.f32.mrf.mxu0
    %v4258 = vadd.f32 %v2102, %v4257
    %v4259 = vpop.f32.mrf.mxu0
    %v4260 = vadd.f32 %v2098, %v4259
    %v4261 = vpop.f32.mrf.mxu0
    %v4262 = vadd.f32 %v2102, %v4261
    %4263 = vmatprep.mubr.bf16.mxu0 %v1782
    %4264 = vmatmul.mubr.bf16.gmra.mxu0 %v1781
    %v4265 = vpop.f32.mrf.mxu0
    %v4266 = vadd.f32 %v2098, %v4265
    %v4267 = vpop.f32.mrf.mxu0
    %v4268 = vadd.f32 %v2102, %v4267
    %v4269 = vpop.f32.mrf.mxu0
    %v4270 = vadd.f32 %v2098, %v4269
    %v4271 = vpop.f32.mrf.mxu0
    %v4272 = vadd.f32 %v2102, %v4271
    %4273 = vmatprep.mubr.bf16.mxu0 %v1786
    %4274 = vmatmul.mubr.bf16.gmra.mxu0 %v1785
    %v4275 = vpop.f32.mrf.mxu0
    %v4276 = vadd.f32 %v2098, %v4275
    %v4277 = vpop.f32.mrf.mxu0
    %v4278 = vadd.f32 %v2102, %v4277
    %v4279 = vpop.f32.mrf.mxu0
    %v4280 = vadd.f32 %v2098, %v4279
    %v4281 = vpop.f32.mrf.mxu0
    %v4282 = vadd.f32 %v2102, %v4281
    %4283 = vmatprep.mubr.bf16.mxu0 %v1790
    %4284 = vmatmul.mubr.bf16.gmra.mxu0 %v1789
    %v4285 = vpop.f32.mrf.mxu0
    %v4286 = vadd.f32 %v2098, %v4285
    %v4287 = vpop.f32.mrf.mxu0
    %v4288 = vadd.f32 %v2102, %v4287
    %v4289 = vpop.f32.mrf.mxu0
    %v4290 = vadd.f32 %v2098, %v4289
    %v4291 = vpop.f32.mrf.mxu0
    %v4292 = vadd.f32 %v2102, %v4291
    %4293 = vmatprep.mubr.bf16.mxu0 %v1794
    %4294 = vmatmul.mubr.bf16.gmra.mxu0 %v1793
    %v4295 = vpop.f32.mrf.mxu0
    %v4296 = vadd.f32 %v2098, %v4295
    %v4297 = vpop.f32.mrf.mxu0
    %v4298 = vadd.f32 %v2102, %v4297
    %v4299 = vpop.f32.mrf.mxu0
    %v4300 = vadd.f32 %v2098, %v4299
    %v4301 = vpop.f32.mrf.mxu0
    %v4302 = vadd.f32 %v2102, %v4301
    %4303 = vmatprep.mubr.bf16.mxu0 %v1798
    %4304 = vmatmul.mubr.bf16.gmra.mxu0 %v1797
    %v4305 = vpop.f32.mrf.mxu0
    %v4306 = vadd.f32 %v2098, %v4305
    %v4307 = vpop.f32.mrf.mxu0
    %v4308 = vadd.f32 %v2102, %v4307
    %v4309 = vpop.f32.mrf.mxu0
    %v4310 = vadd.f32 %v2098, %v4309
    %v4311 = vpop.f32.mrf.mxu0
    %v4312 = vadd.f32 %v2102, %v4311
    %4313 = vmatprep.mubr.bf16.mxu0 %v1802
    %4314 = vmatmul.mubr.bf16.gmra.mxu0 %v1801
    %v4315 = vpop.f32.mrf.mxu0
    %v4316 = vadd.f32 %v2098, %v4315
    %v4317 = vpop.f32.mrf.mxu0
    %v4318 = vadd.f32 %v2102, %v4317
    %v4319 = vpop.f32.mrf.mxu0
    %v4320 = vadd.f32 %v2098, %v4319
    %v4321 = vpop.f32.mrf.mxu0
    %v4322 = vadd.f32 %v2102, %v4321
    %4323 = vmatprep.mubr.bf16.mxu0 %v1806
    %4324 = vmatmul.mubr.bf16.gmra.mxu0 %v1805
    %v4325 = vpop.f32.mrf.mxu0
    %v4326 = vadd.f32 %v2098, %v4325
    %v4327 = vpop.f32.mrf.mxu0
    %v4328 = vadd.f32 %v2102, %v4327
    %v4329 = vpop.f32.mrf.mxu0
    %v4330 = vadd.f32 %v2098, %v4329
    %v4331 = vpop.f32.mrf.mxu0
    %v4332 = vadd.f32 %v2102, %v4331
    %4333 = vmatprep.mubr.bf16.mxu0 %v1810
    %4334 = vmatmul.mubr.bf16.gmra.mxu0 %v1809
    %v4335 = vpop.f32.mrf.mxu0
    %v4336 = vadd.f32 %v2098, %v4335
    %v4337 = vpop.f32.mrf.mxu0
    %v4338 = vadd.f32 %v2102, %v4337
    %v4339 = vpop.f32.mrf.mxu0
    %v4340 = vadd.f32 %v2098, %v4339
    %v4341 = vpop.f32.mrf.mxu0
    %v4342 = vadd.f32 %v2102, %v4341
    %4343 = vmatprep.mubr.bf16.mxu0 %v1814
    %4344 = vmatmul.mubr.bf16.gmra.mxu0 %v1813
    %v4345 = vpop.f32.mrf.mxu0
    %v4346 = vadd.f32 %v2098, %v4345
    %v4347 = vpop.f32.mrf.mxu0
    %v4348 = vadd.f32 %v2102, %v4347
    %v4349 = vpop.f32.mrf.mxu0
    %v4350 = vadd.f32 %v2098, %v4349
    %v4351 = vpop.f32.mrf.mxu0
    %v4352 = vadd.f32 %v2102, %v4351
    %4353 = vmatprep.mubr.bf16.mxu0 %v1818
    %4354 = vmatmul.mubr.bf16.gmra.mxu0 %v1817
    %v4355 = vpop.f32.mrf.mxu0
    %v4356 = vadd.f32 %v2098, %v4355
    %v4357 = vpop.f32.mrf.mxu0
    %v4358 = vadd.f32 %v2102, %v4357
    %v4359 = vpop.f32.mrf.mxu0
    %v4360 = vadd.f32 %v2098, %v4359
    %v4361 = vpop.f32.mrf.mxu0
    %v4362 = vadd.f32 %v2102, %v4361
    %4363 = vdwg.mxu0
    %4364 = vmatprep.subr.bf16.mxu0 %v3076
    %4365 = vmatpush1.bf16.msra.mxu0 %v3075
    %4366 = vmatprep.subr.bf16.mxu0 %v3068
    %4367 = vmatpush1.bf16.msra.mxu0 %v3067
    %4368 = vmatprep.subr.bf16.mxu0 %v3060
    %4369 = vmatpush1.bf16.msra.mxu0 %v3059
    %4370 = vmatprep.subr.bf16.mxu0 %v3052
    %4371 = vmatpush1.bf16.msra.mxu0 %v3051
    %4372 = vmatprep.subr.bf16.mxu0 %v3044
    %4373 = vmatpush1.bf16.msra.mxu0 %v3043
    %4374 = vmatprep.subr.bf16.mxu0 %v3036
    %4375 = vmatpush1.bf16.msra.mxu0 %v3035
    %4376 = vmatprep.subr.bf16.mxu0 %v3028
    %4377 = vmatpush1.bf16.msra.mxu0 %v3027
    %4378 = vmatprep.subr.bf16.mxu0 %v3020
    %4379 = vmatpush1.bf16.msra.mxu0 %v3019
    %4380 = vmatprep.subr.bf16.mxu0 %v3140
    %4381 = vmatpush2.bf16.msra.mxu0 %v3139
    %4382 = vmatprep.subr.bf16.mxu0 %v3132
    %4383 = vmatpush2.bf16.msra.mxu0 %v3131
    %4384 = vmatprep.subr.bf16.mxu0 %v3124
    %4385 = vmatpush2.bf16.msra.mxu0 %v3123
    %4386 = vmatprep.subr.bf16.mxu0 %v3116
    %4387 = vmatpush2.bf16.msra.mxu0 %v3115
    %4388 = vmatprep.subr.bf16.mxu0 %v3108
    %4389 = vmatpush2.bf16.msra.mxu0 %v3107
    %4390 = vmatprep.subr.bf16.mxu0 %v3100
    %4391 = vmatpush2.bf16.msra.mxu0 %v3099
    %4392 = vmatprep.subr.bf16.mxu0 %v3092
    %4393 = vmatpush2.bf16.msra.mxu0 %v3091
    %4394 = vmatprep.subr.bf16.mxu0 %v3084
    %4395 = vmatpush2.bf16.msra.mxu0 %v3083
    %4396 = vmatprep.mubr.bf16.mxu0 %v1760
    %4397 = vmatmul.mubr.bf16.gmra.mxu0 %v1759
    %v4398 = vpop.f32.mrf.mxu0
    %v4399 = vadd.f32 %v4206, %v4398
    %v4400 = vpop.f32.mrf.mxu0
    %v4401 = vadd.f32 %v4208, %v4400
    %v4402 = vpop.f32.mrf.mxu0
    %v4403 = vadd.f32 %v4210, %v4402
    %v4404 = vpop.f32.mrf.mxu0
    %v4405 = vadd.f32 %v4212, %v4404
    %4406 = vmatprep.mubr.bf16.mxu0 %v1764
    %4407 = vmatmul.mubr.bf16.gmra.mxu0 %v1763
    %v4408 = vpop.f32.mrf.mxu0
    %v4409 = vadd.f32 %v4216, %v4408
    %v4410 = vpop.f32.mrf.mxu0
    %v4411 = vadd.f32 %v4218, %v4410
    %v4412 = vpop.f32.mrf.mxu0
    %v4413 = vadd.f32 %v4220, %v4412
    %v4414 = vpop.f32.mrf.mxu0
    %v4415 = vadd.f32 %v4222, %v4414
    %4416 = vmatprep.mubr.bf16.mxu0 %v1768
    %4417 = vmatmul.mubr.bf16.gmra.mxu0 %v1767
    %v4418 = vpop.f32.mrf.mxu0
    %v4419 = vadd.f32 %v4226, %v4418
    %v4420 = vpop.f32.mrf.mxu0
    %v4421 = vadd.f32 %v4228, %v4420
    %v4422 = vpop.f32.mrf.mxu0
    %v4423 = vadd.f32 %v4230, %v4422
    %v4424 = vpop.f32.mrf.mxu0
    %v4425 = vadd.f32 %v4232, %v4424
    %4426 = vmatprep.mubr.bf16.mxu0 %v1772
    %4427 = vmatmul.mubr.bf16.gmra.mxu0 %v1771
    %v4428 = vpop.f32.mrf.mxu0
    %v4429 = vadd.f32 %v4236, %v4428
    %v4430 = vpop.f32.mrf.mxu0
    %v4431 = vadd.f32 %v4238, %v4430
    %v4432 = vpop.f32.mrf.mxu0
    %v4433 = vadd.f32 %v4240, %v4432
    %v4434 = vpop.f32.mrf.mxu0
    %v4435 = vadd.f32 %v4242, %v4434
    %4436 = vmatprep.mubr.bf16.mxu0 %v1776
    %4437 = vmatmul.mubr.bf16.gmra.mxu0 %v1775
    %v4438 = vpop.f32.mrf.mxu0
    %v4439 = vadd.f32 %v4246, %v4438
    %v4440 = vpop.f32.mrf.mxu0
    %v4441 = vadd.f32 %v4248, %v4440
    %v4442 = vpop.f32.mrf.mxu0
    %v4443 = vadd.f32 %v4250, %v4442
    %v4444 = vpop.f32.mrf.mxu0
    %v4445 = vadd.f32 %v4252, %v4444
    %4446 = vmatprep.mubr.bf16.mxu0 %v1780
    %4447 = vmatmul.mubr.bf16.gmra.mxu0 %v1779
    %v4448 = vpop.f32.mrf.mxu0
    %v4449 = vadd.f32 %v4256, %v4448
    %v4450 = vpop.f32.mrf.mxu0
    %v4451 = vadd.f32 %v4258, %v4450
    %v4452 = vpop.f32.mrf.mxu0
    %v4453 = vadd.f32 %v4260, %v4452
    %v4454 = vpop.f32.mrf.mxu0
    %v4455 = vadd.f32 %v4262, %v4454
    %4456 = vmatprep.mubr.bf16.mxu0 %v1784
    %4457 = vmatmul.mubr.bf16.gmra.mxu0 %v1783
    %v4458 = vpop.f32.mrf.mxu0
    %v4459 = vadd.f32 %v4266, %v4458
    %v4460 = vpop.f32.mrf.mxu0
    %v4461 = vadd.f32 %v4268, %v4460
    %v4462 = vpop.f32.mrf.mxu0
    %v4463 = vadd.f32 %v4270, %v4462
    %v4464 = vpop.f32.mrf.mxu0
    %v4465 = vadd.f32 %v4272, %v4464
    %4466 = vmatprep.mubr.bf16.mxu0 %v1788
    %4467 = vmatmul.mubr.bf16.gmra.mxu0 %v1787
    %v4468 = vpop.f32.mrf.mxu0
    %v4469 = vadd.f32 %v4276, %v4468
    %v4470 = vpop.f32.mrf.mxu0
    %v4471 = vadd.f32 %v4278, %v4470
    %v4472 = vpop.f32.mrf.mxu0
    %v4473 = vadd.f32 %v4280, %v4472
    %v4474 = vpop.f32.mrf.mxu0
    %v4475 = vadd.f32 %v4282, %v4474
    %4476 = vmatprep.mubr.bf16.mxu0 %v1792
    %4477 = vmatmul.mubr.bf16.gmra.mxu0 %v1791
    %v4478 = vpop.f32.mrf.mxu0
    %v4479 = vadd.f32 %v4286, %v4478
    %v4480 = vpop.f32.mrf.mxu0
    %v4481 = vadd.f32 %v4288, %v4480
    %v4482 = vpop.f32.mrf.mxu0
    %v4483 = vadd.f32 %v4290, %v4482
    %v4484 = vpop.f32.mrf.mxu0
    %v4485 = vadd.f32 %v4292, %v4484
    %4486 = vmatprep.mubr.bf16.mxu0 %v1796
    %4487 = vmatmul.mubr.bf16.gmra.mxu0 %v1795
    %v4488 = vpop.f32.mrf.mxu0
    %v4489 = vadd.f32 %v4296, %v4488
    %v4490 = vpop.f32.mrf.mxu0
    %v4491 = vadd.f32 %v4298, %v4490
    %v4492 = vpop.f32.mrf.mxu0
    %v4493 = vadd.f32 %v4300, %v4492
    %v4494 = vpop.f32.mrf.mxu0
    %v4495 = vadd.f32 %v4302, %v4494
    %4496 = vmatprep.mubr.bf16.mxu0 %v1800
    %4497 = vmatmul.mubr.bf16.gmra.mxu0 %v1799
    %v4498 = vpop.f32.mrf.mxu0
    %v4499 = vadd.f32 %v4306, %v4498
    %v4500 = vpop.f32.mrf.mxu0
    %v4501 = vadd.f32 %v4308, %v4500
    %v4502 = vpop.f32.mrf.mxu0
    %v4503 = vadd.f32 %v4310, %v4502
    %v4504 = vpop.f32.mrf.mxu0
    %v4505 = vadd.f32 %v4312, %v4504
    %4506 = vmatprep.mubr.bf16.mxu0 %v1804
    %4507 = vmatmul.mubr.bf16.gmra.mxu0 %v1803
    %v4508 = vpop.f32.mrf.mxu0
    %v4509 = vadd.f32 %v4316, %v4508
    %v4510 = vpop.f32.mrf.mxu0
    %v4511 = vadd.f32 %v4318, %v4510
    %v4512 = vpop.f32.mrf.mxu0
    %v4513 = vadd.f32 %v4320, %v4512
    %v4514 = vpop.f32.mrf.mxu0
    %v4515 = vadd.f32 %v4322, %v4514
    %4516 = vmatprep.mubr.bf16.mxu0 %v1808
    %4517 = vmatmul.mubr.bf16.gmra.mxu0 %v1807
    %v4518 = vpop.f32.mrf.mxu0
    %v4519 = vadd.f32 %v4326, %v4518
    %v4520 = vpop.f32.mrf.mxu0
    %v4521 = vadd.f32 %v4328, %v4520
    %v4522 = vpop.f32.mrf.mxu0
    %v4523 = vadd.f32 %v4330, %v4522
    %v4524 = vpop.f32.mrf.mxu0
    %v4525 = vadd.f32 %v4332, %v4524
    %4526 = vmatprep.mubr.bf16.mxu0 %v1812
    %4527 = vmatmul.mubr.bf16.gmra.mxu0 %v1811
    %v4528 = vpop.f32.mrf.mxu0
    %v4529 = vadd.f32 %v4336, %v4528
    %v4530 = vpop.f32.mrf.mxu0
    %v4531 = vadd.f32 %v4338, %v4530
    %v4532 = vpop.f32.mrf.mxu0
    %v4533 = vadd.f32 %v4340, %v4532
    %v4534 = vpop.f32.mrf.mxu0
    %v4535 = vadd.f32 %v4342, %v4534
    %4536 = vmatprep.mubr.bf16.mxu0 %v1816
    %4537 = vmatmul.mubr.bf16.gmra.mxu0 %v1815
    %v4538 = vpop.f32.mrf.mxu0
    %v4539 = vadd.f32 %v4346, %v4538
    %v4540 = vpop.f32.mrf.mxu0
    %v4541 = vadd.f32 %v4348, %v4540
    %v4542 = vpop.f32.mrf.mxu0
    %v4543 = vadd.f32 %v4350, %v4542
    %v4544 = vpop.f32.mrf.mxu0
    %v4545 = vadd.f32 %v4352, %v4544
    %4546 = vmatprep.mubr.bf16.mxu0 %v1820
    %4547 = vmatmul.mubr.bf16.gmra.mxu0 %v1819
    %v4548 = vpop.f32.mrf.mxu0
    %v4549 = vadd.f32 %v4356, %v4548
    %v4550 = vpop.f32.mrf.mxu0
    %v4551 = vadd.f32 %v4358, %v4550
    %v4552 = vpop.f32.mrf.mxu0
    %v4553 = vadd.f32 %v4360, %v4552
    %v4554 = vpop.f32.mrf.mxu0
    %v4555 = vadd.f32 %v4362, %v4554
    %4556 = vdwg.mxu0
    %4557 = vmatprep.subr.bf16.mxu0 %v2950
    %4558 = vmatpush1.bf16.msra.mxu0 %v2949
    %4559 = vmatprep.subr.bf16.mxu0 %v2942
    %4560 = vmatpush1.bf16.msra.mxu0 %v2941
    %4561 = vmatprep.subr.bf16.mxu0 %v2934
    %4562 = vmatpush1.bf16.msra.mxu0 %v2933
    %4563 = vmatprep.subr.bf16.mxu0 %v2926
    %4564 = vmatpush1.bf16.msra.mxu0 %v2925
    %4565 = vmatprep.subr.bf16.mxu0 %v2918
    %4566 = vmatpush1.bf16.msra.mxu0 %v2917
    %4567 = vmatprep.subr.bf16.mxu0 %v2910
    %4568 = vmatpush1.bf16.msra.mxu0 %v2909
    %4569 = vmatprep.subr.bf16.mxu0 %v2902
    %4570 = vmatpush1.bf16.msra.mxu0 %v2901
    %4571 = vmatprep.subr.bf16.mxu0 %v2894
    %4572 = vmatpush1.bf16.msra.mxu0 %v2893
    %4573 = vmatprep.subr.bf16.mxu0 %v3014
    %4574 = vmatpush2.bf16.msra.mxu0 %v3013
    %4575 = vmatprep.subr.bf16.mxu0 %v3006
    %4576 = vmatpush2.bf16.msra.mxu0 %v3005
    %4577 = vmatprep.subr.bf16.mxu0 %v2998
    %4578 = vmatpush2.bf16.msra.mxu0 %v2997
    %4579 = vmatprep.subr.bf16.mxu0 %v2990
    %4580 = vmatpush2.bf16.msra.mxu0 %v2989
    %4581 = vmatprep.subr.bf16.mxu0 %v2982
    %4582 = vmatpush2.bf16.msra.mxu0 %v2981
    %4583 = vmatprep.subr.bf16.mxu0 %v2974
    %4584 = vmatpush2.bf16.msra.mxu0 %v2973
    %4585 = vmatprep.subr.bf16.mxu0 %v2966
    %4586 = vmatpush2.bf16.msra.mxu0 %v2965
    %4587 = vmatprep.subr.bf16.mxu0 %v2958
    %4588 = vmatpush2.bf16.msra.mxu0 %v2957
    %4589 = vmatprep.mubr.bf16.mxu0 %v1758
    %4590 = vmatmul.mubr.bf16.gmra.mxu0 %v1757
    %v4591 = vpop.f32.mrf.mxu0
    %v4592 = vadd.f32 %v2106, %v4591
    %v4593 = vpop.f32.mrf.mxu0
    %v4594 = vadd.f32 %v2110, %v4593
    %v4595 = vpop.f32.mrf.mxu0
    %v4596 = vadd.f32 %v2106, %v4595
    %v4597 = vpop.f32.mrf.mxu0
    %v4598 = vadd.f32 %v2110, %v4597
    %4599 = vmatprep.mubr.bf16.mxu0 %v1762
    %4600 = vmatmul.mubr.bf16.gmra.mxu0 %v1761
    %v4601 = vpop.f32.mrf.mxu0
    %v4602 = vadd.f32 %v2106, %v4601
    %v4603 = vpop.f32.mrf.mxu0
    %v4604 = vadd.f32 %v2110, %v4603
    %v4605 = vpop.f32.mrf.mxu0
    %v4606 = vadd.f32 %v2106, %v4605
    %v4607 = vpop.f32.mrf.mxu0
    %v4608 = vadd.f32 %v2110, %v4607
    %4609 = vmatprep.mubr.bf16.mxu0 %v1766
    %4610 = vmatmul.mubr.bf16.gmra.mxu0 %v1765
    %v4611 = vpop.f32.mrf.mxu0
    %v4612 = vadd.f32 %v2106, %v4611
    %v4613 = vpop.f32.mrf.mxu0
    %v4614 = vadd.f32 %v2110, %v4613
    %v4615 = vpop.f32.mrf.mxu0
    %v4616 = vadd.f32 %v2106, %v4615
    %v4617 = vpop.f32.mrf.mxu0
    %v4618 = vadd.f32 %v2110, %v4617
    %4619 = vmatprep.mubr.bf16.mxu0 %v1770
    %4620 = vmatmul.mubr.bf16.gmra.mxu0 %v1769
    %v4621 = vpop.f32.mrf.mxu0
    %v4622 = vadd.f32 %v2106, %v4621
    %v4623 = vpop.f32.mrf.mxu0
    %v4624 = vadd.f32 %v2110, %v4623
    %v4625 = vpop.f32.mrf.mxu0
    %v4626 = vadd.f32 %v2106, %v4625
    %v4627 = vpop.f32.mrf.mxu0
    %v4628 = vadd.f32 %v2110, %v4627
    %4629 = vmatprep.mubr.bf16.mxu0 %v1774
    %4630 = vmatmul.mubr.bf16.gmra.mxu0 %v1773
    %v4631 = vpop.f32.mrf.mxu0
    %v4632 = vadd.f32 %v2106, %v4631
    %v4633 = vpop.f32.mrf.mxu0
    %v4634 = vadd.f32 %v2110, %v4633
    %v4635 = vpop.f32.mrf.mxu0
    %v4636 = vadd.f32 %v2106, %v4635
    %v4637 = vpop.f32.mrf.mxu0
    %v4638 = vadd.f32 %v2110, %v4637
    %4639 = vmatprep.mubr.bf16.mxu0 %v1778
    %4640 = vmatmul.mubr.bf16.gmra.mxu0 %v1777
    %v4641 = vpop.f32.mrf.mxu0
    %v4642 = vadd.f32 %v2106, %v4641
    %v4643 = vpop.f32.mrf.mxu0
    %v4644 = vadd.f32 %v2110, %v4643
    %v4645 = vpop.f32.mrf.mxu0
    %v4646 = vadd.f32 %v2106, %v4645
    %v4647 = vpop.f32.mrf.mxu0
    %v4648 = vadd.f32 %v2110, %v4647
    %4649 = vmatprep.mubr.bf16.mxu0 %v1782
    %4650 = vmatmul.mubr.bf16.gmra.mxu0 %v1781
    %v4651 = vpop.f32.mrf.mxu0
    %v4652 = vadd.f32 %v2106, %v4651
    %v4653 = vpop.f32.mrf.mxu0
    %v4654 = vadd.f32 %v2110, %v4653
    %v4655 = vpop.f32.mrf.mxu0
    %v4656 = vadd.f32 %v2106, %v4655
    %v4657 = vpop.f32.mrf.mxu0
    %v4658 = vadd.f32 %v2110, %v4657
    %4659 = vmatprep.mubr.bf16.mxu0 %v1786
    %4660 = vmatmul.mubr.bf16.gmra.mxu0 %v1785
    %v4661 = vpop.f32.mrf.mxu0
    %v4662 = vadd.f32 %v2106, %v4661
    %v4663 = vpop.f32.mrf.mxu0
    %v4664 = vadd.f32 %v2110, %v4663
    %v4665 = vpop.f32.mrf.mxu0
    %v4666 = vadd.f32 %v2106, %v4665
    %v4667 = vpop.f32.mrf.mxu0
    %v4668 = vadd.f32 %v2110, %v4667
    %4669 = vmatprep.mubr.bf16.mxu0 %v1790
    %4670 = vmatmul.mubr.bf16.gmra.mxu0 %v1789
    %v4671 = vpop.f32.mrf.mxu0
    %v4672 = vadd.f32 %v2106, %v4671
    %v4673 = vpop.f32.mrf.mxu0
    %v4674 = vadd.f32 %v2110, %v4673
    %v4675 = vpop.f32.mrf.mxu0
    %v4676 = vadd.f32 %v2106, %v4675
    %v4677 = vpop.f32.mrf.mxu0
    %v4678 = vadd.f32 %v2110, %v4677
    %4679 = vmatprep.mubr.bf16.mxu0 %v1794
    %4680 = vmatmul.mubr.bf16.gmra.mxu0 %v1793
    %v4681 = vpop.f32.mrf.mxu0
    %v4682 = vadd.f32 %v2106, %v4681
    %v4683 = vpop.f32.mrf.mxu0
    %v4684 = vadd.f32 %v2110, %v4683
    %v4685 = vpop.f32.mrf.mxu0
    %v4686 = vadd.f32 %v2106, %v4685
    %v4687 = vpop.f32.mrf.mxu0
    %v4688 = vadd.f32 %v2110, %v4687
    %4689 = vmatprep.mubr.bf16.mxu0 %v1798
    %4690 = vmatmul.mubr.bf16.gmra.mxu0 %v1797
    %v4691 = vpop.f32.mrf.mxu0
    %v4692 = vadd.f32 %v2106, %v4691
    %v4693 = vpop.f32.mrf.mxu0
    %v4694 = vadd.f32 %v2110, %v4693
    %v4695 = vpop.f32.mrf.mxu0
    %v4696 = vadd.f32 %v2106, %v4695
    %v4697 = vpop.f32.mrf.mxu0
    %v4698 = vadd.f32 %v2110, %v4697
    %4699 = vmatprep.mubr.bf16.mxu0 %v1802
    %4700 = vmatmul.mubr.bf16.gmra.mxu0 %v1801
    %v4701 = vpop.f32.mrf.mxu0
    %v4702 = vadd.f32 %v2106, %v4701
    %v4703 = vpop.f32.mrf.mxu0
    %v4704 = vadd.f32 %v2110, %v4703
    %v4705 = vpop.f32.mrf.mxu0
    %v4706 = vadd.f32 %v2106, %v4705
    %v4707 = vpop.f32.mrf.mxu0
    %v4708 = vadd.f32 %v2110, %v4707
    %4709 = vmatprep.mubr.bf16.mxu0 %v1806
    %4710 = vmatmul.mubr.bf16.gmra.mxu0 %v1805
    %v4711 = vpop.f32.mrf.mxu0
    %v4712 = vadd.f32 %v2106, %v4711
    %v4713 = vpop.f32.mrf.mxu0
    %v4714 = vadd.f32 %v2110, %v4713
    %v4715 = vpop.f32.mrf.mxu0
    %v4716 = vadd.f32 %v2106, %v4715
    %v4717 = vpop.f32.mrf.mxu0
    %v4718 = vadd.f32 %v2110, %v4717
    %4719 = vmatprep.mubr.bf16.mxu0 %v1810
    %4720 = vmatmul.mubr.bf16.gmra.mxu0 %v1809
    %v4721 = vpop.f32.mrf.mxu0
    %v4722 = vadd.f32 %v2106, %v4721
    %v4723 = vpop.f32.mrf.mxu0
    %v4724 = vadd.f32 %v2110, %v4723
    %v4725 = vpop.f32.mrf.mxu0
    %v4726 = vadd.f32 %v2106, %v4725
    %v4727 = vpop.f32.mrf.mxu0
    %v4728 = vadd.f32 %v2110, %v4727
    %4729 = vmatprep.mubr.bf16.mxu0 %v1814
    %4730 = vmatmul.mubr.bf16.gmra.mxu0 %v1813
    %v4731 = vpop.f32.mrf.mxu0
    %v4732 = vadd.f32 %v2106, %v4731
    %v4733 = vpop.f32.mrf.mxu0
    %v4734 = vadd.f32 %v2110, %v4733
    %v4735 = vpop.f32.mrf.mxu0
    %v4736 = vadd.f32 %v2106, %v4735
    %v4737 = vpop.f32.mrf.mxu0
    %v4738 = vadd.f32 %v2110, %v4737
    %4739 = vmatprep.mubr.bf16.mxu0 %v1818
    %4740 = vmatmul.mubr.bf16.gmra.mxu0 %v1817
    %v4741 = vpop.f32.mrf.mxu0
    %v4742 = vadd.f32 %v2106, %v4741
    %v4743 = vpop.f32.mrf.mxu0
    %v4744 = vadd.f32 %v2110, %v4743
    %v4745 = vpop.f32.mrf.mxu0
    %v4746 = vadd.f32 %v2106, %v4745
    %v4747 = vpop.f32.mrf.mxu0
    %v4748 = vadd.f32 %v2110, %v4747
    %4749 = vdwg.mxu0
    %4750 = vmatprep.subr.bf16.mxu0 %v3078
    %4751 = vmatpush1.bf16.msra.mxu0 %v3077
    %4752 = vmatprep.subr.bf16.mxu0 %v3070
    %4753 = vmatpush1.bf16.msra.mxu0 %v3069
    %4754 = vmatprep.subr.bf16.mxu0 %v3062
    %4755 = vmatpush1.bf16.msra.mxu0 %v3061
    %4756 = vmatprep.subr.bf16.mxu0 %v3054
    %4757 = vmatpush1.bf16.msra.mxu0 %v3053
    %4758 = vmatprep.subr.bf16.mxu0 %v3046
    %4759 = vmatpush1.bf16.msra.mxu0 %v3045
    %4760 = vmatprep.subr.bf16.mxu0 %v3038
    %4761 = vmatpush1.bf16.msra.mxu0 %v3037
    %4762 = vmatprep.subr.bf16.mxu0 %v3030
    %4763 = vmatpush1.bf16.msra.mxu0 %v3029
    %4764 = vmatprep.subr.bf16.mxu0 %v3022
    %4765 = vmatpush1.bf16.msra.mxu0 %v3021
    %4766 = vmatprep.subr.bf16.mxu0 %v3142
    %4767 = vmatpush2.bf16.msra.mxu0 %v3141
    %4768 = vmatprep.subr.bf16.mxu0 %v3134
    %4769 = vmatpush2.bf16.msra.mxu0 %v3133
    %4770 = vmatprep.subr.bf16.mxu0 %v3126
    %4771 = vmatpush2.bf16.msra.mxu0 %v3125
    %4772 = vmatprep.subr.bf16.mxu0 %v3118
    %4773 = vmatpush2.bf16.msra.mxu0 %v3117
    %4774 = vmatprep.subr.bf16.mxu0 %v3110
    %4775 = vmatpush2.bf16.msra.mxu0 %v3109
    %4776 = vmatprep.subr.bf16.mxu0 %v3102
    %4777 = vmatpush2.bf16.msra.mxu0 %v3101
    %4778 = vmatprep.subr.bf16.mxu0 %v3094
    %4779 = vmatpush2.bf16.msra.mxu0 %v3093
    %4780 = vmatprep.subr.bf16.mxu0 %v3086
    %4781 = vmatpush2.bf16.msra.mxu0 %v3085
    %4782 = vmatprep.mubr.bf16.mxu0 %v1760
    %4783 = vmatmul.mubr.bf16.gmra.mxu0 %v1759
    %v4784 = vpop.f32.mrf.mxu0
    %v4785 = vadd.f32 %v4592, %v4784
    %v4786 = vpop.f32.mrf.mxu0
    %v4787 = vadd.f32 %v4594, %v4786
    %v4788 = vpop.f32.mrf.mxu0
    %v4789 = vadd.f32 %v4596, %v4788
    %v4790 = vpop.f32.mrf.mxu0
    %v4791 = vadd.f32 %v4598, %v4790
    %4792 = vmatprep.mubr.bf16.mxu0 %v1764
    %4793 = vmatmul.mubr.bf16.gmra.mxu0 %v1763
    %v4794 = vpop.f32.mrf.mxu0
    %v4795 = vadd.f32 %v4602, %v4794
    %v4796 = vpop.f32.mrf.mxu0
    %v4797 = vadd.f32 %v4604, %v4796
    %v4798 = vpop.f32.mrf.mxu0
    %v4799 = vadd.f32 %v4606, %v4798
    %v4800 = vpop.f32.mrf.mxu0
    %v4801 = vadd.f32 %v4608, %v4800
    %4802 = vmatprep.mubr.bf16.mxu0 %v1768
    %4803 = vmatmul.mubr.bf16.gmra.mxu0 %v1767
    %v4804 = vpop.f32.mrf.mxu0
    %v4805 = vadd.f32 %v4612, %v4804
    %v4806 = vpop.f32.mrf.mxu0
    %v4807 = vadd.f32 %v4614, %v4806
    %v4808 = vpop.f32.mrf.mxu0
    %v4809 = vadd.f32 %v4616, %v4808
    %v4810 = vpop.f32.mrf.mxu0
    %v4811 = vadd.f32 %v4618, %v4810
    %4812 = vmatprep.mubr.bf16.mxu0 %v1772
    %4813 = vmatmul.mubr.bf16.gmra.mxu0 %v1771
    %v4814 = vpop.f32.mrf.mxu0
    %v4815 = vadd.f32 %v4622, %v4814
    %v4816 = vpop.f32.mrf.mxu0
    %v4817 = vadd.f32 %v4624, %v4816
    %v4818 = vpop.f32.mrf.mxu0
    %v4819 = vadd.f32 %v4626, %v4818
    %v4820 = vpop.f32.mrf.mxu0
    %v4821 = vadd.f32 %v4628, %v4820
    %4822 = vmatprep.mubr.bf16.mxu0 %v1776
    %4823 = vmatmul.mubr.bf16.gmra.mxu0 %v1775
    %v4824 = vpop.f32.mrf.mxu0
    %v4825 = vadd.f32 %v4632, %v4824
    %v4826 = vpop.f32.mrf.mxu0
    %v4827 = vadd.f32 %v4634, %v4826
    %v4828 = vpop.f32.mrf.mxu0
    %v4829 = vadd.f32 %v4636, %v4828
    %v4830 = vpop.f32.mrf.mxu0
    %v4831 = vadd.f32 %v4638, %v4830
    %4832 = vmatprep.mubr.bf16.mxu0 %v1780
    %4833 = vmatmul.mubr.bf16.gmra.mxu0 %v1779
    %v4834 = vpop.f32.mrf.mxu0
    %v4835 = vadd.f32 %v4642, %v4834
    %v4836 = vpop.f32.mrf.mxu0
    %v4837 = vadd.f32 %v4644, %v4836
    %v4838 = vpop.f32.mrf.mxu0
    %v4839 = vadd.f32 %v4646, %v4838
    %v4840 = vpop.f32.mrf.mxu0
    %v4841 = vadd.f32 %v4648, %v4840
    %4842 = vmatprep.mubr.bf16.mxu0 %v1784
    %4843 = vmatmul.mubr.bf16.gmra.mxu0 %v1783
    %v4844 = vpop.f32.mrf.mxu0
    %v4845 = vadd.f32 %v4652, %v4844
    %v4846 = vpop.f32.mrf.mxu0
    %v4847 = vadd.f32 %v4654, %v4846
    %v4848 = vpop.f32.mrf.mxu0
    %v4849 = vadd.f32 %v4656, %v4848
    %v4850 = vpop.f32.mrf.mxu0
    %v4851 = vadd.f32 %v4658, %v4850
    %4852 = vmatprep.mubr.bf16.mxu0 %v1788
    %4853 = vmatmul.mubr.bf16.gmra.mxu0 %v1787
    %v4854 = vpop.f32.mrf.mxu0
    %v4855 = vadd.f32 %v4662, %v4854
    %v4856 = vpop.f32.mrf.mxu0
    %v4857 = vadd.f32 %v4664, %v4856
    %v4858 = vpop.f32.mrf.mxu0
    %v4859 = vadd.f32 %v4666, %v4858
    %v4860 = vpop.f32.mrf.mxu0
    %v4861 = vadd.f32 %v4668, %v4860
    %4862 = vmatprep.mubr.bf16.mxu0 %v1792
    %4863 = vmatmul.mubr.bf16.gmra.mxu0 %v1791
    %v4864 = vpop.f32.mrf.mxu0
    %v4865 = vadd.f32 %v4672, %v4864
    %v4866 = vpop.f32.mrf.mxu0
    %v4867 = vadd.f32 %v4674, %v4866
    %v4868 = vpop.f32.mrf.mxu0
    %v4869 = vadd.f32 %v4676, %v4868
    %v4870 = vpop.f32.mrf.mxu0
    %v4871 = vadd.f32 %v4678, %v4870
    %4872 = vmatprep.mubr.bf16.mxu0 %v1796
    %4873 = vmatmul.mubr.bf16.gmra.mxu0 %v1795
    %v4874 = vpop.f32.mrf.mxu0
    %v4875 = vadd.f32 %v4682, %v4874
    %v4876 = vpop.f32.mrf.mxu0
    %v4877 = vadd.f32 %v4684, %v4876
    %v4878 = vpop.f32.mrf.mxu0
    %v4879 = vadd.f32 %v4686, %v4878
    %v4880 = vpop.f32.mrf.mxu0
    %v4881 = vadd.f32 %v4688, %v4880
    %4882 = vmatprep.mubr.bf16.mxu0 %v1800
    %4883 = vmatmul.mubr.bf16.gmra.mxu0 %v1799
    %v4884 = vpop.f32.mrf.mxu0
    %v4885 = vadd.f32 %v4692, %v4884
    %v4886 = vpop.f32.mrf.mxu0
    %v4887 = vadd.f32 %v4694, %v4886
    %v4888 = vpop.f32.mrf.mxu0
    %v4889 = vadd.f32 %v4696, %v4888
    %v4890 = vpop.f32.mrf.mxu0
    %v4891 = vadd.f32 %v4698, %v4890
    %4892 = vmatprep.mubr.bf16.mxu0 %v1804
    %4893 = vmatmul.mubr.bf16.gmra.mxu0 %v1803
    %v4894 = vpop.f32.mrf.mxu0
    %v4895 = vadd.f32 %v4702, %v4894
    %v4896 = vpop.f32.mrf.mxu0
    %v4897 = vadd.f32 %v4704, %v4896
    %v4898 = vpop.f32.mrf.mxu0
    %v4899 = vadd.f32 %v4706, %v4898
    %v4900 = vpop.f32.mrf.mxu0
    %v4901 = vadd.f32 %v4708, %v4900
    %4902 = vmatprep.mubr.bf16.mxu0 %v1808
    %4903 = vmatmul.mubr.bf16.gmra.mxu0 %v1807
    %v4904 = vpop.f32.mrf.mxu0
    %v4905 = vadd.f32 %v4712, %v4904
    %v4906 = vpop.f32.mrf.mxu0
    %v4907 = vadd.f32 %v4714, %v4906
    %v4908 = vpop.f32.mrf.mxu0
    %v4909 = vadd.f32 %v4716, %v4908
    %v4910 = vpop.f32.mrf.mxu0
    %v4911 = vadd.f32 %v4718, %v4910
    %4912 = vmatprep.mubr.bf16.mxu0 %v1812
    %4913 = vmatmul.mubr.bf16.gmra.mxu0 %v1811
    %v4914 = vpop.f32.mrf.mxu0
    %v4915 = vadd.f32 %v4722, %v4914
    %v4916 = vpop.f32.mrf.mxu0
    %v4917 = vadd.f32 %v4724, %v4916
    %v4918 = vpop.f32.mrf.mxu0
    %v4919 = vadd.f32 %v4726, %v4918
    %v4920 = vpop.f32.mrf.mxu0
    %v4921 = vadd.f32 %v4728, %v4920
    %4922 = vmatprep.mubr.bf16.mxu0 %v1816
    %4923 = vmatmul.mubr.bf16.gmra.mxu0 %v1815
    %v4924 = vpop.f32.mrf.mxu0
    %v4925 = vadd.f32 %v4732, %v4924
    %v4926 = vpop.f32.mrf.mxu0
    %v4927 = vadd.f32 %v4734, %v4926
    %v4928 = vpop.f32.mrf.mxu0
    %v4929 = vadd.f32 %v4736, %v4928
    %v4930 = vpop.f32.mrf.mxu0
    %v4931 = vadd.f32 %v4738, %v4930
    %4932 = vmatprep.mubr.bf16.mxu0 %v1820
    %4933 = vmatmul.mubr.bf16.gmra.mxu0 %v1819
    %v4934 = vpop.f32.mrf.mxu0
    %v4935 = vadd.f32 %v4742, %v4934
    %v4936 = vpop.f32.mrf.mxu0
    %v4937 = vadd.f32 %v4744, %v4936
    %v4938 = vpop.f32.mrf.mxu0
    %v4939 = vadd.f32 %v4746, %v4938
    %v4940 = vpop.f32.mrf.mxu0
    %v4941 = vadd.f32 %v4748, %v4940
    %4942 = vdwg.mxu0
    %v4943 = vmul.f32 %v3627, 0.2
    %v4944 = vmul.f32 %v3629, 0.2
    %v4945 = vmul.f32 %v4013, 0.2
    %v4946 = vmul.f32 %v4015, 0.2
    %v4947 = vmul.f32 %v4399, 0.2
    %v4948 = vmul.f32 %v4401, 0.2
    %v4949 = vmul.f32 %v4785, 0.2
    %v4950 = vmul.f32 %v4787, 0.2
    %v4951 = vmul.f32 %v3631, 0.2
    %v4952 = vmul.f32 %v3633, 0.2
    %v4953 = vmul.f32 %v4017, 0.2
    %v4954 = vmul.f32 %v4019, 0.2
    %v4955 = vmul.f32 %v4403, 0.2
    %v4956 = vmul.f32 %v4405, 0.2
    %v4957 = vmul.f32 %v4789, 0.2
    %v4958 = vmul.f32 %v4791, 0.2
    %v4959 = vmul.f32 %v3637, 0.2
    %v4960 = vmul.f32 %v3639, 0.2
    %v4961 = vmul.f32 %v4023, 0.2
    %v4962 = vmul.f32 %v4025, 0.2
    %v4963 = vmul.f32 %v4409, 0.2
    %v4964 = vmul.f32 %v4411, 0.2
    %v4965 = vmul.f32 %v4795, 0.2
    %v4966 = vmul.f32 %v4797, 0.2
    %v4967 = vmul.f32 %v3641, 0.2
    %v4968 = vmul.f32 %v3643, 0.2
    %v4969 = vmul.f32 %v4027, 0.2
    %v4970 = vmul.f32 %v4029, 0.2
    %v4971 = vmul.f32 %v4413, 0.2
    %v4972 = vmul.f32 %v4415, 0.2
    %v4973 = vmul.f32 %v4799, 0.2
    %v4974 = vmul.f32 %v4801, 0.2
    %v4975 = vmul.f32 %v3647, 0.2
    %v4976 = vmul.f32 %v3649, 0.2
    %v4977 = vmul.f32 %v4033, 0.2
    %v4978 = vmul.f32 %v4035, 0.2
    %v4979 = vmul.f32 %v4419, 0.2
    %v4980 = vmul.f32 %v4421, 0.2
    %v4981 = vmul.f32 %v4805, 0.2
    %v4982 = vmul.f32 %v4807, 0.2
    %v4983 = vmul.f32 %v3651, 0.2
    %v4984 = vmul.f32 %v3653, 0.2
    %v4985 = vmul.f32 %v4037, 0.2
    %v4986 = vmul.f32 %v4039, 0.2
    %v4987 = vmul.f32 %v4423, 0.2
    %v4988 = vmul.f32 %v4425, 0.2
    %v4989 = vmul.f32 %v4809, 0.2
    %v4990 = vmul.f32 %v4811, 0.2
    %v4991 = vmul.f32 %v3657, 0.2
    %v4992 = vmul.f32 %v3659, 0.2
    %v4993 = vmul.f32 %v4043, 0.2
    %v4994 = vmul.f32 %v4045, 0.2
    %v4995 = vmul.f32 %v4429, 0.2
    %v4996 = vmul.f32 %v4431, 0.2
    %v4997 = vmul.f32 %v4815, 0.2
    %v4998 = vmul.f32 %v4817, 0.2
    %v4999 = vmul.f32 %v3661, 0.2
    %v5000 = vmul.f32 %v3663, 0.2
    %v5001 = vmul.f32 %v4047, 0.2
    %v5002 = vmul.f32 %v4049, 0.2
    %v5003 = vmul.f32 %v4433, 0.2
    %v5004 = vmul.f32 %v4435, 0.2
    %v5005 = vmul.f32 %v4819, 0.2
    %v5006 = vmul.f32 %v4821, 0.2
    %v5007 = vmul.f32 %v3667, 0.2
    %v5008 = vmul.f32 %v3669, 0.2
    %v5009 = vmul.f32 %v4053, 0.2
    %v5010 = vmul.f32 %v4055, 0.2
    %v5011 = vmul.f32 %v4439, 0.2
    %v5012 = vmul.f32 %v4441, 0.2
    %v5013 = vmul.f32 %v4825, 0.2
    %v5014 = vmul.f32 %v4827, 0.2
    %v5015 = vmul.f32 %v3671, 0.2
    %v5016 = vmul.f32 %v3673, 0.2
    %v5017 = vmul.f32 %v4057, 0.2
    %v5018 = vmul.f32 %v4059, 0.2
    %v5019 = vmul.f32 %v4443, 0.2
    %v5020 = vmul.f32 %v4445, 0.2
    %v5021 = vmul.f32 %v4829, 0.2
    %v5022 = vmul.f32 %v4831, 0.2
    %v5023 = vmul.f32 %v3677, 0.2
    %v5024 = vmul.f32 %v3679, 0.2
    %v5025 = vmul.f32 %v4063, 0.2
    %v5026 = vmul.f32 %v4065, 0.2
    %v5027 = vmul.f32 %v4449, 0.2
    %v5028 = vmul.f32 %v4451, 0.2
    %v5029 = vmul.f32 %v4835, 0.2
    %v5030 = vmul.f32 %v4837, 0.2
    %v5031 = vmul.f32 %v3681, 0.2
    %v5032 = vmul.f32 %v3683, 0.2
    %v5033 = vmul.f32 %v4067, 0.2
    %v5034 = vmul.f32 %v4069, 0.2
    %v5035 = vmul.f32 %v4453, 0.2
    %v5036 = vmul.f32 %v4455, 0.2
    %v5037 = vmul.f32 %v4839, 0.2
    %v5038 = vmul.f32 %v4841, 0.2
    %v5039 = vmul.f32 %v3687, 0.2
    %v5040 = vmul.f32 %v3689, 0.2
    %v5041 = vmul.f32 %v4073, 0.2
    %v5042 = vmul.f32 %v4075, 0.2
    %v5043 = vmul.f32 %v4459, 0.2
    %v5044 = vmul.f32 %v4461, 0.2
    %v5045 = vmul.f32 %v4845, 0.2
    %v5046 = vmul.f32 %v4847, 0.2
    %v5047 = vmul.f32 %v3691, 0.2
    %v5048 = vmul.f32 %v3693, 0.2
    %v5049 = vmul.f32 %v4077, 0.2
    %v5050 = vmul.f32 %v4079, 0.2
    %v5051 = vmul.f32 %v4463, 0.2
    %v5052 = vmul.f32 %v4465, 0.2
    %v5053 = vmul.f32 %v4849, 0.2
    %v5054 = vmul.f32 %v4851, 0.2
    %v5055 = vmul.f32 %v3697, 0.2
    %v5056 = vmul.f32 %v3699, 0.2
    %v5057 = vmul.f32 %v4083, 0.2
    %v5058 = vmul.f32 %v4085, 0.2
    %v5059 = vmul.f32 %v4469, 0.2
    %v5060 = vmul.f32 %v4471, 0.2
    %v5061 = vmul.f32 %v4855, 0.2
    %v5062 = vmul.f32 %v4857, 0.2
    %v5063 = vmul.f32 %v3701, 0.2
    %v5064 = vmul.f32 %v3703, 0.2
    %v5065 = vmul.f32 %v4087, 0.2
    %v5066 = vmul.f32 %v4089, 0.2
    %v5067 = vmul.f32 %v4473, 0.2
    %v5068 = vmul.f32 %v4475, 0.2
    %v5069 = vmul.f32 %v4859, 0.2
    %v5070 = vmul.f32 %v4861, 0.2
    %v5071 = vmul.f32 %v3707, 0.2
    %v5072 = vmul.f32 %v3709, 0.2
    %v5073 = vmul.f32 %v4093, 0.2
    %v5074 = vmul.f32 %v4095, 0.2
    %v5075 = vmul.f32 %v4479, 0.2
    %v5076 = vmul.f32 %v4481, 0.2
    %v5077 = vmul.f32 %v4865, 0.2
    %v5078 = vmul.f32 %v4867, 0.2
    %v5079 = vmul.f32 %v3711, 0.2
    %v5080 = vmul.f32 %v3713, 0.2
    %v5081 = vmul.f32 %v4097, 0.2
    %v5082 = vmul.f32 %v4099, 0.2
    %v5083 = vmul.f32 %v4483, 0.2
    %v5084 = vmul.f32 %v4485, 0.2
    %v5085 = vmul.f32 %v4869, 0.2
    %v5086 = vmul.f32 %v4871, 0.2
    %v5087 = vmul.f32 %v3717, 0.2
    %v5088 = vmul.f32 %v3719, 0.2
    %v5089 = vmul.f32 %v4103, 0.2
    %v5090 = vmul.f32 %v4105, 0.2
    %v5091 = vmul.f32 %v4489, 0.2
    %v5092 = vmul.f32 %v4491, 0.2
    %v5093 = vmul.f32 %v4875, 0.2
    %v5094 = vmul.f32 %v4877, 0.2
    %v5095 = vmul.f32 %v3721, 0.2
    %v5096 = vmul.f32 %v3723, 0.2
    %v5097 = vmul.f32 %v4107, 0.2
    %v5098 = vmul.f32 %v4109, 0.2
    %v5099 = vmul.f32 %v4493, 0.2
    %v5100 = vmul.f32 %v4495, 0.2
    %v5101 = vmul.f32 %v4879, 0.2
    %v5102 = vmul.f32 %v4881, 0.2
    %v5103 = vmul.f32 %v3727, 0.2
    %v5104 = vmul.f32 %v3729, 0.2
    %v5105 = vmul.f32 %v4113, 0.2
    %v5106 = vmul.f32 %v4115, 0.2
    %v5107 = vmul.f32 %v4499, 0.2
    %v5108 = vmul.f32 %v4501, 0.2
    %v5109 = vmul.f32 %v4885, 0.2
    %v5110 = vmul.f32 %v4887, 0.2
    %v5111 = vmul.f32 %v3731, 0.2
    %v5112 = vmul.f32 %v3733, 0.2
    %v5113 = vmul.f32 %v4117, 0.2
    %v5114 = vmul.f32 %v4119, 0.2
    %v5115 = vmul.f32 %v4503, 0.2
    %v5116 = vmul.f32 %v4505, 0.2
    %v5117 = vmul.f32 %v4889, 0.2
    %v5118 = vmul.f32 %v4891, 0.2
    %v5119 = vmul.f32 %v3737, 0.2
    %v5120 = vmul.f32 %v3739, 0.2
    %v5121 = vmul.f32 %v4123, 0.2
    %v5122 = vmul.f32 %v4125, 0.2
    %v5123 = vmul.f32 %v4509, 0.2
    %v5124 = vmul.f32 %v4511, 0.2
    %v5125 = vmul.f32 %v4895, 0.2
    %v5126 = vmul.f32 %v4897, 0.2
    %v5127 = vmul.f32 %v3741, 0.2
    %v5128 = vmul.f32 %v3743, 0.2
    %v5129 = vmul.f32 %v4127, 0.2
    %v5130 = vmul.f32 %v4129, 0.2
    %v5131 = vmul.f32 %v4513, 0.2
    %v5132 = vmul.f32 %v4515, 0.2
    %v5133 = vmul.f32 %v4899, 0.2
    %v5134 = vmul.f32 %v4901, 0.2
    %v5135 = vmul.f32 %v3747, 0.2
    %v5136 = vmul.f32 %v3749, 0.2
    %v5137 = vmul.f32 %v4133, 0.2
    %v5138 = vmul.f32 %v4135, 0.2
    %v5139 = vmul.f32 %v4519, 0.2
    %v5140 = vmul.f32 %v4521, 0.2
    %v5141 = vmul.f32 %v4905, 0.2
    %v5142 = vmul.f32 %v4907, 0.2
    %v5143 = vmul.f32 %v3751, 0.2
    %v5144 = vmul.f32 %v3753, 0.2
    %v5145 = vmul.f32 %v4137, 0.2
    %v5146 = vmul.f32 %v4139, 0.2
    %v5147 = vmul.f32 %v4523, 0.2
    %v5148 = vmul.f32 %v4525, 0.2
    %v5149 = vmul.f32 %v4909, 0.2
    %v5150 = vmul.f32 %v4911, 0.2
    %v5151 = vmul.f32 %v3757, 0.2
    %v5152 = vmul.f32 %v3759, 0.2
    %v5153 = vmul.f32 %v4143, 0.2
    %v5154 = vmul.f32 %v4145, 0.2
    %v5155 = vmul.f32 %v4529, 0.2
    %v5156 = vmul.f32 %v4531, 0.2
    %v5157 = vmul.f32 %v4915, 0.2
    %v5158 = vmul.f32 %v4917, 0.2
    %v5159 = vmul.f32 %v3761, 0.2
    %v5160 = vmul.f32 %v3763, 0.2
    %v5161 = vmul.f32 %v4147, 0.2
    %v5162 = vmul.f32 %v4149, 0.2
    %v5163 = vmul.f32 %v4533, 0.2
    %v5164 = vmul.f32 %v4535, 0.2
    %v5165 = vmul.f32 %v4919, 0.2
    %v5166 = vmul.f32 %v4921, 0.2
    %v5167 = vmul.f32 %v3767, 0.2
    %v5168 = vmul.f32 %v3769, 0.2
    %v5169 = vmul.f32 %v4153, 0.2
    %v5170 = vmul.f32 %v4155, 0.2
    %v5171 = vmul.f32 %v4539, 0.2
    %v5172 = vmul.f32 %v4541, 0.2
    %v5173 = vmul.f32 %v4925, 0.2
    %v5174 = vmul.f32 %v4927, 0.2
    %v5175 = vmul.f32 %v3771, 0.2
    %v5176 = vmul.f32 %v3773, 0.2
    %v5177 = vmul.f32 %v4157, 0.2
    %v5178 = vmul.f32 %v4159, 0.2
    %v5179 = vmul.f32 %v4543, 0.2
    %v5180 = vmul.f32 %v4545, 0.2
    %v5181 = vmul.f32 %v4929, 0.2
    %v5182 = vmul.f32 %v4931, 0.2
    %v5183 = vmul.f32 %v3777, 0.2
    %v5184 = vmul.f32 %v3779, 0.2
    %v5185 = vmul.f32 %v4163, 0.2
    %v5186 = vmul.f32 %v4165, 0.2
    %v5187 = vmul.f32 %v4549, 0.2
    %v5188 = vmul.f32 %v4551, 0.2
    %v5189 = vmul.f32 %v4935, 0.2
    %v5190 = vmul.f32 %v4937, 0.2
    %v5191 = vmul.f32 %v3781, 0.2
    %v5192 = vmul.f32 %v3783, 0.2
    %v5193 = vmul.f32 %v4167, 0.2
    %v5194 = vmul.f32 %v4169, 0.2
    %v5195 = vmul.f32 %v4553, 0.2
    %v5196 = vmul.f32 %v4555, 0.2
    %v5197 = vmul.f32 %v4939, 0.2
    %v5198 = vmul.f32 %v4941, 0.2
    %v5199 = vmax.f32 %v3627, %v4943
    %v5200 = vmax.f32 %v3629, %v4944
    %v5201 = vmax.f32 %v4013, %v4945
    %v5202 = vmax.f32 %v4015, %v4946
    %v5203 = vmax.f32 %v4399, %v4947
    %v5204 = vmax.f32 %v4401, %v4948
    %v5205 = vmax.f32 %v4785, %v4949
    %v5206 = vmax.f32 %v4787, %v4950
    %v5207 = vmax.f32 %v3631, %v4951
    %v5208 = vmax.f32 %v3633, %v4952
    %v5209 = vmax.f32 %v4017, %v4953
    %v5210 = vmax.f32 %v4019, %v4954
    %v5211 = vmax.f32 %v4403, %v4955
    %v5212 = vmax.f32 %v4405, %v4956
    %v5213 = vmax.f32 %v4789, %v4957
    %v5214 = vmax.f32 %v4791, %v4958
    %v5215 = vmax.f32 %v3637, %v4959
    %v5216 = vmax.f32 %v3639, %v4960
    %v5217 = vmax.f32 %v4023, %v4961
    %v5218 = vmax.f32 %v4025, %v4962
    %v5219 = vmax.f32 %v4409, %v4963
    %v5220 = vmax.f32 %v4411, %v4964
    %v5221 = vmax.f32 %v4795, %v4965
    %v5222 = vmax.f32 %v4797, %v4966
    %v5223 = vmax.f32 %v3641, %v4967
    %v5224 = vmax.f32 %v3643, %v4968
    %v5225 = vmax.f32 %v4027, %v4969
    %v5226 = vmax.f32 %v4029, %v4970
    %v5227 = vmax.f32 %v4413, %v4971
    %v5228 = vmax.f32 %v4415, %v4972
    %v5229 = vmax.f32 %v4799, %v4973
    %v5230 = vmax.f32 %v4801, %v4974
    %v5231 = vmax.f32 %v3647, %v4975
    %v5232 = vmax.f32 %v3649, %v4976
    %v5233 = vmax.f32 %v4033, %v4977
    %v5234 = vmax.f32 %v4035, %v4978
    %v5235 = vmax.f32 %v4419, %v4979
    %v5236 = vmax.f32 %v4421, %v4980
    %v5237 = vmax.f32 %v4805, %v4981
    %v5238 = vmax.f32 %v4807, %v4982
    %v5239 = vmax.f32 %v3651, %v4983
    %v5240 = vmax.f32 %v3653, %v4984
    %v5241 = vmax.f32 %v4037, %v4985
    %v5242 = vmax.f32 %v4039, %v4986
    %v5243 = vmax.f32 %v4423, %v4987
    %v5244 = vmax.f32 %v4425, %v4988
    %v5245 = vmax.f32 %v4809, %v4989
    %v5246 = vmax.f32 %v4811, %v4990
    %v5247 = vmax.f32 %v3657, %v4991
    %v5248 = vmax.f32 %v3659, %v4992
    %v5249 = vmax.f32 %v4043, %v4993
    %v5250 = vmax.f32 %v4045, %v4994
    %v5251 = vmax.f32 %v4429, %v4995
    %v5252 = vmax.f32 %v4431, %v4996
    %v5253 = vmax.f32 %v4815, %v4997
    %v5254 = vmax.f32 %v4817, %v4998
    %v5255 = vmax.f32 %v3661, %v4999
    %v5256 = vmax.f32 %v3663, %v5000
    %v5257 = vmax.f32 %v4047, %v5001
    %v5258 = vmax.f32 %v4049, %v5002
    %v5259 = vmax.f32 %v4433, %v5003
    %v5260 = vmax.f32 %v4435, %v5004
    %v5261 = vmax.f32 %v4819, %v5005
    %v5262 = vmax.f32 %v4821, %v5006
    %v5263 = vmax.f32 %v3667, %v5007
    %v5264 = vmax.f32 %v3669, %v5008
    %v5265 = vmax.f32 %v4053, %v5009
    %v5266 = vmax.f32 %v4055, %v5010
    %v5267 = vmax.f32 %v4439, %v5011
    %v5268 = vmax.f32 %v4441, %v5012
    %v5269 = vmax.f32 %v4825, %v5013
    %v5270 = vmax.f32 %v4827, %v5014
    %v5271 = vmax.f32 %v3671, %v5015
    %v5272 = vmax.f32 %v3673, %v5016
    %v5273 = vmax.f32 %v4057, %v5017
    %v5274 = vmax.f32 %v4059, %v5018
    %v5275 = vmax.f32 %v4443, %v5019
    %v5276 = vmax.f32 %v4445, %v5020
    %v5277 = vmax.f32 %v4829, %v5021
    %v5278 = vmax.f32 %v4831, %v5022
    %v5279 = vmax.f32 %v3677, %v5023
    %v5280 = vmax.f32 %v3679, %v5024
    %v5281 = vmax.f32 %v4063, %v5025
    %v5282 = vmax.f32 %v4065, %v5026
    %v5283 = vmax.f32 %v4449, %v5027
    %v5284 = vmax.f32 %v4451, %v5028
    %v5285 = vmax.f32 %v4835, %v5029
    %v5286 = vmax.f32 %v4837, %v5030
    %v5287 = vmax.f32 %v3681, %v5031
    %v5288 = vmax.f32 %v3683, %v5032
    %v5289 = vmax.f32 %v4067, %v5033
    %v5290 = vmax.f32 %v4069, %v5034
    %v5291 = vmax.f32 %v4453, %v5035
    %v5292 = vmax.f32 %v4455, %v5036
    %v5293 = vmax.f32 %v4839, %v5037
    %v5294 = vmax.f32 %v4841, %v5038
    %v5295 = vmax.f32 %v3687, %v5039
    %v5296 = vmax.f32 %v3689, %v5040
    %v5297 = vmax.f32 %v4073, %v5041
    %v5298 = vmax.f32 %v4075, %v5042
    %v5299 = vmax.f32 %v4459, %v5043
    %v5300 = vmax.f32 %v4461, %v5044
    %v5301 = vmax.f32 %v4845, %v5045
    %v5302 = vmax.f32 %v4847, %v5046
    %v5303 = vmax.f32 %v3691, %v5047
    %v5304 = vmax.f32 %v3693, %v5048
    %v5305 = vmax.f32 %v4077, %v5049
    %v5306 = vmax.f32 %v4079, %v5050
    %v5307 = vmax.f32 %v4463, %v5051
    %v5308 = vmax.f32 %v4465, %v5052
    %v5309 = vmax.f32 %v4849, %v5053
    %v5310 = vmax.f32 %v4851, %v5054
    %v5311 = vmax.f32 %v3697, %v5055
    %v5312 = vmax.f32 %v3699, %v5056
    %v5313 = vmax.f32 %v4083, %v5057
    %v5314 = vmax.f32 %v4085, %v5058
    %v5315 = vmax.f32 %v4469, %v5059
    %v5316 = vmax.f32 %v4471, %v5060
    %v5317 = vmax.f32 %v4855, %v5061
    %v5318 = vmax.f32 %v4857, %v5062
    %v5319 = vmax.f32 %v3701, %v5063
    %v5320 = vmax.f32 %v3703, %v5064
    %v5321 = vmax.f32 %v4087, %v5065
    %v5322 = vmax.f32 %v4089, %v5066
    %v5323 = vmax.f32 %v4473, %v5067
    %v5324 = vmax.f32 %v4475, %v5068
    %v5325 = vmax.f32 %v4859, %v5069
    %v5326 = vmax.f32 %v4861, %v5070
    %v5327 = vmax.f32 %v3707, %v5071
    %v5328 = vmax.f32 %v3709, %v5072
    %v5329 = vmax.f32 %v4093, %v5073
    %v5330 = vmax.f32 %v4095, %v5074
    %v5331 = vmax.f32 %v4479, %v5075
    %v5332 = vmax.f32 %v4481, %v5076
    %v5333 = vmax.f32 %v4865, %v5077
    %v5334 = vmax.f32 %v4867, %v5078
    %v5335 = vmax.f32 %v3711, %v5079
    %v5336 = vmax.f32 %v3713, %v5080
    %v5337 = vmax.f32 %v4097, %v5081
    %v5338 = vmax.f32 %v4099, %v5082
    %v5339 = vmax.f32 %v4483, %v5083
    %v5340 = vmax.f32 %v4485, %v5084
    %v5341 = vmax.f32 %v4869, %v5085
    %v5342 = vmax.f32 %v4871, %v5086
    %v5343 = vmax.f32 %v3717, %v5087
    %v5344 = vmax.f32 %v3719, %v5088
    %v5345 = vmax.f32 %v4103, %v5089
    %v5346 = vmax.f32 %v4105, %v5090
    %v5347 = vmax.f32 %v4489, %v5091
    %v5348 = vmax.f32 %v4491, %v5092
    %v5349 = vmax.f32 %v4875, %v5093
    %v5350 = vmax.f32 %v4877, %v5094
    %v5351 = vmax.f32 %v3721, %v5095
    %v5352 = vmax.f32 %v3723, %v5096
    %v5353 = vmax.f32 %v4107, %v5097
    %v5354 = vmax.f32 %v4109, %v5098
    %v5355 = vmax.f32 %v4493, %v5099
    %v5356 = vmax.f32 %v4495, %v5100
    %v5357 = vmax.f32 %v4879, %v5101
    %v5358 = vmax.f32 %v4881, %v5102
    %v5359 = vmax.f32 %v3727, %v5103
    %v5360 = vmax.f32 %v3729, %v5104
    %v5361 = vmax.f32 %v4113, %v5105
    %v5362 = vmax.f32 %v4115, %v5106
    %v5363 = vmax.f32 %v4499, %v5107
    %v5364 = vmax.f32 %v4501, %v5108
    %v5365 = vmax.f32 %v4885, %v5109
    %v5366 = vmax.f32 %v4887, %v5110
    %v5367 = vmax.f32 %v3731, %v5111
    %v5368 = vmax.f32 %v3733, %v5112
    %v5369 = vmax.f32 %v4117, %v5113
    %v5370 = vmax.f32 %v4119, %v5114
    %v5371 = vmax.f32 %v4503, %v5115
    %v5372 = vmax.f32 %v4505, %v5116
    %v5373 = vmax.f32 %v4889, %v5117
    %v5374 = vmax.f32 %v4891, %v5118
    %v5375 = vmax.f32 %v3737, %v5119
    %v5376 = vmax.f32 %v3739, %v5120
    %v5377 = vmax.f32 %v4123, %v5121
    %v5378 = vmax.f32 %v4125, %v5122
    %v5379 = vmax.f32 %v4509, %v5123
    %v5380 = vmax.f32 %v4511, %v5124
    %v5381 = vmax.f32 %v4895, %v5125
    %v5382 = vmax.f32 %v4897, %v5126
    %v5383 = vmax.f32 %v3741, %v5127
    %v5384 = vmax.f32 %v3743, %v5128
    %v5385 = vmax.f32 %v4127, %v5129
    %v5386 = vmax.f32 %v4129, %v5130
    %v5387 = vmax.f32 %v4513, %v5131
    %v5388 = vmax.f32 %v4515, %v5132
    %v5389 = vmax.f32 %v4899, %v5133
    %v5390 = vmax.f32 %v4901, %v5134
    %v5391 = vmax.f32 %v3747, %v5135
    %v5392 = vmax.f32 %v3749, %v5136
    %v5393 = vmax.f32 %v4133, %v5137
    %v5394 = vmax.f32 %v4135, %v5138
    %v5395 = vmax.f32 %v4519, %v5139
    %v5396 = vmax.f32 %v4521, %v5140
    %v5397 = vmax.f32 %v4905, %v5141
    %v5398 = vmax.f32 %v4907, %v5142
    %v5399 = vmax.f32 %v3751, %v5143
    %v5400 = vmax.f32 %v3753, %v5144
    %v5401 = vmax.f32 %v4137, %v5145
    %v5402 = vmax.f32 %v4139, %v5146
    %v5403 = vmax.f32 %v4523, %v5147
    %v5404 = vmax.f32 %v4525, %v5148
    %v5405 = vmax.f32 %v4909, %v5149
    %v5406 = vmax.f32 %v4911, %v5150
    %v5407 = vmax.f32 %v3757, %v5151
    %v5408 = vmax.f32 %v3759, %v5152
    %v5409 = vmax.f32 %v4143, %v5153
    %v5410 = vmax.f32 %v4145, %v5154
    %v5411 = vmax.f32 %v4529, %v5155
    %v5412 = vmax.f32 %v4531, %v5156
    %v5413 = vmax.f32 %v4915, %v5157
    %v5414 = vmax.f32 %v4917, %v5158
    %v5415 = vmax.f32 %v3761, %v5159
    %v5416 = vmax.f32 %v3763, %v5160
    %v5417 = vmax.f32 %v4147, %v5161
    %v5418 = vmax.f32 %v4149, %v5162
    %v5419 = vmax.f32 %v4533, %v5163
    %v5420 = vmax.f32 %v4535, %v5164
    %v5421 = vmax.f32 %v4919, %v5165
    %v5422 = vmax.f32 %v4921, %v5166
    %v5423 = vmax.f32 %v3767, %v5167
    %v5424 = vmax.f32 %v3769, %v5168
    %v5425 = vmax.f32 %v4153, %v5169
    %v5426 = vmax.f32 %v4155, %v5170
    %v5427 = vmax.f32 %v4539, %v5171
    %v5428 = vmax.f32 %v4541, %v5172
    %v5429 = vmax.f32 %v4925, %v5173
    %v5430 = vmax.f32 %v4927, %v5174
    %v5431 = vmax.f32 %v3771, %v5175
    %v5432 = vmax.f32 %v3773, %v5176
    %v5433 = vmax.f32 %v4157, %v5177
    %v5434 = vmax.f32 %v4159, %v5178
    %v5435 = vmax.f32 %v4543, %v5179
    %v5436 = vmax.f32 %v4545, %v5180
    %v5437 = vmax.f32 %v4929, %v5181
    %v5438 = vmax.f32 %v4931, %v5182
    %v5439 = vmax.f32 %v3777, %v5183
    %v5440 = vmax.f32 %v3779, %v5184
    %v5441 = vmax.f32 %v4163, %v5185
    %v5442 = vmax.f32 %v4165, %v5186
    %v5443 = vmax.f32 %v4549, %v5187
    %v5444 = vmax.f32 %v4551, %v5188
    %v5445 = vmax.f32 %v4935, %v5189
    %v5446 = vmax.f32 %v4937, %v5190
    %v5447 = vmax.f32 %v3781, %v5191
    %v5448 = vmax.f32 %v3783, %v5192
    %v5449 = vmax.f32 %v4167, %v5193
    %v5450 = vmax.f32 %v4169, %v5194
    %v5451 = vmax.f32 %v4553, %v5195
    %v5452 = vmax.f32 %v4555, %v5196
    %v5453 = vmax.f32 %v4939, %v5197
    %v5454 = vmax.f32 %v4941, %v5198
    %v5455 = vpack.c.bf16 %v5207, %v5199
    %v5456 = vpack.c.bf16 %v5208, %v5200
    %v5457 = vpack.c.bf16 %v5209, %v5201
    %v5458 = vpack.c.bf16 %v5210, %v5202
    %v5459 = vpack.c.bf16 %v5211, %v5203
    %v5460 = vpack.c.bf16 %v5212, %v5204
    %v5461 = vpack.c.bf16 %v5213, %v5205
    %v5462 = vpack.c.bf16 %v5214, %v5206
    %v5463 = vpack.c.bf16 %v5223, %v5215
    %v5464 = vpack.c.bf16 %v5224, %v5216
    %v5465 = vpack.c.bf16 %v5225, %v5217
    %v5466 = vpack.c.bf16 %v5226, %v5218
    %v5467 = vpack.c.bf16 %v5227, %v5219
    %v5468 = vpack.c.bf16 %v5228, %v5220
    %v5469 = vpack.c.bf16 %v5229, %v5221
    %v5470 = vpack.c.bf16 %v5230, %v5222
    %v5471 = vpack.c.bf16 %v5239, %v5231
    %v5472 = vpack.c.bf16 %v5240, %v5232
    %v5473 = vpack.c.bf16 %v5241, %v5233
    %v5474 = vpack.c.bf16 %v5242, %v5234
    %v5475 = vpack.c.bf16 %v5243, %v5235
    %v5476 = vpack.c.bf16 %v5244, %v5236
    %v5477 = vpack.c.bf16 %v5245, %v5237
    %v5478 = vpack.c.bf16 %v5246, %v5238
    %v5479 = vpack.c.bf16 %v5255, %v5247
    %v5480 = vpack.c.bf16 %v5256, %v5248
    %v5481 = vpack.c.bf16 %v5257, %v5249
    %v5482 = vpack.c.bf16 %v5258, %v5250
    %v5483 = vpack.c.bf16 %v5259, %v5251
    %v5484 = vpack.c.bf16 %v5260, %v5252
    %v5485 = vpack.c.bf16 %v5261, %v5253
    %v5486 = vpack.c.bf16 %v5262, %v5254
    %v5487 = vpack.c.bf16 %v5271, %v5263
    %v5488 = vpack.c.bf16 %v5272, %v5264
    %v5489 = vpack.c.bf16 %v5273, %v5265
    %v5490 = vpack.c.bf16 %v5274, %v5266
    %v5491 = vpack.c.bf16 %v5275, %v5267
    %v5492 = vpack.c.bf16 %v5276, %v5268
    %v5493 = vpack.c.bf16 %v5277, %v5269
    %v5494 = vpack.c.bf16 %v5278, %v5270
    %v5495 = vpack.c.bf16 %v5287, %v5279
    %v5496 = vpack.c.bf16 %v5288, %v5280
    %v5497 = vpack.c.bf16 %v5289, %v5281
    %v5498 = vpack.c.bf16 %v5290, %v5282
    %v5499 = vpack.c.bf16 %v5291, %v5283
    %v5500 = vpack.c.bf16 %v5292, %v5284
    %v5501 = vpack.c.bf16 %v5293, %v5285
    %v5502 = vpack.c.bf16 %v5294, %v5286
    %v5503 = vpack.c.bf16 %v5303, %v5295
    %v5504 = vpack.c.bf16 %v5304, %v5296
    %v5505 = vpack.c.bf16 %v5305, %v5297
    %v5506 = vpack.c.bf16 %v5306, %v5298
    %v5507 = vpack.c.bf16 %v5307, %v5299
    %v5508 = vpack.c.bf16 %v5308, %v5300
    %v5509 = vpack.c.bf16 %v5309, %v5301
    %v5510 = vpack.c.bf16 %v5310, %v5302
    %v5511 = vpack.c.bf16 %v5319, %v5311
    %v5512 = vpack.c.bf16 %v5320, %v5312
    %v5513 = vpack.c.bf16 %v5321, %v5313
    %v5514 = vpack.c.bf16 %v5322, %v5314
    %v5515 = vpack.c.bf16 %v5323, %v5315
    %v5516 = vpack.c.bf16 %v5324, %v5316
    %v5517 = vpack.c.bf16 %v5325, %v5317
    %v5518 = vpack.c.bf16 %v5326, %v5318
    %v5519 = vpack.c.bf16 %v5335, %v5327
    %v5520 = vpack.c.bf16 %v5336, %v5328
    %v5521 = vpack.c.bf16 %v5337, %v5329
    %v5522 = vpack.c.bf16 %v5338, %v5330
    %v5523 = vpack.c.bf16 %v5339, %v5331
    %v5524 = vpack.c.bf16 %v5340, %v5332
    %v5525 = vpack.c.bf16 %v5341, %v5333
    %v5526 = vpack.c.bf16 %v5342, %v5334
    %v5527 = vpack.c.bf16 %v5351, %v5343
    %v5528 = vpack.c.bf16 %v5352, %v5344
    %v5529 = vpack.c.bf16 %v5353, %v5345
    %v5530 = vpack.c.bf16 %v5354, %v5346
    %v5531 = vpack.c.bf16 %v5355, %v5347
    %v5532 = vpack.c.bf16 %v5356, %v5348
    %v5533 = vpack.c.bf16 %v5357, %v5349
    %v5534 = vpack.c.bf16 %v5358, %v5350
    %v5535 = vpack.c.bf16 %v5367, %v5359
    %v5536 = vpack.c.bf16 %v5368, %v5360
    %v5537 = vpack.c.bf16 %v5369, %v5361
    %v5538 = vpack.c.bf16 %v5370, %v5362
    %v5539 = vpack.c.bf16 %v5371, %v5363
    %v5540 = vpack.c.bf16 %v5372, %v5364
    %v5541 = vpack.c.bf16 %v5373, %v5365
    %v5542 = vpack.c.bf16 %v5374, %v5366
    %v5543 = vpack.c.bf16 %v5383, %v5375
    %v5544 = vpack.c.bf16 %v5384, %v5376
    %v5545 = vpack.c.bf16 %v5385, %v5377
    %v5546 = vpack.c.bf16 %v5386, %v5378
    %v5547 = vpack.c.bf16 %v5387, %v5379
    %v5548 = vpack.c.bf16 %v5388, %v5380
    %v5549 = vpack.c.bf16 %v5389, %v5381
    %v5550 = vpack.c.bf16 %v5390, %v5382
    %v5551 = vpack.c.bf16 %v5399, %v5391
    %v5552 = vpack.c.bf16 %v5400, %v5392
    %v5553 = vpack.c.bf16 %v5401, %v5393
    %v5554 = vpack.c.bf16 %v5402, %v5394
    %v5555 = vpack.c.bf16 %v5403, %v5395
    %v5556 = vpack.c.bf16 %v5404, %v5396
    %v5557 = vpack.c.bf16 %v5405, %v5397
    %v5558 = vpack.c.bf16 %v5406, %v5398
    %v5559 = vpack.c.bf16 %v5415, %v5407
    %v5560 = vpack.c.bf16 %v5416, %v5408
    %v5561 = vpack.c.bf16 %v5417, %v5409
    %v5562 = vpack.c.bf16 %v5418, %v5410
    %v5563 = vpack.c.bf16 %v5419, %v5411
    %v5564 = vpack.c.bf16 %v5420, %v5412
    %v5565 = vpack.c.bf16 %v5421, %v5413
    %v5566 = vpack.c.bf16 %v5422, %v5414
    %v5567 = vpack.c.bf16 %v5431, %v5423
    %v5568 = vpack.c.bf16 %v5432, %v5424
    %v5569 = vpack.c.bf16 %v5433, %v5425
    %v5570 = vpack.c.bf16 %v5434, %v5426
    %v5571 = vpack.c.bf16 %v5435, %v5427
    %v5572 = vpack.c.bf16 %v5436, %v5428
    %v5573 = vpack.c.bf16 %v5437, %v5429
    %v5574 = vpack.c.bf16 %v5438, %v5430
    %v5575 = vpack.c.bf16 %v5447, %v5439
    %v5576 = vpack.c.bf16 %v5448, %v5440
    %v5577 = vpack.c.bf16 %v5449, %v5441
    %v5578 = vpack.c.bf16 %v5450, %v5442
    %v5579 = vpack.c.bf16 %v5451, %v5443
    %v5580 = vpack.c.bf16 %v5452, %v5444
    %v5581 = vpack.c.bf16 %v5453, %v5445
    %v5582 = vpack.c.bf16 %v5454, %v5446
    %v5583 = vld [vmem:[#allocation13] sm:$0xff]
    %v5584 = vld [vmem:[#allocation13 + $0x8] sm:$0xff]
    %v5585 = vld [vmem:[#allocation13 + $0x10] sm:$0xff]
    %v5586 = vld [vmem:[#allocation13 + $0x18] sm:$0xf]
    %v5587 = vld [vmem:[#allocation13 + $0x1c] sm:$0xff]
    %v5588 = vld [vmem:[#allocation13 + $0x24] sm:$0xff]
    %v5589 = vld [vmem:[#allocation13 + $0x2c] sm:$0xff]
    %v5590 = vld [vmem:[#allocation13 + $0x34] sm:$0xf]
    %v5591 = vld [vmem:[#allocation13 + $0x38] sm:$0xff]
    %v5592 = vld [vmem:[#allocation13 + $0x40] sm:$0xff]
    %v5593 = vld [vmem:[#allocation13 + $0x48] sm:$0xff]
    %v5594 = vld [vmem:[#allocation13 + $0x50] sm:$0xf]
    %v5595 = vld [vmem:[#allocation13 + $0x54] sm:$0xff]
    %v5596 = vld [vmem:[#allocation13 + $0x5c] sm:$0xff]
    %v5597 = vld [vmem:[#allocation13 + $0x64] sm:$0xff]
    %v5598 = vld [vmem:[#allocation13 + $0x6c] sm:$0xf]
    %v5599 = vld [vmem:[#allocation13 + $0x70] sm:$0xff]
    %v5600 = vld [vmem:[#allocation13 + $0x78] sm:$0xff]
    %v5601 = vld [vmem:[#allocation13 + $0x80] sm:$0xff]
    %v5602 = vld [vmem:[#allocation13 + $0x88] sm:$0xf]
    %v5603 = vld [vmem:[#allocation13 + $0x8c] sm:$0xff]
    %v5604 = vld [vmem:[#allocation13 + $0x94] sm:$0xff]
    %v5605 = vld [vmem:[#allocation13 + $0x9c] sm:$0xff]
    %v5606 = vld [vmem:[#allocation13 + $0xa4] sm:$0xf]
    %v5607 = vld [vmem:[#allocation13 + $0xa8] sm:$0xff]
    %v5608 = vld [vmem:[#allocation13 + $0xb0] sm:$0xff]
    %v5609 = vld [vmem:[#allocation13 + $0xb8] sm:$0xff]
    %v5610 = vld [vmem:[#allocation13 + $0xc0] sm:$0xf]
    %v5611 = vld [vmem:[#allocation13 + $0xc4] sm:$0xff]
    %v5612 = vld [vmem:[#allocation13 + $0xcc] sm:$0xff]
    %v5613 = vld [vmem:[#allocation13 + $0xd4] sm:$0xff]
    %v5614 = vld [vmem:[#allocation13 + $0xdc] sm:$0xf]
    %v5615 = vld [vmem:[#allocation13 + $0xe0] sm:$0xff]
    %v5616 = vld [vmem:[#allocation13 + $0xe8] sm:$0xff]
    %v5617 = vld [vmem:[#allocation13 + $0xf0] sm:$0xff]
    %v5618 = vld [vmem:[#allocation13 + $0xf8] sm:$0xf]
    %v5619 = vld [vmem:[#allocation13 + $0xfc] sm:$0xff]
    %v5620 = vld [vmem:[#allocation13 + $0x104] sm:$0xff]
    %v5621 = vld [vmem:[#allocation13 + $0x10c] sm:$0xff]
    %v5622 = vld [vmem:[#allocation13 + $0x114] sm:$0xf]
    %v5623 = vld [vmem:[#allocation13 + $0x118] sm:$0xff]
    %v5624 = vld [vmem:[#allocation13 + $0x120] sm:$0xff]
    %v5625 = vld [vmem:[#allocation13 + $0x128] sm:$0xff]
    %v5626 = vld [vmem:[#allocation13 + $0x130] sm:$0xf]
    %v5627 = vld [vmem:[#allocation13 + $0x134] sm:$0xff]
    %v5628 = vld [vmem:[#allocation13 + $0x13c] sm:$0xff]
    %v5629 = vld [vmem:[#allocation13 + $0x144] sm:$0xff]
    %v5630 = vld [vmem:[#allocation13 + $0x14c] sm:$0xf]
    %v5631 = vld [vmem:[#allocation13 + $0x150] sm:$0xff]
    %v5632 = vld [vmem:[#allocation13 + $0x158] sm:$0xff]
    %v5633 = vld [vmem:[#allocation13 + $0x160] sm:$0xff]
    %v5634 = vld [vmem:[#allocation13 + $0x168] sm:$0xf]
    %v5635 = vld [vmem:[#allocation13 + $0x16c] sm:$0xff]
    %v5636 = vld [vmem:[#allocation13 + $0x174] sm:$0xff]
    %v5637 = vld [vmem:[#allocation13 + $0x17c] sm:$0xff]
    %v5638 = vld [vmem:[#allocation13 + $0x184] sm:$0xf]
    %v5639 = vld [vmem:[#allocation13 + $0x188] sm:$0xff]
    %v5640 = vld [vmem:[#allocation13 + $0x190] sm:$0xff]
    %v5641 = vld [vmem:[#allocation13 + $0x198] sm:$0xff]
    %v5642 = vld [vmem:[#allocation13 + $0x1a0] sm:$0xf]
    %v5643 = vld [vmem:[#allocation13 + $0x1a4] sm:$0xff]
    %v5644 = vld [vmem:[#allocation13 + $0x1ac] sm:$0xff]
    %v5645 = vld [vmem:[#allocation13 + $0x1b4] sm:$0xff]
    %v5646 = vld [vmem:[#allocation13 + $0x1bc] sm:$0xf]
    %v5647 = vld [vmem:[#allocation13 + $0x1c0] sm:$0xff]
    %v5648 = vld [vmem:[#allocation13 + $0x1c8] sm:$0xff]
    %v5649 = vld [vmem:[#allocation13 + $0x1d0] sm:$0xff]
    %v5650 = vld [vmem:[#allocation13 + $0x1d8] sm:$0xf]
    %v5651 = vld [vmem:[#allocation13 + $0x1dc] sm:$0xff]
    %v5652 = vld [vmem:[#allocation13 + $0x1e4] sm:$0xff]
    %v5653 = vld [vmem:[#allocation13 + $0x1ec] sm:$0xff]
    %v5654 = vld [vmem:[#allocation13 + $0x1f4] sm:$0xf]
    %v5655 = vld [vmem:[#allocation13 + $0x1f8] sm:$0xff]
    %v5656 = vld [vmem:[#allocation13 + $0x200] sm:$0xff]
    %v5657 = vld [vmem:[#allocation13 + $0x208] sm:$0xff]
    %v5658 = vld [vmem:[#allocation13 + $0x210] sm:$0xf]
    %v5659 = vld [vmem:[#allocation13 + $0x214] sm:$0xff]
    %v5660 = vld [vmem:[#allocation13 + $0x21c] sm:$0xff]
    %v5661 = vld [vmem:[#allocation13 + $0x224] sm:$0xff]
    %v5662 = vld [vmem:[#allocation13 + $0x22c] sm:$0xf]
    %v5663 = vld [vmem:[#allocation13 + $0x230] sm:$0xff]
    %v5664 = vld [vmem:[#allocation13 + $0x238] sm:$0xff]
    %v5665 = vld [vmem:[#allocation13 + $0x240] sm:$0xff]
    %v5666 = vld [vmem:[#allocation13 + $0x248] sm:$0xf]
    %v5667 = vld [vmem:[#allocation13 + $0x24c] sm:$0xff]
    %v5668 = vld [vmem:[#allocation13 + $0x254] sm:$0xff]
    %v5669 = vld [vmem:[#allocation13 + $0x25c] sm:$0xff]
    %v5670 = vld [vmem:[#allocation13 + $0x264] sm:$0xf]
    %v5671 = vld [vmem:[#allocation13 + $0x268] sm:$0xff]
    %v5672 = vld [vmem:[#allocation13 + $0x270] sm:$0xff]
    %v5673 = vld [vmem:[#allocation13 + $0x278] sm:$0xff]
    %v5674 = vld [vmem:[#allocation13 + $0x280] sm:$0xf]
    %v5675 = vld [vmem:[#allocation13 + $0x284] sm:$0xff]
    %v5676 = vld [vmem:[#allocation13 + $0x28c] sm:$0xff]
    %v5677 = vld [vmem:[#allocation13 + $0x294] sm:$0xff]
    %v5678 = vld [vmem:[#allocation13 + $0x29c] sm:$0xf]
    %v5679 = vld [vmem:[#allocation13 + $0x2a0] sm:$0xff]
    %v5680 = vld [vmem:[#allocation13 + $0x2a8] sm:$0xff]
    %v5681 = vld [vmem:[#allocation13 + $0x2b0] sm:$0xff]
    %v5682 = vld [vmem:[#allocation13 + $0x2b8] sm:$0xf]
    %v5683 = vld [vmem:[#allocation13 + $0x2bc] sm:$0xff]
    %v5684 = vld [vmem:[#allocation13 + $0x2c4] sm:$0xff]
    %v5685 = vld [vmem:[#allocation13 + $0x2cc] sm:$0xff]
    %v5686 = vld [vmem:[#allocation13 + $0x2d4] sm:$0xf]
    %v5687 = vld [vmem:[#allocation13 + $0x2d8] sm:$0xff]
    %v5688 = vld [vmem:[#allocation13 + $0x2e0] sm:$0xff]
    %v5689 = vld [vmem:[#allocation13 + $0x2e8] sm:$0xff]
    %v5690 = vld [vmem:[#allocation13 + $0x2f0] sm:$0xf]
    %v5691 = vld [vmem:[#allocation13 + $0x2f4] sm:$0xff]
    %v5692 = vld [vmem:[#allocation13 + $0x2fc] sm:$0xff]
    %v5693 = vld [vmem:[#allocation13 + $0x304] sm:$0xff]
    %v5694 = vld [vmem:[#allocation13 + $0x30c] sm:$0xf]
    %v5695 = vld [vmem:[#allocation13 + $0x310] sm:$0xff]
    %v5696 = vld [vmem:[#allocation13 + $0x318] sm:$0xff]
    %v5697 = vld [vmem:[#allocation13 + $0x320] sm:$0xff]
    %v5698 = vld [vmem:[#allocation13 + $0x328] sm:$0xf]
    %v5699 = vld [vmem:[#allocation13 + $0x32c] sm:$0xff]
    %v5700 = vld [vmem:[#allocation13 + $0x334] sm:$0xff]
    %v5701 = vld [vmem:[#allocation13 + $0x33c] sm:$0xff]
    %v5702 = vld [vmem:[#allocation13 + $0x344] sm:$0xf]
    %v5703 = vld [vmem:[#allocation13 + $0x348] sm:$0xff]
    %v5704 = vld [vmem:[#allocation13 + $0x350] sm:$0xff]
    %v5705 = vld [vmem:[#allocation13 + $0x358] sm:$0xff]
    %v5706 = vld [vmem:[#allocation13 + $0x360] sm:$0xf]
    %v5707 = vld [vmem:[#allocation13 + $0x364] sm:$0xff]
    %v5708 = vld [vmem:[#allocation13 + $0x36c] sm:$0xff]
    %v5709 = vld [vmem:[#allocation13 + $0x374] sm:$0xff]
    %v5710 = vld [vmem:[#allocation13 + $0x37c] sm:$0xf]
    %v5711 = vld [vmem:[#allocation13 + $0x380] sm:$0xff]
    %v5712 = vld [vmem:[#allocation13 + $0x388] sm:$0xff]
    %v5713 = vld [vmem:[#allocation13 + $0x390] sm:$0xff]
    %v5714 = vld [vmem:[#allocation13 + $0x398] sm:$0xf]
    %v5715 = vld [vmem:[#allocation13 + $0x39c] sm:$0xff]
    %v5716 = vld [vmem:[#allocation13 + $0x3a4] sm:$0xff]
    %v5717 = vld [vmem:[#allocation13 + $0x3ac] sm:$0xff]
    %v5718 = vld [vmem:[#allocation13 + $0x3b4] sm:$0xf]
    %v5719 = vld [vmem:[#allocation13 + $0x3b8] sm:$0xff]
    %v5720 = vld [vmem:[#allocation13 + $0x3c0] sm:$0xff]
    %v5721 = vld [vmem:[#allocation13 + $0x3c8] sm:$0xff]
    %v5722 = vld [vmem:[#allocation13 + $0x3d0] sm:$0xf]
    %v5723 = vld [vmem:[#allocation13 + $0x3d4] sm:$0xff]
    %v5724 = vld [vmem:[#allocation13 + $0x3dc] sm:$0xff]
    %v5725 = vld [vmem:[#allocation13 + $0x3e4] sm:$0xff]
    %v5726 = vld [vmem:[#allocation13 + $0x3ec] sm:$0xf]
    %v5727 = vld [vmem:[#allocation13 + $0x3f0] sm:$0xff]
    %v5728 = vld [vmem:[#allocation13 + $0x3f8] sm:$0xff]
    %v5729 = vld [vmem:[#allocation13 + $0x400] sm:$0xff]
    %v5730 = vld [vmem:[#allocation13 + $0x408] sm:$0xf]
    %v5731 = vld [vmem:[#allocation13 + $0x40c] sm:$0xff]
    %v5732 = vld [vmem:[#allocation13 + $0x414] sm:$0xff]
    %v5733 = vld [vmem:[#allocation13 + $0x41c] sm:$0xff]
    %v5734 = vld [vmem:[#allocation13 + $0x424] sm:$0xf]
    %v5735 = vld [vmem:[#allocation13 + $0x428] sm:$0xff]
    %v5736 = vld [vmem:[#allocation13 + $0x430] sm:$0xff]
    %v5737 = vld [vmem:[#allocation13 + $0x438] sm:$0xff]
    %v5738 = vld [vmem:[#allocation13 + $0x440] sm:$0xf]
    %v5739 = vld [vmem:[#allocation13 + $0x444] sm:$0xff]
    %v5740 = vld [vmem:[#allocation13 + $0x44c] sm:$0xff]
    %v5741 = vld [vmem:[#allocation13 + $0x454] sm:$0xff]
    %v5742 = vld [vmem:[#allocation13 + $0x45c] sm:$0xf]
    %v5743 = vld [vmem:[#allocation13 + $0x460] sm:$0xff]
    %v5744 = vld [vmem:[#allocation13 + $0x468] sm:$0xff]
    %v5745 = vld [vmem:[#allocation13 + $0x470] sm:$0xff]
    %v5746 = vld [vmem:[#allocation13 + $0x478] sm:$0xf]
    %v5747 = vld [vmem:[#allocation13 + $0x47c] sm:$0xff]
    %v5748 = vld [vmem:[#allocation13 + $0x484] sm:$0xff]
    %v5749 = vld [vmem:[#allocation13 + $0x48c] sm:$0xff]
    %v5750 = vld [vmem:[#allocation13 + $0x494] sm:$0xf]
    %v5751 = vld [vmem:[#allocation13 + $0x498] sm:$0xff]
    %v5752 = vld [vmem:[#allocation13 + $0x4a0] sm:$0xff]
    %v5753 = vld [vmem:[#allocation13 + $0x4a8] sm:$0xff]
    %v5754 = vld [vmem:[#allocation13 + $0x4b0] sm:$0xf]
    %v5755 = vld [vmem:[#allocation13 + $0x4b4] sm:$0xff]
    %v5756 = vld [vmem:[#allocation13 + $0x4bc] sm:$0xff]
    %v5757 = vld [vmem:[#allocation13 + $0x4c4] sm:$0xff]
    %v5758 = vld [vmem:[#allocation13 + $0x4cc] sm:$0xf]
    %v5759 = vld [vmem:[#allocation13 + $0x4d0] sm:$0xff]
    %v5760 = vld [vmem:[#allocation13 + $0x4d8] sm:$0xff]
    %v5761 = vld [vmem:[#allocation13 + $0x4e0] sm:$0xff]
    %v5762 = vld [vmem:[#allocation13 + $0x4e8] sm:$0xf]
    %v5763 = vld [vmem:[#allocation13 + $0x4ec] sm:$0xff]
    %v5764 = vld [vmem:[#allocation13 + $0x4f4] sm:$0xff]
    %v5765 = vld [vmem:[#allocation13 + $0x4fc] sm:$0xff]
    %v5766 = vld [vmem:[#allocation13 + $0x504] sm:$0xf]
    %v5767 = vld [vmem:[#allocation13 + $0x508] sm:$0xff]
    %v5768 = vld [vmem:[#allocation13 + $0x510] sm:$0xff]
    %v5769 = vld [vmem:[#allocation13 + $0x518] sm:$0xff]
    %v5770 = vld [vmem:[#allocation13 + $0x520] sm:$0xf]
    %v5771 = vld [vmem:[#allocation13 + $0x524] sm:$0xff]
    %v5772 = vld [vmem:[#allocation13 + $0x52c] sm:$0xff]
    %v5773 = vld [vmem:[#allocation13 + $0x534] sm:$0xff]
    %v5774 = vld [vmem:[#allocation13 + $0x53c] sm:$0xf]
    %v5775 = vld [vmem:[#allocation13 + $0x540] sm:$0xff]
    %v5776 = vld [vmem:[#allocation13 + $0x548] sm:$0xff]
    %v5777 = vld [vmem:[#allocation13 + $0x550] sm:$0xff]
    %v5778 = vld [vmem:[#allocation13 + $0x558] sm:$0xf]
    %v5779 = vld [vmem:[#allocation13 + $0x55c] sm:$0xff]
    %v5780 = vld [vmem:[#allocation13 + $0x564] sm:$0xff]
    %v5781 = vld [vmem:[#allocation13 + $0x56c] sm:$0xff]
    %v5782 = vld [vmem:[#allocation13 + $0x574] sm:$0xf]
    %v5783 = vld [vmem:[#allocation13 + $0x578] sm:$0xff]
    %v5784 = vld [vmem:[#allocation13 + $0x580] sm:$0xff]
    %v5785 = vld [vmem:[#allocation13 + $0x588] sm:$0xff]
    %v5786 = vld [vmem:[#allocation13 + $0x590] sm:$0xf]
    %v5787 = vld [vmem:[#allocation13 + $0x594] sm:$0xff]
    %v5788 = vld [vmem:[#allocation13 + $0x59c] sm:$0xff]
    %v5789 = vld [vmem:[#allocation13 + $0x5a4] sm:$0xff]
    %v5790 = vld [vmem:[#allocation13 + $0x5ac] sm:$0xf]
    %v5791 = vld [vmem:[#allocation13 + $0x5b0] sm:$0xff]
    %v5792 = vld [vmem:[#allocation13 + $0x5b8] sm:$0xff]
    %v5793 = vld [vmem:[#allocation13 + $0x5c0] sm:$0xff]
    %v5794 = vld [vmem:[#allocation13 + $0x5c8] sm:$0xf]
    %v5795 = vld [vmem:[#allocation13 + $0x5cc] sm:$0xff]
    %v5796 = vld [vmem:[#allocation13 + $0x5d4] sm:$0xff]
    %v5797 = vld [vmem:[#allocation13 + $0x5dc] sm:$0xff]
    %v5798 = vld [vmem:[#allocation13 + $0x5e4] sm:$0xf]
    %v5799 = vld [vmem:[#allocation13 + $0x5e8] sm:$0xff]
    %v5800 = vld [vmem:[#allocation13 + $0x5f0] sm:$0xff]
    %v5801 = vld [vmem:[#allocation13 + $0x5f8] sm:$0xff]
    %v5802 = vld [vmem:[#allocation13 + $0x600] sm:$0xf]
    %v5803 = vld [vmem:[#allocation13 + $0x604] sm:$0xff]
    %v5804 = vld [vmem:[#allocation13 + $0x60c] sm:$0xff]
    %v5805 = vld [vmem:[#allocation13 + $0x614] sm:$0xff]
    %v5806 = vld [vmem:[#allocation13 + $0x61c] sm:$0xf]
    %v5807 = vld [vmem:[#allocation13 + $0x620] sm:$0xff]
    %v5808 = vld [vmem:[#allocation13 + $0x628] sm:$0xff]
    %v5809 = vld [vmem:[#allocation13 + $0x630] sm:$0xff]
    %v5810 = vld [vmem:[#allocation13 + $0x638] sm:$0xf]
    %v5811 = vld [vmem:[#allocation13 + $0x63c] sm:$0xff]
    %v5812 = vld [vmem:[#allocation13 + $0x644] sm:$0xff]
    %v5813 = vld [vmem:[#allocation13 + $0x64c] sm:$0xff]
    %v5814 = vld [vmem:[#allocation13 + $0x654] sm:$0xf]
    %v5815 = vld [vmem:[#allocation13 + $0x658] sm:$0xff]
    %v5816 = vld [vmem:[#allocation13 + $0x660] sm:$0xff]
    %v5817 = vld [vmem:[#allocation13 + $0x668] sm:$0xff]
    %v5818 = vld [vmem:[#allocation13 + $0x670] sm:$0xf]
    %v5819 = vld [vmem:[#allocation13 + $0x674] sm:$0xff]
    %v5820 = vld [vmem:[#allocation13 + $0x67c] sm:$0xff]
    %v5821 = vld [vmem:[#allocation13 + $0x684] sm:$0xff]
    %v5822 = vld [vmem:[#allocation13 + $0x68c] sm:$0xf]
    %v5823 = vld [vmem:[#allocation13 + $0x690] sm:$0xff]
    %v5824 = vld [vmem:[#allocation13 + $0x698] sm:$0xff]
    %v5825 = vld [vmem:[#allocation13 + $0x6a0] sm:$0xff]
    %v5826 = vld [vmem:[#allocation13 + $0x6a8] sm:$0xf]
    %v5827 = vld [vmem:[#allocation13 + $0x6ac] sm:$0xff]
    %v5828 = vld [vmem:[#allocation13 + $0x6b4] sm:$0xff]
    %v5829 = vld [vmem:[#allocation13 + $0x6bc] sm:$0xff]
    %v5830 = vld [vmem:[#allocation13 + $0x6c4] sm:$0xf]
    %v5831 = vld [vmem:[#allocation13 + $0x6c8] sm:$0xff]
    %v5832 = vld [vmem:[#allocation13 + $0x6d0] sm:$0xff]
    %v5833 = vld [vmem:[#allocation13 + $0x6d8] sm:$0xff]
    %v5834 = vld [vmem:[#allocation13 + $0x6e0] sm:$0xf]
    %v5835 = vld [vmem:[#allocation13 + $0x6e4] sm:$0xff]
    %v5836 = vld [vmem:[#allocation13 + $0x6ec] sm:$0xff]
    %v5837 = vld [vmem:[#allocation13 + $0x6f4] sm:$0xff]
    %v5838 = vld [vmem:[#allocation13 + $0x6fc] sm:$0xf]
    %v5839 = vld [vmem:[#allocation13 + $0x700] sm:$0xff]
    %v5840 = vld [vmem:[#allocation13 + $0x708] sm:$0xff]
    %v5841 = vld [vmem:[#allocation13 + $0x710] sm:$0xff]
    %v5842 = vld [vmem:[#allocation13 + $0x718] sm:$0xf]
    %v5843 = vld [vmem:[#allocation13 + $0x71c] sm:$0xff]
    %v5844 = vld [vmem:[#allocation13 + $0x724] sm:$0xff]
    %v5845 = vld [vmem:[#allocation13 + $0x72c] sm:$0xff]
    %v5846 = vld [vmem:[#allocation13 + $0x734] sm:$0xf]
    %v5847 = vld [vmem:[#allocation13 + $0x738] sm:$0xff]
    %v5848 = vld [vmem:[#allocation13 + $0x740] sm:$0xff]
    %v5849 = vld [vmem:[#allocation13 + $0x748] sm:$0xff]
    %v5850 = vld [vmem:[#allocation13 + $0x750] sm:$0xf]
    %v5851 = vld [vmem:[#allocation13 + $0x754] sm:$0xff]
    %v5852 = vld [vmem:[#allocation13 + $0x75c] sm:$0xff]
    %v5853 = vld [vmem:[#allocation13 + $0x764] sm:$0xff]
    %v5854 = vld [vmem:[#allocation13 + $0x76c] sm:$0xf]
    %v5855 = vld [vmem:[#allocation13 + $0x770] sm:$0xff]
    %v5856 = vld [vmem:[#allocation13 + $0x778] sm:$0xff]
    %v5857 = vld [vmem:[#allocation13 + $0x780] sm:$0xff]
    %v5858 = vld [vmem:[#allocation13 + $0x788] sm:$0xf]
    %v5859 = vld [vmem:[#allocation13 + $0x78c] sm:$0xff]
    %v5860 = vld [vmem:[#allocation13 + $0x794] sm:$0xff]
    %v5861 = vld [vmem:[#allocation13 + $0x79c] sm:$0xff]
    %v5862 = vld [vmem:[#allocation13 + $0x7a4] sm:$0xf]
    %v5863 = vld [vmem:[#allocation13 + $0x7a8] sm:$0xff]
    %v5864 = vld [vmem:[#allocation13 + $0x7b0] sm:$0xff]
    %v5865 = vld [vmem:[#allocation13 + $0x7b8] sm:$0xff]
    %v5866 = vld [vmem:[#allocation13 + $0x7c0] sm:$0xf]
    %v5867 = vld [vmem:[#allocation13 + $0x7c4] sm:$0xff]
    %v5868 = vld [vmem:[#allocation13 + $0x7cc] sm:$0xff]
    %v5869 = vld [vmem:[#allocation13 + $0x7d4] sm:$0xff]
    %v5870 = vld [vmem:[#allocation13 + $0x7dc] sm:$0xf]
    %v5871 = vld [vmem:[#allocation13 + $0x7e0] sm:$0xff]
    %v5872 = vld [vmem:[#allocation13 + $0x7e8] sm:$0xff]
    %v5873 = vld [vmem:[#allocation13 + $0x7f0] sm:$0xff]
    %v5874 = vld [vmem:[#allocation13 + $0x7f8] sm:$0xf]
    %v5875 = vld [vmem:[#allocation13 + $0x7fc] sm:$0xff]
    %v5876 = vld [vmem:[#allocation13 + $0x804] sm:$0xff]
    %v5877 = vld [vmem:[#allocation13 + $0x80c] sm:$0xff]
    %v5878 = vld [vmem:[#allocation13 + $0x814] sm:$0xf]
    %v5879 = vld [vmem:[#allocation13 + $0x818] sm:$0xff]
    %v5880 = vld [vmem:[#allocation13 + $0x820] sm:$0xff]
    %v5881 = vld [vmem:[#allocation13 + $0x828] sm:$0xff]
    %v5882 = vld [vmem:[#allocation13 + $0x830] sm:$0xf]
    %v5883 = vld [vmem:[#allocation13 + $0x834] sm:$0xff]
    %v5884 = vld [vmem:[#allocation13 + $0x83c] sm:$0xff]
    %v5885 = vld [vmem:[#allocation13 + $0x844] sm:$0xff]
    %v5886 = vld [vmem:[#allocation13 + $0x84c] sm:$0xf]
    %v5887 = vld [vmem:[#allocation13 + $0x850] sm:$0xff]
    %v5888 = vld [vmem:[#allocation13 + $0x858] sm:$0xff]
    %v5889 = vld [vmem:[#allocation13 + $0x860] sm:$0xff]
    %v5890 = vld [vmem:[#allocation13 + $0x868] sm:$0xf]
    %v5891 = vld [vmem:[#allocation13 + $0x86c] sm:$0xff]
    %v5892 = vld [vmem:[#allocation13 + $0x874] sm:$0xff]
    %v5893 = vld [vmem:[#allocation13 + $0x87c] sm:$0xff]
    %v5894 = vld [vmem:[#allocation13 + $0x884] sm:$0xf]
    %v5895 = vld [vmem:[#allocation13 + $0x888] sm:$0xff]
    %v5896 = vld [vmem:[#allocation13 + $0x890] sm:$0xff]
    %v5897 = vld [vmem:[#allocation13 + $0x898] sm:$0xff]
    %v5898 = vld [vmem:[#allocation13 + $0x8a0] sm:$0xf]
    %v5899 = vld [vmem:[#allocation13 + $0x8a4] sm:$0xff]
    %v5900 = vld [vmem:[#allocation13 + $0x8ac] sm:$0xff]
    %v5901 = vld [vmem:[#allocation13 + $0x8b4] sm:$0xff]
    %v5902 = vld [vmem:[#allocation13 + $0x8bc] sm:$0xf]
    %v5903 = vld [vmem:[#allocation13 + $0x8c0] sm:$0xff]
    %v5904 = vld [vmem:[#allocation13 + $0x8c8] sm:$0xff]
    %v5905 = vld [vmem:[#allocation13 + $0x8d0] sm:$0xff]
    %v5906 = vld [vmem:[#allocation13 + $0x8d8] sm:$0xf]
    %v5907 = vld [vmem:[#allocation13 + $0x8dc] sm:$0xff]
    %v5908 = vld [vmem:[#allocation13 + $0x8e4] sm:$0xff]
    %v5909 = vld [vmem:[#allocation13 + $0x8ec] sm:$0xff]
    %v5910 = vld [vmem:[#allocation13 + $0x8f4] sm:$0xf]
    %v5911 = vld [vmem:[#allocation13 + $0x8f8] sm:$0xff]
    %v5912 = vld [vmem:[#allocation13 + $0x900] sm:$0xff]
    %v5913 = vld [vmem:[#allocation13 + $0x908] sm:$0xff]
    %v5914 = vld [vmem:[#allocation13 + $0x910] sm:$0xf]
    %v5915 = vld [vmem:[#allocation13 + $0x914] sm:$0xff]
    %v5916 = vld [vmem:[#allocation13 + $0x91c] sm:$0xff]
    %v5917 = vld [vmem:[#allocation13 + $0x924] sm:$0xff]
    %v5918 = vld [vmem:[#allocation13 + $0x92c] sm:$0xf]
    %v5919 = vld [vmem:[#allocation13 + $0x930] sm:$0xff]
    %v5920 = vld [vmem:[#allocation13 + $0x938] sm:$0xff]
    %v5921 = vld [vmem:[#allocation13 + $0x940] sm:$0xff]
    %v5922 = vld [vmem:[#allocation13 + $0x948] sm:$0xf]
    %v5923 = vld [vmem:[#allocation13 + $0x94c] sm:$0xff]
    %v5924 = vld [vmem:[#allocation13 + $0x954] sm:$0xff]
    %v5925 = vld [vmem:[#allocation13 + $0x95c] sm:$0xff]
    %v5926 = vld [vmem:[#allocation13 + $0x964] sm:$0xf]
    %v5927 = vld [vmem:[#allocation13 + $0x968] sm:$0xff]
    %v5928 = vld [vmem:[#allocation13 + $0x970] sm:$0xff]
    %v5929 = vld [vmem:[#allocation13 + $0x978] sm:$0xff]
    %v5930 = vld [vmem:[#allocation13 + $0x980] sm:$0xf]
    %v5931 = vld [vmem:[#allocation13 + $0x984] sm:$0xff]
    %v5932 = vld [vmem:[#allocation13 + $0x98c] sm:$0xff]
    %v5933 = vld [vmem:[#allocation13 + $0x994] sm:$0xff]
    %v5934 = vld [vmem:[#allocation13 + $0x99c] sm:$0xf]
    %v5935 = vld [vmem:[#allocation13 + $0x9a0] sm:$0xff]
    %v5936 = vld [vmem:[#allocation13 + $0x9a8] sm:$0xff]
    %v5937 = vld [vmem:[#allocation13 + $0x9b0] sm:$0xff]
    %v5938 = vld [vmem:[#allocation13 + $0x9b8] sm:$0xf]
    %v5939 = vld [vmem:[#allocation13 + $0x9bc] sm:$0xff]
    %v5940 = vld [vmem:[#allocation13 + $0x9c4] sm:$0xff]
    %v5941 = vld [vmem:[#allocation13 + $0x9cc] sm:$0xff]
    %v5942 = vld [vmem:[#allocation13 + $0x9d4] sm:$0xf]
    %v5943 = vld [vmem:[#allocation13 + $0x9d8] sm:$0xff]
    %v5944 = vld [vmem:[#allocation13 + $0x9e0] sm:$0xff]
    %v5945 = vld [vmem:[#allocation13 + $0x9e8] sm:$0xff]
    %v5946 = vld [vmem:[#allocation13 + $0x9f0] sm:$0xf]
    %v5947 = vld [vmem:[#allocation13 + $0x9f4] sm:$0xff]
    %v5948 = vld [vmem:[#allocation13 + $0x9fc] sm:$0xff]
    %v5949 = vld [vmem:[#allocation13 + $0xa04] sm:$0xff]
    %v5950 = vld [vmem:[#allocation13 + $0xa0c] sm:$0xf]
    %v5951 = vld [vmem:[#allocation13 + $0xa10] sm:$0xff]
    %v5952 = vld [vmem:[#allocation13 + $0xa18] sm:$0xff]
    %v5953 = vld [vmem:[#allocation13 + $0xa20] sm:$0xff]
    %v5954 = vld [vmem:[#allocation13 + $0xa28] sm:$0xf]
    %v5955 = vld [vmem:[#allocation13 + $0xa2c] sm:$0xff]
    %v5956 = vld [vmem:[#allocation13 + $0xa34] sm:$0xff]
    %v5957 = vld [vmem:[#allocation13 + $0xa3c] sm:$0xff]
    %v5958 = vld [vmem:[#allocation13 + $0xa44] sm:$0xf]
    %v5959 = vld [vmem:[#allocation13 + $0xa48] sm:$0xff]
    %v5960 = vld [vmem:[#allocation13 + $0xa50] sm:$0xff]
    %v5961 = vld [vmem:[#allocation13 + $0xa58] sm:$0xff]
    %v5962 = vld [vmem:[#allocation13 + $0xa60] sm:$0xf]
    %v5963 = vld [vmem:[#allocation13 + $0xa64] sm:$0xff]
    %v5964 = vld [vmem:[#allocation13 + $0xa6c] sm:$0xff]
    %v5965 = vld [vmem:[#allocation13 + $0xa74] sm:$0xff]
    %v5966 = vld [vmem:[#allocation13 + $0xa7c] sm:$0xf]
    %v5967 = vld [vmem:[#allocation13 + $0xa80] sm:$0xff]
    %v5968 = vld [vmem:[#allocation13 + $0xa88] sm:$0xff]
    %v5969 = vld [vmem:[#allocation13 + $0xa90] sm:$0xff]
    %v5970 = vld [vmem:[#allocation13 + $0xa98] sm:$0xf]
    %v5971 = vld [vmem:[#allocation13 + $0xa9c] sm:$0xff]
    %v5972 = vld [vmem:[#allocation13 + $0xaa4] sm:$0xff]
    %v5973 = vld [vmem:[#allocation13 + $0xaac] sm:$0xff]
    %v5974 = vld [vmem:[#allocation13 + $0xab4] sm:$0xf]
    %v5975 = vld [vmem:[#allocation13 + $0xab8] sm:$0xff]
    %v5976 = vld [vmem:[#allocation13 + $0xac0] sm:$0xff]
    %v5977 = vld [vmem:[#allocation13 + $0xac8] sm:$0xff]
    %v5978 = vld [vmem:[#allocation13 + $0xad0] sm:$0xf]
    %v5979 = vld [vmem:[#allocation13 + $0xad4] sm:$0xff]
    %v5980 = vld [vmem:[#allocation13 + $0xadc] sm:$0xff]
    %v5981 = vld [vmem:[#allocation13 + $0xae4] sm:$0xff]
    %v5982 = vld [vmem:[#allocation13 + $0xaec] sm:$0xf]
    %v5983 = vld [vmem:[#allocation13 + $0xaf0] sm:$0xff]
    %v5984 = vld [vmem:[#allocation13 + $0xaf8] sm:$0xff]
    %v5985 = vld [vmem:[#allocation13 + $0xb00] sm:$0xff]
    %v5986 = vld [vmem:[#allocation13 + $0xb08] sm:$0xf]
    %v5987 = vld [vmem:[#allocation13 + $0xb0c] sm:$0xff]
    %v5988 = vld [vmem:[#allocation13 + $0xb14] sm:$0xff]
    %v5989 = vld [vmem:[#allocation13 + $0xb1c] sm:$0xff]
    %v5990 = vld [vmem:[#allocation13 + $0xb24] sm:$0xf]
    %v5991 = vld [vmem:[#allocation13 + $0xb28] sm:$0xff]
    %v5992 = vld [vmem:[#allocation13 + $0xb30] sm:$0xff]
    %v5993 = vld [vmem:[#allocation13 + $0xb38] sm:$0xff]
    %v5994 = vld [vmem:[#allocation13 + $0xb40] sm:$0xf]
    %v5995 = vld [vmem:[#allocation13 + $0xb44] sm:$0xff]
    %v5996 = vld [vmem:[#allocation13 + $0xb4c] sm:$0xff]
    %v5997 = vld [vmem:[#allocation13 + $0xb54] sm:$0xff]
    %v5998 = vld [vmem:[#allocation13 + $0xb5c] sm:$0xf]
    %v5999 = vld [vmem:[#allocation13 + $0xb60] sm:$0xff]
    %v6000 = vld [vmem:[#allocation13 + $0xb68] sm:$0xff]
    %v6001 = vld [vmem:[#allocation13 + $0xb70] sm:$0xff]
    %v6002 = vld [vmem:[#allocation13 + $0xb78] sm:$0xf]
    %v6003 = vld [vmem:[#allocation13 + $0xb7c] sm:$0xff]
    %v6004 = vld [vmem:[#allocation13 + $0xb84] sm:$0xff]
    %v6005 = vld [vmem:[#allocation13 + $0xb8c] sm:$0xff]
    %v6006 = vld [vmem:[#allocation13 + $0xb94] sm:$0xf]
    %v6007 = vld [vmem:[#allocation13 + $0xb98] sm:$0xff]
    %v6008 = vld [vmem:[#allocation13 + $0xba0] sm:$0xff]
    %v6009 = vld [vmem:[#allocation13 + $0xba8] sm:$0xff]
    %v6010 = vld [vmem:[#allocation13 + $0xbb0] sm:$0xf]
    %v6011 = vld [vmem:[#allocation13 + $0xbb4] sm:$0xff]
    %v6012 = vld [vmem:[#allocation13 + $0xbbc] sm:$0xff]
    %v6013 = vld [vmem:[#allocation13 + $0xbc4] sm:$0xff]
    %v6014 = vld [vmem:[#allocation13 + $0xbcc] sm:$0xf]
    %v6015 = vld [vmem:[#allocation13 + $0xbd0] sm:$0xff]
    %v6016 = vld [vmem:[#allocation13 + $0xbd8] sm:$0xff]
    %v6017 = vld [vmem:[#allocation13 + $0xbe0] sm:$0xff]
    %v6018 = vld [vmem:[#allocation13 + $0xbe8] sm:$0xf]
    %v6019 = vld [vmem:[#allocation13 + $0xbec] sm:$0xff]
    %v6020 = vld [vmem:[#allocation13 + $0xbf4] sm:$0xff]
    %v6021 = vld [vmem:[#allocation13 + $0xbfc] sm:$0xff]
    %v6022 = vld [vmem:[#allocation13 + $0xc04] sm:$0xf]
    %v6023 = vld [vmem:[#allocation13 + $0xc08] sm:$0xff]
    %v6024 = vld [vmem:[#allocation13 + $0xc10] sm:$0xff]
    %v6025 = vld [vmem:[#allocation13 + $0xc18] sm:$0xff]
    %v6026 = vld [vmem:[#allocation13 + $0xc20] sm:$0xf]
    %v6027 = vld [vmem:[#allocation13 + $0xc24] sm:$0xff]
    %v6028 = vld [vmem:[#allocation13 + $0xc2c] sm:$0xff]
    %v6029 = vld [vmem:[#allocation13 + $0xc34] sm:$0xff]
    %v6030 = vld [vmem:[#allocation13 + $0xc3c] sm:$0xf]
    %v6031 = vld [vmem:[#allocation13 + $0xc40] sm:$0xff]
    %v6032 = vld [vmem:[#allocation13 + $0xc48] sm:$0xff]
    %v6033 = vld [vmem:[#allocation13 + $0xc50] sm:$0xff]
    %v6034 = vld [vmem:[#allocation13 + $0xc58] sm:$0xf]
    %v6035 = vld [vmem:[#allocation13 + $0xc5c] sm:$0xff]
    %v6036 = vld [vmem:[#allocation13 + $0xc64] sm:$0xff]
    %v6037 = vld [vmem:[#allocation13 + $0xc6c] sm:$0xff]
    %v6038 = vld [vmem:[#allocation13 + $0xc74] sm:$0xf]
    %v6039 = vld [vmem:[#allocation13 + $0xc78] sm:$0xff]
    %v6040 = vld [vmem:[#allocation13 + $0xc80] sm:$0xff]
    %v6041 = vld [vmem:[#allocation13 + $0xc88] sm:$0xff]
    %v6042 = vld [vmem:[#allocation13 + $0xc90] sm:$0xf]
    %v6043 = vld [vmem:[#allocation13 + $0xc94] sm:$0xff]
    %v6044 = vld [vmem:[#allocation13 + $0xc9c] sm:$0xff]
    %v6045 = vld [vmem:[#allocation13 + $0xca4] sm:$0xff]
    %v6046 = vld [vmem:[#allocation13 + $0xcac] sm:$0xf]
    %v6047 = vld [vmem:[#allocation13 + $0xcb0] sm:$0xff]
    %v6048 = vld [vmem:[#allocation13 + $0xcb8] sm:$0xff]
    %v6049 = vld [vmem:[#allocation13 + $0xcc0] sm:$0xff]
    %v6050 = vld [vmem:[#allocation13 + $0xcc8] sm:$0xf]
    %v6051 = vld [vmem:[#allocation13 + $0xccc] sm:$0xff]
    %v6052 = vld [vmem:[#allocation13 + $0xcd4] sm:$0xff]
    %v6053 = vld [vmem:[#allocation13 + $0xcdc] sm:$0xff]
    %v6054 = vld [vmem:[#allocation13 + $0xce4] sm:$0xf]
    %v6055 = vld [vmem:[#allocation13 + $0xce8] sm:$0xff]
    %v6056 = vld [vmem:[#allocation13 + $0xcf0] sm:$0xff]
    %v6057 = vld [vmem:[#allocation13 + $0xcf8] sm:$0xff]
    %v6058 = vld [vmem:[#allocation13 + $0xd00] sm:$0xf]
    %v6059 = vld [vmem:[#allocation13 + $0xd04] sm:$0xff]
    %v6060 = vld [vmem:[#allocation13 + $0xd0c] sm:$0xff]
    %v6061 = vld [vmem:[#allocation13 + $0xd14] sm:$0xff]
    %v6062 = vld [vmem:[#allocation13 + $0xd1c] sm:$0xf]
    %v6063 = vld [vmem:[#allocation13 + $0xd20] sm:$0xff]
    %v6064 = vld [vmem:[#allocation13 + $0xd28] sm:$0xff]
    %v6065 = vld [vmem:[#allocation13 + $0xd30] sm:$0xff]
    %v6066 = vld [vmem:[#allocation13 + $0xd38] sm:$0xf]
    %v6067 = vld [vmem:[#allocation13 + $0xd3c] sm:$0xff]
    %v6068 = vld [vmem:[#allocation13 + $0xd44] sm:$0xff]
    %v6069 = vld [vmem:[#allocation13 + $0xd4c] sm:$0xff]
    %v6070 = vld [vmem:[#allocation13 + $0xd54] sm:$0xf]
    %v6071 = vld [vmem:[#allocation13 + $0xd58] sm:$0xff]
    %v6072 = vld [vmem:[#allocation13 + $0xd60] sm:$0xff]
    %v6073 = vld [vmem:[#allocation13 + $0xd68] sm:$0xff]
    %v6074 = vld [vmem:[#allocation13 + $0xd70] sm:$0xf]
    %v6075 = vld [vmem:[#allocation13 + $0xd74] sm:$0xff]
    %v6076 = vld [vmem:[#allocation13 + $0xd7c] sm:$0xff]
    %v6077 = vld [vmem:[#allocation13 + $0xd84] sm:$0xff]
    %v6078 = vld [vmem:[#allocation13 + $0xd8c] sm:$0xf]
    %v6079 = vld [vmem:[#allocation13 + $0xd90] sm:$0xff]
    %v6080 = vld [vmem:[#allocation13 + $0xd98] sm:$0xff]
    %v6081 = vld [vmem:[#allocation13 + $0xda0] sm:$0xff]
    %v6082 = vld [vmem:[#allocation13 + $0xda8] sm:$0xf]
    %v6083 = vld [vmem:[#allocation13 + $0xdac] sm:$0xff]
    %v6084 = vld [vmem:[#allocation13 + $0xdb4] sm:$0xff]
    %v6085 = vld [vmem:[#allocation13 + $0xdbc] sm:$0xff]
    %v6086 = vld [vmem:[#allocation13 + $0xdc4] sm:$0xf]
    %v6087 = vld [vmem:[#allocation13 + $0xdc8] sm:$0xff]
    %v6088 = vld [vmem:[#allocation13 + $0xdd0] sm:$0xff]
    %v6089 = vld [vmem:[#allocation13 + $0xdd8] sm:$0xff]
    %v6090 = vld [vmem:[#allocation13 + $0xde0] sm:$0xf]
    %v6091 = vld [vmem:[#allocation13 + $0xde4] sm:$0xff]
    %v6092 = vld [vmem:[#allocation13 + $0xdec] sm:$0xff]
    %v6093 = vld [vmem:[#allocation13 + $0xdf4] sm:$0xff]
    %v6094 = vld [vmem:[#allocation13 + $0xdfc] sm:$0xf]
    %v6095 = vld [vmem:[#allocation14] sm:$0xff]
    %v6097 = vlaneseq
    %v6098 = vshrl.u32 %v6097, 7
    %v6099 = vsub.s32 0, %v6098
    %v6100 = vrot.slane %v6095, %v6099
    %v6101 = vlaneseq
    %v6102 = vshrl.u32 %v6101, 7
    %v6103 = vsub.s32 1, %v6102
    %v6104 = vrot.slane %v6095, %v6103
    %v6105 = vlaneseq
    %v6106 = vshrl.u32 %v6105, 7
    %v6107 = vsub.s32 2, %v6106
    %v6108 = vrot.slane %v6095, %v6107
    %v6109 = vlaneseq
    %v6110 = vshrl.u32 %v6109, 7
    %v6111 = vsub.s32 3, %v6110
    %v6112 = vrot.slane %v6095, %v6111
    %v6113 = vlaneseq
    %v6114 = vshrl.u32 %v6113, 7
    %v6115 = vsub.s32 4, %v6114
    %v6116 = vrot.slane %v6095, %v6115
    %v6117 = vlaneseq
    %v6118 = vshrl.u32 %v6117, 7
    %v6119 = vsub.s32 5, %v6118
    %v6120 = vrot.slane %v6095, %v6119
    %v6121 = vlaneseq
    %v6122 = vshrl.u32 %v6121, 7
    %v6123 = vsub.s32 6, %v6122
    %v6124 = vrot.slane %v6095, %v6123
    %v6644 = vunpack.c.l.b16 %v5583
    %v6645 = vunpack.c.h.b16 %v5583
    %v6646 = vunpack.c.l.b16 %v5584
    %v6647 = vunpack.c.h.b16 %v5584
    %v6648 = vunpack.c.l.b16 %v5585
    %v6649 = vunpack.c.h.b16 %v5585
    %v6650 = vunpack.c.l.b16 %v5586
    %v6651 = vunpack.c.l.b16 %v5587
    %v6652 = vunpack.c.h.b16 %v5587
    %v6653 = vunpack.c.l.b16 %v5588
    %v6654 = vunpack.c.h.b16 %v5588
    %v6655 = vunpack.c.l.b16 %v5589
    %v6656 = vunpack.c.h.b16 %v5589
    %v6657 = vunpack.c.l.b16 %v5590
    %v6658 = vunpack.c.l.b16 %v5591
    %v6659 = vunpack.c.h.b16 %v5591
    %v6660 = vunpack.c.l.b16 %v5592
    %v6661 = vunpack.c.h.b16 %v5592
    %v6662 = vunpack.c.l.b16 %v5593
    %v6663 = vunpack.c.h.b16 %v5593
    %v6664 = vunpack.c.l.b16 %v5594
    %v6665 = vunpack.c.l.b16 %v5595
    %v6666 = vunpack.c.h.b16 %v5595
    %v6667 = vunpack.c.l.b16 %v5596
    %v6668 = vunpack.c.h.b16 %v5596
    %v6669 = vunpack.c.l.b16 %v5597
    %v6670 = vunpack.c.h.b16 %v5597
    %v6671 = vunpack.c.l.b16 %v5598
    %v6672 = vunpack.c.l.b16 %v5599
    %v6673 = vunpack.c.h.b16 %v5599
    %v6674 = vunpack.c.l.b16 %v5600
    %v6675 = vunpack.c.h.b16 %v5600
    %v6676 = vunpack.c.l.b16 %v5601
    %v6677 = vunpack.c.h.b16 %v5601
    %v6678 = vunpack.c.l.b16 %v5602
    %v6679 = vunpack.c.l.b16 %v5603
    %v6680 = vunpack.c.h.b16 %v5603
    %v6681 = vunpack.c.l.b16 %v5604
    %v6682 = vunpack.c.h.b16 %v5604
    %v6683 = vunpack.c.l.b16 %v5605
    %v6684 = vunpack.c.h.b16 %v5605
    %v6685 = vunpack.c.l.b16 %v5606
    %v6686 = vunpack.c.l.b16 %v5607
    %v6687 = vunpack.c.h.b16 %v5607
    %v6688 = vunpack.c.l.b16 %v5608
    %v6689 = vunpack.c.h.b16 %v5608
    %v6690 = vunpack.c.l.b16 %v5609
    %v6691 = vunpack.c.h.b16 %v5609
    %v6692 = vunpack.c.l.b16 %v5610
    %v6693 = vunpack.c.l.b16 %v5611
    %v6694 = vunpack.c.h.b16 %v5611
    %v6695 = vunpack.c.l.b16 %v5612
    %v6696 = vunpack.c.h.b16 %v5612
    %v6697 = vunpack.c.l.b16 %v5613
    %v6698 = vunpack.c.h.b16 %v5613
    %v6699 = vunpack.c.l.b16 %v5614
    %v6700 = vunpack.c.l.b16 %v5615
    %v6701 = vunpack.c.h.b16 %v5615
    %v6702 = vunpack.c.l.b16 %v5616
    %v6703 = vunpack.c.h.b16 %v5616
    %v6704 = vunpack.c.l.b16 %v5617
    %v6705 = vunpack.c.h.b16 %v5617
    %v6706 = vunpack.c.l.b16 %v5618
    %v6707 = vunpack.c.l.b16 %v5619
    %v6708 = vunpack.c.h.b16 %v5619
    %v6709 = vunpack.c.l.b16 %v5620
    %v6710 = vunpack.c.h.b16 %v5620
    %v6711 = vunpack.c.l.b16 %v5621
    %v6712 = vunpack.c.h.b16 %v5621
    %v6713 = vunpack.c.l.b16 %v5622
    %v6714 = vunpack.c.l.b16 %v5623
    %v6715 = vunpack.c.h.b16 %v5623
    %v6716 = vunpack.c.l.b16 %v5624
    %v6717 = vunpack.c.h.b16 %v5624
    %v6718 = vunpack.c.l.b16 %v5625
    %v6719 = vunpack.c.h.b16 %v5625
    %v6720 = vunpack.c.l.b16 %v5626
    %v6721 = vunpack.c.l.b16 %v5627
    %v6722 = vunpack.c.h.b16 %v5627
    %v6723 = vunpack.c.l.b16 %v5628
    %v6724 = vunpack.c.h.b16 %v5628
    %v6725 = vunpack.c.l.b16 %v5629
    %v6726 = vunpack.c.h.b16 %v5629
    %v6727 = vunpack.c.l.b16 %v5630
    %v6728 = vunpack.c.l.b16 %v5631
    %v6729 = vunpack.c.h.b16 %v5631
    %v6730 = vunpack.c.l.b16 %v5632
    %v6731 = vunpack.c.h.b16 %v5632
    %v6732 = vunpack.c.l.b16 %v5633
    %v6733 = vunpack.c.h.b16 %v5633
    %v6734 = vunpack.c.l.b16 %v5634
    %v6735 = vunpack.c.l.b16 %v5635
    %v6736 = vunpack.c.h.b16 %v5635
    %v6737 = vunpack.c.l.b16 %v5636
    %v6738 = vunpack.c.h.b16 %v5636
    %v6739 = vunpack.c.l.b16 %v5637
    %v6740 = vunpack.c.h.b16 %v5637
    %v6741 = vunpack.c.l.b16 %v5638
    %v6742 = vunpack.c.l.b16 %v5639
    %v6743 = vunpack.c.h.b16 %v5639
    %v6744 = vunpack.c.l.b16 %v5640
    %v6745 = vunpack.c.h.b16 %v5640
    %v6746 = vunpack.c.l.b16 %v5641
    %v6747 = vunpack.c.h.b16 %v5641
    %v6748 = vunpack.c.l.b16 %v5642
    %v6749 = vunpack.c.l.b16 %v5643
    %v6750 = vunpack.c.h.b16 %v5643
    %v6751 = vunpack.c.l.b16 %v5644
    %v6752 = vunpack.c.h.b16 %v5644
    %v6753 = vunpack.c.l.b16 %v5645
    %v6754 = vunpack.c.h.b16 %v5645
    %v6755 = vunpack.c.l.b16 %v5646
    %v6756 = vunpack.c.l.b16 %v5647
    %v6757 = vunpack.c.h.b16 %v5647
    %v6758 = vunpack.c.l.b16 %v5648
    %v6759 = vunpack.c.h.b16 %v5648
    %v6760 = vunpack.c.l.b16 %v5649
    %v6761 = vunpack.c.h.b16 %v5649
    %v6762 = vunpack.c.l.b16 %v5650
    %v6763 = vunpack.c.l.b16 %v5651
    %v6764 = vunpack.c.h.b16 %v5651
    %v6765 = vunpack.c.l.b16 %v5652
    %v6766 = vunpack.c.h.b16 %v5652
    %v6767 = vunpack.c.l.b16 %v5653
    %v6768 = vunpack.c.h.b16 %v5653
    %v6769 = vunpack.c.l.b16 %v5654
    %v6770 = vunpack.c.l.b16 %v5655
    %v6771 = vunpack.c.h.b16 %v5655
    %v6772 = vunpack.c.l.b16 %v5656
    %v6773 = vunpack.c.h.b16 %v5656
    %v6774 = vunpack.c.l.b16 %v5657
    %v6775 = vunpack.c.h.b16 %v5657
    %v6776 = vunpack.c.l.b16 %v5658
    %v6777 = vunpack.c.l.b16 %v5659
    %v6778 = vunpack.c.h.b16 %v5659
    %v6779 = vunpack.c.l.b16 %v5660
    %v6780 = vunpack.c.h.b16 %v5660
    %v6781 = vunpack.c.l.b16 %v5661
    %v6782 = vunpack.c.h.b16 %v5661
    %v6783 = vunpack.c.l.b16 %v5662
    %v6784 = vunpack.c.l.b16 %v5663
    %v6785 = vunpack.c.h.b16 %v5663
    %v6786 = vunpack.c.l.b16 %v5664
    %v6787 = vunpack.c.h.b16 %v5664
    %v6788 = vunpack.c.l.b16 %v5665
    %v6789 = vunpack.c.h.b16 %v5665
    %v6790 = vunpack.c.l.b16 %v5666
    %v6791 = vunpack.c.l.b16 %v5667
    %v6792 = vunpack.c.h.b16 %v5667
    %v6793 = vunpack.c.l.b16 %v5668
    %v6794 = vunpack.c.h.b16 %v5668
    %v6795 = vunpack.c.l.b16 %v5669
    %v6796 = vunpack.c.h.b16 %v5669
    %v6797 = vunpack.c.l.b16 %v5670
    %v6798 = vunpack.c.l.b16 %v5671
    %v6799 = vunpack.c.h.b16 %v5671
    %v6800 = vunpack.c.l.b16 %v5672
    %v6801 = vunpack.c.h.b16 %v5672
    %v6802 = vunpack.c.l.b16 %v5673
    %v6803 = vunpack.c.h.b16 %v5673
    %v6804 = vunpack.c.l.b16 %v5674
    %v6805 = vunpack.c.l.b16 %v5675
    %v6806 = vunpack.c.h.b16 %v5675
    %v6807 = vunpack.c.l.b16 %v5676
    %v6808 = vunpack.c.h.b16 %v5676
    %v6809 = vunpack.c.l.b16 %v5677
    %v6810 = vunpack.c.h.b16 %v5677
    %v6811 = vunpack.c.l.b16 %v5678
    %v6812 = vunpack.c.l.b16 %v5679
    %v6813 = vunpack.c.h.b16 %v5679
    %v6814 = vunpack.c.l.b16 %v5680
    %v6815 = vunpack.c.h.b16 %v5680
    %v6816 = vunpack.c.l.b16 %v5681
    %v6817 = vunpack.c.h.b16 %v5681
    %v6818 = vunpack.c.l.b16 %v5682
    %v6819 = vunpack.c.l.b16 %v5683
    %v6820 = vunpack.c.h.b16 %v5683
    %v6821 = vunpack.c.l.b16 %v5684
    %v6822 = vunpack.c.h.b16 %v5684
    %v6823 = vunpack.c.l.b16 %v5685
    %v6824 = vunpack.c.h.b16 %v5685
    %v6825 = vunpack.c.l.b16 %v5686
    %v6826 = vunpack.c.l.b16 %v5687
    %v6827 = vunpack.c.h.b16 %v5687
    %v6828 = vunpack.c.l.b16 %v5688
    %v6829 = vunpack.c.h.b16 %v5688
    %v6830 = vunpack.c.l.b16 %v5689
    %v6831 = vunpack.c.h.b16 %v5689
    %v6832 = vunpack.c.l.b16 %v5690
    %v6833 = vunpack.c.l.b16 %v5691
    %v6834 = vunpack.c.h.b16 %v5691
    %v6835 = vunpack.c.l.b16 %v5692
    %v6836 = vunpack.c.h.b16 %v5692
    %v6837 = vunpack.c.l.b16 %v5693
    %v6838 = vunpack.c.h.b16 %v5693
    %v6839 = vunpack.c.l.b16 %v5694
    %v6840 = vunpack.c.l.b16 %v5695
    %v6841 = vunpack.c.h.b16 %v5695
    %v6842 = vunpack.c.l.b16 %v5696
    %v6843 = vunpack.c.h.b16 %v5696
    %v6844 = vunpack.c.l.b16 %v5697
    %v6845 = vunpack.c.h.b16 %v5697
    %v6846 = vunpack.c.l.b16 %v5698
    %v6847 = vunpack.c.l.b16 %v5699
    %v6848 = vunpack.c.h.b16 %v5699
    %v6849 = vunpack.c.l.b16 %v5700
    %v6850 = vunpack.c.h.b16 %v5700
    %v6851 = vunpack.c.l.b16 %v5701
    %v6852 = vunpack.c.h.b16 %v5701
    %v6853 = vunpack.c.l.b16 %v5702
    %v6854 = vunpack.c.l.b16 %v5703
    %v6855 = vunpack.c.h.b16 %v5703
    %v6856 = vunpack.c.l.b16 %v5704
    %v6857 = vunpack.c.h.b16 %v5704
    %v6858 = vunpack.c.l.b16 %v5705
    %v6859 = vunpack.c.h.b16 %v5705
    %v6860 = vunpack.c.l.b16 %v5706
    %v6861 = vunpack.c.l.b16 %v5707
    %v6862 = vunpack.c.h.b16 %v5707
    %v6863 = vunpack.c.l.b16 %v5708
    %v6864 = vunpack.c.h.b16 %v5708
    %v6865 = vunpack.c.l.b16 %v5709
    %v6866 = vunpack.c.h.b16 %v5709
    %v6867 = vunpack.c.l.b16 %v5710
    %v6868 = vunpack.c.l.b16 %v5711
    %v6869 = vunpack.c.h.b16 %v5711
    %v6870 = vunpack.c.l.b16 %v5712
    %v6871 = vunpack.c.h.b16 %v5712
    %v6872 = vunpack.c.l.b16 %v5713
    %v6873 = vunpack.c.h.b16 %v5713
    %v6874 = vunpack.c.l.b16 %v5714
    %v6875 = vunpack.c.l.b16 %v5715
    %v6876 = vunpack.c.h.b16 %v5715
    %v6877 = vunpack.c.l.b16 %v5716
    %v6878 = vunpack.c.h.b16 %v5716
    %v6879 = vunpack.c.l.b16 %v5717
    %v6880 = vunpack.c.h.b16 %v5717
    %v6881 = vunpack.c.l.b16 %v5718
    %v6882 = vunpack.c.l.b16 %v5719
    %v6883 = vunpack.c.h.b16 %v5719
    %v6884 = vunpack.c.l.b16 %v5720
    %v6885 = vunpack.c.h.b16 %v5720
    %v6886 = vunpack.c.l.b16 %v5721
    %v6887 = vunpack.c.h.b16 %v5721
    %v6888 = vunpack.c.l.b16 %v5722
    %v6889 = vunpack.c.l.b16 %v5723
    %v6890 = vunpack.c.h.b16 %v5723
    %v6891 = vunpack.c.l.b16 %v5724
    %v6892 = vunpack.c.h.b16 %v5724
    %v6893 = vunpack.c.l.b16 %v5725
    %v6894 = vunpack.c.h.b16 %v5725
    %v6895 = vunpack.c.l.b16 %v5726
    %v6896 = vunpack.c.l.b16 %v5727
    %v6897 = vunpack.c.h.b16 %v5727
    %v6898 = vunpack.c.l.b16 %v5728
    %v6899 = vunpack.c.h.b16 %v5728
    %v6900 = vunpack.c.l.b16 %v5729
    %v6901 = vunpack.c.h.b16 %v5729
    %v6902 = vunpack.c.l.b16 %v5730
    %v6903 = vunpack.c.l.b16 %v5731
    %v6904 = vunpack.c.h.b16 %v5731
    %v6905 = vunpack.c.l.b16 %v5732
    %v6906 = vunpack.c.h.b16 %v5732
    %v6907 = vunpack.c.l.b16 %v5733
    %v6908 = vunpack.c.h.b16 %v5733
    %v6909 = vunpack.c.l.b16 %v5734
    %v6910 = vunpack.c.l.b16 %v5735
    %v6911 = vunpack.c.h.b16 %v5735
    %v6912 = vunpack.c.l.b16 %v5736
    %v6913 = vunpack.c.h.b16 %v5736
    %v6914 = vunpack.c.l.b16 %v5737
    %v6915 = vunpack.c.h.b16 %v5737
    %v6916 = vunpack.c.l.b16 %v5738
    %v6917 = vunpack.c.l.b16 %v5739
    %v6918 = vunpack.c.h.b16 %v5739
    %v6919 = vunpack.c.l.b16 %v5740
    %v6920 = vunpack.c.h.b16 %v5740
    %v6921 = vunpack.c.l.b16 %v5741
    %v6922 = vunpack.c.h.b16 %v5741
    %v6923 = vunpack.c.l.b16 %v5742
    %v6924 = vunpack.c.l.b16 %v5743
    %v6925 = vunpack.c.h.b16 %v5743
    %v6926 = vunpack.c.l.b16 %v5744
    %v6927 = vunpack.c.h.b16 %v5744
    %v6928 = vunpack.c.l.b16 %v5745
    %v6929 = vunpack.c.h.b16 %v5745
    %v6930 = vunpack.c.l.b16 %v5746
    %v6931 = vunpack.c.l.b16 %v5747
    %v6932 = vunpack.c.h.b16 %v5747
    %v6933 = vunpack.c.l.b16 %v5748
    %v6934 = vunpack.c.h.b16 %v5748
    %v6935 = vunpack.c.l.b16 %v5749
    %v6936 = vunpack.c.h.b16 %v5749
    %v6937 = vunpack.c.l.b16 %v5750
    %v6938 = vunpack.c.l.b16 %v5751
    %v6939 = vunpack.c.h.b16 %v5751
    %v6940 = vunpack.c.l.b16 %v5752
    %v6941 = vunpack.c.h.b16 %v5752
    %v6942 = vunpack.c.l.b16 %v5753
    %v6943 = vunpack.c.h.b16 %v5753
    %v6944 = vunpack.c.l.b16 %v5754
    %v6945 = vunpack.c.l.b16 %v5755
    %v6946 = vunpack.c.h.b16 %v5755
    %v6947 = vunpack.c.l.b16 %v5756
    %v6948 = vunpack.c.h.b16 %v5756
    %v6949 = vunpack.c.l.b16 %v5757
    %v6950 = vunpack.c.h.b16 %v5757
    %v6951 = vunpack.c.l.b16 %v5758
    %v6952 = vunpack.c.l.b16 %v5759
    %v6953 = vunpack.c.h.b16 %v5759
    %v6954 = vunpack.c.l.b16 %v5760
    %v6955 = vunpack.c.h.b16 %v5760
    %v6956 = vunpack.c.l.b16 %v5761
    %v6957 = vunpack.c.h.b16 %v5761
    %v6958 = vunpack.c.l.b16 %v5762
    %v6959 = vunpack.c.l.b16 %v5763
    %v6960 = vunpack.c.h.b16 %v5763
    %v6961 = vunpack.c.l.b16 %v5764
    %v6962 = vunpack.c.h.b16 %v5764
    %v6963 = vunpack.c.l.b16 %v5765
    %v6964 = vunpack.c.h.b16 %v5765
    %v6965 = vunpack.c.l.b16 %v5766
    %v6966 = vunpack.c.l.b16 %v5767
    %v6967 = vunpack.c.h.b16 %v5767
    %v6968 = vunpack.c.l.b16 %v5768
    %v6969 = vunpack.c.h.b16 %v5768
    %v6970 = vunpack.c.l.b16 %v5769
    %v6971 = vunpack.c.h.b16 %v5769
    %v6972 = vunpack.c.l.b16 %v5770
    %v6973 = vunpack.c.l.b16 %v5771
    %v6974 = vunpack.c.h.b16 %v5771
    %v6975 = vunpack.c.l.b16 %v5772
    %v6976 = vunpack.c.h.b16 %v5772
    %v6977 = vunpack.c.l.b16 %v5773
    %v6978 = vunpack.c.h.b16 %v5773
    %v6979 = vunpack.c.l.b16 %v5774
    %v6980 = vunpack.c.l.b16 %v5775
    %v6981 = vunpack.c.h.b16 %v5775
    %v6982 = vunpack.c.l.b16 %v5776
    %v6983 = vunpack.c.h.b16 %v5776
    %v6984 = vunpack.c.l.b16 %v5777
    %v6985 = vunpack.c.h.b16 %v5777
    %v6986 = vunpack.c.l.b16 %v5778
    %v6987 = vunpack.c.l.b16 %v5779
    %v6988 = vunpack.c.h.b16 %v5779
    %v6989 = vunpack.c.l.b16 %v5780
    %v6990 = vunpack.c.h.b16 %v5780
    %v6991 = vunpack.c.l.b16 %v5781
    %v6992 = vunpack.c.h.b16 %v5781
    %v6993 = vunpack.c.l.b16 %v5782
    %v6994 = vunpack.c.l.b16 %v5783
    %v6995 = vunpack.c.h.b16 %v5783
    %v6996 = vunpack.c.l.b16 %v5784
    %v6997 = vunpack.c.h.b16 %v5784
    %v6998 = vunpack.c.l.b16 %v5785
    %v6999 = vunpack.c.h.b16 %v5785
    %v7000 = vunpack.c.l.b16 %v5786
    %v7001 = vunpack.c.l.b16 %v5787
    %v7002 = vunpack.c.h.b16 %v5787
    %v7003 = vunpack.c.l.b16 %v5788
    %v7004 = vunpack.c.h.b16 %v5788
    %v7005 = vunpack.c.l.b16 %v5789
    %v7006 = vunpack.c.h.b16 %v5789
    %v7007 = vunpack.c.l.b16 %v5790
    %v7008 = vunpack.c.l.b16 %v5791
    %v7009 = vunpack.c.h.b16 %v5791
    %v7010 = vunpack.c.l.b16 %v5792
    %v7011 = vunpack.c.h.b16 %v5792
    %v7012 = vunpack.c.l.b16 %v5793
    %v7013 = vunpack.c.h.b16 %v5793
    %v7014 = vunpack.c.l.b16 %v5794
    %v7015 = vunpack.c.l.b16 %v5795
    %v7016 = vunpack.c.h.b16 %v5795
    %v7017 = vunpack.c.l.b16 %v5796
    %v7018 = vunpack.c.h.b16 %v5796
    %v7019 = vunpack.c.l.b16 %v5797
    %v7020 = vunpack.c.h.b16 %v5797
    %v7021 = vunpack.c.l.b16 %v5798
    %v7022 = vunpack.c.l.b16 %v5799
    %v7023 = vunpack.c.h.b16 %v5799
    %v7024 = vunpack.c.l.b16 %v5800
    %v7025 = vunpack.c.h.b16 %v5800
    %v7026 = vunpack.c.l.b16 %v5801
    %v7027 = vunpack.c.h.b16 %v5801
    %v7028 = vunpack.c.l.b16 %v5802
    %v7029 = vunpack.c.l.b16 %v5803
    %v7030 = vunpack.c.h.b16 %v5803
    %v7031 = vunpack.c.l.b16 %v5804
    %v7032 = vunpack.c.h.b16 %v5804
    %v7033 = vunpack.c.l.b16 %v5805
    %v7034 = vunpack.c.h.b16 %v5805
    %v7035 = vunpack.c.l.b16 %v5806
    %v7036 = vunpack.c.l.b16 %v5807
    %v7037 = vunpack.c.h.b16 %v5807
    %v7038 = vunpack.c.l.b16 %v5808
    %v7039 = vunpack.c.h.b16 %v5808
    %v7040 = vunpack.c.l.b16 %v5809
    %v7041 = vunpack.c.h.b16 %v5809
    %v7042 = vunpack.c.l.b16 %v5810
    %v7043 = vunpack.c.l.b16 %v5811
    %v7044 = vunpack.c.h.b16 %v5811
    %v7045 = vunpack.c.l.b16 %v5812
    %v7046 = vunpack.c.h.b16 %v5812
    %v7047 = vunpack.c.l.b16 %v5813
    %v7048 = vunpack.c.h.b16 %v5813
    %v7049 = vunpack.c.l.b16 %v5814
    %v7050 = vunpack.c.l.b16 %v5815
    %v7051 = vunpack.c.h.b16 %v5815
    %v7052 = vunpack.c.l.b16 %v5816
    %v7053 = vunpack.c.h.b16 %v5816
    %v7054 = vunpack.c.l.b16 %v5817
    %v7055 = vunpack.c.h.b16 %v5817
    %v7056 = vunpack.c.l.b16 %v5818
    %v7057 = vunpack.c.l.b16 %v5819
    %v7058 = vunpack.c.h.b16 %v5819
    %v7059 = vunpack.c.l.b16 %v5820
    %v7060 = vunpack.c.h.b16 %v5820
    %v7061 = vunpack.c.l.b16 %v5821
    %v7062 = vunpack.c.h.b16 %v5821
    %v7063 = vunpack.c.l.b16 %v5822
    %v7064 = vunpack.c.l.b16 %v5823
    %v7065 = vunpack.c.h.b16 %v5823
    %v7066 = vunpack.c.l.b16 %v5824
    %v7067 = vunpack.c.h.b16 %v5824
    %v7068 = vunpack.c.l.b16 %v5825
    %v7069 = vunpack.c.h.b16 %v5825
    %v7070 = vunpack.c.l.b16 %v5826
    %v7071 = vunpack.c.l.b16 %v5827
    %v7072 = vunpack.c.h.b16 %v5827
    %v7073 = vunpack.c.l.b16 %v5828
    %v7074 = vunpack.c.h.b16 %v5828
    %v7075 = vunpack.c.l.b16 %v5829
    %v7076 = vunpack.c.h.b16 %v5829
    %v7077 = vunpack.c.l.b16 %v5830
    %v7078 = vunpack.c.l.b16 %v5831
    %v7079 = vunpack.c.h.b16 %v5831
    %v7080 = vunpack.c.l.b16 %v5832
    %v7081 = vunpack.c.h.b16 %v5832
    %v7082 = vunpack.c.l.b16 %v5833
    %v7083 = vunpack.c.h.b16 %v5833
    %v7084 = vunpack.c.l.b16 %v5834
    %v7085 = vunpack.c.l.b16 %v5835
    %v7086 = vunpack.c.h.b16 %v5835
    %v7087 = vunpack.c.l.b16 %v5836
    %v7088 = vunpack.c.h.b16 %v5836
    %v7089 = vunpack.c.l.b16 %v5837
    %v7090 = vunpack.c.h.b16 %v5837
    %v7091 = vunpack.c.l.b16 %v5838
    %v7092 = vunpack.c.l.b16 %v5839
    %v7093 = vunpack.c.h.b16 %v5839
    %v7094 = vunpack.c.l.b16 %v5840
    %v7095 = vunpack.c.h.b16 %v5840
    %v7096 = vunpack.c.l.b16 %v5841
    %v7097 = vunpack.c.h.b16 %v5841
    %v7098 = vunpack.c.l.b16 %v5842
    %v7099 = vunpack.c.l.b16 %v5843
    %v7100 = vunpack.c.h.b16 %v5843
    %v7101 = vunpack.c.l.b16 %v5844
    %v7102 = vunpack.c.h.b16 %v5844
    %v7103 = vunpack.c.l.b16 %v5845
    %v7104 = vunpack.c.h.b16 %v5845
    %v7105 = vunpack.c.l.b16 %v5846
    %v7106 = vunpack.c.l.b16 %v5847
    %v7107 = vunpack.c.h.b16 %v5847
    %v7108 = vunpack.c.l.b16 %v5848
    %v7109 = vunpack.c.h.b16 %v5848
    %v7110 = vunpack.c.l.b16 %v5849
    %v7111 = vunpack.c.h.b16 %v5849
    %v7112 = vunpack.c.l.b16 %v5850
    %v7113 = vunpack.c.l.b16 %v5851
    %v7114 = vunpack.c.h.b16 %v5851
    %v7115 = vunpack.c.l.b16 %v5852
    %v7116 = vunpack.c.h.b16 %v5852
    %v7117 = vunpack.c.l.b16 %v5853
    %v7118 = vunpack.c.h.b16 %v5853
    %v7119 = vunpack.c.l.b16 %v5854
    %v7120 = vunpack.c.l.b16 %v5855
    %v7121 = vunpack.c.h.b16 %v5855
    %v7122 = vunpack.c.l.b16 %v5856
    %v7123 = vunpack.c.h.b16 %v5856
    %v7124 = vunpack.c.l.b16 %v5857
    %v7125 = vunpack.c.h.b16 %v5857
    %v7126 = vunpack.c.l.b16 %v5858
    %v7127 = vunpack.c.l.b16 %v5859
    %v7128 = vunpack.c.h.b16 %v5859
    %v7129 = vunpack.c.l.b16 %v5860
    %v7130 = vunpack.c.h.b16 %v5860
    %v7131 = vunpack.c.l.b16 %v5861
    %v7132 = vunpack.c.h.b16 %v5861
    %v7133 = vunpack.c.l.b16 %v5862
    %v7134 = vunpack.c.l.b16 %v5863
    %v7135 = vunpack.c.h.b16 %v5863
    %v7136 = vunpack.c.l.b16 %v5864
    %v7137 = vunpack.c.h.b16 %v5864
    %v7138 = vunpack.c.l.b16 %v5865
    %v7139 = vunpack.c.h.b16 %v5865
    %v7140 = vunpack.c.l.b16 %v5866
    %v7141 = vunpack.c.l.b16 %v5867
    %v7142 = vunpack.c.h.b16 %v5867
    %v7143 = vunpack.c.l.b16 %v5868
    %v7144 = vunpack.c.h.b16 %v5868
    %v7145 = vunpack.c.l.b16 %v5869
    %v7146 = vunpack.c.h.b16 %v5869
    %v7147 = vunpack.c.l.b16 %v5870
    %v7148 = vunpack.c.l.b16 %v5871
    %v7149 = vunpack.c.h.b16 %v5871
    %v7150 = vunpack.c.l.b16 %v5872
    %v7151 = vunpack.c.h.b16 %v5872
    %v7152 = vunpack.c.l.b16 %v5873
    %v7153 = vunpack.c.h.b16 %v5873
    %v7154 = vunpack.c.l.b16 %v5874
    %v7155 = vunpack.c.l.b16 %v5875
    %v7156 = vunpack.c.h.b16 %v5875
    %v7157 = vunpack.c.l.b16 %v5876
    %v7158 = vunpack.c.h.b16 %v5876
    %v7159 = vunpack.c.l.b16 %v5877
    %v7160 = vunpack.c.h.b16 %v5877
    %v7161 = vunpack.c.l.b16 %v5878
    %v7162 = vunpack.c.l.b16 %v5879
    %v7163 = vunpack.c.h.b16 %v5879
    %v7164 = vunpack.c.l.b16 %v5880
    %v7165 = vunpack.c.h.b16 %v5880
    %v7166 = vunpack.c.l.b16 %v5881
    %v7167 = vunpack.c.h.b16 %v5881
    %v7168 = vunpack.c.l.b16 %v5882
    %v7169 = vunpack.c.l.b16 %v5883
    %v7170 = vunpack.c.h.b16 %v5883
    %v7171 = vunpack.c.l.b16 %v5884
    %v7172 = vunpack.c.h.b16 %v5884
    %v7173 = vunpack.c.l.b16 %v5885
    %v7174 = vunpack.c.h.b16 %v5885
    %v7175 = vunpack.c.l.b16 %v5886
    %v7176 = vunpack.c.l.b16 %v5887
    %v7177 = vunpack.c.h.b16 %v5887
    %v7178 = vunpack.c.l.b16 %v5888
    %v7179 = vunpack.c.h.b16 %v5888
    %v7180 = vunpack.c.l.b16 %v5889
    %v7181 = vunpack.c.h.b16 %v5889
    %v7182 = vunpack.c.l.b16 %v5890
    %v7183 = vunpack.c.l.b16 %v5891
    %v7184 = vunpack.c.h.b16 %v5891
    %v7185 = vunpack.c.l.b16 %v5892
    %v7186 = vunpack.c.h.b16 %v5892
    %v7187 = vunpack.c.l.b16 %v5893
    %v7188 = vunpack.c.h.b16 %v5893
    %v7189 = vunpack.c.l.b16 %v5894
    %v7190 = vunpack.c.l.b16 %v5895
    %v7191 = vunpack.c.h.b16 %v5895
    %v7192 = vunpack.c.l.b16 %v5896
    %v7193 = vunpack.c.h.b16 %v5896
    %v7194 = vunpack.c.l.b16 %v5897
    %v7195 = vunpack.c.h.b16 %v5897
    %v7196 = vunpack.c.l.b16 %v5898
    %v7197 = vunpack.c.l.b16 %v5899
    %v7198 = vunpack.c.h.b16 %v5899
    %v7199 = vunpack.c.l.b16 %v5900
    %v7200 = vunpack.c.h.b16 %v5900
    %v7201 = vunpack.c.l.b16 %v5901
    %v7202 = vunpack.c.h.b16 %v5901
    %v7203 = vunpack.c.l.b16 %v5902
    %v7204 = vunpack.c.l.b16 %v5903
    %v7205 = vunpack.c.h.b16 %v5903
    %v7206 = vunpack.c.l.b16 %v5904
    %v7207 = vunpack.c.h.b16 %v5904
    %v7208 = vunpack.c.l.b16 %v5905
    %v7209 = vunpack.c.h.b16 %v5905
    %v7210 = vunpack.c.l.b16 %v5906
    %v7211 = vunpack.c.l.b16 %v5907
    %v7212 = vunpack.c.h.b16 %v5907
    %v7213 = vunpack.c.l.b16 %v5908
    %v7214 = vunpack.c.h.b16 %v5908
    %v7215 = vunpack.c.l.b16 %v5909
    %v7216 = vunpack.c.h.b16 %v5909
    %v7217 = vunpack.c.l.b16 %v5910
    %v7218 = vunpack.c.l.b16 %v5911
    %v7219 = vunpack.c.h.b16 %v5911
    %v7220 = vunpack.c.l.b16 %v5912
    %v7221 = vunpack.c.h.b16 %v5912
    %v7222 = vunpack.c.l.b16 %v5913
    %v7223 = vunpack.c.h.b16 %v5913
    %v7224 = vunpack.c.l.b16 %v5914
    %v7225 = vunpack.c.l.b16 %v5915
    %v7226 = vunpack.c.h.b16 %v5915
    %v7227 = vunpack.c.l.b16 %v5916
    %v7228 = vunpack.c.h.b16 %v5916
    %v7229 = vunpack.c.l.b16 %v5917
    %v7230 = vunpack.c.h.b16 %v5917
    %v7231 = vunpack.c.l.b16 %v5918
    %v7232 = vunpack.c.l.b16 %v5919
    %v7233 = vunpack.c.h.b16 %v5919
    %v7234 = vunpack.c.l.b16 %v5920
    %v7235 = vunpack.c.h.b16 %v5920
    %v7236 = vunpack.c.l.b16 %v5921
    %v7237 = vunpack.c.h.b16 %v5921
    %v7238 = vunpack.c.l.b16 %v5922
    %v7239 = vunpack.c.l.b16 %v5923
    %v7240 = vunpack.c.h.b16 %v5923
    %v7241 = vunpack.c.l.b16 %v5924
    %v7242 = vunpack.c.h.b16 %v5924
    %v7243 = vunpack.c.l.b16 %v5925
    %v7244 = vunpack.c.h.b16 %v5925
    %v7245 = vunpack.c.l.b16 %v5926
    %v7246 = vunpack.c.l.b16 %v5927
    %v7247 = vunpack.c.h.b16 %v5927
    %v7248 = vunpack.c.l.b16 %v5928
    %v7249 = vunpack.c.h.b16 %v5928
    %v7250 = vunpack.c.l.b16 %v5929
    %v7251 = vunpack.c.h.b16 %v5929
    %v7252 = vunpack.c.l.b16 %v5930
    %v7253 = vunpack.c.l.b16 %v5931
    %v7254 = vunpack.c.h.b16 %v5931
    %v7255 = vunpack.c.l.b16 %v5932
    %v7256 = vunpack.c.h.b16 %v5932
    %v7257 = vunpack.c.l.b16 %v5933
    %v7258 = vunpack.c.h.b16 %v5933
    %v7259 = vunpack.c.l.b16 %v5934
    %v7260 = vunpack.c.l.b16 %v5935
    %v7261 = vunpack.c.h.b16 %v5935
    %v7262 = vunpack.c.l.b16 %v5936
    %v7263 = vunpack.c.h.b16 %v5936
    %v7264 = vunpack.c.l.b16 %v5937
    %v7265 = vunpack.c.h.b16 %v5937
    %v7266 = vunpack.c.l.b16 %v5938
    %v7267 = vunpack.c.l.b16 %v5939
    %v7268 = vunpack.c.h.b16 %v5939
    %v7269 = vunpack.c.l.b16 %v5940
    %v7270 = vunpack.c.h.b16 %v5940
    %v7271 = vunpack.c.l.b16 %v5941
    %v7272 = vunpack.c.h.b16 %v5941
    %v7273 = vunpack.c.l.b16 %v5942
    %v7274 = vunpack.c.l.b16 %v5943
    %v7275 = vunpack.c.h.b16 %v5943
    %v7276 = vunpack.c.l.b16 %v5944
    %v7277 = vunpack.c.h.b16 %v5944
    %v7278 = vunpack.c.l.b16 %v5945
    %v7279 = vunpack.c.h.b16 %v5945
    %v7280 = vunpack.c.l.b16 %v5946
    %v7281 = vunpack.c.l.b16 %v5947
    %v7282 = vunpack.c.h.b16 %v5947
    %v7283 = vunpack.c.l.b16 %v5948
    %v7284 = vunpack.c.h.b16 %v5948
    %v7285 = vunpack.c.l.b16 %v5949
    %v7286 = vunpack.c.h.b16 %v5949
    %v7287 = vunpack.c.l.b16 %v5950
    %v7288 = vunpack.c.l.b16 %v5951
    %v7289 = vunpack.c.h.b16 %v5951
    %v7290 = vunpack.c.l.b16 %v5952
    %v7291 = vunpack.c.h.b16 %v5952
    %v7292 = vunpack.c.l.b16 %v5953
    %v7293 = vunpack.c.h.b16 %v5953
    %v7294 = vunpack.c.l.b16 %v5954
    %v7295 = vunpack.c.l.b16 %v5955
    %v7296 = vunpack.c.h.b16 %v5955
    %v7297 = vunpack.c.l.b16 %v5956
    %v7298 = vunpack.c.h.b16 %v5956
    %v7299 = vunpack.c.l.b16 %v5957
    %v7300 = vunpack.c.h.b16 %v5957
    %v7301 = vunpack.c.l.b16 %v5958
    %v7302 = vunpack.c.l.b16 %v5959
    %v7303 = vunpack.c.h.b16 %v5959
    %v7304 = vunpack.c.l.b16 %v5960
    %v7305 = vunpack.c.h.b16 %v5960
    %v7306 = vunpack.c.l.b16 %v5961
    %v7307 = vunpack.c.h.b16 %v5961
    %v7308 = vunpack.c.l.b16 %v5962
    %v7309 = vunpack.c.l.b16 %v5963
    %v7310 = vunpack.c.h.b16 %v5963
    %v7311 = vunpack.c.l.b16 %v5964
    %v7312 = vunpack.c.h.b16 %v5964
    %v7313 = vunpack.c.l.b16 %v5965
    %v7314 = vunpack.c.h.b16 %v5965
    %v7315 = vunpack.c.l.b16 %v5966
    %v7316 = vunpack.c.l.b16 %v5967
    %v7317 = vunpack.c.h.b16 %v5967
    %v7318 = vunpack.c.l.b16 %v5968
    %v7319 = vunpack.c.h.b16 %v5968
    %v7320 = vunpack.c.l.b16 %v5969
    %v7321 = vunpack.c.h.b16 %v5969
    %v7322 = vunpack.c.l.b16 %v5970
    %v7323 = vunpack.c.l.b16 %v5971
    %v7324 = vunpack.c.h.b16 %v5971
    %v7325 = vunpack.c.l.b16 %v5972
    %v7326 = vunpack.c.h.b16 %v5972
    %v7327 = vunpack.c.l.b16 %v5973
    %v7328 = vunpack.c.h.b16 %v5973
    %v7329 = vunpack.c.l.b16 %v5974
    %v7330 = vunpack.c.l.b16 %v5975
    %v7331 = vunpack.c.h.b16 %v5975
    %v7332 = vunpack.c.l.b16 %v5976
    %v7333 = vunpack.c.h.b16 %v5976
    %v7334 = vunpack.c.l.b16 %v5977
    %v7335 = vunpack.c.h.b16 %v5977
    %v7336 = vunpack.c.l.b16 %v5978
    %v7337 = vunpack.c.l.b16 %v5979
    %v7338 = vunpack.c.h.b16 %v5979
    %v7339 = vunpack.c.l.b16 %v5980
    %v7340 = vunpack.c.h.b16 %v5980
    %v7341 = vunpack.c.l.b16 %v5981
    %v7342 = vunpack.c.h.b16 %v5981
    %v7343 = vunpack.c.l.b16 %v5982
    %v7344 = vunpack.c.l.b16 %v5983
    %v7345 = vunpack.c.h.b16 %v5983
    %v7346 = vunpack.c.l.b16 %v5984
    %v7347 = vunpack.c.h.b16 %v5984
    %v7348 = vunpack.c.l.b16 %v5985
    %v7349 = vunpack.c.h.b16 %v5985
    %v7350 = vunpack.c.l.b16 %v5986
    %v7351 = vunpack.c.l.b16 %v5987
    %v7352 = vunpack.c.h.b16 %v5987
    %v7353 = vunpack.c.l.b16 %v5988
    %v7354 = vunpack.c.h.b16 %v5988
    %v7355 = vunpack.c.l.b16 %v5989
    %v7356 = vunpack.c.h.b16 %v5989
    %v7357 = vunpack.c.l.b16 %v5990
    %v7358 = vunpack.c.l.b16 %v5991
    %v7359 = vunpack.c.h.b16 %v5991
    %v7360 = vunpack.c.l.b16 %v5992
    %v7361 = vunpack.c.h.b16 %v5992
    %v7362 = vunpack.c.l.b16 %v5993
    %v7363 = vunpack.c.h.b16 %v5993
    %v7364 = vunpack.c.l.b16 %v5994
    %v7365 = vunpack.c.l.b16 %v5995
    %v7366 = vunpack.c.h.b16 %v5995
    %v7367 = vunpack.c.l.b16 %v5996
    %v7368 = vunpack.c.h.b16 %v5996
    %v7369 = vunpack.c.l.b16 %v5997
    %v7370 = vunpack.c.h.b16 %v5997
    %v7371 = vunpack.c.l.b16 %v5998
    %v7372 = vunpack.c.l.b16 %v5999
    %v7373 = vunpack.c.h.b16 %v5999
    %v7374 = vunpack.c.l.b16 %v6000
    %v7375 = vunpack.c.h.b16 %v6000
    %v7376 = vunpack.c.l.b16 %v6001
    %v7377 = vunpack.c.h.b16 %v6001
    %v7378 = vunpack.c.l.b16 %v6002
    %v7379 = vunpack.c.l.b16 %v6003
    %v7380 = vunpack.c.h.b16 %v6003
    %v7381 = vunpack.c.l.b16 %v6004
    %v7382 = vunpack.c.h.b16 %v6004
    %v7383 = vunpack.c.l.b16 %v6005
    %v7384 = vunpack.c.h.b16 %v6005
    %v7385 = vunpack.c.l.b16 %v6006
    %v7386 = vunpack.c.l.b16 %v6007
    %v7387 = vunpack.c.h.b16 %v6007
    %v7388 = vunpack.c.l.b16 %v6008
    %v7389 = vunpack.c.h.b16 %v6008
    %v7390 = vunpack.c.l.b16 %v6009
    %v7391 = vunpack.c.h.b16 %v6009
    %v7392 = vunpack.c.l.b16 %v6010
    %v7393 = vunpack.c.l.b16 %v6011
    %v7394 = vunpack.c.h.b16 %v6011
    %v7395 = vunpack.c.l.b16 %v6012
    %v7396 = vunpack.c.h.b16 %v6012
    %v7397 = vunpack.c.l.b16 %v6013
    %v7398 = vunpack.c.h.b16 %v6013
    %v7399 = vunpack.c.l.b16 %v6014
    %v7400 = vunpack.c.l.b16 %v6015
    %v7401 = vunpack.c.h.b16 %v6015
    %v7402 = vunpack.c.l.b16 %v6016
    %v7403 = vunpack.c.h.b16 %v6016
    %v7404 = vunpack.c.l.b16 %v6017
    %v7405 = vunpack.c.h.b16 %v6017
    %v7406 = vunpack.c.l.b16 %v6018
    %v7407 = vunpack.c.l.b16 %v6019
    %v7408 = vunpack.c.h.b16 %v6019
    %v7409 = vunpack.c.l.b16 %v6020
    %v7410 = vunpack.c.h.b16 %v6020
    %v7411 = vunpack.c.l.b16 %v6021
    %v7412 = vunpack.c.h.b16 %v6021
    %v7413 = vunpack.c.l.b16 %v6022
    %v7414 = vunpack.c.l.b16 %v6023
    %v7415 = vunpack.c.h.b16 %v6023
    %v7416 = vunpack.c.l.b16 %v6024
    %v7417 = vunpack.c.h.b16 %v6024
    %v7418 = vunpack.c.l.b16 %v6025
    %v7419 = vunpack.c.h.b16 %v6025
    %v7420 = vunpack.c.l.b16 %v6026
    %v7421 = vunpack.c.l.b16 %v6027
    %v7422 = vunpack.c.h.b16 %v6027
    %v7423 = vunpack.c.l.b16 %v6028
    %v7424 = vunpack.c.h.b16 %v6028
    %v7425 = vunpack.c.l.b16 %v6029
    %v7426 = vunpack.c.h.b16 %v6029
    %v7427 = vunpack.c.l.b16 %v6030
    %v7428 = vunpack.c.l.b16 %v6031
    %v7429 = vunpack.c.h.b16 %v6031
    %v7430 = vunpack.c.l.b16 %v6032
    %v7431 = vunpack.c.h.b16 %v6032
    %v7432 = vunpack.c.l.b16 %v6033
    %v7433 = vunpack.c.h.b16 %v6033
    %v7434 = vunpack.c.l.b16 %v6034
    %v7435 = vunpack.c.l.b16 %v6035
    %v7436 = vunpack.c.h.b16 %v6035
    %v7437 = vunpack.c.l.b16 %v6036
    %v7438 = vunpack.c.h.b16 %v6036
    %v7439 = vunpack.c.l.b16 %v6037
    %v7440 = vunpack.c.h.b16 %v6037
    %v7441 = vunpack.c.l.b16 %v6038
    %v7442 = vunpack.c.l.b16 %v6039
    %v7443 = vunpack.c.h.b16 %v6039
    %v7444 = vunpack.c.l.b16 %v6040
    %v7445 = vunpack.c.h.b16 %v6040
    %v7446 = vunpack.c.l.b16 %v6041
    %v7447 = vunpack.c.h.b16 %v6041
    %v7448 = vunpack.c.l.b16 %v6042
    %v7449 = vunpack.c.l.b16 %v6043
    %v7450 = vunpack.c.h.b16 %v6043
    %v7451 = vunpack.c.l.b16 %v6044
    %v7452 = vunpack.c.h.b16 %v6044
    %v7453 = vunpack.c.l.b16 %v6045
    %v7454 = vunpack.c.h.b16 %v6045
    %v7455 = vunpack.c.l.b16 %v6046
    %v7456 = vunpack.c.l.b16 %v6047
    %v7457 = vunpack.c.h.b16 %v6047
    %v7458 = vunpack.c.l.b16 %v6048
    %v7459 = vunpack.c.h.b16 %v6048
    %v7460 = vunpack.c.l.b16 %v6049
    %v7461 = vunpack.c.h.b16 %v6049
    %v7462 = vunpack.c.l.b16 %v6050
    %v7463 = vunpack.c.l.b16 %v6051
    %v7464 = vunpack.c.h.b16 %v6051
    %v7465 = vunpack.c.l.b16 %v6052
    %v7466 = vunpack.c.h.b16 %v6052
    %v7467 = vunpack.c.l.b16 %v6053
    %v7468 = vunpack.c.h.b16 %v6053
    %v7469 = vunpack.c.l.b16 %v6054
    %v7470 = vunpack.c.l.b16 %v6055
    %v7471 = vunpack.c.h.b16 %v6055
    %v7472 = vunpack.c.l.b16 %v6056
    %v7473 = vunpack.c.h.b16 %v6056
    %v7474 = vunpack.c.l.b16 %v6057
    %v7475 = vunpack.c.h.b16 %v6057
    %v7476 = vunpack.c.l.b16 %v6058
    %v7477 = vunpack.c.l.b16 %v6059
    %v7478 = vunpack.c.h.b16 %v6059
    %v7479 = vunpack.c.l.b16 %v6060
    %v7480 = vunpack.c.h.b16 %v6060
    %v7481 = vunpack.c.l.b16 %v6061
    %v7482 = vunpack.c.h.b16 %v6061
    %v7483 = vunpack.c.l.b16 %v6062
    %v7484 = vunpack.c.l.b16 %v6063
    %v7485 = vunpack.c.h.b16 %v6063
    %v7486 = vunpack.c.l.b16 %v6064
    %v7487 = vunpack.c.h.b16 %v6064
    %v7488 = vunpack.c.l.b16 %v6065
    %v7489 = vunpack.c.h.b16 %v6065
    %v7490 = vunpack.c.l.b16 %v6066
    %v7491 = vunpack.c.l.b16 %v6067
    %v7492 = vunpack.c.h.b16 %v6067
    %v7493 = vunpack.c.l.b16 %v6068
    %v7494 = vunpack.c.h.b16 %v6068
    %v7495 = vunpack.c.l.b16 %v6069
    %v7496 = vunpack.c.h.b16 %v6069
    %v7497 = vunpack.c.l.b16 %v6070
    %v7498 = vunpack.c.l.b16 %v6071
    %v7499 = vunpack.c.h.b16 %v6071
    %v7500 = vunpack.c.l.b16 %v6072
    %v7501 = vunpack.c.h.b16 %v6072
    %v7502 = vunpack.c.l.b16 %v6073
    %v7503 = vunpack.c.h.b16 %v6073
    %v7504 = vunpack.c.l.b16 %v6074
    %v7505 = vunpack.c.l.b16 %v6075
    %v7506 = vunpack.c.h.b16 %v6075
    %v7507 = vunpack.c.l.b16 %v6076
    %v7508 = vunpack.c.h.b16 %v6076
    %v7509 = vunpack.c.l.b16 %v6077
    %v7510 = vunpack.c.h.b16 %v6077
    %v7511 = vunpack.c.l.b16 %v6078
    %v7512 = vunpack.c.l.b16 %v6079
    %v7513 = vunpack.c.h.b16 %v6079
    %v7514 = vunpack.c.l.b16 %v6080
    %v7515 = vunpack.c.h.b16 %v6080
    %v7516 = vunpack.c.l.b16 %v6081
    %v7517 = vunpack.c.h.b16 %v6081
    %v7518 = vunpack.c.l.b16 %v6082
    %v7519 = vunpack.c.l.b16 %v6083
    %v7520 = vunpack.c.h.b16 %v6083
    %v7521 = vunpack.c.l.b16 %v6084
    %v7522 = vunpack.c.h.b16 %v6084
    %v7523 = vunpack.c.l.b16 %v6085
    %v7524 = vunpack.c.h.b16 %v6085
    %v7525 = vunpack.c.l.b16 %v6086
    %v7526 = vunpack.c.l.b16 %v6087
    %v7527 = vunpack.c.h.b16 %v6087
    %v7528 = vunpack.c.l.b16 %v6088
    %v7529 = vunpack.c.h.b16 %v6088
    %v7530 = vunpack.c.l.b16 %v6089
    %v7531 = vunpack.c.h.b16 %v6089
    %v7532 = vunpack.c.l.b16 %v6090
    %v7533 = vunpack.c.l.b16 %v6091
    %v7534 = vunpack.c.h.b16 %v6091
    %v7535 = vunpack.c.l.b16 %v6092
    %v7536 = vunpack.c.h.b16 %v6092
    %v7537 = vunpack.c.l.b16 %v6093
    %v7538 = vunpack.c.h.b16 %v6093
    %v7539 = vunpack.c.l.b16 %v6094
    %v7540 = vpack.c.b16 %v6651, %v6644
    %v7541 = vpack.c.b16 %v6652, %v6645
    %v7542 = vpack.c.b16 %v6653, %v6646
    %v7543 = vpack.c.b16 %v6654, %v6647
    %v7544 = vpack.c.b16 %v6655, %v6648
    %v7545 = vpack.c.b16 %v6656, %v6649
    %v7546 = vpack.c.b16 %v6657, %v6650
    %v7547 = vpack.c.b16 %v6665, %v6658
    %v7548 = vpack.c.b16 %v6666, %v6659
    %v7549 = vpack.c.b16 %v6667, %v6660
    %v7550 = vpack.c.b16 %v6668, %v6661
    %v7551 = vpack.c.b16 %v6669, %v6662
    %v7552 = vpack.c.b16 %v6670, %v6663
    %v7553 = vpack.c.b16 %v6671, %v6664
    %v7554 = vpack.c.b16 %v6679, %v6672
    %v7555 = vpack.c.b16 %v6680, %v6673
    %v7556 = vpack.c.b16 %v6681, %v6674
    %v7557 = vpack.c.b16 %v6682, %v6675
    %v7558 = vpack.c.b16 %v6683, %v6676
    %v7559 = vpack.c.b16 %v6684, %v6677
    %v7560 = vpack.c.b16 %v6685, %v6678
    %v7561 = vpack.c.b16 %v6693, %v6686
    %v7562 = vpack.c.b16 %v6694, %v6687
    %v7563 = vpack.c.b16 %v6695, %v6688
    %v7564 = vpack.c.b16 %v6696, %v6689
    %v7565 = vpack.c.b16 %v6697, %v6690
    %v7566 = vpack.c.b16 %v6698, %v6691
    %v7567 = vpack.c.b16 %v6699, %v6692
    %v7568 = vpack.c.b16 %v6707, %v6700
    %v7569 = vpack.c.b16 %v6708, %v6701
    %v7570 = vpack.c.b16 %v6709, %v6702
    %v7571 = vpack.c.b16 %v6710, %v6703
    %v7572 = vpack.c.b16 %v6711, %v6704
    %v7573 = vpack.c.b16 %v6712, %v6705
    %v7574 = vpack.c.b16 %v6713, %v6706
    %v7575 = vpack.c.b16 %v6721, %v6714
    %v7576 = vpack.c.b16 %v6722, %v6715
    %v7577 = vpack.c.b16 %v6723, %v6716
    %v7578 = vpack.c.b16 %v6724, %v6717
    %v7579 = vpack.c.b16 %v6725, %v6718
    %v7580 = vpack.c.b16 %v6726, %v6719
    %v7581 = vpack.c.b16 %v6727, %v6720
    %v7582 = vpack.c.b16 %v6735, %v6728
    %v7583 = vpack.c.b16 %v6736, %v6729
    %v7584 = vpack.c.b16 %v6737, %v6730
    %v7585 = vpack.c.b16 %v6738, %v6731
    %v7586 = vpack.c.b16 %v6739, %v6732
    %v7587 = vpack.c.b16 %v6740, %v6733
    %v7588 = vpack.c.b16 %v6741, %v6734
    %v7589 = vpack.c.b16 %v6749, %v6742
    %v7590 = vpack.c.b16 %v6750, %v6743
    %v7591 = vpack.c.b16 %v6751, %v6744
    %v7592 = vpack.c.b16 %v6752, %v6745
    %v7593 = vpack.c.b16 %v6753, %v6746
    %v7594 = vpack.c.b16 %v6754, %v6747
    %v7595 = vpack.c.b16 %v6755, %v6748
    %v7596 = vpack.c.b16 %v6763, %v6756
    %v7597 = vpack.c.b16 %v6764, %v6757
    %v7598 = vpack.c.b16 %v6765, %v6758
    %v7599 = vpack.c.b16 %v6766, %v6759
    %v7600 = vpack.c.b16 %v6767, %v6760
    %v7601 = vpack.c.b16 %v6768, %v6761
    %v7602 = vpack.c.b16 %v6769, %v6762
    %v7603 = vpack.c.b16 %v6777, %v6770
    %v7604 = vpack.c.b16 %v6778, %v6771
    %v7605 = vpack.c.b16 %v6779, %v6772
    %v7606 = vpack.c.b16 %v6780, %v6773
    %v7607 = vpack.c.b16 %v6781, %v6774
    %v7608 = vpack.c.b16 %v6782, %v6775
    %v7609 = vpack.c.b16 %v6783, %v6776
    %v7610 = vpack.c.b16 %v6791, %v6784
    %v7611 = vpack.c.b16 %v6792, %v6785
    %v7612 = vpack.c.b16 %v6793, %v6786
    %v7613 = vpack.c.b16 %v6794, %v6787
    %v7614 = vpack.c.b16 %v6795, %v6788
    %v7615 = vpack.c.b16 %v6796, %v6789
    %v7616 = vpack.c.b16 %v6797, %v6790
    %v7617 = vpack.c.b16 %v6805, %v6798
    %v7618 = vpack.c.b16 %v6806, %v6799
    %v7619 = vpack.c.b16 %v6807, %v6800
    %v7620 = vpack.c.b16 %v6808, %v6801
    %v7621 = vpack.c.b16 %v6809, %v6802
    %v7622 = vpack.c.b16 %v6810, %v6803
    %v7623 = vpack.c.b16 %v6811, %v6804
    %v7624 = vpack.c.b16 %v6819, %v6812
    %v7625 = vpack.c.b16 %v6820, %v6813
    %v7626 = vpack.c.b16 %v6821, %v6814
    %v7627 = vpack.c.b16 %v6822, %v6815
    %v7628 = vpack.c.b16 %v6823, %v6816
    %v7629 = vpack.c.b16 %v6824, %v6817
    %v7630 = vpack.c.b16 %v6825, %v6818
    %v7631 = vpack.c.b16 %v6833, %v6826
    %v7632 = vpack.c.b16 %v6834, %v6827
    %v7633 = vpack.c.b16 %v6835, %v6828
    %v7634 = vpack.c.b16 %v6836, %v6829
    %v7635 = vpack.c.b16 %v6837, %v6830
    %v7636 = vpack.c.b16 %v6838, %v6831
    %v7637 = vpack.c.b16 %v6839, %v6832
    %v7638 = vpack.c.b16 %v6847, %v6840
    %v7639 = vpack.c.b16 %v6848, %v6841
    %v7640 = vpack.c.b16 %v6849, %v6842
    %v7641 = vpack.c.b16 %v6850, %v6843
    %v7642 = vpack.c.b16 %v6851, %v6844
    %v7643 = vpack.c.b16 %v6852, %v6845
    %v7644 = vpack.c.b16 %v6853, %v6846
    %v7645 = vpack.c.b16 %v6861, %v6854
    %v7646 = vpack.c.b16 %v6862, %v6855
    %v7647 = vpack.c.b16 %v6863, %v6856
    %v7648 = vpack.c.b16 %v6864, %v6857
    %v7649 = vpack.c.b16 %v6865, %v6858
    %v7650 = vpack.c.b16 %v6866, %v6859
    %v7651 = vpack.c.b16 %v6867, %v6860
    %v7652 = vpack.c.b16 %v6875, %v6868
    %v7653 = vpack.c.b16 %v6876, %v6869
    %v7654 = vpack.c.b16 %v6877, %v6870
    %v7655 = vpack.c.b16 %v6878, %v6871
    %v7656 = vpack.c.b16 %v6879, %v6872
    %v7657 = vpack.c.b16 %v6880, %v6873
    %v7658 = vpack.c.b16 %v6881, %v6874
    %v7659 = vpack.c.b16 %v6889, %v6882
    %v7660 = vpack.c.b16 %v6890, %v6883
    %v7661 = vpack.c.b16 %v6891, %v6884
    %v7662 = vpack.c.b16 %v6892, %v6885
    %v7663 = vpack.c.b16 %v6893, %v6886
    %v7664 = vpack.c.b16 %v6894, %v6887
    %v7665 = vpack.c.b16 %v6895, %v6888
    %v7666 = vpack.c.b16 %v6903, %v6896
    %v7667 = vpack.c.b16 %v6904, %v6897
    %v7668 = vpack.c.b16 %v6905, %v6898
    %v7669 = vpack.c.b16 %v6906, %v6899
    %v7670 = vpack.c.b16 %v6907, %v6900
    %v7671 = vpack.c.b16 %v6908, %v6901
    %v7672 = vpack.c.b16 %v6909, %v6902
    %v7673 = vpack.c.b16 %v6917, %v6910
    %v7674 = vpack.c.b16 %v6918, %v6911
    %v7675 = vpack.c.b16 %v6919, %v6912
    %v7676 = vpack.c.b16 %v6920, %v6913
    %v7677 = vpack.c.b16 %v6921, %v6914
    %v7678 = vpack.c.b16 %v6922, %v6915
    %v7679 = vpack.c.b16 %v6923, %v6916
    %v7680 = vpack.c.b16 %v6931, %v6924
    %v7681 = vpack.c.b16 %v6932, %v6925
    %v7682 = vpack.c.b16 %v6933, %v6926
    %v7683 = vpack.c.b16 %v6934, %v6927
    %v7684 = vpack.c.b16 %v6935, %v6928
    %v7685 = vpack.c.b16 %v6936, %v6929
    %v7686 = vpack.c.b16 %v6937, %v6930
    %v7687 = vpack.c.b16 %v6945, %v6938
    %v7688 = vpack.c.b16 %v6946, %v6939
    %v7689 = vpack.c.b16 %v6947, %v6940
    %v7690 = vpack.c.b16 %v6948, %v6941
    %v7691 = vpack.c.b16 %v6949, %v6942
    %v7692 = vpack.c.b16 %v6950, %v6943
    %v7693 = vpack.c.b16 %v6951, %v6944
    %v7694 = vpack.c.b16 %v6959, %v6952
    %v7695 = vpack.c.b16 %v6960, %v6953
    %v7696 = vpack.c.b16 %v6961, %v6954
    %v7697 = vpack.c.b16 %v6962, %v6955
    %v7698 = vpack.c.b16 %v6963, %v6956
    %v7699 = vpack.c.b16 %v6964, %v6957
    %v7700 = vpack.c.b16 %v6965, %v6958
    %v7701 = vpack.c.b16 %v6973, %v6966
    %v7702 = vpack.c.b16 %v6974, %v6967
    %v7703 = vpack.c.b16 %v6975, %v6968
    %v7704 = vpack.c.b16 %v6976, %v6969
    %v7705 = vpack.c.b16 %v6977, %v6970
    %v7706 = vpack.c.b16 %v6978, %v6971
    %v7707 = vpack.c.b16 %v6979, %v6972
    %v7708 = vpack.c.b16 %v6987, %v6980
    %v7709 = vpack.c.b16 %v6988, %v6981
    %v7710 = vpack.c.b16 %v6989, %v6982
    %v7711 = vpack.c.b16 %v6990, %v6983
    %v7712 = vpack.c.b16 %v6991, %v6984
    %v7713 = vpack.c.b16 %v6992, %v6985
    %v7714 = vpack.c.b16 %v6993, %v6986
    %v7715 = vpack.c.b16 %v7001, %v6994
    %v7716 = vpack.c.b16 %v7002, %v6995
    %v7717 = vpack.c.b16 %v7003, %v6996
    %v7718 = vpack.c.b16 %v7004, %v6997
    %v7719 = vpack.c.b16 %v7005, %v6998
    %v7720 = vpack.c.b16 %v7006, %v6999
    %v7721 = vpack.c.b16 %v7007, %v7000
    %v7722 = vpack.c.b16 %v7015, %v7008
    %v7723 = vpack.c.b16 %v7016, %v7009
    %v7724 = vpack.c.b16 %v7017, %v7010
    %v7725 = vpack.c.b16 %v7018, %v7011
    %v7726 = vpack.c.b16 %v7019, %v7012
    %v7727 = vpack.c.b16 %v7020, %v7013
    %v7728 = vpack.c.b16 %v7021, %v7014
    %v7729 = vpack.c.b16 %v7029, %v7022
    %v7730 = vpack.c.b16 %v7030, %v7023
    %v7731 = vpack.c.b16 %v7031, %v7024
    %v7732 = vpack.c.b16 %v7032, %v7025
    %v7733 = vpack.c.b16 %v7033, %v7026
    %v7734 = vpack.c.b16 %v7034, %v7027
    %v7735 = vpack.c.b16 %v7035, %v7028
    %v7736 = vpack.c.b16 %v7043, %v7036
    %v7737 = vpack.c.b16 %v7044, %v7037
    %v7738 = vpack.c.b16 %v7045, %v7038
    %v7739 = vpack.c.b16 %v7046, %v7039
    %v7740 = vpack.c.b16 %v7047, %v7040
    %v7741 = vpack.c.b16 %v7048, %v7041
    %v7742 = vpack.c.b16 %v7049, %v7042
    %v7743 = vpack.c.b16 %v7057, %v7050
    %v7744 = vpack.c.b16 %v7058, %v7051
    %v7745 = vpack.c.b16 %v7059, %v7052
    %v7746 = vpack.c.b16 %v7060, %v7053
    %v7747 = vpack.c.b16 %v7061, %v7054
    %v7748 = vpack.c.b16 %v7062, %v7055
    %v7749 = vpack.c.b16 %v7063, %v7056
    %v7750 = vpack.c.b16 %v7071, %v7064
    %v7751 = vpack.c.b16 %v7072, %v7065
    %v7752 = vpack.c.b16 %v7073, %v7066
    %v7753 = vpack.c.b16 %v7074, %v7067
    %v7754 = vpack.c.b16 %v7075, %v7068
    %v7755 = vpack.c.b16 %v7076, %v7069
    %v7756 = vpack.c.b16 %v7077, %v7070
    %v7757 = vpack.c.b16 %v7085, %v7078
    %v7758 = vpack.c.b16 %v7086, %v7079
    %v7759 = vpack.c.b16 %v7087, %v7080
    %v7760 = vpack.c.b16 %v7088, %v7081
    %v7761 = vpack.c.b16 %v7089, %v7082
    %v7762 = vpack.c.b16 %v7090, %v7083
    %v7763 = vpack.c.b16 %v7091, %v7084
    %v7764 = vpack.c.b16 %v7099, %v7092
    %v7765 = vpack.c.b16 %v7100, %v7093
    %v7766 = vpack.c.b16 %v7101, %v7094
    %v7767 = vpack.c.b16 %v7102, %v7095
    %v7768 = vpack.c.b16 %v7103, %v7096
    %v7769 = vpack.c.b16 %v7104, %v7097
    %v7770 = vpack.c.b16 %v7105, %v7098
    %v7771 = vpack.c.b16 %v7113, %v7106
    %v7772 = vpack.c.b16 %v7114, %v7107
    %v7773 = vpack.c.b16 %v7115, %v7108
    %v7774 = vpack.c.b16 %v7116, %v7109
    %v7775 = vpack.c.b16 %v7117, %v7110
    %v7776 = vpack.c.b16 %v7118, %v7111
    %v7777 = vpack.c.b16 %v7119, %v7112
    %v7778 = vpack.c.b16 %v7127, %v7120
    %v7779 = vpack.c.b16 %v7128, %v7121
    %v7780 = vpack.c.b16 %v7129, %v7122
    %v7781 = vpack.c.b16 %v7130, %v7123
    %v7782 = vpack.c.b16 %v7131, %v7124
    %v7783 = vpack.c.b16 %v7132, %v7125
    %v7784 = vpack.c.b16 %v7133, %v7126
    %v7785 = vpack.c.b16 %v7141, %v7134
    %v7786 = vpack.c.b16 %v7142, %v7135
    %v7787 = vpack.c.b16 %v7143, %v7136
    %v7788 = vpack.c.b16 %v7144, %v7137
    %v7789 = vpack.c.b16 %v7145, %v7138
    %v7790 = vpack.c.b16 %v7146, %v7139
    %v7791 = vpack.c.b16 %v7147, %v7140
    %v7792 = vpack.c.b16 %v7155, %v7148
    %v7793 = vpack.c.b16 %v7156, %v7149
    %v7794 = vpack.c.b16 %v7157, %v7150
    %v7795 = vpack.c.b16 %v7158, %v7151
    %v7796 = vpack.c.b16 %v7159, %v7152
    %v7797 = vpack.c.b16 %v7160, %v7153
    %v7798 = vpack.c.b16 %v7161, %v7154
    %v7799 = vpack.c.b16 %v7169, %v7162
    %v7800 = vpack.c.b16 %v7170, %v7163
    %v7801 = vpack.c.b16 %v7171, %v7164
    %v7802 = vpack.c.b16 %v7172, %v7165
    %v7803 = vpack.c.b16 %v7173, %v7166
    %v7804 = vpack.c.b16 %v7174, %v7167
    %v7805 = vpack.c.b16 %v7175, %v7168
    %v7806 = vpack.c.b16 %v7183, %v7176
    %v7807 = vpack.c.b16 %v7184, %v7177
    %v7808 = vpack.c.b16 %v7185, %v7178
    %v7809 = vpack.c.b16 %v7186, %v7179
    %v7810 = vpack.c.b16 %v7187, %v7180
    %v7811 = vpack.c.b16 %v7188, %v7181
    %v7812 = vpack.c.b16 %v7189, %v7182
    %v7813 = vpack.c.b16 %v7197, %v7190
    %v7814 = vpack.c.b16 %v7198, %v7191
    %v7815 = vpack.c.b16 %v7199, %v7192
    %v7816 = vpack.c.b16 %v7200, %v7193
    %v7817 = vpack.c.b16 %v7201, %v7194
    %v7818 = vpack.c.b16 %v7202, %v7195
    %v7819 = vpack.c.b16 %v7203, %v7196
    %v7820 = vpack.c.b16 %v7211, %v7204
    %v7821 = vpack.c.b16 %v7212, %v7205
    %v7822 = vpack.c.b16 %v7213, %v7206
    %v7823 = vpack.c.b16 %v7214, %v7207
    %v7824 = vpack.c.b16 %v7215, %v7208
    %v7825 = vpack.c.b16 %v7216, %v7209
    %v7826 = vpack.c.b16 %v7217, %v7210
    %v7827 = vpack.c.b16 %v7225, %v7218
    %v7828 = vpack.c.b16 %v7226, %v7219
    %v7829 = vpack.c.b16 %v7227, %v7220
    %v7830 = vpack.c.b16 %v7228, %v7221
    %v7831 = vpack.c.b16 %v7229, %v7222
    %v7832 = vpack.c.b16 %v7230, %v7223
    %v7833 = vpack.c.b16 %v7231, %v7224
    %v7834 = vpack.c.b16 %v7239, %v7232
    %v7835 = vpack.c.b16 %v7240, %v7233
    %v7836 = vpack.c.b16 %v7241, %v7234
    %v7837 = vpack.c.b16 %v7242, %v7235
    %v7838 = vpack.c.b16 %v7243, %v7236
    %v7839 = vpack.c.b16 %v7244, %v7237
    %v7840 = vpack.c.b16 %v7245, %v7238
    %v7841 = vpack.c.b16 %v7253, %v7246
    %v7842 = vpack.c.b16 %v7254, %v7247
    %v7843 = vpack.c.b16 %v7255, %v7248
    %v7844 = vpack.c.b16 %v7256, %v7249
    %v7845 = vpack.c.b16 %v7257, %v7250
    %v7846 = vpack.c.b16 %v7258, %v7251
    %v7847 = vpack.c.b16 %v7259, %v7252
    %v7848 = vpack.c.b16 %v7267, %v7260
    %v7849 = vpack.c.b16 %v7268, %v7261
    %v7850 = vpack.c.b16 %v7269, %v7262
    %v7851 = vpack.c.b16 %v7270, %v7263
    %v7852 = vpack.c.b16 %v7271, %v7264
    %v7853 = vpack.c.b16 %v7272, %v7265
    %v7854 = vpack.c.b16 %v7273, %v7266
    %v7855 = vpack.c.b16 %v7281, %v7274
    %v7856 = vpack.c.b16 %v7282, %v7275
    %v7857 = vpack.c.b16 %v7283, %v7276
    %v7858 = vpack.c.b16 %v7284, %v7277
    %v7859 = vpack.c.b16 %v7285, %v7278
    %v7860 = vpack.c.b16 %v7286, %v7279
    %v7861 = vpack.c.b16 %v7287, %v7280
    %v7862 = vpack.c.b16 %v7295, %v7288
    %v7863 = vpack.c.b16 %v7296, %v7289
    %v7864 = vpack.c.b16 %v7297, %v7290
    %v7865 = vpack.c.b16 %v7298, %v7291
    %v7866 = vpack.c.b16 %v7299, %v7292
    %v7867 = vpack.c.b16 %v7300, %v7293
    %v7868 = vpack.c.b16 %v7301, %v7294
    %v7869 = vpack.c.b16 %v7309, %v7302
    %v7870 = vpack.c.b16 %v7310, %v7303
    %v7871 = vpack.c.b16 %v7311, %v7304
    %v7872 = vpack.c.b16 %v7312, %v7305
    %v7873 = vpack.c.b16 %v7313, %v7306
    %v7874 = vpack.c.b16 %v7314, %v7307
    %v7875 = vpack.c.b16 %v7315, %v7308
    %v7876 = vpack.c.b16 %v7323, %v7316
    %v7877 = vpack.c.b16 %v7324, %v7317
    %v7878 = vpack.c.b16 %v7325, %v7318
    %v7879 = vpack.c.b16 %v7326, %v7319
    %v7880 = vpack.c.b16 %v7327, %v7320
    %v7881 = vpack.c.b16 %v7328, %v7321
    %v7882 = vpack.c.b16 %v7329, %v7322
    %v7883 = vpack.c.b16 %v7337, %v7330
    %v7884 = vpack.c.b16 %v7338, %v7331
    %v7885 = vpack.c.b16 %v7339, %v7332
    %v7886 = vpack.c.b16 %v7340, %v7333
    %v7887 = vpack.c.b16 %v7341, %v7334
    %v7888 = vpack.c.b16 %v7342, %v7335
    %v7889 = vpack.c.b16 %v7343, %v7336
    %v7890 = vpack.c.b16 %v7351, %v7344
    %v7891 = vpack.c.b16 %v7352, %v7345
    %v7892 = vpack.c.b16 %v7353, %v7346
    %v7893 = vpack.c.b16 %v7354, %v7347
    %v7894 = vpack.c.b16 %v7355, %v7348
    %v7895 = vpack.c.b16 %v7356, %v7349
    %v7896 = vpack.c.b16 %v7357, %v7350
    %v7897 = vpack.c.b16 %v7365, %v7358
    %v7898 = vpack.c.b16 %v7366, %v7359
    %v7899 = vpack.c.b16 %v7367, %v7360
    %v7900 = vpack.c.b16 %v7368, %v7361
    %v7901 = vpack.c.b16 %v7369, %v7362
    %v7902 = vpack.c.b16 %v7370, %v7363
    %v7903 = vpack.c.b16 %v7371, %v7364
    %v7904 = vpack.c.b16 %v7379, %v7372
    %v7905 = vpack.c.b16 %v7380, %v7373
    %v7906 = vpack.c.b16 %v7381, %v7374
    %v7907 = vpack.c.b16 %v7382, %v7375
    %v7908 = vpack.c.b16 %v7383, %v7376
    %v7909 = vpack.c.b16 %v7384, %v7377
    %v7910 = vpack.c.b16 %v7385, %v7378
    %v7911 = vpack.c.b16 %v7393, %v7386
    %v7912 = vpack.c.b16 %v7394, %v7387
    %v7913 = vpack.c.b16 %v7395, %v7388
    %v7914 = vpack.c.b16 %v7396, %v7389
    %v7915 = vpack.c.b16 %v7397, %v7390
    %v7916 = vpack.c.b16 %v7398, %v7391
    %v7917 = vpack.c.b16 %v7399, %v7392
    %v7918 = vpack.c.b16 %v7407, %v7400
    %v7919 = vpack.c.b16 %v7408, %v7401
    %v7920 = vpack.c.b16 %v7409, %v7402
    %v7921 = vpack.c.b16 %v7410, %v7403
    %v7922 = vpack.c.b16 %v7411, %v7404
    %v7923 = vpack.c.b16 %v7412, %v7405
    %v7924 = vpack.c.b16 %v7413, %v7406
    %v7925 = vpack.c.b16 %v7421, %v7414
    %v7926 = vpack.c.b16 %v7422, %v7415
    %v7927 = vpack.c.b16 %v7423, %v7416
    %v7928 = vpack.c.b16 %v7424, %v7417
    %v7929 = vpack.c.b16 %v7425, %v7418
    %v7930 = vpack.c.b16 %v7426, %v7419
    %v7931 = vpack.c.b16 %v7427, %v7420
    %v7932 = vpack.c.b16 %v7435, %v7428
    %v7933 = vpack.c.b16 %v7436, %v7429
    %v7934 = vpack.c.b16 %v7437, %v7430
    %v7935 = vpack.c.b16 %v7438, %v7431
    %v7936 = vpack.c.b16 %v7439, %v7432
    %v7937 = vpack.c.b16 %v7440, %v7433
    %v7938 = vpack.c.b16 %v7441, %v7434
    %v7939 = vpack.c.b16 %v7449, %v7442
    %v7940 = vpack.c.b16 %v7450, %v7443
    %v7941 = vpack.c.b16 %v7451, %v7444
    %v7942 = vpack.c.b16 %v7452, %v7445
    %v7943 = vpack.c.b16 %v7453, %v7446
    %v7944 = vpack.c.b16 %v7454, %v7447
    %v7945 = vpack.c.b16 %v7455, %v7448
    %v7946 = vpack.c.b16 %v7463, %v7456
    %v7947 = vpack.c.b16 %v7464, %v7457
    %v7948 = vpack.c.b16 %v7465, %v7458
    %v7949 = vpack.c.b16 %v7466, %v7459
    %v7950 = vpack.c.b16 %v7467, %v7460
    %v7951 = vpack.c.b16 %v7468, %v7461
    %v7952 = vpack.c.b16 %v7469, %v7462
    %v7953 = vpack.c.b16 %v7477, %v7470
    %v7954 = vpack.c.b16 %v7478, %v7471
    %v7955 = vpack.c.b16 %v7479, %v7472
    %v7956 = vpack.c.b16 %v7480, %v7473
    %v7957 = vpack.c.b16 %v7481, %v7474
    %v7958 = vpack.c.b16 %v7482, %v7475
    %v7959 = vpack.c.b16 %v7483, %v7476
    %v7960 = vpack.c.b16 %v7491, %v7484
    %v7961 = vpack.c.b16 %v7492, %v7485
    %v7962 = vpack.c.b16 %v7493, %v7486
    %v7963 = vpack.c.b16 %v7494, %v7487
    %v7964 = vpack.c.b16 %v7495, %v7488
    %v7965 = vpack.c.b16 %v7496, %v7489
    %v7966 = vpack.c.b16 %v7497, %v7490
    %v7967 = vpack.c.b16 %v7505, %v7498
    %v7968 = vpack.c.b16 %v7506, %v7499
    %v7969 = vpack.c.b16 %v7507, %v7500
    %v7970 = vpack.c.b16 %v7508, %v7501
    %v7971 = vpack.c.b16 %v7509, %v7502
    %v7972 = vpack.c.b16 %v7510, %v7503
    %v7973 = vpack.c.b16 %v7511, %v7504
    %v7974 = vpack.c.b16 %v7519, %v7512
    %v7975 = vpack.c.b16 %v7520, %v7513
    %v7976 = vpack.c.b16 %v7521, %v7514
    %v7977 = vpack.c.b16 %v7522, %v7515
    %v7978 = vpack.c.b16 %v7523, %v7516
    %v7979 = vpack.c.b16 %v7524, %v7517
    %v7980 = vpack.c.b16 %v7525, %v7518
    %v7981 = vpack.c.b16 %v7533, %v7526
    %v7982 = vpack.c.b16 %v7534, %v7527
    %v7983 = vpack.c.b16 %v7535, %v7528
    %v7984 = vpack.c.b16 %v7536, %v7529
    %v7985 = vpack.c.b16 %v7537, %v7530
    %v7986 = vpack.c.b16 %v7538, %v7531
    %v7987 = vpack.c.b16 %v7539, %v7532
    %8436 = vmatprep.subr.bf16.mxu0 %v7590
    %8437 = vmatpush1.bf16.msra.mxu0 %v7589
    %8438 = vmatprep.subr.bf16.mxu0 %v7583
    %8439 = vmatpush1.bf16.msra.mxu0 %v7582
    %8440 = vmatprep.subr.bf16.mxu0 %v7576
    %8441 = vmatpush1.bf16.msra.mxu0 %v7575
    %8442 = vmatprep.subr.bf16.mxu0 %v7569
    %8443 = vmatpush1.bf16.msra.mxu0 %v7568
    %8444 = vmatprep.subr.bf16.mxu0 %v7562
    %8445 = vmatpush1.bf16.msra.mxu0 %v7561
    %8446 = vmatprep.subr.bf16.mxu0 %v7555
    %8447 = vmatpush1.bf16.msra.mxu0 %v7554
    %8448 = vmatprep.subr.bf16.mxu0 %v7548
    %8449 = vmatpush1.bf16.msra.mxu0 %v7547
    %8450 = vmatprep.subr.bf16.mxu0 %v7541
    %8451 = vmatpush1.bf16.msra.mxu0 %v7540
    %8452 = vmatprep.subr.bf16.mxu0 %v7646
    %8453 = vmatpush2.bf16.msra.mxu0 %v7645
    %8454 = vmatprep.subr.bf16.mxu0 %v7639
    %8455 = vmatpush2.bf16.msra.mxu0 %v7638
    %8456 = vmatprep.subr.bf16.mxu0 %v7632
    %8457 = vmatpush2.bf16.msra.mxu0 %v7631
    %8458 = vmatprep.subr.bf16.mxu0 %v7625
    %8459 = vmatpush2.bf16.msra.mxu0 %v7624
    %8460 = vmatprep.subr.bf16.mxu0 %v7618
    %8461 = vmatpush2.bf16.msra.mxu0 %v7617
    %8462 = vmatprep.subr.bf16.mxu0 %v7611
    %8463 = vmatpush2.bf16.msra.mxu0 %v7610
    %8464 = vmatprep.subr.bf16.mxu0 %v7604
    %8465 = vmatpush2.bf16.msra.mxu0 %v7603
    %8466 = vmatprep.subr.bf16.mxu0 %v7597
    %8467 = vmatpush2.bf16.msra.mxu0 %v7596
    %8468 = vmatprep.mubr.bf16.mxu0 %v5456
    %8469 = vmatmul.mubr.bf16.gmra.mxu0 %v5455
    %v8470 = vpop.f32.mrf.mxu0
    %v8471 = vadd.f32 %v6100, %v8470
    %v8472 = vpop.f32.mrf.mxu0
    %v8473 = vadd.f32 %v6104, %v8472
    %v8474 = vpop.f32.mrf.mxu0
    %v8475 = vadd.f32 %v6100, %v8474
    %v8476 = vpop.f32.mrf.mxu0
    %v8477 = vadd.f32 %v6104, %v8476
    %8478 = vmatprep.mubr.bf16.mxu0 %v5464
    %8479 = vmatmul.mubr.bf16.gmra.mxu0 %v5463
    %v8480 = vpop.f32.mrf.mxu0
    %v8481 = vadd.f32 %v6100, %v8480
    %v8482 = vpop.f32.mrf.mxu0
    %v8483 = vadd.f32 %v6104, %v8482
    %v8484 = vpop.f32.mrf.mxu0
    %v8485 = vadd.f32 %v6100, %v8484
    %v8486 = vpop.f32.mrf.mxu0
    %v8487 = vadd.f32 %v6104, %v8486
    %8488 = vmatprep.mubr.bf16.mxu0 %v5472
    %8489 = vmatmul.mubr.bf16.gmra.mxu0 %v5471
    %v8490 = vpop.f32.mrf.mxu0
    %v8491 = vadd.f32 %v6100, %v8490
    %v8492 = vpop.f32.mrf.mxu0
    %v8493 = vadd.f32 %v6104, %v8492
    %v8494 = vpop.f32.mrf.mxu0
    %v8495 = vadd.f32 %v6100, %v8494
    %v8496 = vpop.f32.mrf.mxu0
    %v8497 = vadd.f32 %v6104, %v8496
    %8498 = vmatprep.mubr.bf16.mxu0 %v5480
    %8499 = vmatmul.mubr.bf16.gmra.mxu0 %v5479
    %v8500 = vpop.f32.mrf.mxu0
    %v8501 = vadd.f32 %v6100, %v8500
    %v8502 = vpop.f32.mrf.mxu0
    %v8503 = vadd.f32 %v6104, %v8502
    %v8504 = vpop.f32.mrf.mxu0
    %v8505 = vadd.f32 %v6100, %v8504
    %v8506 = vpop.f32.mrf.mxu0
    %v8507 = vadd.f32 %v6104, %v8506
    %8508 = vmatprep.mubr.bf16.mxu0 %v5488
    %8509 = vmatmul.mubr.bf16.gmra.mxu0 %v5487
    %v8510 = vpop.f32.mrf.mxu0
    %v8511 = vadd.f32 %v6100, %v8510
    %v8512 = vpop.f32.mrf.mxu0
    %v8513 = vadd.f32 %v6104, %v8512
    %v8514 = vpop.f32.mrf.mxu0
    %v8515 = vadd.f32 %v6100, %v8514
    %v8516 = vpop.f32.mrf.mxu0
    %v8517 = vadd.f32 %v6104, %v8516
    %8518 = vmatprep.mubr.bf16.mxu0 %v5496
    %8519 = vmatmul.mubr.bf16.gmra.mxu0 %v5495
    %v8520 = vpop.f32.mrf.mxu0
    %v8521 = vadd.f32 %v6100, %v8520
    %v8522 = vpop.f32.mrf.mxu0
    %v8523 = vadd.f32 %v6104, %v8522
    %v8524 = vpop.f32.mrf.mxu0
    %v8525 = vadd.f32 %v6100, %v8524
    %v8526 = vpop.f32.mrf.mxu0
    %v8527 = vadd.f32 %v6104, %v8526
    %8528 = vmatprep.mubr.bf16.mxu0 %v5504
    %8529 = vmatmul.mubr.bf16.gmra.mxu0 %v5503
    %v8530 = vpop.f32.mrf.mxu0
    %v8531 = vadd.f32 %v6100, %v8530
    %v8532 = vpop.f32.mrf.mxu0
    %v8533 = vadd.f32 %v6104, %v8532
    %v8534 = vpop.f32.mrf.mxu0
    %v8535 = vadd.f32 %v6100, %v8534
    %v8536 = vpop.f32.mrf.mxu0
    %v8537 = vadd.f32 %v6104, %v8536
    %8538 = vmatprep.mubr.bf16.mxu0 %v5512
    %8539 = vmatmul.mubr.bf16.gmra.mxu0 %v5511
    %v8540 = vpop.f32.mrf.mxu0
    %v8541 = vadd.f32 %v6100, %v8540
    %v8542 = vpop.f32.mrf.mxu0
    %v8543 = vadd.f32 %v6104, %v8542
    %v8544 = vpop.f32.mrf.mxu0
    %v8545 = vadd.f32 %v6100, %v8544
    %v8546 = vpop.f32.mrf.mxu0
    %v8547 = vadd.f32 %v6104, %v8546
    %8548 = vmatprep.mubr.bf16.mxu0 %v5520
    %8549 = vmatmul.mubr.bf16.gmra.mxu0 %v5519
    %v8550 = vpop.f32.mrf.mxu0
    %v8551 = vadd.f32 %v6100, %v8550
    %v8552 = vpop.f32.mrf.mxu0
    %v8553 = vadd.f32 %v6104, %v8552
    %v8554 = vpop.f32.mrf.mxu0
    %v8555 = vadd.f32 %v6100, %v8554
    %v8556 = vpop.f32.mrf.mxu0
    %v8557 = vadd.f32 %v6104, %v8556
    %8558 = vmatprep.mubr.bf16.mxu0 %v5528
    %8559 = vmatmul.mubr.bf16.gmra.mxu0 %v5527
    %v8560 = vpop.f32.mrf.mxu0
    %v8561 = vadd.f32 %v6100, %v8560
    %v8562 = vpop.f32.mrf.mxu0
    %v8563 = vadd.f32 %v6104, %v8562
    %v8564 = vpop.f32.mrf.mxu0
    %v8565 = vadd.f32 %v6100, %v8564
    %v8566 = vpop.f32.mrf.mxu0
    %v8567 = vadd.f32 %v6104, %v8566
    %8568 = vmatprep.mubr.bf16.mxu0 %v5536
    %8569 = vmatmul.mubr.bf16.gmra.mxu0 %v5535
    %v8570 = vpop.f32.mrf.mxu0
    %v8571 = vadd.f32 %v6100, %v8570
    %v8572 = vpop.f32.mrf.mxu0
    %v8573 = vadd.f32 %v6104, %v8572
    %v8574 = vpop.f32.mrf.mxu0
    %v8575 = vadd.f32 %v6100, %v8574
    %v8576 = vpop.f32.mrf.mxu0
    %v8577 = vadd.f32 %v6104, %v8576
    %8578 = vmatprep.mubr.bf16.mxu0 %v5544
    %8579 = vmatmul.mubr.bf16.gmra.mxu0 %v5543
    %v8580 = vpop.f32.mrf.mxu0
    %v8581 = vadd.f32 %v6100, %v8580
    %v8582 = vpop.f32.mrf.mxu0
    %v8583 = vadd.f32 %v6104, %v8582
    %v8584 = vpop.f32.mrf.mxu0
    %v8585 = vadd.f32 %v6100, %v8584
    %v8586 = vpop.f32.mrf.mxu0
    %v8587 = vadd.f32 %v6104, %v8586
    %8588 = vmatprep.mubr.bf16.mxu0 %v5552
    %8589 = vmatmul.mubr.bf16.gmra.mxu0 %v5551
    %v8590 = vpop.f32.mrf.mxu0
    %v8591 = vadd.f32 %v6100, %v8590
    %v8592 = vpop.f32.mrf.mxu0
    %v8593 = vadd.f32 %v6104, %v8592
    %v8594 = vpop.f32.mrf.mxu0
    %v8595 = vadd.f32 %v6100, %v8594
    %v8596 = vpop.f32.mrf.mxu0
    %v8597 = vadd.f32 %v6104, %v8596
    %8598 = vmatprep.mubr.bf16.mxu0 %v5560
    %8599 = vmatmul.mubr.bf16.gmra.mxu0 %v5559
    %v8600 = vpop.f32.mrf.mxu0
    %v8601 = vadd.f32 %v6100, %v8600
    %v8602 = vpop.f32.mrf.mxu0
    %v8603 = vadd.f32 %v6104, %v8602
    %v8604 = vpop.f32.mrf.mxu0
    %v8605 = vadd.f32 %v6100, %v8604
    %v8606 = vpop.f32.mrf.mxu0
    %v8607 = vadd.f32 %v6104, %v8606
    %8608 = vmatprep.mubr.bf16.mxu0 %v5568
    %8609 = vmatmul.mubr.bf16.gmra.mxu0 %v5567
    %v8610 = vpop.f32.mrf.mxu0
    %v8611 = vadd.f32 %v6100, %v8610
    %v8612 = vpop.f32.mrf.mxu0
    %v8613 = vadd.f32 %v6104, %v8612
    %v8614 = vpop.f32.mrf.mxu0
    %v8615 = vadd.f32 %v6100, %v8614
    %v8616 = vpop.f32.mrf.mxu0
    %v8617 = vadd.f32 %v6104, %v8616
    %8618 = vmatprep.mubr.bf16.mxu0 %v5576
    %8619 = vmatmul.mubr.bf16.gmra.mxu0 %v5575
    %v8620 = vpop.f32.mrf.mxu0
    %v8621 = vadd.f32 %v6100, %v8620
    %v8622 = vpop.f32.mrf.mxu0
    %v8623 = vadd.f32 %v6104, %v8622
    %v8624 = vpop.f32.mrf.mxu0
    %v8625 = vadd.f32 %v6100, %v8624
    %v8626 = vpop.f32.mrf.mxu0
    %v8627 = vadd.f32 %v6104, %v8626
    %8628 = vdwg.mxu0
    %8629 = vmatprep.subr.bf16.mxu0 %v7702
    %8630 = vmatpush1.bf16.msra.mxu0 %v7701
    %8631 = vmatprep.subr.bf16.mxu0 %v7695
    %8632 = vmatpush1.bf16.msra.mxu0 %v7694
    %8633 = vmatprep.subr.bf16.mxu0 %v7688
    %8634 = vmatpush1.bf16.msra.mxu0 %v7687
    %8635 = vmatprep.subr.bf16.mxu0 %v7681
    %8636 = vmatpush1.bf16.msra.mxu0 %v7680
    %8637 = vmatprep.subr.bf16.mxu0 %v7674
    %8638 = vmatpush1.bf16.msra.mxu0 %v7673
    %8639 = vmatprep.subr.bf16.mxu0 %v7667
    %8640 = vmatpush1.bf16.msra.mxu0 %v7666
    %8641 = vmatprep.subr.bf16.mxu0 %v7660
    %8642 = vmatpush1.bf16.msra.mxu0 %v7659
    %8643 = vmatprep.subr.bf16.mxu0 %v7653
    %8644 = vmatpush1.bf16.msra.mxu0 %v7652
    %8645 = vmatprep.subr.bf16.mxu0 %v7758
    %8646 = vmatpush2.bf16.msra.mxu0 %v7757
    %8647 = vmatprep.subr.bf16.mxu0 %v7751
    %8648 = vmatpush2.bf16.msra.mxu0 %v7750
    %8649 = vmatprep.subr.bf16.mxu0 %v7744
    %8650 = vmatpush2.bf16.msra.mxu0 %v7743
    %8651 = vmatprep.subr.bf16.mxu0 %v7737
    %8652 = vmatpush2.bf16.msra.mxu0 %v7736
    %8653 = vmatprep.subr.bf16.mxu0 %v7730
    %8654 = vmatpush2.bf16.msra.mxu0 %v7729
    %8655 = vmatprep.subr.bf16.mxu0 %v7723
    %8656 = vmatpush2.bf16.msra.mxu0 %v7722
    %8657 = vmatprep.subr.bf16.mxu0 %v7716
    %8658 = vmatpush2.bf16.msra.mxu0 %v7715
    %8659 = vmatprep.subr.bf16.mxu0 %v7709
    %8660 = vmatpush2.bf16.msra.mxu0 %v7708
    %8661 = vmatprep.mubr.bf16.mxu0 %v5458
    %8662 = vmatmul.mubr.bf16.gmra.mxu0 %v5457
    %v8663 = vpop.f32.mrf.mxu0
    %v8664 = vadd.f32 %v8471, %v8663
    %v8665 = vpop.f32.mrf.mxu0
    %v8666 = vadd.f32 %v8473, %v8665
    %v8667 = vpop.f32.mrf.mxu0
    %v8668 = vadd.f32 %v8475, %v8667
    %v8669 = vpop.f32.mrf.mxu0
    %v8670 = vadd.f32 %v8477, %v8669
    %8671 = vmatprep.mubr.bf16.mxu0 %v5466
    %8672 = vmatmul.mubr.bf16.gmra.mxu0 %v5465
    %v8673 = vpop.f32.mrf.mxu0
    %v8674 = vadd.f32 %v8481, %v8673
    %v8675 = vpop.f32.mrf.mxu0
    %v8676 = vadd.f32 %v8483, %v8675
    %v8677 = vpop.f32.mrf.mxu0
    %v8678 = vadd.f32 %v8485, %v8677
    %v8679 = vpop.f32.mrf.mxu0
    %v8680 = vadd.f32 %v8487, %v8679
    %8681 = vmatprep.mubr.bf16.mxu0 %v5474
    %8682 = vmatmul.mubr.bf16.gmra.mxu0 %v5473
    %v8683 = vpop.f32.mrf.mxu0
    %v8684 = vadd.f32 %v8491, %v8683
    %v8685 = vpop.f32.mrf.mxu0
    %v8686 = vadd.f32 %v8493, %v8685
    %v8687 = vpop.f32.mrf.mxu0
    %v8688 = vadd.f32 %v8495, %v8687
    %v8689 = vpop.f32.mrf.mxu0
    %v8690 = vadd.f32 %v8497, %v8689
    %8691 = vmatprep.mubr.bf16.mxu0 %v5482
    %8692 = vmatmul.mubr.bf16.gmra.mxu0 %v5481
    %v8693 = vpop.f32.mrf.mxu0
    %v8694 = vadd.f32 %v8501, %v8693
    %v8695 = vpop.f32.mrf.mxu0
    %v8696 = vadd.f32 %v8503, %v8695
    %v8697 = vpop.f32.mrf.mxu0
    %v8698 = vadd.f32 %v8505, %v8697
    %v8699 = vpop.f32.mrf.mxu0
    %v8700 = vadd.f32 %v8507, %v8699
    %8701 = vmatprep.mubr.bf16.mxu0 %v5490
    %8702 = vmatmul.mubr.bf16.gmra.mxu0 %v5489
    %v8703 = vpop.f32.mrf.mxu0
    %v8704 = vadd.f32 %v8511, %v8703
    %v8705 = vpop.f32.mrf.mxu0
    %v8706 = vadd.f32 %v8513, %v8705
    %v8707 = vpop.f32.mrf.mxu0
    %v8708 = vadd.f32 %v8515, %v8707
    %v8709 = vpop.f32.mrf.mxu0
    %v8710 = vadd.f32 %v8517, %v8709
    %8711 = vmatprep.mubr.bf16.mxu0 %v5498
    %8712 = vmatmul.mubr.bf16.gmra.mxu0 %v5497
    %v8713 = vpop.f32.mrf.mxu0
    %v8714 = vadd.f32 %v8521, %v8713
    %v8715 = vpop.f32.mrf.mxu0
    %v8716 = vadd.f32 %v8523, %v8715
    %v8717 = vpop.f32.mrf.mxu0
    %v8718 = vadd.f32 %v8525, %v8717
    %v8719 = vpop.f32.mrf.mxu0
    %v8720 = vadd.f32 %v8527, %v8719
    %8721 = vmatprep.mubr.bf16.mxu0 %v5506
    %8722 = vmatmul.mubr.bf16.gmra.mxu0 %v5505
    %v8723 = vpop.f32.mrf.mxu0
    %v8724 = vadd.f32 %v8531, %v8723
    %v8725 = vpop.f32.mrf.mxu0
    %v8726 = vadd.f32 %v8533, %v8725
    %v8727 = vpop.f32.mrf.mxu0
    %v8728 = vadd.f32 %v8535, %v8727
    %v8729 = vpop.f32.mrf.mxu0
    %v8730 = vadd.f32 %v8537, %v8729
    %8731 = vmatprep.mubr.bf16.mxu0 %v5514
    %8732 = vmatmul.mubr.bf16.gmra.mxu0 %v5513
    %v8733 = vpop.f32.mrf.mxu0
    %v8734 = vadd.f32 %v8541, %v8733
    %v8735 = vpop.f32.mrf.mxu0
    %v8736 = vadd.f32 %v8543, %v8735
    %v8737 = vpop.f32.mrf.mxu0
    %v8738 = vadd.f32 %v8545, %v8737
    %v8739 = vpop.f32.mrf.mxu0
    %v8740 = vadd.f32 %v8547, %v8739
    %8741 = vmatprep.mubr.bf16.mxu0 %v5522
    %8742 = vmatmul.mubr.bf16.gmra.mxu0 %v5521
    %v8743 = vpop.f32.mrf.mxu0
    %v8744 = vadd.f32 %v8551, %v8743
    %v8745 = vpop.f32.mrf.mxu0
    %v8746 = vadd.f32 %v8553, %v8745
    %v8747 = vpop.f32.mrf.mxu0
    %v8748 = vadd.f32 %v8555, %v8747
    %v8749 = vpop.f32.mrf.mxu0
    %v8750 = vadd.f32 %v8557, %v8749
    %8751 = vmatprep.mubr.bf16.mxu0 %v5530
    %8752 = vmatmul.mubr.bf16.gmra.mxu0 %v5529
    %v8753 = vpop.f32.mrf.mxu0
    %v8754 = vadd.f32 %v8561, %v8753
    %v8755 = vpop.f32.mrf.mxu0
    %v8756 = vadd.f32 %v8563, %v8755
    %v8757 = vpop.f32.mrf.mxu0
    %v8758 = vadd.f32 %v8565, %v8757
    %v8759 = vpop.f32.mrf.mxu0
    %v8760 = vadd.f32 %v8567, %v8759
    %8761 = vmatprep.mubr.bf16.mxu0 %v5538
    %8762 = vmatmul.mubr.bf16.gmra.mxu0 %v5537
    %v8763 = vpop.f32.mrf.mxu0
    %v8764 = vadd.f32 %v8571, %v8763
    %v8765 = vpop.f32.mrf.mxu0
    %v8766 = vadd.f32 %v8573, %v8765
    %v8767 = vpop.f32.mrf.mxu0
    %v8768 = vadd.f32 %v8575, %v8767
    %v8769 = vpop.f32.mrf.mxu0
    %v8770 = vadd.f32 %v8577, %v8769
    %8771 = vmatprep.mubr.bf16.mxu0 %v5546
    %8772 = vmatmul.mubr.bf16.gmra.mxu0 %v5545
    %v8773 = vpop.f32.mrf.mxu0
    %v8774 = vadd.f32 %v8581, %v8773
    %v8775 = vpop.f32.mrf.mxu0
    %v8776 = vadd.f32 %v8583, %v8775
    %v8777 = vpop.f32.mrf.mxu0
    %v8778 = vadd.f32 %v8585, %v8777
    %v8779 = vpop.f32.mrf.mxu0
    %v8780 = vadd.f32 %v8587, %v8779
    %8781 = vmatprep.mubr.bf16.mxu0 %v5554
    %8782 = vmatmul.mubr.bf16.gmra.mxu0 %v5553
    %v8783 = vpop.f32.mrf.mxu0
    %v8784 = vadd.f32 %v8591, %v8783
    %v8785 = vpop.f32.mrf.mxu0
    %v8786 = vadd.f32 %v8593, %v8785
    %v8787 = vpop.f32.mrf.mxu0
    %v8788 = vadd.f32 %v8595, %v8787
    %v8789 = vpop.f32.mrf.mxu0
    %v8790 = vadd.f32 %v8597, %v8789
    %8791 = vmatprep.mubr.bf16.mxu0 %v5562
    %8792 = vmatmul.mubr.bf16.gmra.mxu0 %v5561
    %v8793 = vpop.f32.mrf.mxu0
    %v8794 = vadd.f32 %v8601, %v8793
    %v8795 = vpop.f32.mrf.mxu0
    %v8796 = vadd.f32 %v8603, %v8795
    %v8797 = vpop.f32.mrf.mxu0
    %v8798 = vadd.f32 %v8605, %v8797
    %v8799 = vpop.f32.mrf.mxu0
    %v8800 = vadd.f32 %v8607, %v8799
    %8801 = vmatprep.mubr.bf16.mxu0 %v5570
    %8802 = vmatmul.mubr.bf16.gmra.mxu0 %v5569
    %v8803 = vpop.f32.mrf.mxu0
    %v8804 = vadd.f32 %v8611, %v8803
    %v8805 = vpop.f32.mrf.mxu0
    %v8806 = vadd.f32 %v8613, %v8805
    %v8807 = vpop.f32.mrf.mxu0
    %v8808 = vadd.f32 %v8615, %v8807
    %v8809 = vpop.f32.mrf.mxu0
    %v8810 = vadd.f32 %v8617, %v8809
    %8811 = vmatprep.mubr.bf16.mxu0 %v5578
    %8812 = vmatmul.mubr.bf16.gmra.mxu0 %v5577
    %v8813 = vpop.f32.mrf.mxu0
    %v8814 = vadd.f32 %v8621, %v8813
    %v8815 = vpop.f32.mrf.mxu0
    %v8816 = vadd.f32 %v8623, %v8815
    %v8817 = vpop.f32.mrf.mxu0
    %v8818 = vadd.f32 %v8625, %v8817
    %v8819 = vpop.f32.mrf.mxu0
    %v8820 = vadd.f32 %v8627, %v8819
    %8821 = vdwg.mxu0
    %8822 = vmatprep.subr.bf16.mxu0 %v7814
    %8823 = vmatpush1.bf16.msra.mxu0 %v7813
    %8824 = vmatprep.subr.bf16.mxu0 %v7807
    %8825 = vmatpush1.bf16.msra.mxu0 %v7806
    %8826 = vmatprep.subr.bf16.mxu0 %v7800
    %8827 = vmatpush1.bf16.msra.mxu0 %v7799
    %8828 = vmatprep.subr.bf16.mxu0 %v7793
    %8829 = vmatpush1.bf16.msra.mxu0 %v7792
    %8830 = vmatprep.subr.bf16.mxu0 %v7786
    %8831 = vmatpush1.bf16.msra.mxu0 %v7785
    %8832 = vmatprep.subr.bf16.mxu0 %v7779
    %8833 = vmatpush1.bf16.msra.mxu0 %v7778
    %8834 = vmatprep.subr.bf16.mxu0 %v7772
    %8835 = vmatpush1.bf16.msra.mxu0 %v7771
    %8836 = vmatprep.subr.bf16.mxu0 %v7765
    %8837 = vmatpush1.bf16.msra.mxu0 %v7764
    %8838 = vmatprep.subr.bf16.mxu0 %v7870
    %8839 = vmatpush2.bf16.msra.mxu0 %v7869
    %8840 = vmatprep.subr.bf16.mxu0 %v7863
    %8841 = vmatpush2.bf16.msra.mxu0 %v7862
    %8842 = vmatprep.subr.bf16.mxu0 %v7856
    %8843 = vmatpush2.bf16.msra.mxu0 %v7855
    %8844 = vmatprep.subr.bf16.mxu0 %v7849
    %8845 = vmatpush2.bf16.msra.mxu0 %v7848
    %8846 = vmatprep.subr.bf16.mxu0 %v7842
    %8847 = vmatpush2.bf16.msra.mxu0 %v7841
    %8848 = vmatprep.subr.bf16.mxu0 %v7835
    %8849 = vmatpush2.bf16.msra.mxu0 %v7834
    %8850 = vmatprep.subr.bf16.mxu0 %v7828
    %8851 = vmatpush2.bf16.msra.mxu0 %v7827
    %8852 = vmatprep.subr.bf16.mxu0 %v7821
    %8853 = vmatpush2.bf16.msra.mxu0 %v7820
    %8854 = vmatprep.mubr.bf16.mxu0 %v5460
    %8855 = vmatmul.mubr.bf16.gmra.mxu0 %v5459
    %v8856 = vpop.f32.mrf.mxu0
    %v8857 = vadd.f32 %v8664, %v8856
    %v8858 = vpop.f32.mrf.mxu0
    %v8859 = vadd.f32 %v8666, %v8858
    %v8860 = vpop.f32.mrf.mxu0
    %v8861 = vadd.f32 %v8668, %v8860
    %v8862 = vpop.f32.mrf.mxu0
    %v8863 = vadd.f32 %v8670, %v8862
    %8864 = vmatprep.mubr.bf16.mxu0 %v5468
    %8865 = vmatmul.mubr.bf16.gmra.mxu0 %v5467
    %v8866 = vpop.f32.mrf.mxu0
    %v8867 = vadd.f32 %v8674, %v8866
    %v8868 = vpop.f32.mrf.mxu0
    %v8869 = vadd.f32 %v8676, %v8868
    %v8870 = vpop.f32.mrf.mxu0
    %v8871 = vadd.f32 %v8678, %v8870
    %v8872 = vpop.f32.mrf.mxu0
    %v8873 = vadd.f32 %v8680, %v8872
    %8874 = vmatprep.mubr.bf16.mxu0 %v5476
    %8875 = vmatmul.mubr.bf16.gmra.mxu0 %v5475
    %v8876 = vpop.f32.mrf.mxu0
    %v8877 = vadd.f32 %v8684, %v8876
    %v8878 = vpop.f32.mrf.mxu0
    %v8879 = vadd.f32 %v8686, %v8878
    %v8880 = vpop.f32.mrf.mxu0
    %v8881 = vadd.f32 %v8688, %v8880
    %v8882 = vpop.f32.mrf.mxu0
    %v8883 = vadd.f32 %v8690, %v8882
    %8884 = vmatprep.mubr.bf16.mxu0 %v5484
    %8885 = vmatmul.mubr.bf16.gmra.mxu0 %v5483
    %v8886 = vpop.f32.mrf.mxu0
    %v8887 = vadd.f32 %v8694, %v8886
    %v8888 = vpop.f32.mrf.mxu0
    %v8889 = vadd.f32 %v8696, %v8888
    %v8890 = vpop.f32.mrf.mxu0
    %v8891 = vadd.f32 %v8698, %v8890
    %v8892 = vpop.f32.mrf.mxu0
    %v8893 = vadd.f32 %v8700, %v8892
    %8894 = vmatprep.mubr.bf16.mxu0 %v5492
    %8895 = vmatmul.mubr.bf16.gmra.mxu0 %v5491
    %v8896 = vpop.f32.mrf.mxu0
    %v8897 = vadd.f32 %v8704, %v8896
    %v8898 = vpop.f32.mrf.mxu0
    %v8899 = vadd.f32 %v8706, %v8898
    %v8900 = vpop.f32.mrf.mxu0
    %v8901 = vadd.f32 %v8708, %v8900
    %v8902 = vpop.f32.mrf.mxu0
    %v8903 = vadd.f32 %v8710, %v8902
    %8904 = vmatprep.mubr.bf16.mxu0 %v5500
    %8905 = vmatmul.mubr.bf16.gmra.mxu0 %v5499
    %v8906 = vpop.f32.mrf.mxu0
    %v8907 = vadd.f32 %v8714, %v8906
    %v8908 = vpop.f32.mrf.mxu0
    %v8909 = vadd.f32 %v8716, %v8908
    %v8910 = vpop.f32.mrf.mxu0
    %v8911 = vadd.f32 %v8718, %v8910
    %v8912 = vpop.f32.mrf.mxu0
    %v8913 = vadd.f32 %v8720, %v8912
    %8914 = vmatprep.mubr.bf16.mxu0 %v5508
    %8915 = vmatmul.mubr.bf16.gmra.mxu0 %v5507
    %v8916 = vpop.f32.mrf.mxu0
    %v8917 = vadd.f32 %v8724, %v8916
    %v8918 = vpop.f32.mrf.mxu0
    %v8919 = vadd.f32 %v8726, %v8918
    %v8920 = vpop.f32.mrf.mxu0
    %v8921 = vadd.f32 %v8728, %v8920
    %v8922 = vpop.f32.mrf.mxu0
    %v8923 = vadd.f32 %v8730, %v8922
    %8924 = vmatprep.mubr.bf16.mxu0 %v5516
    %8925 = vmatmul.mubr.bf16.gmra.mxu0 %v5515
    %v8926 = vpop.f32.mrf.mxu0
    %v8927 = vadd.f32 %v8734, %v8926
    %v8928 = vpop.f32.mrf.mxu0
    %v8929 = vadd.f32 %v8736, %v8928
    %v8930 = vpop.f32.mrf.mxu0
    %v8931 = vadd.f32 %v8738, %v8930
    %v8932 = vpop.f32.mrf.mxu0
    %v8933 = vadd.f32 %v8740, %v8932
    %8934 = vmatprep.mubr.bf16.mxu0 %v5524
    %8935 = vmatmul.mubr.bf16.gmra.mxu0 %v5523
    %v8936 = vpop.f32.mrf.mxu0
    %v8937 = vadd.f32 %v8744, %v8936
    %v8938 = vpop.f32.mrf.mxu0
    %v8939 = vadd.f32 %v8746, %v8938
    %v8940 = vpop.f32.mrf.mxu0
    %v8941 = vadd.f32 %v8748, %v8940
    %v8942 = vpop.f32.mrf.mxu0
    %v8943 = vadd.f32 %v8750, %v8942
    %8944 = vmatprep.mubr.bf16.mxu0 %v5532
    %8945 = vmatmul.mubr.bf16.gmra.mxu0 %v5531
    %v8946 = vpop.f32.mrf.mxu0
    %v8947 = vadd.f32 %v8754, %v8946
    %v8948 = vpop.f32.mrf.mxu0
    %v8949 = vadd.f32 %v8756, %v8948
    %v8950 = vpop.f32.mrf.mxu0
    %v8951 = vadd.f32 %v8758, %v8950
    %v8952 = vpop.f32.mrf.mxu0
    %v8953 = vadd.f32 %v8760, %v8952
    %8954 = vmatprep.mubr.bf16.mxu0 %v5540
    %8955 = vmatmul.mubr.bf16.gmra.mxu0 %v5539
    %v8956 = vpop.f32.mrf.mxu0
    %v8957 = vadd.f32 %v8764, %v8956
    %v8958 = vpop.f32.mrf.mxu0
    %v8959 = vadd.f32 %v8766, %v8958
    %v8960 = vpop.f32.mrf.mxu0
    %v8961 = vadd.f32 %v8768, %v8960
    %v8962 = vpop.f32.mrf.mxu0
    %v8963 = vadd.f32 %v8770, %v8962
    %8964 = vmatprep.mubr.bf16.mxu0 %v5548
    %8965 = vmatmul.mubr.bf16.gmra.mxu0 %v5547
    %v8966 = vpop.f32.mrf.mxu0
    %v8967 = vadd.f32 %v8774, %v8966
    %v8968 = vpop.f32.mrf.mxu0
    %v8969 = vadd.f32 %v8776, %v8968
    %v8970 = vpop.f32.mrf.mxu0
    %v8971 = vadd.f32 %v8778, %v8970
    %v8972 = vpop.f32.mrf.mxu0
    %v8973 = vadd.f32 %v8780, %v8972
    %8974 = vmatprep.mubr.bf16.mxu0 %v5556
    %8975 = vmatmul.mubr.bf16.gmra.mxu0 %v5555
    %v8976 = vpop.f32.mrf.mxu0
    %v8977 = vadd.f32 %v8784, %v8976
    %v8978 = vpop.f32.mrf.mxu0
    %v8979 = vadd.f32 %v8786, %v8978
    %v8980 = vpop.f32.mrf.mxu0
    %v8981 = vadd.f32 %v8788, %v8980
    %v8982 = vpop.f32.mrf.mxu0
    %v8983 = vadd.f32 %v8790, %v8982
    %8984 = vmatprep.mubr.bf16.mxu0 %v5564
    %8985 = vmatmul.mubr.bf16.gmra.mxu0 %v5563
    %v8986 = vpop.f32.mrf.mxu0
    %v8987 = vadd.f32 %v8794, %v8986
    %v8988 = vpop.f32.mrf.mxu0
    %v8989 = vadd.f32 %v8796, %v8988
    %v8990 = vpop.f32.mrf.mxu0
    %v8991 = vadd.f32 %v8798, %v8990
    %v8992 = vpop.f32.mrf.mxu0
    %v8993 = vadd.f32 %v8800, %v8992
    %8994 = vmatprep.mubr.bf16.mxu0 %v5572
    %8995 = vmatmul.mubr.bf16.gmra.mxu0 %v5571
    %v8996 = vpop.f32.mrf.mxu0
    %v8997 = vadd.f32 %v8804, %v8996
    %v8998 = vpop.f32.mrf.mxu0
    %v8999 = vadd.f32 %v8806, %v8998
    %v9000 = vpop.f32.mrf.mxu0
    %v9001 = vadd.f32 %v8808, %v9000
    %v9002 = vpop.f32.mrf.mxu0
    %v9003 = vadd.f32 %v8810, %v9002
    %9004 = vmatprep.mubr.bf16.mxu0 %v5580
    %9005 = vmatmul.mubr.bf16.gmra.mxu0 %v5579
    %v9006 = vpop.f32.mrf.mxu0
    %v9007 = vadd.f32 %v8814, %v9006
    %v9008 = vpop.f32.mrf.mxu0
    %v9009 = vadd.f32 %v8816, %v9008
    %v9010 = vpop.f32.mrf.mxu0
    %v9011 = vadd.f32 %v8818, %v9010
    %v9012 = vpop.f32.mrf.mxu0
    %v9013 = vadd.f32 %v8820, %v9012
    %9014 = vdwg.mxu0
    %9015 = vmatprep.subr.bf16.mxu0 %v7926
    %9016 = vmatpush1.bf16.msra.mxu0 %v7925
    %9017 = vmatprep.subr.bf16.mxu0 %v7919
    %9018 = vmatpush1.bf16.msra.mxu0 %v7918
    %9019 = vmatprep.subr.bf16.mxu0 %v7912
    %9020 = vmatpush1.bf16.msra.mxu0 %v7911
    %9021 = vmatprep.subr.bf16.mxu0 %v7905
    %9022 = vmatpush1.bf16.msra.mxu0 %v7904
    %9023 = vmatprep.subr.bf16.mxu0 %v7898
    %9024 = vmatpush1.bf16.msra.mxu0 %v7897
    %9025 = vmatprep.subr.bf16.mxu0 %v7891
    %9026 = vmatpush1.bf16.msra.mxu0 %v7890
    %9027 = vmatprep.subr.bf16.mxu0 %v7884
    %9028 = vmatpush1.bf16.msra.mxu0 %v7883
    %9029 = vmatprep.subr.bf16.mxu0 %v7877
    %9030 = vmatpush1.bf16.msra.mxu0 %v7876
    %9031 = vmatprep.subr.bf16.mxu0 %v7982
    %9032 = vmatpush2.bf16.msra.mxu0 %v7981
    %9033 = vmatprep.subr.bf16.mxu0 %v7975
    %9034 = vmatpush2.bf16.msra.mxu0 %v7974
    %9035 = vmatprep.subr.bf16.mxu0 %v7968
    %9036 = vmatpush2.bf16.msra.mxu0 %v7967
    %9037 = vmatprep.subr.bf16.mxu0 %v7961
    %9038 = vmatpush2.bf16.msra.mxu0 %v7960
    %9039 = vmatprep.subr.bf16.mxu0 %v7954
    %9040 = vmatpush2.bf16.msra.mxu0 %v7953
    %9041 = vmatprep.subr.bf16.mxu0 %v7947
    %9042 = vmatpush2.bf16.msra.mxu0 %v7946
    %9043 = vmatprep.subr.bf16.mxu0 %v7940
    %9044 = vmatpush2.bf16.msra.mxu0 %v7939
    %9045 = vmatprep.subr.bf16.mxu0 %v7933
    %9046 = vmatpush2.bf16.msra.mxu0 %v7932
    %9047 = vmatprep.mubr.bf16.mxu0 %v5462
    %9048 = vmatmul.mubr.bf16.gmra.mxu0 %v5461
    %v9049 = vpop.f32.mrf.mxu0
    %v9050 = vadd.f32 %v8857, %v9049
    %v9051 = vpop.f32.mrf.mxu0
    %v9052 = vadd.f32 %v8859, %v9051
    %v9053 = vpop.f32.mrf.mxu0
    %v9054 = vadd.f32 %v8861, %v9053
    %v9055 = vpop.f32.mrf.mxu0
    %v9056 = vadd.f32 %v8863, %v9055
    %9057 = vmatprep.mubr.bf16.mxu0 %v5470
    %9058 = vmatmul.mubr.bf16.gmra.mxu0 %v5469
    %v9059 = vpop.f32.mrf.mxu0
    %v9060 = vadd.f32 %v8867, %v9059
    %v9061 = vpop.f32.mrf.mxu0
    %v9062 = vadd.f32 %v8869, %v9061
    %v9063 = vpop.f32.mrf.mxu0
    %v9064 = vadd.f32 %v8871, %v9063
    %v9065 = vpop.f32.mrf.mxu0
    %v9066 = vadd.f32 %v8873, %v9065
    %9067 = vmatprep.mubr.bf16.mxu0 %v5478
    %9068 = vmatmul.mubr.bf16.gmra.mxu0 %v5477
    %v9069 = vpop.f32.mrf.mxu0
    %v9070 = vadd.f32 %v8877, %v9069
    %v9071 = vpop.f32.mrf.mxu0
    %v9072 = vadd.f32 %v8879, %v9071
    %v9073 = vpop.f32.mrf.mxu0
    %v9074 = vadd.f32 %v8881, %v9073
    %v9075 = vpop.f32.mrf.mxu0
    %v9076 = vadd.f32 %v8883, %v9075
    %9077 = vmatprep.mubr.bf16.mxu0 %v5486
    %9078 = vmatmul.mubr.bf16.gmra.mxu0 %v5485
    %v9079 = vpop.f32.mrf.mxu0
    %v9080 = vadd.f32 %v8887, %v9079
    %v9081 = vpop.f32.mrf.mxu0
    %v9082 = vadd.f32 %v8889, %v9081
    %v9083 = vpop.f32.mrf.mxu0
    %v9084 = vadd.f32 %v8891, %v9083
    %v9085 = vpop.f32.mrf.mxu0
    %v9086 = vadd.f32 %v8893, %v9085
    %9087 = vmatprep.mubr.bf16.mxu0 %v5494
    %9088 = vmatmul.mubr.bf16.gmra.mxu0 %v5493
    %v9089 = vpop.f32.mrf.mxu0
    %v9090 = vadd.f32 %v8897, %v9089
    %v9091 = vpop.f32.mrf.mxu0
    %v9092 = vadd.f32 %v8899, %v9091
    %v9093 = vpop.f32.mrf.mxu0
    %v9094 = vadd.f32 %v8901, %v9093
    %v9095 = vpop.f32.mrf.mxu0
    %v9096 = vadd.f32 %v8903, %v9095
    %9097 = vmatprep.mubr.bf16.mxu0 %v5502
    %9098 = vmatmul.mubr.bf16.gmra.mxu0 %v5501
    %v9099 = vpop.f32.mrf.mxu0
    %v9100 = vadd.f32 %v8907, %v9099
    %v9101 = vpop.f32.mrf.mxu0
    %v9102 = vadd.f32 %v8909, %v9101
    %v9103 = vpop.f32.mrf.mxu0
    %v9104 = vadd.f32 %v8911, %v9103
    %v9105 = vpop.f32.mrf.mxu0
    %v9106 = vadd.f32 %v8913, %v9105
    %9107 = vmatprep.mubr.bf16.mxu0 %v5510
    %9108 = vmatmul.mubr.bf16.gmra.mxu0 %v5509
    %v9109 = vpop.f32.mrf.mxu0
    %v9110 = vadd.f32 %v8917, %v9109
    %v9111 = vpop.f32.mrf.mxu0
    %v9112 = vadd.f32 %v8919, %v9111
    %v9113 = vpop.f32.mrf.mxu0
    %v9114 = vadd.f32 %v8921, %v9113
    %v9115 = vpop.f32.mrf.mxu0
    %v9116 = vadd.f32 %v8923, %v9115
    %9117 = vmatprep.mubr.bf16.mxu0 %v5518
    %9118 = vmatmul.mubr.bf16.gmra.mxu0 %v5517
    %v9119 = vpop.f32.mrf.mxu0
    %v9120 = vadd.f32 %v8927, %v9119
    %v9121 = vpop.f32.mrf.mxu0
    %v9122 = vadd.f32 %v8929, %v9121
    %v9123 = vpop.f32.mrf.mxu0
    %v9124 = vadd.f32 %v8931, %v9123
    %v9125 = vpop.f32.mrf.mxu0
    %v9126 = vadd.f32 %v8933, %v9125
    %9127 = vmatprep.mubr.bf16.mxu0 %v5526
    %9128 = vmatmul.mubr.bf16.gmra.mxu0 %v5525
    %v9129 = vpop.f32.mrf.mxu0
    %v9130 = vadd.f32 %v8937, %v9129
    %v9131 = vpop.f32.mrf.mxu0
    %v9132 = vadd.f32 %v8939, %v9131
    %v9133 = vpop.f32.mrf.mxu0
    %v9134 = vadd.f32 %v8941, %v9133
    %v9135 = vpop.f32.mrf.mxu0
    %v9136 = vadd.f32 %v8943, %v9135
    %9137 = vmatprep.mubr.bf16.mxu0 %v5534
    %9138 = vmatmul.mubr.bf16.gmra.mxu0 %v5533
    %v9139 = vpop.f32.mrf.mxu0
    %v9140 = vadd.f32 %v8947, %v9139
    %v9141 = vpop.f32.mrf.mxu0
    %v9142 = vadd.f32 %v8949, %v9141
    %v9143 = vpop.f32.mrf.mxu0
    %v9144 = vadd.f32 %v8951, %v9143
    %v9145 = vpop.f32.mrf.mxu0
    %v9146 = vadd.f32 %v8953, %v9145
    %9147 = vmatprep.mubr.bf16.mxu0 %v5542
    %9148 = vmatmul.mubr.bf16.gmra.mxu0 %v5541
    %v9149 = vpop.f32.mrf.mxu0
    %v9150 = vadd.f32 %v8957, %v9149
    %v9151 = vpop.f32.mrf.mxu0
    %v9152 = vadd.f32 %v8959, %v9151
    %v9153 = vpop.f32.mrf.mxu0
    %v9154 = vadd.f32 %v8961, %v9153
    %v9155 = vpop.f32.mrf.mxu0
    %v9156 = vadd.f32 %v8963, %v9155
    %9157 = vmatprep.mubr.bf16.mxu0 %v5550
    %9158 = vmatmul.mubr.bf16.gmra.mxu0 %v5549
    %v9159 = vpop.f32.mrf.mxu0
    %v9160 = vadd.f32 %v8967, %v9159
    %v9161 = vpop.f32.mrf.mxu0
    %v9162 = vadd.f32 %v8969, %v9161
    %v9163 = vpop.f32.mrf.mxu0
    %v9164 = vadd.f32 %v8971, %v9163
    %v9165 = vpop.f32.mrf.mxu0
    %v9166 = vadd.f32 %v8973, %v9165
    %9167 = vmatprep.mubr.bf16.mxu0 %v5558
    %9168 = vmatmul.mubr.bf16.gmra.mxu0 %v5557
    %v9169 = vpop.f32.mrf.mxu0
    %v9170 = vadd.f32 %v8977, %v9169
    %v9171 = vpop.f32.mrf.mxu0
    %v9172 = vadd.f32 %v8979, %v9171
    %v9173 = vpop.f32.mrf.mxu0
    %v9174 = vadd.f32 %v8981, %v9173
    %v9175 = vpop.f32.mrf.mxu0
    %v9176 = vadd.f32 %v8983, %v9175
    %9177 = vmatprep.mubr.bf16.mxu0 %v5566
    %9178 = vmatmul.mubr.bf16.gmra.mxu0 %v5565
    %v9179 = vpop.f32.mrf.mxu0
    %v9180 = vadd.f32 %v8987, %v9179
    %v9181 = vpop.f32.mrf.mxu0
    %v9182 = vadd.f32 %v8989, %v9181
    %v9183 = vpop.f32.mrf.mxu0
    %v9184 = vadd.f32 %v8991, %v9183
    %v9185 = vpop.f32.mrf.mxu0
    %v9186 = vadd.f32 %v8993, %v9185
    %9187 = vmatprep.mubr.bf16.mxu0 %v5574
    %9188 = vmatmul.mubr.bf16.gmra.mxu0 %v5573
    %v9189 = vpop.f32.mrf.mxu0
    %v9190 = vadd.f32 %v8997, %v9189
    %v9191 = vpop.f32.mrf.mxu0
    %v9192 = vadd.f32 %v8999, %v9191
    %v9193 = vpop.f32.mrf.mxu0
    %v9194 = vadd.f32 %v9001, %v9193
    %v9195 = vpop.f32.mrf.mxu0
    %v9196 = vadd.f32 %v9003, %v9195
    %9197 = vmatprep.mubr.bf16.mxu0 %v5582
    %9198 = vmatmul.mubr.bf16.gmra.mxu0 %v5581
    %v9199 = vpop.f32.mrf.mxu0
    %v9200 = vadd.f32 %v9007, %v9199
    %v9201 = vpop.f32.mrf.mxu0
    %v9202 = vadd.f32 %v9009, %v9201
    %v9203 = vpop.f32.mrf.mxu0
    %v9204 = vadd.f32 %v9011, %v9203
    %v9205 = vpop.f32.mrf.mxu0
    %v9206 = vadd.f32 %v9013, %v9205
    %9207 = vdwg.mxu0
    %9208 = vmatprep.subr.bf16.mxu0 %v7592
    %9209 = vmatpush1.bf16.msra.mxu0 %v7591
    %9210 = vmatprep.subr.bf16.mxu0 %v7585
    %9211 = vmatpush1.bf16.msra.mxu0 %v7584
    %9212 = vmatprep.subr.bf16.mxu0 %v7578
    %9213 = vmatpush1.bf16.msra.mxu0 %v7577
    %9214 = vmatprep.subr.bf16.mxu0 %v7571
    %9215 = vmatpush1.bf16.msra.mxu0 %v7570
    %9216 = vmatprep.subr.bf16.mxu0 %v7564
    %9217 = vmatpush1.bf16.msra.mxu0 %v7563
    %9218 = vmatprep.subr.bf16.mxu0 %v7557
    %9219 = vmatpush1.bf16.msra.mxu0 %v7556
    %9220 = vmatprep.subr.bf16.mxu0 %v7550
    %9221 = vmatpush1.bf16.msra.mxu0 %v7549
    %9222 = vmatprep.subr.bf16.mxu0 %v7543
    %9223 = vmatpush1.bf16.msra.mxu0 %v7542
    %9224 = vmatprep.subr.bf16.mxu0 %v7648
    %9225 = vmatpush2.bf16.msra.mxu0 %v7647
    %9226 = vmatprep.subr.bf16.mxu0 %v7641
    %9227 = vmatpush2.bf16.msra.mxu0 %v7640
    %9228 = vmatprep.subr.bf16.mxu0 %v7634
    %9229 = vmatpush2.bf16.msra.mxu0 %v7633
    %9230 = vmatprep.subr.bf16.mxu0 %v7627
    %9231 = vmatpush2.bf16.msra.mxu0 %v7626
    %9232 = vmatprep.subr.bf16.mxu0 %v7620
    %9233 = vmatpush2.bf16.msra.mxu0 %v7619
    %9234 = vmatprep.subr.bf16.mxu0 %v7613
    %9235 = vmatpush2.bf16.msra.mxu0 %v7612
    %9236 = vmatprep.subr.bf16.mxu0 %v7606
    %9237 = vmatpush2.bf16.msra.mxu0 %v7605
    %9238 = vmatprep.subr.bf16.mxu0 %v7599
    %9239 = vmatpush2.bf16.msra.mxu0 %v7598
    %9240 = vmatprep.mubr.bf16.mxu0 %v5456
    %9241 = vmatmul.mubr.bf16.gmra.mxu0 %v5455
    %v9242 = vpop.f32.mrf.mxu0
    %v9243 = vadd.f32 %v6108, %v9242
    %v9244 = vpop.f32.mrf.mxu0
    %v9245 = vadd.f32 %v6112, %v9244
    %v9246 = vpop.f32.mrf.mxu0
    %v9247 = vadd.f32 %v6108, %v9246
    %v9248 = vpop.f32.mrf.mxu0
    %v9249 = vadd.f32 %v6112, %v9248
    %9250 = vmatprep.mubr.bf16.mxu0 %v5464
    %9251 = vmatmul.mubr.bf16.gmra.mxu0 %v5463
    %v9252 = vpop.f32.mrf.mxu0
    %v9253 = vadd.f32 %v6108, %v9252
    %v9254 = vpop.f32.mrf.mxu0
    %v9255 = vadd.f32 %v6112, %v9254
    %v9256 = vpop.f32.mrf.mxu0
    %v9257 = vadd.f32 %v6108, %v9256
    %v9258 = vpop.f32.mrf.mxu0
    %v9259 = vadd.f32 %v6112, %v9258
    %9260 = vmatprep.mubr.bf16.mxu0 %v5472
    %9261 = vmatmul.mubr.bf16.gmra.mxu0 %v5471
    %v9262 = vpop.f32.mrf.mxu0
    %v9263 = vadd.f32 %v6108, %v9262
    %v9264 = vpop.f32.mrf.mxu0
    %v9265 = vadd.f32 %v6112, %v9264
    %v9266 = vpop.f32.mrf.mxu0
    %v9267 = vadd.f32 %v6108, %v9266
    %v9268 = vpop.f32.mrf.mxu0
    %v9269 = vadd.f32 %v6112, %v9268
    %9270 = vmatprep.mubr.bf16.mxu0 %v5480
    %9271 = vmatmul.mubr.bf16.gmra.mxu0 %v5479
    %v9272 = vpop.f32.mrf.mxu0
    %v9273 = vadd.f32 %v6108, %v9272
    %v9274 = vpop.f32.mrf.mxu0
    %v9275 = vadd.f32 %v6112, %v9274
    %v9276 = vpop.f32.mrf.mxu0
    %v9277 = vadd.f32 %v6108, %v9276
    %v9278 = vpop.f32.mrf.mxu0
    %v9279 = vadd.f32 %v6112, %v9278
    %9280 = vmatprep.mubr.bf16.mxu0 %v5488
    %9281 = vmatmul.mubr.bf16.gmra.mxu0 %v5487
    %v9282 = vpop.f32.mrf.mxu0
    %v9283 = vadd.f32 %v6108, %v9282
    %v9284 = vpop.f32.mrf.mxu0
    %v9285 = vadd.f32 %v6112, %v9284
    %v9286 = vpop.f32.mrf.mxu0
    %v9287 = vadd.f32 %v6108, %v9286
    %v9288 = vpop.f32.mrf.mxu0
    %v9289 = vadd.f32 %v6112, %v9288
    %9290 = vmatprep.mubr.bf16.mxu0 %v5496
    %9291 = vmatmul.mubr.bf16.gmra.mxu0 %v5495
    %v9292 = vpop.f32.mrf.mxu0
    %v9293 = vadd.f32 %v6108, %v9292
    %v9294 = vpop.f32.mrf.mxu0
    %v9295 = vadd.f32 %v6112, %v9294
    %v9296 = vpop.f32.mrf.mxu0
    %v9297 = vadd.f32 %v6108, %v9296
    %v9298 = vpop.f32.mrf.mxu0
    %v9299 = vadd.f32 %v6112, %v9298
    %9300 = vmatprep.mubr.bf16.mxu0 %v5504
    %9301 = vmatmul.mubr.bf16.gmra.mxu0 %v5503
    %v9302 = vpop.f32.mrf.mxu0
    %v9303 = vadd.f32 %v6108, %v9302
    %v9304 = vpop.f32.mrf.mxu0
    %v9305 = vadd.f32 %v6112, %v9304
    %v9306 = vpop.f32.mrf.mxu0
    %v9307 = vadd.f32 %v6108, %v9306
    %v9308 = vpop.f32.mrf.mxu0
    %v9309 = vadd.f32 %v6112, %v9308
    %9310 = vmatprep.mubr.bf16.mxu0 %v5512
    %9311 = vmatmul.mubr.bf16.gmra.mxu0 %v5511
    %v9312 = vpop.f32.mrf.mxu0
    %v9313 = vadd.f32 %v6108, %v9312
    %v9314 = vpop.f32.mrf.mxu0
    %v9315 = vadd.f32 %v6112, %v9314
    %v9316 = vpop.f32.mrf.mxu0
    %v9317 = vadd.f32 %v6108, %v9316
    %v9318 = vpop.f32.mrf.mxu0
    %v9319 = vadd.f32 %v6112, %v9318
    %9320 = vmatprep.mubr.bf16.mxu0 %v5520
    %9321 = vmatmul.mubr.bf16.gmra.mxu0 %v5519
    %v9322 = vpop.f32.mrf.mxu0
    %v9323 = vadd.f32 %v6108, %v9322
    %v9324 = vpop.f32.mrf.mxu0
    %v9325 = vadd.f32 %v6112, %v9324
    %v9326 = vpop.f32.mrf.mxu0
    %v9327 = vadd.f32 %v6108, %v9326
    %v9328 = vpop.f32.mrf.mxu0
    %v9329 = vadd.f32 %v6112, %v9328
    %9330 = vmatprep.mubr.bf16.mxu0 %v5528
    %9331 = vmatmul.mubr.bf16.gmra.mxu0 %v5527
    %v9332 = vpop.f32.mrf.mxu0
    %v9333 = vadd.f32 %v6108, %v9332
    %v9334 = vpop.f32.mrf.mxu0
    %v9335 = vadd.f32 %v6112, %v9334
    %v9336 = vpop.f32.mrf.mxu0
    %v9337 = vadd.f32 %v6108, %v9336
    %v9338 = vpop.f32.mrf.mxu0
    %v9339 = vadd.f32 %v6112, %v9338
    %9340 = vmatprep.mubr.bf16.mxu0 %v5536
    %9341 = vmatmul.mubr.bf16.gmra.mxu0 %v5535
    %v9342 = vpop.f32.mrf.mxu0
    %v9343 = vadd.f32 %v6108, %v9342
    %v9344 = vpop.f32.mrf.mxu0
    %v9345 = vadd.f32 %v6112, %v9344
    %v9346 = vpop.f32.mrf.mxu0
    %v9347 = vadd.f32 %v6108, %v9346
    %v9348 = vpop.f32.mrf.mxu0
    %v9349 = vadd.f32 %v6112, %v9348
    %9350 = vmatprep.mubr.bf16.mxu0 %v5544
    %9351 = vmatmul.mubr.bf16.gmra.mxu0 %v5543
    %v9352 = vpop.f32.mrf.mxu0
    %v9353 = vadd.f32 %v6108, %v9352
    %v9354 = vpop.f32.mrf.mxu0
    %v9355 = vadd.f32 %v6112, %v9354
    %v9356 = vpop.f32.mrf.mxu0
    %v9357 = vadd.f32 %v6108, %v9356
    %v9358 = vpop.f32.mrf.mxu0
    %v9359 = vadd.f32 %v6112, %v9358
    %9360 = vmatprep.mubr.bf16.mxu0 %v5552
    %9361 = vmatmul.mubr.bf16.gmra.mxu0 %v5551
    %v9362 = vpop.f32.mrf.mxu0
    %v9363 = vadd.f32 %v6108, %v9362
    %v9364 = vpop.f32.mrf.mxu0
    %v9365 = vadd.f32 %v6112, %v9364
    %v9366 = vpop.f32.mrf.mxu0
    %v9367 = vadd.f32 %v6108, %v9366
    %v9368 = vpop.f32.mrf.mxu0
    %v9369 = vadd.f32 %v6112, %v9368
    %9370 = vmatprep.mubr.bf16.mxu0 %v5560
    %9371 = vmatmul.mubr.bf16.gmra.mxu0 %v5559
    %v9372 = vpop.f32.mrf.mxu0
    %v9373 = vadd.f32 %v6108, %v9372
    %v9374 = vpop.f32.mrf.mxu0
    %v9375 = vadd.f32 %v6112, %v9374
    %v9376 = vpop.f32.mrf.mxu0
    %v9377 = vadd.f32 %v6108, %v9376
    %v9378 = vpop.f32.mrf.mxu0
    %v9379 = vadd.f32 %v6112, %v9378
    %9380 = vmatprep.mubr.bf16.mxu0 %v5568
    %9381 = vmatmul.mubr.bf16.gmra.mxu0 %v5567
    %v9382 = vpop.f32.mrf.mxu0
    %v9383 = vadd.f32 %v6108, %v9382
    %v9384 = vpop.f32.mrf.mxu0
    %v9385 = vadd.f32 %v6112, %v9384
    %v9386 = vpop.f32.mrf.mxu0
    %v9387 = vadd.f32 %v6108, %v9386
    %v9388 = vpop.f32.mrf.mxu0
    %v9389 = vadd.f32 %v6112, %v9388
    %9390 = vmatprep.mubr.bf16.mxu0 %v5576
    %9391 = vmatmul.mubr.bf16.gmra.mxu0 %v5575
    %v9392 = vpop.f32.mrf.mxu0
    %v9393 = vadd.f32 %v6108, %v9392
    %v9394 = vpop.f32.mrf.mxu0
    %v9395 = vadd.f32 %v6112, %v9394
    %v9396 = vpop.f32.mrf.mxu0
    %v9397 = vadd.f32 %v6108, %v9396
    %v9398 = vpop.f32.mrf.mxu0
    %v9399 = vadd.f32 %v6112, %v9398
    %9400 = vdwg.mxu0
    %9401 = vmatprep.subr.bf16.mxu0 %v7704
    %9402 = vmatpush1.bf16.msra.mxu0 %v7703
    %9403 = vmatprep.subr.bf16.mxu0 %v7697
    %9404 = vmatpush1.bf16.msra.mxu0 %v7696
    %9405 = vmatprep.subr.bf16.mxu0 %v7690
    %9406 = vmatpush1.bf16.msra.mxu0 %v7689
    %9407 = vmatprep.subr.bf16.mxu0 %v7683
    %9408 = vmatpush1.bf16.msra.mxu0 %v7682
    %9409 = vmatprep.subr.bf16.mxu0 %v7676
    %9410 = vmatpush1.bf16.msra.mxu0 %v7675
    %9411 = vmatprep.subr.bf16.mxu0 %v7669
    %9412 = vmatpush1.bf16.msra.mxu0 %v7668
    %9413 = vmatprep.subr.bf16.mxu0 %v7662
    %9414 = vmatpush1.bf16.msra.mxu0 %v7661
    %9415 = vmatprep.subr.bf16.mxu0 %v7655
    %9416 = vmatpush1.bf16.msra.mxu0 %v7654
    %9417 = vmatprep.subr.bf16.mxu0 %v7760
    %9418 = vmatpush2.bf16.msra.mxu0 %v7759
    %9419 = vmatprep.subr.bf16.mxu0 %v7753
    %9420 = vmatpush2.bf16.msra.mxu0 %v7752
    %9421 = vmatprep.subr.bf16.mxu0 %v7746
    %9422 = vmatpush2.bf16.msra.mxu0 %v7745
    %9423 = vmatprep.subr.bf16.mxu0 %v7739
    %9424 = vmatpush2.bf16.msra.mxu0 %v7738
    %9425 = vmatprep.subr.bf16.mxu0 %v7732
    %9426 = vmatpush2.bf16.msra.mxu0 %v7731
    %9427 = vmatprep.subr.bf16.mxu0 %v7725
    %9428 = vmatpush2.bf16.msra.mxu0 %v7724
    %9429 = vmatprep.subr.bf16.mxu0 %v7718
    %9430 = vmatpush2.bf16.msra.mxu0 %v7717
    %9431 = vmatprep.subr.bf16.mxu0 %v7711
    %9432 = vmatpush2.bf16.msra.mxu0 %v7710
    %9433 = vmatprep.mubr.bf16.mxu0 %v5458
    %9434 = vmatmul.mubr.bf16.gmra.mxu0 %v5457
    %v9435 = vpop.f32.mrf.mxu0
    %v9436 = vadd.f32 %v9243, %v9435
    %v9437 = vpop.f32.mrf.mxu0
    %v9438 = vadd.f32 %v9245, %v9437
    %v9439 = vpop.f32.mrf.mxu0
    %v9440 = vadd.f32 %v9247, %v9439
    %v9441 = vpop.f32.mrf.mxu0
    %v9442 = vadd.f32 %v9249, %v9441
    %9443 = vmatprep.mubr.bf16.mxu0 %v5466
    %9444 = vmatmul.mubr.bf16.gmra.mxu0 %v5465
    %v9445 = vpop.f32.mrf.mxu0
    %v9446 = vadd.f32 %v9253, %v9445
    %v9447 = vpop.f32.mrf.mxu0
    %v9448 = vadd.f32 %v9255, %v9447
    %v9449 = vpop.f32.mrf.mxu0
    %v9450 = vadd.f32 %v9257, %v9449
    %v9451 = vpop.f32.mrf.mxu0
    %v9452 = vadd.f32 %v9259, %v9451
    %9453 = vmatprep.mubr.bf16.mxu0 %v5474
    %9454 = vmatmul.mubr.bf16.gmra.mxu0 %v5473
    %v9455 = vpop.f32.mrf.mxu0
    %v9456 = vadd.f32 %v9263, %v9455
    %v9457 = vpop.f32.mrf.mxu0
    %v9458 = vadd.f32 %v9265, %v9457
    %v9459 = vpop.f32.mrf.mxu0
    %v9460 = vadd.f32 %v9267, %v9459
    %v9461 = vpop.f32.mrf.mxu0
    %v9462 = vadd.f32 %v9269, %v9461
    %9463 = vmatprep.mubr.bf16.mxu0 %v5482
    %9464 = vmatmul.mubr.bf16.gmra.mxu0 %v5481
    %v9465 = vpop.f32.mrf.mxu0
    %v9466 = vadd.f32 %v9273, %v9465
    %v9467 = vpop.f32.mrf.mxu0
    %v9468 = vadd.f32 %v9275, %v9467
    %v9469 = vpop.f32.mrf.mxu0
    %v9470 = vadd.f32 %v9277, %v9469
    %v9471 = vpop.f32.mrf.mxu0
    %v9472 = vadd.f32 %v9279, %v9471
    %9473 = vmatprep.mubr.bf16.mxu0 %v5490
    %9474 = vmatmul.mubr.bf16.gmra.mxu0 %v5489
    %v9475 = vpop.f32.mrf.mxu0
    %v9476 = vadd.f32 %v9283, %v9475
    %v9477 = vpop.f32.mrf.mxu0
    %v9478 = vadd.f32 %v9285, %v9477
    %v9479 = vpop.f32.mrf.mxu0
    %v9480 = vadd.f32 %v9287, %v9479
    %v9481 = vpop.f32.mrf.mxu0
    %v9482 = vadd.f32 %v9289, %v9481
    %9483 = vmatprep.mubr.bf16.mxu0 %v5498
    %9484 = vmatmul.mubr.bf16.gmra.mxu0 %v5497
    %v9485 = vpop.f32.mrf.mxu0
    %v9486 = vadd.f32 %v9293, %v9485
    %v9487 = vpop.f32.mrf.mxu0
    %v9488 = vadd.f32 %v9295, %v9487
    %v9489 = vpop.f32.mrf.mxu0
    %v9490 = vadd.f32 %v9297, %v9489
    %v9491 = vpop.f32.mrf.mxu0
    %v9492 = vadd.f32 %v9299, %v9491
    %9493 = vmatprep.mubr.bf16.mxu0 %v5506
    %9494 = vmatmul.mubr.bf16.gmra.mxu0 %v5505
    %v9495 = vpop.f32.mrf.mxu0
    %v9496 = vadd.f32 %v9303, %v9495
    %v9497 = vpop.f32.mrf.mxu0
    %v9498 = vadd.f32 %v9305, %v9497
    %v9499 = vpop.f32.mrf.mxu0
    %v9500 = vadd.f32 %v9307, %v9499
    %v9501 = vpop.f32.mrf.mxu0
    %v9502 = vadd.f32 %v9309, %v9501
    %9503 = vmatprep.mubr.bf16.mxu0 %v5514
    %9504 = vmatmul.mubr.bf16.gmra.mxu0 %v5513
    %v9505 = vpop.f32.mrf.mxu0
    %v9506 = vadd.f32 %v9313, %v9505
    %v9507 = vpop.f32.mrf.mxu0
    %v9508 = vadd.f32 %v9315, %v9507
    %v9509 = vpop.f32.mrf.mxu0
    %v9510 = vadd.f32 %v9317, %v9509
    %v9511 = vpop.f32.mrf.mxu0
    %v9512 = vadd.f32 %v9319, %v9511
    %9513 = vmatprep.mubr.bf16.mxu0 %v5522
    %9514 = vmatmul.mubr.bf16.gmra.mxu0 %v5521
    %v9515 = vpop.f32.mrf.mxu0
    %v9516 = vadd.f32 %v9323, %v9515
    %v9517 = vpop.f32.mrf.mxu0
    %v9518 = vadd.f32 %v9325, %v9517
    %v9519 = vpop.f32.mrf.mxu0
    %v9520 = vadd.f32 %v9327, %v9519
    %v9521 = vpop.f32.mrf.mxu0
    %v9522 = vadd.f32 %v9329, %v9521
    %9523 = vmatprep.mubr.bf16.mxu0 %v5530
    %9524 = vmatmul.mubr.bf16.gmra.mxu0 %v5529
    %v9525 = vpop.f32.mrf.mxu0
    %v9526 = vadd.f32 %v9333, %v9525
    %v9527 = vpop.f32.mrf.mxu0
    %v9528 = vadd.f32 %v9335, %v9527
    %v9529 = vpop.f32.mrf.mxu0
    %v9530 = vadd.f32 %v9337, %v9529
    %v9531 = vpop.f32.mrf.mxu0
    %v9532 = vadd.f32 %v9339, %v9531
    %9533 = vmatprep.mubr.bf16.mxu0 %v5538
    %9534 = vmatmul.mubr.bf16.gmra.mxu0 %v5537
    %v9535 = vpop.f32.mrf.mxu0
    %v9536 = vadd.f32 %v9343, %v9535
    %v9537 = vpop.f32.mrf.mxu0
    %v9538 = vadd.f32 %v9345, %v9537
    %v9539 = vpop.f32.mrf.mxu0
    %v9540 = vadd.f32 %v9347, %v9539
    %v9541 = vpop.f32.mrf.mxu0
    %v9542 = vadd.f32 %v9349, %v9541
    %9543 = vmatprep.mubr.bf16.mxu0 %v5546
    %9544 = vmatmul.mubr.bf16.gmra.mxu0 %v5545
    %v9545 = vpop.f32.mrf.mxu0
    %v9546 = vadd.f32 %v9353, %v9545
    %v9547 = vpop.f32.mrf.mxu0
    %v9548 = vadd.f32 %v9355, %v9547
    %v9549 = vpop.f32.mrf.mxu0
    %v9550 = vadd.f32 %v9357, %v9549
    %v9551 = vpop.f32.mrf.mxu0
    %v9552 = vadd.f32 %v9359, %v9551
    %9553 = vmatprep.mubr.bf16.mxu0 %v5554
    %9554 = vmatmul.mubr.bf16.gmra.mxu0 %v5553
    %v9555 = vpop.f32.mrf.mxu0
    %v9556 = vadd.f32 %v9363, %v9555
    %v9557 = vpop.f32.mrf.mxu0
    %v9558 = vadd.f32 %v9365, %v9557
    %v9559 = vpop.f32.mrf.mxu0
    %v9560 = vadd.f32 %v9367, %v9559
    %v9561 = vpop.f32.mrf.mxu0
    %v9562 = vadd.f32 %v9369, %v9561
    %9563 = vmatprep.mubr.bf16.mxu0 %v5562
    %9564 = vmatmul.mubr.bf16.gmra.mxu0 %v5561
    %v9565 = vpop.f32.mrf.mxu0
    %v9566 = vadd.f32 %v9373, %v9565
    %v9567 = vpop.f32.mrf.mxu0
    %v9568 = vadd.f32 %v9375, %v9567
    %v9569 = vpop.f32.mrf.mxu0
    %v9570 = vadd.f32 %v9377, %v9569
    %v9571 = vpop.f32.mrf.mxu0
    %v9572 = vadd.f32 %v9379, %v9571
    %9573 = vmatprep.mubr.bf16.mxu0 %v5570
    %9574 = vmatmul.mubr.bf16.gmra.mxu0 %v5569
    %v9575 = vpop.f32.mrf.mxu0
    %v9576 = vadd.f32 %v9383, %v9575
    %v9577 = vpop.f32.mrf.mxu0
    %v9578 = vadd.f32 %v9385, %v9577
    %v9579 = vpop.f32.mrf.mxu0
    %v9580 = vadd.f32 %v9387, %v9579
    %v9581 = vpop.f32.mrf.mxu0
    %v9582 = vadd.f32 %v9389, %v9581
    %9583 = vmatprep.mubr.bf16.mxu0 %v5578
    %9584 = vmatmul.mubr.bf16.gmra.mxu0 %v5577
    %v9585 = vpop.f32.mrf.mxu0
    %v9586 = vadd.f32 %v9393, %v9585
    %v9587 = vpop.f32.mrf.mxu0
    %v9588 = vadd.f32 %v9395, %v9587
    %v9589 = vpop.f32.mrf.mxu0
    %v9590 = vadd.f32 %v9397, %v9589
    %v9591 = vpop.f32.mrf.mxu0
    %v9592 = vadd.f32 %v9399, %v9591
    %9593 = vdwg.mxu0
    %9594 = vmatprep.subr.bf16.mxu0 %v7816
    %9595 = vmatpush1.bf16.msra.mxu0 %v7815
    %9596 = vmatprep.subr.bf16.mxu0 %v7809
    %9597 = vmatpush1.bf16.msra.mxu0 %v7808
    %9598 = vmatprep.subr.bf16.mxu0 %v7802
    %9599 = vmatpush1.bf16.msra.mxu0 %v7801
    %9600 = vmatprep.subr.bf16.mxu0 %v7795
    %9601 = vmatpush1.bf16.msra.mxu0 %v7794
    %9602 = vmatprep.subr.bf16.mxu0 %v7788
    %9603 = vmatpush1.bf16.msra.mxu0 %v7787
    %9604 = vmatprep.subr.bf16.mxu0 %v7781
    %9605 = vmatpush1.bf16.msra.mxu0 %v7780
    %9606 = vmatprep.subr.bf16.mxu0 %v7774
    %9607 = vmatpush1.bf16.msra.mxu0 %v7773
    %9608 = vmatprep.subr.bf16.mxu0 %v7767
    %9609 = vmatpush1.bf16.msra.mxu0 %v7766
    %9610 = vmatprep.subr.bf16.mxu0 %v7872
    %9611 = vmatpush2.bf16.msra.mxu0 %v7871
    %9612 = vmatprep.subr.bf16.mxu0 %v7865
    %9613 = vmatpush2.bf16.msra.mxu0 %v7864
    %9614 = vmatprep.subr.bf16.mxu0 %v7858
    %9615 = vmatpush2.bf16.msra.mxu0 %v7857
    %9616 = vmatprep.subr.bf16.mxu0 %v7851
    %9617 = vmatpush2.bf16.msra.mxu0 %v7850
    %9618 = vmatprep.subr.bf16.mxu0 %v7844
    %9619 = vmatpush2.bf16.msra.mxu0 %v7843
    %9620 = vmatprep.subr.bf16.mxu0 %v7837
    %9621 = vmatpush2.bf16.msra.mxu0 %v7836
    %9622 = vmatprep.subr.bf16.mxu0 %v7830
    %9623 = vmatpush2.bf16.msra.mxu0 %v7829
    %9624 = vmatprep.subr.bf16.mxu0 %v7823
    %9625 = vmatpush2.bf16.msra.mxu0 %v7822
    %9626 = vmatprep.mubr.bf16.mxu0 %v5460
    %9627 = vmatmul.mubr.bf16.gmra.mxu0 %v5459
    %v9628 = vpop.f32.mrf.mxu0
    %v9629 = vadd.f32 %v9436, %v9628
    %v9630 = vpop.f32.mrf.mxu0
    %v9631 = vadd.f32 %v9438, %v9630
    %v9632 = vpop.f32.mrf.mxu0
    %v9633 = vadd.f32 %v9440, %v9632
    %v9634 = vpop.f32.mrf.mxu0
    %v9635 = vadd.f32 %v9442, %v9634
    %9636 = vmatprep.mubr.bf16.mxu0 %v5468
    %9637 = vmatmul.mubr.bf16.gmra.mxu0 %v5467
    %v9638 = vpop.f32.mrf.mxu0
    %v9639 = vadd.f32 %v9446, %v9638
    %v9640 = vpop.f32.mrf.mxu0
    %v9641 = vadd.f32 %v9448, %v9640
    %v9642 = vpop.f32.mrf.mxu0
    %v9643 = vadd.f32 %v9450, %v9642
    %v9644 = vpop.f32.mrf.mxu0
    %v9645 = vadd.f32 %v9452, %v9644
    %9646 = vmatprep.mubr.bf16.mxu0 %v5476
    %9647 = vmatmul.mubr.bf16.gmra.mxu0 %v5475
    %v9648 = vpop.f32.mrf.mxu0
    %v9649 = vadd.f32 %v9456, %v9648
    %v9650 = vpop.f32.mrf.mxu0
    %v9651 = vadd.f32 %v9458, %v9650
    %v9652 = vpop.f32.mrf.mxu0
    %v9653 = vadd.f32 %v9460, %v9652
    %v9654 = vpop.f32.mrf.mxu0
    %v9655 = vadd.f32 %v9462, %v9654
    %9656 = vmatprep.mubr.bf16.mxu0 %v5484
    %9657 = vmatmul.mubr.bf16.gmra.mxu0 %v5483
    %v9658 = vpop.f32.mrf.mxu0
    %v9659 = vadd.f32 %v9466, %v9658
    %v9660 = vpop.f32.mrf.mxu0
    %v9661 = vadd.f32 %v9468, %v9660
    %v9662 = vpop.f32.mrf.mxu0
    %v9663 = vadd.f32 %v9470, %v9662
    %v9664 = vpop.f32.mrf.mxu0
    %v9665 = vadd.f32 %v9472, %v9664
    %9666 = vmatprep.mubr.bf16.mxu0 %v5492
    %9667 = vmatmul.mubr.bf16.gmra.mxu0 %v5491
    %v9668 = vpop.f32.mrf.mxu0
    %v9669 = vadd.f32 %v9476, %v9668
    %v9670 = vpop.f32.mrf.mxu0
    %v9671 = vadd.f32 %v9478, %v9670
    %v9672 = vpop.f32.mrf.mxu0
    %v9673 = vadd.f32 %v9480, %v9672
    %v9674 = vpop.f32.mrf.mxu0
    %v9675 = vadd.f32 %v9482, %v9674
    %9676 = vmatprep.mubr.bf16.mxu0 %v5500
    %9677 = vmatmul.mubr.bf16.gmra.mxu0 %v5499
    %v9678 = vpop.f32.mrf.mxu0
    %v9679 = vadd.f32 %v9486, %v9678
    %v9680 = vpop.f32.mrf.mxu0
    %v9681 = vadd.f32 %v9488, %v9680
    %v9682 = vpop.f32.mrf.mxu0
    %v9683 = vadd.f32 %v9490, %v9682
    %v9684 = vpop.f32.mrf.mxu0
    %v9685 = vadd.f32 %v9492, %v9684
    %9686 = vmatprep.mubr.bf16.mxu0 %v5508
    %9687 = vmatmul.mubr.bf16.gmra.mxu0 %v5507
    %v9688 = vpop.f32.mrf.mxu0
    %v9689 = vadd.f32 %v9496, %v9688
    %v9690 = vpop.f32.mrf.mxu0
    %v9691 = vadd.f32 %v9498, %v9690
    %v9692 = vpop.f32.mrf.mxu0
    %v9693 = vadd.f32 %v9500, %v9692
    %v9694 = vpop.f32.mrf.mxu0
    %v9695 = vadd.f32 %v9502, %v9694
    %9696 = vmatprep.mubr.bf16.mxu0 %v5516
    %9697 = vmatmul.mubr.bf16.gmra.mxu0 %v5515
    %v9698 = vpop.f32.mrf.mxu0
    %v9699 = vadd.f32 %v9506, %v9698
    %v9700 = vpop.f32.mrf.mxu0
    %v9701 = vadd.f32 %v9508, %v9700
    %v9702 = vpop.f32.mrf.mxu0
    %v9703 = vadd.f32 %v9510, %v9702
    %v9704 = vpop.f32.mrf.mxu0
    %v9705 = vadd.f32 %v9512, %v9704
    %9706 = vmatprep.mubr.bf16.mxu0 %v5524
    %9707 = vmatmul.mubr.bf16.gmra.mxu0 %v5523
    %v9708 = vpop.f32.mrf.mxu0
    %v9709 = vadd.f32 %v9516, %v9708
    %v9710 = vpop.f32.mrf.mxu0
    %v9711 = vadd.f32 %v9518, %v9710
    %v9712 = vpop.f32.mrf.mxu0
    %v9713 = vadd.f32 %v9520, %v9712
    %v9714 = vpop.f32.mrf.mxu0
    %v9715 = vadd.f32 %v9522, %v9714
    %9716 = vmatprep.mubr.bf16.mxu0 %v5532
    %9717 = vmatmul.mubr.bf16.gmra.mxu0 %v5531
    %v9718 = vpop.f32.mrf.mxu0
    %v9719 = vadd.f32 %v9526, %v9718
    %v9720 = vpop.f32.mrf.mxu0
    %v9721 = vadd.f32 %v9528, %v9720
    %v9722 = vpop.f32.mrf.mxu0
    %v9723 = vadd.f32 %v9530, %v9722
    %v9724 = vpop.f32.mrf.mxu0
    %v9725 = vadd.f32 %v9532, %v9724
    %9726 = vmatprep.mubr.bf16.mxu0 %v5540
    %9727 = vmatmul.mubr.bf16.gmra.mxu0 %v5539
    %v9728 = vpop.f32.mrf.mxu0
    %v9729 = vadd.f32 %v9536, %v9728
    %v9730 = vpop.f32.mrf.mxu0
    %v9731 = vadd.f32 %v9538, %v9730
    %v9732 = vpop.f32.mrf.mxu0
    %v9733 = vadd.f32 %v9540, %v9732
    %v9734 = vpop.f32.mrf.mxu0
    %v9735 = vadd.f32 %v9542, %v9734
    %9736 = vmatprep.mubr.bf16.mxu0 %v5548
    %9737 = vmatmul.mubr.bf16.gmra.mxu0 %v5547
    %v9738 = vpop.f32.mrf.mxu0
    %v9739 = vadd.f32 %v9546, %v9738
    %v9740 = vpop.f32.mrf.mxu0
    %v9741 = vadd.f32 %v9548, %v9740
    %v9742 = vpop.f32.mrf.mxu0
    %v9743 = vadd.f32 %v9550, %v9742
    %v9744 = vpop.f32.mrf.mxu0
    %v9745 = vadd.f32 %v9552, %v9744
    %9746 = vmatprep.mubr.bf16.mxu0 %v5556
    %9747 = vmatmul.mubr.bf16.gmra.mxu0 %v5555
    %v9748 = vpop.f32.mrf.mxu0
    %v9749 = vadd.f32 %v9556, %v9748
    %v9750 = vpop.f32.mrf.mxu0
    %v9751 = vadd.f32 %v9558, %v9750
    %v9752 = vpop.f32.mrf.mxu0
    %v9753 = vadd.f32 %v9560, %v9752
    %v9754 = vpop.f32.mrf.mxu0
    %v9755 = vadd.f32 %v9562, %v9754
    %9756 = vmatprep.mubr.bf16.mxu0 %v5564
    %9757 = vmatmul.mubr.bf16.gmra.mxu0 %v5563
    %v9758 = vpop.f32.mrf.mxu0
    %v9759 = vadd.f32 %v9566, %v9758
    %v9760 = vpop.f32.mrf.mxu0
    %v9761 = vadd.f32 %v9568, %v9760
    %v9762 = vpop.f32.mrf.mxu0
    %v9763 = vadd.f32 %v9570, %v9762
    %v9764 = vpop.f32.mrf.mxu0
    %v9765 = vadd.f32 %v9572, %v9764
    %9766 = vmatprep.mubr.bf16.mxu0 %v5572
    %9767 = vmatmul.mubr.bf16.gmra.mxu0 %v5571
    %v9768 = vpop.f32.mrf.mxu0
    %v9769 = vadd.f32 %v9576, %v9768
    %v9770 = vpop.f32.mrf.mxu0
    %v9771 = vadd.f32 %v9578, %v9770
    %v9772 = vpop.f32.mrf.mxu0
    %v9773 = vadd.f32 %v9580, %v9772
    %v9774 = vpop.f32.mrf.mxu0
    %v9775 = vadd.f32 %v9582, %v9774
    %9776 = vmatprep.mubr.bf16.mxu0 %v5580
    %9777 = vmatmul.mubr.bf16.gmra.mxu0 %v5579
    %v9778 = vpop.f32.mrf.mxu0
    %v9779 = vadd.f32 %v9586, %v9778
    %v9780 = vpop.f32.mrf.mxu0
    %v9781 = vadd.f32 %v9588, %v9780
    %v9782 = vpop.f32.mrf.mxu0
    %v9783 = vadd.f32 %v9590, %v9782
    %v9784 = vpop.f32.mrf.mxu0
    %v9785 = vadd.f32 %v9592, %v9784
    %9786 = vdwg.mxu0
    %9787 = vmatprep.subr.bf16.mxu0 %v7928
    %9788 = vmatpush1.bf16.msra.mxu0 %v7927
    %9789 = vmatprep.subr.bf16.mxu0 %v7921
    %9790 = vmatpush1.bf16.msra.mxu0 %v7920
    %9791 = vmatprep.subr.bf16.mxu0 %v7914
    %9792 = vmatpush1.bf16.msra.mxu0 %v7913
    %9793 = vmatprep.subr.bf16.mxu0 %v7907
    %9794 = vmatpush1.bf16.msra.mxu0 %v7906
    %9795 = vmatprep.subr.bf16.mxu0 %v7900
    %9796 = vmatpush1.bf16.msra.mxu0 %v7899
    %9797 = vmatprep.subr.bf16.mxu0 %v7893
    %9798 = vmatpush1.bf16.msra.mxu0 %v7892
    %9799 = vmatprep.subr.bf16.mxu0 %v7886
    %9800 = vmatpush1.bf16.msra.mxu0 %v7885
    %9801 = vmatprep.subr.bf16.mxu0 %v7879
    %9802 = vmatpush1.bf16.msra.mxu0 %v7878
    %9803 = vmatprep.subr.bf16.mxu0 %v7984
    %9804 = vmatpush2.bf16.msra.mxu0 %v7983
    %9805 = vmatprep.subr.bf16.mxu0 %v7977
    %9806 = vmatpush2.bf16.msra.mxu0 %v7976
    %9807 = vmatprep.subr.bf16.mxu0 %v7970
    %9808 = vmatpush2.bf16.msra.mxu0 %v7969
    %9809 = vmatprep.subr.bf16.mxu0 %v7963
    %9810 = vmatpush2.bf16.msra.mxu0 %v7962
    %9811 = vmatprep.subr.bf16.mxu0 %v7956
    %9812 = vmatpush2.bf16.msra.mxu0 %v7955
    %9813 = vmatprep.subr.bf16.mxu0 %v7949
    %9814 = vmatpush2.bf16.msra.mxu0 %v7948
    %9815 = vmatprep.subr.bf16.mxu0 %v7942
    %9816 = vmatpush2.bf16.msra.mxu0 %v7941
    %9817 = vmatprep.subr.bf16.mxu0 %v7935
    %9818 = vmatpush2.bf16.msra.mxu0 %v7934
    %9819 = vmatprep.mubr.bf16.mxu0 %v5462
    %9820 = vmatmul.mubr.bf16.gmra.mxu0 %v5461
    %v9821 = vpop.f32.mrf.mxu0
    %v9822 = vadd.f32 %v9629, %v9821
    %v9823 = vpop.f32.mrf.mxu0
    %v9824 = vadd.f32 %v9631, %v9823
    %v9825 = vpop.f32.mrf.mxu0
    %v9826 = vadd.f32 %v9633, %v9825
    %v9827 = vpop.f32.mrf.mxu0
    %v9828 = vadd.f32 %v9635, %v9827
    %9829 = vmatprep.mubr.bf16.mxu0 %v5470
    %9830 = vmatmul.mubr.bf16.gmra.mxu0 %v5469
    %v9831 = vpop.f32.mrf.mxu0
    %v9832 = vadd.f32 %v9639, %v9831
    %v9833 = vpop.f32.mrf.mxu0
    %v9834 = vadd.f32 %v9641, %v9833
    %v9835 = vpop.f32.mrf.mxu0
    %v9836 = vadd.f32 %v9643, %v9835
    %v9837 = vpop.f32.mrf.mxu0
    %v9838 = vadd.f32 %v9645, %v9837
    %9839 = vmatprep.mubr.bf16.mxu0 %v5478
    %9840 = vmatmul.mubr.bf16.gmra.mxu0 %v5477
    %v9841 = vpop.f32.mrf.mxu0
    %v9842 = vadd.f32 %v9649, %v9841
    %v9843 = vpop.f32.mrf.mxu0
    %v9844 = vadd.f32 %v9651, %v9843
    %v9845 = vpop.f32.mrf.mxu0
    %v9846 = vadd.f32 %v9653, %v9845
    %v9847 = vpop.f32.mrf.mxu0
    %v9848 = vadd.f32 %v9655, %v9847
    %9849 = vmatprep.mubr.bf16.mxu0 %v5486
    %9850 = vmatmul.mubr.bf16.gmra.mxu0 %v5485
    %v9851 = vpop.f32.mrf.mxu0
    %v9852 = vadd.f32 %v9659, %v9851
    %v9853 = vpop.f32.mrf.mxu0
    %v9854 = vadd.f32 %v9661, %v9853
    %v9855 = vpop.f32.mrf.mxu0
    %v9856 = vadd.f32 %v9663, %v9855
    %v9857 = vpop.f32.mrf.mxu0
    %v9858 = vadd.f32 %v9665, %v9857
    %9859 = vmatprep.mubr.bf16.mxu0 %v5494
    %9860 = vmatmul.mubr.bf16.gmra.mxu0 %v5493
    %v9861 = vpop.f32.mrf.mxu0
    %v9862 = vadd.f32 %v9669, %v9861
    %v9863 = vpop.f32.mrf.mxu0
    %v9864 = vadd.f32 %v9671, %v9863
    %v9865 = vpop.f32.mrf.mxu0
    %v9866 = vadd.f32 %v9673, %v9865
    %v9867 = vpop.f32.mrf.mxu0
    %v9868 = vadd.f32 %v9675, %v9867
    %9869 = vmatprep.mubr.bf16.mxu0 %v5502
    %9870 = vmatmul.mubr.bf16.gmra.mxu0 %v5501
    %v9871 = vpop.f32.mrf.mxu0
    %v9872 = vadd.f32 %v9679, %v9871
    %v9873 = vpop.f32.mrf.mxu0
    %v9874 = vadd.f32 %v9681, %v9873
    %v9875 = vpop.f32.mrf.mxu0
    %v9876 = vadd.f32 %v9683, %v9875
    %v9877 = vpop.f32.mrf.mxu0
    %v9878 = vadd.f32 %v9685, %v9877
    %9879 = vmatprep.mubr.bf16.mxu0 %v5510
    %9880 = vmatmul.mubr.bf16.gmra.mxu0 %v5509
    %v9881 = vpop.f32.mrf.mxu0
    %v9882 = vadd.f32 %v9689, %v9881
    %v9883 = vpop.f32.mrf.mxu0
    %v9884 = vadd.f32 %v9691, %v9883
    %v9885 = vpop.f32.mrf.mxu0
    %v9886 = vadd.f32 %v9693, %v9885
    %v9887 = vpop.f32.mrf.mxu0
    %v9888 = vadd.f32 %v9695, %v9887
    %9889 = vmatprep.mubr.bf16.mxu0 %v5518
    %9890 = vmatmul.mubr.bf16.gmra.mxu0 %v5517
    %v9891 = vpop.f32.mrf.mxu0
    %v9892 = vadd.f32 %v9699, %v9891
    %v9893 = vpop.f32.mrf.mxu0
    %v9894 = vadd.f32 %v9701, %v9893
    %v9895 = vpop.f32.mrf.mxu0
    %v9896 = vadd.f32 %v9703, %v9895
    %v9897 = vpop.f32.mrf.mxu0
    %v9898 = vadd.f32 %v9705, %v9897
    %9899 = vmatprep.mubr.bf16.mxu0 %v5526
    %9900 = vmatmul.mubr.bf16.gmra.mxu0 %v5525
    %v9901 = vpop.f32.mrf.mxu0
    %v9902 = vadd.f32 %v9709, %v9901
    %v9903 = vpop.f32.mrf.mxu0
    %v9904 = vadd.f32 %v9711, %v9903
    %v9905 = vpop.f32.mrf.mxu0
    %v9906 = vadd.f32 %v9713, %v9905
    %v9907 = vpop.f32.mrf.mxu0
    %v9908 = vadd.f32 %v9715, %v9907
    %9909 = vmatprep.mubr.bf16.mxu0 %v5534
    %9910 = vmatmul.mubr.bf16.gmra.mxu0 %v5533
    %v9911 = vpop.f32.mrf.mxu0
    %v9912 = vadd.f32 %v9719, %v9911
    %v9913 = vpop.f32.mrf.mxu0
    %v9914 = vadd.f32 %v9721, %v9913
    %v9915 = vpop.f32.mrf.mxu0
    %v9916 = vadd.f32 %v9723, %v9915
    %v9917 = vpop.f32.mrf.mxu0
    %v9918 = vadd.f32 %v9725, %v9917
    %9919 = vmatprep.mubr.bf16.mxu0 %v5542
    %9920 = vmatmul.mubr.bf16.gmra.mxu0 %v5541
    %v9921 = vpop.f32.mrf.mxu0
    %v9922 = vadd.f32 %v9729, %v9921
    %v9923 = vpop.f32.mrf.mxu0
    %v9924 = vadd.f32 %v9731, %v9923
    %v9925 = vpop.f32.mrf.mxu0
    %v9926 = vadd.f32 %v9733, %v9925
    %v9927 = vpop.f32.mrf.mxu0
    %v9928 = vadd.f32 %v9735, %v9927
    %9929 = vmatprep.mubr.bf16.mxu0 %v5550
    %9930 = vmatmul.mubr.bf16.gmra.mxu0 %v5549
    %v9931 = vpop.f32.mrf.mxu0
    %v9932 = vadd.f32 %v9739, %v9931
    %v9933 = vpop.f32.mrf.mxu0
    %v9934 = vadd.f32 %v9741, %v9933
    %v9935 = vpop.f32.mrf.mxu0
    %v9936 = vadd.f32 %v9743, %v9935
    %v9937 = vpop.f32.mrf.mxu0
    %v9938 = vadd.f32 %v9745, %v9937
    %9939 = vmatprep.mubr.bf16.mxu0 %v5558
    %9940 = vmatmul.mubr.bf16.gmra.mxu0 %v5557
    %v9941 = vpop.f32.mrf.mxu0
    %v9942 = vadd.f32 %v9749, %v9941
    %v9943 = vpop.f32.mrf.mxu0
    %v9944 = vadd.f32 %v9751, %v9943
    %v9945 = vpop.f32.mrf.mxu0
    %v9946 = vadd.f32 %v9753, %v9945
    %v9947 = vpop.f32.mrf.mxu0
    %v9948 = vadd.f32 %v9755, %v9947
    %9949 = vmatprep.mubr.bf16.mxu0 %v5566
    %9950 = vmatmul.mubr.bf16.gmra.mxu0 %v5565
    %v9951 = vpop.f32.mrf.mxu0
    %v9952 = vadd.f32 %v9759, %v9951
    %v9953 = vpop.f32.mrf.mxu0
    %v9954 = vadd.f32 %v9761, %v9953
    %v9955 = vpop.f32.mrf.mxu0
    %v9956 = vadd.f32 %v9763, %v9955
    %v9957 = vpop.f32.mrf.mxu0
    %v9958 = vadd.f32 %v9765, %v9957
    %9959 = vmatprep.mubr.bf16.mxu0 %v5574
    %9960 = vmatmul.mubr.bf16.gmra.mxu0 %v5573
    %v9961 = vpop.f32.mrf.mxu0
    %v9962 = vadd.f32 %v9769, %v9961
    %v9963 = vpop.f32.mrf.mxu0
    %v9964 = vadd.f32 %v9771, %v9963
    %v9965 = vpop.f32.mrf.mxu0
    %v9966 = vadd.f32 %v9773, %v9965
    %v9967 = vpop.f32.mrf.mxu0
    %v9968 = vadd.f32 %v9775, %v9967
    %9969 = vmatprep.mubr.bf16.mxu0 %v5582
    %9970 = vmatmul.mubr.bf16.gmra.mxu0 %v5581
    %v9971 = vpop.f32.mrf.mxu0
    %v9972 = vadd.f32 %v9779, %v9971
    %v9973 = vpop.f32.mrf.mxu0
    %v9974 = vadd.f32 %v9781, %v9973
    %v9975 = vpop.f32.mrf.mxu0
    %v9976 = vadd.f32 %v9783, %v9975
    %v9977 = vpop.f32.mrf.mxu0
    %v9978 = vadd.f32 %v9785, %v9977
    %9979 = vdwg.mxu0
    %9980 = vmatprep.subr.bf16.mxu0 %v7594
    %9981 = vmatpush1.bf16.msra.mxu0 %v7593
    %9982 = vmatprep.subr.bf16.mxu0 %v7587
    %9983 = vmatpush1.bf16.msra.mxu0 %v7586
    %9984 = vmatprep.subr.bf16.mxu0 %v7580
    %9985 = vmatpush1.bf16.msra.mxu0 %v7579
    %9986 = vmatprep.subr.bf16.mxu0 %v7573
    %9987 = vmatpush1.bf16.msra.mxu0 %v7572
    %9988 = vmatprep.subr.bf16.mxu0 %v7566
    %9989 = vmatpush1.bf16.msra.mxu0 %v7565
    %9990 = vmatprep.subr.bf16.mxu0 %v7559
    %9991 = vmatpush1.bf16.msra.mxu0 %v7558
    %9992 = vmatprep.subr.bf16.mxu0 %v7552
    %9993 = vmatpush1.bf16.msra.mxu0 %v7551
    %9994 = vmatprep.subr.bf16.mxu0 %v7545
    %9995 = vmatpush1.bf16.msra.mxu0 %v7544
    %9996 = vmatprep.subr.bf16.mxu0 %v7650
    %9997 = vmatpush2.bf16.msra.mxu0 %v7649
    %9998 = vmatprep.subr.bf16.mxu0 %v7643
    %9999 = vmatpush2.bf16.msra.mxu0 %v7642
    %10000 = vmatprep.subr.bf16.mxu0 %v7636
    %10001 = vmatpush2.bf16.msra.mxu0 %v7635
    %10002 = vmatprep.subr.bf16.mxu0 %v7629
    %10003 = vmatpush2.bf16.msra.mxu0 %v7628
    %10004 = vmatprep.subr.bf16.mxu0 %v7622
    %10005 = vmatpush2.bf16.msra.mxu0 %v7621
    %10006 = vmatprep.subr.bf16.mxu0 %v7615
    %10007 = vmatpush2.bf16.msra.mxu0 %v7614
    %10008 = vmatprep.subr.bf16.mxu0 %v7608
    %10009 = vmatpush2.bf16.msra.mxu0 %v7607
    %10010 = vmatprep.subr.bf16.mxu0 %v7601
    %10011 = vmatpush2.bf16.msra.mxu0 %v7600
    %10012 = vmatprep.mubr.bf16.mxu0 %v5456
    %10013 = vmatmul.mubr.bf16.gmra.mxu0 %v5455
    %v10014 = vpop.f32.mrf.mxu0
    %v10015 = vadd.f32 %v6116, %v10014
    %v10016 = vpop.f32.mrf.mxu0
    %v10017 = vadd.f32 %v6120, %v10016
    %v10018 = vpop.f32.mrf.mxu0
    %v10019 = vadd.f32 %v6116, %v10018
    %v10020 = vpop.f32.mrf.mxu0
    %v10021 = vadd.f32 %v6120, %v10020
    %10022 = vmatprep.mubr.bf16.mxu0 %v5464
    %10023 = vmatmul.mubr.bf16.gmra.mxu0 %v5463
    %v10024 = vpop.f32.mrf.mxu0
    %v10025 = vadd.f32 %v6116, %v10024
    %v10026 = vpop.f32.mrf.mxu0
    %v10027 = vadd.f32 %v6120, %v10026
    %v10028 = vpop.f32.mrf.mxu0
    %v10029 = vadd.f32 %v6116, %v10028
    %v10030 = vpop.f32.mrf.mxu0
    %v10031 = vadd.f32 %v6120, %v10030
    %10032 = vmatprep.mubr.bf16.mxu0 %v5472
    %10033 = vmatmul.mubr.bf16.gmra.mxu0 %v5471
    %v10034 = vpop.f32.mrf.mxu0
    %v10035 = vadd.f32 %v6116, %v10034
    %v10036 = vpop.f32.mrf.mxu0
    %v10037 = vadd.f32 %v6120, %v10036
    %v10038 = vpop.f32.mrf.mxu0
    %v10039 = vadd.f32 %v6116, %v10038
    %v10040 = vpop.f32.mrf.mxu0
    %v10041 = vadd.f32 %v6120, %v10040
    %10042 = vmatprep.mubr.bf16.mxu0 %v5480
    %10043 = vmatmul.mubr.bf16.gmra.mxu0 %v5479
    %v10044 = vpop.f32.mrf.mxu0
    %v10045 = vadd.f32 %v6116, %v10044
    %v10046 = vpop.f32.mrf.mxu0
    %v10047 = vadd.f32 %v6120, %v10046
    %v10048 = vpop.f32.mrf.mxu0
    %v10049 = vadd.f32 %v6116, %v10048
    %v10050 = vpop.f32.mrf.mxu0
    %v10051 = vadd.f32 %v6120, %v10050
    %10052 = vmatprep.mubr.bf16.mxu0 %v5488
    %10053 = vmatmul.mubr.bf16.gmra.mxu0 %v5487
    %v10054 = vpop.f32.mrf.mxu0
    %v10055 = vadd.f32 %v6116, %v10054
    %v10056 = vpop.f32.mrf.mxu0
    %v10057 = vadd.f32 %v6120, %v10056
    %v10058 = vpop.f32.mrf.mxu0
    %v10059 = vadd.f32 %v6116, %v10058
    %v10060 = vpop.f32.mrf.mxu0
    %v10061 = vadd.f32 %v6120, %v10060
    %10062 = vmatprep.mubr.bf16.mxu0 %v5496
    %10063 = vmatmul.mubr.bf16.gmra.mxu0 %v5495
    %v10064 = vpop.f32.mrf.mxu0
    %v10065 = vadd.f32 %v6116, %v10064
    %v10066 = vpop.f32.mrf.mxu0
    %v10067 = vadd.f32 %v6120, %v10066
    %v10068 = vpop.f32.mrf.mxu0
    %v10069 = vadd.f32 %v6116, %v10068
    %v10070 = vpop.f32.mrf.mxu0
    %v10071 = vadd.f32 %v6120, %v10070
    %10072 = vmatprep.mubr.bf16.mxu0 %v5504
    %10073 = vmatmul.mubr.bf16.gmra.mxu0 %v5503
    %v10074 = vpop.f32.mrf.mxu0
    %v10075 = vadd.f32 %v6116, %v10074
    %v10076 = vpop.f32.mrf.mxu0
    %v10077 = vadd.f32 %v6120, %v10076
    %v10078 = vpop.f32.mrf.mxu0
    %v10079 = vadd.f32 %v6116, %v10078
    %v10080 = vpop.f32.mrf.mxu0
    %v10081 = vadd.f32 %v6120, %v10080
    %10082 = vmatprep.mubr.bf16.mxu0 %v5512
    %10083 = vmatmul.mubr.bf16.gmra.mxu0 %v5511
    %v10084 = vpop.f32.mrf.mxu0
    %v10085 = vadd.f32 %v6116, %v10084
    %v10086 = vpop.f32.mrf.mxu0
    %v10087 = vadd.f32 %v6120, %v10086
    %v10088 = vpop.f32.mrf.mxu0
    %v10089 = vadd.f32 %v6116, %v10088
    %v10090 = vpop.f32.mrf.mxu0
    %v10091 = vadd.f32 %v6120, %v10090
    %10092 = vmatprep.mubr.bf16.mxu0 %v5520
    %10093 = vmatmul.mubr.bf16.gmra.mxu0 %v5519
    %v10094 = vpop.f32.mrf.mxu0
    %v10095 = vadd.f32 %v6116, %v10094
    %v10096 = vpop.f32.mrf.mxu0
    %v10097 = vadd.f32 %v6120, %v10096
    %v10098 = vpop.f32.mrf.mxu0
    %v10099 = vadd.f32 %v6116, %v10098
    %v10100 = vpop.f32.mrf.mxu0
    %v10101 = vadd.f32 %v6120, %v10100
    %10102 = vmatprep.mubr.bf16.mxu0 %v5528
    %10103 = vmatmul.mubr.bf16.gmra.mxu0 %v5527
    %v10104 = vpop.f32.mrf.mxu0
    %v10105 = vadd.f32 %v6116, %v10104
    %v10106 = vpop.f32.mrf.mxu0
    %v10107 = vadd.f32 %v6120, %v10106
    %v10108 = vpop.f32.mrf.mxu0
    %v10109 = vadd.f32 %v6116, %v10108
    %v10110 = vpop.f32.mrf.mxu0
    %v10111 = vadd.f32 %v6120, %v10110
    %10112 = vmatprep.mubr.bf16.mxu0 %v5536
    %10113 = vmatmul.mubr.bf16.gmra.mxu0 %v5535
    %v10114 = vpop.f32.mrf.mxu0
    %v10115 = vadd.f32 %v6116, %v10114
    %v10116 = vpop.f32.mrf.mxu0
    %v10117 = vadd.f32 %v6120, %v10116
    %v10118 = vpop.f32.mrf.mxu0
    %v10119 = vadd.f32 %v6116, %v10118
    %v10120 = vpop.f32.mrf.mxu0
    %v10121 = vadd.f32 %v6120, %v10120
    %10122 = vmatprep.mubr.bf16.mxu0 %v5544
    %10123 = vmatmul.mubr.bf16.gmra.mxu0 %v5543
    %v10124 = vpop.f32.mrf.mxu0
    %v10125 = vadd.f32 %v6116, %v10124
    %v10126 = vpop.f32.mrf.mxu0
    %v10127 = vadd.f32 %v6120, %v10126
    %v10128 = vpop.f32.mrf.mxu0
    %v10129 = vadd.f32 %v6116, %v10128
    %v10130 = vpop.f32.mrf.mxu0
    %v10131 = vadd.f32 %v6120, %v10130
    %10132 = vmatprep.mubr.bf16.mxu0 %v5552
    %10133 = vmatmul.mubr.bf16.gmra.mxu0 %v5551
    %v10134 = vpop.f32.mrf.mxu0
    %v10135 = vadd.f32 %v6116, %v10134
    %v10136 = vpop.f32.mrf.mxu0
    %v10137 = vadd.f32 %v6120, %v10136
    %v10138 = vpop.f32.mrf.mxu0
    %v10139 = vadd.f32 %v6116, %v10138
    %v10140 = vpop.f32.mrf.mxu0
    %v10141 = vadd.f32 %v6120, %v10140
    %10142 = vmatprep.mubr.bf16.mxu0 %v5560
    %10143 = vmatmul.mubr.bf16.gmra.mxu0 %v5559
    %v10144 = vpop.f32.mrf.mxu0
    %v10145 = vadd.f32 %v6116, %v10144
    %v10146 = vpop.f32.mrf.mxu0
    %v10147 = vadd.f32 %v6120, %v10146
    %v10148 = vpop.f32.mrf.mxu0
    %v10149 = vadd.f32 %v6116, %v10148
    %v10150 = vpop.f32.mrf.mxu0
    %v10151 = vadd.f32 %v6120, %v10150
    %10152 = vmatprep.mubr.bf16.mxu0 %v5568
    %10153 = vmatmul.mubr.bf16.gmra.mxu0 %v5567
    %v10154 = vpop.f32.mrf.mxu0
    %v10155 = vadd.f32 %v6116, %v10154
    %v10156 = vpop.f32.mrf.mxu0
    %v10157 = vadd.f32 %v6120, %v10156
    %v10158 = vpop.f32.mrf.mxu0
    %v10159 = vadd.f32 %v6116, %v10158
    %v10160 = vpop.f32.mrf.mxu0
    %v10161 = vadd.f32 %v6120, %v10160
    %10162 = vmatprep.mubr.bf16.mxu0 %v5576
    %10163 = vmatmul.mubr.bf16.gmra.mxu0 %v5575
    %v10164 = vpop.f32.mrf.mxu0
    %v10165 = vadd.f32 %v6116, %v10164
    %v10166 = vpop.f32.mrf.mxu0
    %v10167 = vadd.f32 %v6120, %v10166
    %v10168 = vpop.f32.mrf.mxu0
    %v10169 = vadd.f32 %v6116, %v10168
    %v10170 = vpop.f32.mrf.mxu0
    %v10171 = vadd.f32 %v6120, %v10170
    %10172 = vdwg.mxu0
    %10173 = vmatprep.subr.bf16.mxu0 %v7706
    %10174 = vmatpush1.bf16.msra.mxu0 %v7705
    %10175 = vmatprep.subr.bf16.mxu0 %v7699
    %10176 = vmatpush1.bf16.msra.mxu0 %v7698
    %10177 = vmatprep.subr.bf16.mxu0 %v7692
    %10178 = vmatpush1.bf16.msra.mxu0 %v7691
    %10179 = vmatprep.subr.bf16.mxu0 %v7685
    %10180 = vmatpush1.bf16.msra.mxu0 %v7684
    %10181 = vmatprep.subr.bf16.mxu0 %v7678
    %10182 = vmatpush1.bf16.msra.mxu0 %v7677
    %10183 = vmatprep.subr.bf16.mxu0 %v7671
    %10184 = vmatpush1.bf16.msra.mxu0 %v7670
    %10185 = vmatprep.subr.bf16.mxu0 %v7664
    %10186 = vmatpush1.bf16.msra.mxu0 %v7663
    %10187 = vmatprep.subr.bf16.mxu0 %v7657
    %10188 = vmatpush1.bf16.msra.mxu0 %v7656
    %10189 = vmatprep.subr.bf16.mxu0 %v7762
    %10190 = vmatpush2.bf16.msra.mxu0 %v7761
    %10191 = vmatprep.subr.bf16.mxu0 %v7755
    %10192 = vmatpush2.bf16.msra.mxu0 %v7754
    %10193 = vmatprep.subr.bf16.mxu0 %v7748
    %10194 = vmatpush2.bf16.msra.mxu0 %v7747
    %10195 = vmatprep.subr.bf16.mxu0 %v7741
    %10196 = vmatpush2.bf16.msra.mxu0 %v7740
    %10197 = vmatprep.subr.bf16.mxu0 %v7734
    %10198 = vmatpush2.bf16.msra.mxu0 %v7733
    %10199 = vmatprep.subr.bf16.mxu0 %v7727
    %10200 = vmatpush2.bf16.msra.mxu0 %v7726
    %10201 = vmatprep.subr.bf16.mxu0 %v7720
    %10202 = vmatpush2.bf16.msra.mxu0 %v7719
    %10203 = vmatprep.subr.bf16.mxu0 %v7713
    %10204 = vmatpush2.bf16.msra.mxu0 %v7712
    %10205 = vmatprep.mubr.bf16.mxu0 %v5458
    %10206 = vmatmul.mubr.bf16.gmra.mxu0 %v5457
    %v10207 = vpop.f32.mrf.mxu0
    %v10208 = vadd.f32 %v10015, %v10207
    %v10209 = vpop.f32.mrf.mxu0
    %v10210 = vadd.f32 %v10017, %v10209
    %v10211 = vpop.f32.mrf.mxu0
    %v10212 = vadd.f32 %v10019, %v10211
    %v10213 = vpop.f32.mrf.mxu0
    %v10214 = vadd.f32 %v10021, %v10213
    %10215 = vmatprep.mubr.bf16.mxu0 %v5466
    %10216 = vmatmul.mubr.bf16.gmra.mxu0 %v5465
    %v10217 = vpop.f32.mrf.mxu0
    %v10218 = vadd.f32 %v10025, %v10217
    %v10219 = vpop.f32.mrf.mxu0
    %v10220 = vadd.f32 %v10027, %v10219
    %v10221 = vpop.f32.mrf.mxu0
    %v10222 = vadd.f32 %v10029, %v10221
    %v10223 = vpop.f32.mrf.mxu0
    %v10224 = vadd.f32 %v10031, %v10223
    %10225 = vmatprep.mubr.bf16.mxu0 %v5474
    %10226 = vmatmul.mubr.bf16.gmra.mxu0 %v5473
    %v10227 = vpop.f32.mrf.mxu0
    %v10228 = vadd.f32 %v10035, %v10227
    %v10229 = vpop.f32.mrf.mxu0
    %v10230 = vadd.f32 %v10037, %v10229
    %v10231 = vpop.f32.mrf.mxu0
    %v10232 = vadd.f32 %v10039, %v10231
    %v10233 = vpop.f32.mrf.mxu0
    %v10234 = vadd.f32 %v10041, %v10233
    %10235 = vmatprep.mubr.bf16.mxu0 %v5482
    %10236 = vmatmul.mubr.bf16.gmra.mxu0 %v5481
    %v10237 = vpop.f32.mrf.mxu0
    %v10238 = vadd.f32 %v10045, %v10237
    %v10239 = vpop.f32.mrf.mxu0
    %v10240 = vadd.f32 %v10047, %v10239
    %v10241 = vpop.f32.mrf.mxu0
    %v10242 = vadd.f32 %v10049, %v10241
    %v10243 = vpop.f32.mrf.mxu0
    %v10244 = vadd.f32 %v10051, %v10243
    %10245 = vmatprep.mubr.bf16.mxu0 %v5490
    %10246 = vmatmul.mubr.bf16.gmra.mxu0 %v5489
    %v10247 = vpop.f32.mrf.mxu0
    %v10248 = vadd.f32 %v10055, %v10247
    %v10249 = vpop.f32.mrf.mxu0
    %v10250 = vadd.f32 %v10057, %v10249
    %v10251 = vpop.f32.mrf.mxu0
    %v10252 = vadd.f32 %v10059, %v10251
    %v10253 = vpop.f32.mrf.mxu0
    %v10254 = vadd.f32 %v10061, %v10253
    %10255 = vmatprep.mubr.bf16.mxu0 %v5498
    %10256 = vmatmul.mubr.bf16.gmra.mxu0 %v5497
    %v10257 = vpop.f32.mrf.mxu0
    %v10258 = vadd.f32 %v10065, %v10257
    %v10259 = vpop.f32.mrf.mxu0
    %v10260 = vadd.f32 %v10067, %v10259
    %v10261 = vpop.f32.mrf.mxu0
    %v10262 = vadd.f32 %v10069, %v10261
    %v10263 = vpop.f32.mrf.mxu0
    %v10264 = vadd.f32 %v10071, %v10263
    %10265 = vmatprep.mubr.bf16.mxu0 %v5506
    %10266 = vmatmul.mubr.bf16.gmra.mxu0 %v5505
    %v10267 = vpop.f32.mrf.mxu0
    %v10268 = vadd.f32 %v10075, %v10267
    %v10269 = vpop.f32.mrf.mxu0
    %v10270 = vadd.f32 %v10077, %v10269
    %v10271 = vpop.f32.mrf.mxu0
    %v10272 = vadd.f32 %v10079, %v10271
    %v10273 = vpop.f32.mrf.mxu0
    %v10274 = vadd.f32 %v10081, %v10273
    %10275 = vmatprep.mubr.bf16.mxu0 %v5514
    %10276 = vmatmul.mubr.bf16.gmra.mxu0 %v5513
    %v10277 = vpop.f32.mrf.mxu0
    %v10278 = vadd.f32 %v10085, %v10277
    %v10279 = vpop.f32.mrf.mxu0
    %v10280 = vadd.f32 %v10087, %v10279
    %v10281 = vpop.f32.mrf.mxu0
    %v10282 = vadd.f32 %v10089, %v10281
    %v10283 = vpop.f32.mrf.mxu0
    %v10284 = vadd.f32 %v10091, %v10283
    %10285 = vmatprep.mubr.bf16.mxu0 %v5522
    %10286 = vmatmul.mubr.bf16.gmra.mxu0 %v5521
    %v10287 = vpop.f32.mrf.mxu0
    %v10288 = vadd.f32 %v10095, %v10287
    %v10289 = vpop.f32.mrf.mxu0
    %v10290 = vadd.f32 %v10097, %v10289
    %v10291 = vpop.f32.mrf.mxu0
    %v10292 = vadd.f32 %v10099, %v10291
    %v10293 = vpop.f32.mrf.mxu0
    %v10294 = vadd.f32 %v10101, %v10293
    %10295 = vmatprep.mubr.bf16.mxu0 %v5530
    %10296 = vmatmul.mubr.bf16.gmra.mxu0 %v5529
    %v10297 = vpop.f32.mrf.mxu0
    %v10298 = vadd.f32 %v10105, %v10297
    %v10299 = vpop.f32.mrf.mxu0
    %v10300 = vadd.f32 %v10107, %v10299
    %v10301 = vpop.f32.mrf.mxu0
    %v10302 = vadd.f32 %v10109, %v10301
    %v10303 = vpop.f32.mrf.mxu0
    %v10304 = vadd.f32 %v10111, %v10303
    %10305 = vmatprep.mubr.bf16.mxu0 %v5538
    %10306 = vmatmul.mubr.bf16.gmra.mxu0 %v5537
    %v10307 = vpop.f32.mrf.mxu0
    %v10308 = vadd.f32 %v10115, %v10307
    %v10309 = vpop.f32.mrf.mxu0
    %v10310 = vadd.f32 %v10117, %v10309
    %v10311 = vpop.f32.mrf.mxu0
    %v10312 = vadd.f32 %v10119, %v10311
    %v10313 = vpop.f32.mrf.mxu0
    %v10314 = vadd.f32 %v10121, %v10313
    %10315 = vmatprep.mubr.bf16.mxu0 %v5546
    %10316 = vmatmul.mubr.bf16.gmra.mxu0 %v5545
    %v10317 = vpop.f32.mrf.mxu0
    %v10318 = vadd.f32 %v10125, %v10317
    %v10319 = vpop.f32.mrf.mxu0
    %v10320 = vadd.f32 %v10127, %v10319
    %v10321 = vpop.f32.mrf.mxu0
    %v10322 = vadd.f32 %v10129, %v10321
    %v10323 = vpop.f32.mrf.mxu0
    %v10324 = vadd.f32 %v10131, %v10323
    %10325 = vmatprep.mubr.bf16.mxu0 %v5554
    %10326 = vmatmul.mubr.bf16.gmra.mxu0 %v5553
    %v10327 = vpop.f32.mrf.mxu0
    %v10328 = vadd.f32 %v10135, %v10327
    %v10329 = vpop.f32.mrf.mxu0
    %v10330 = vadd.f32 %v10137, %v10329
    %v10331 = vpop.f32.mrf.mxu0
    %v10332 = vadd.f32 %v10139, %v10331
    %v10333 = vpop.f32.mrf.mxu0
    %v10334 = vadd.f32 %v10141, %v10333
    %10335 = vmatprep.mubr.bf16.mxu0 %v5562
    %10336 = vmatmul.mubr.bf16.gmra.mxu0 %v5561
    %v10337 = vpop.f32.mrf.mxu0
    %v10338 = vadd.f32 %v10145, %v10337
    %v10339 = vpop.f32.mrf.mxu0
    %v10340 = vadd.f32 %v10147, %v10339
    %v10341 = vpop.f32.mrf.mxu0
    %v10342 = vadd.f32 %v10149, %v10341
    %v10343 = vpop.f32.mrf.mxu0
    %v10344 = vadd.f32 %v10151, %v10343
    %10345 = vmatprep.mubr.bf16.mxu0 %v5570
    %10346 = vmatmul.mubr.bf16.gmra.mxu0 %v5569
    %v10347 = vpop.f32.mrf.mxu0
    %v10348 = vadd.f32 %v10155, %v10347
    %v10349 = vpop.f32.mrf.mxu0
    %v10350 = vadd.f32 %v10157, %v10349
    %v10351 = vpop.f32.mrf.mxu0
    %v10352 = vadd.f32 %v10159, %v10351
    %v10353 = vpop.f32.mrf.mxu0
    %v10354 = vadd.f32 %v10161, %v10353
    %10355 = vmatprep.mubr.bf16.mxu0 %v5578
    %10356 = vmatmul.mubr.bf16.gmra.mxu0 %v5577
    %v10357 = vpop.f32.mrf.mxu0
    %v10358 = vadd.f32 %v10165, %v10357
    %v10359 = vpop.f32.mrf.mxu0
    %v10360 = vadd.f32 %v10167, %v10359
    %v10361 = vpop.f32.mrf.mxu0
    %v10362 = vadd.f32 %v10169, %v10361
    %v10363 = vpop.f32.mrf.mxu0
    %v10364 = vadd.f32 %v10171, %v10363
    %10365 = vdwg.mxu0
    %10366 = vmatprep.subr.bf16.mxu0 %v7818
    %10367 = vmatpush1.bf16.msra.mxu0 %v7817
    %10368 = vmatprep.subr.bf16.mxu0 %v7811
    %10369 = vmatpush1.bf16.msra.mxu0 %v7810
    %10370 = vmatprep.subr.bf16.mxu0 %v7804
    %10371 = vmatpush1.bf16.msra.mxu0 %v7803
    %10372 = vmatprep.subr.bf16.mxu0 %v7797
    %10373 = vmatpush1.bf16.msra.mxu0 %v7796
    %10374 = vmatprep.subr.bf16.mxu0 %v7790
    %10375 = vmatpush1.bf16.msra.mxu0 %v7789
    %10376 = vmatprep.subr.bf16.mxu0 %v7783
    %10377 = vmatpush1.bf16.msra.mxu0 %v7782
    %10378 = vmatprep.subr.bf16.mxu0 %v7776
    %10379 = vmatpush1.bf16.msra.mxu0 %v7775
    %10380 = vmatprep.subr.bf16.mxu0 %v7769
    %10381 = vmatpush1.bf16.msra.mxu0 %v7768
    %10382 = vmatprep.subr.bf16.mxu0 %v7874
    %10383 = vmatpush2.bf16.msra.mxu0 %v7873
    %10384 = vmatprep.subr.bf16.mxu0 %v7867
    %10385 = vmatpush2.bf16.msra.mxu0 %v7866
    %10386 = vmatprep.subr.bf16.mxu0 %v7860
    %10387 = vmatpush2.bf16.msra.mxu0 %v7859
    %10388 = vmatprep.subr.bf16.mxu0 %v7853
    %10389 = vmatpush2.bf16.msra.mxu0 %v7852
    %10390 = vmatprep.subr.bf16.mxu0 %v7846
    %10391 = vmatpush2.bf16.msra.mxu0 %v7845
    %10392 = vmatprep.subr.bf16.mxu0 %v7839
    %10393 = vmatpush2.bf16.msra.mxu0 %v7838
    %10394 = vmatprep.subr.bf16.mxu0 %v7832
    %10395 = vmatpush2.bf16.msra.mxu0 %v7831
    %10396 = vmatprep.subr.bf16.mxu0 %v7825
    %10397 = vmatpush2.bf16.msra.mxu0 %v7824
    %10398 = vmatprep.mubr.bf16.mxu0 %v5460
    %10399 = vmatmul.mubr.bf16.gmra.mxu0 %v5459
    %v10400 = vpop.f32.mrf.mxu0
    %v10401 = vadd.f32 %v10208, %v10400
    %v10402 = vpop.f32.mrf.mxu0
    %v10403 = vadd.f32 %v10210, %v10402
    %v10404 = vpop.f32.mrf.mxu0
    %v10405 = vadd.f32 %v10212, %v10404
    %v10406 = vpop.f32.mrf.mxu0
    %v10407 = vadd.f32 %v10214, %v10406
    %10408 = vmatprep.mubr.bf16.mxu0 %v5468
    %10409 = vmatmul.mubr.bf16.gmra.mxu0 %v5467
    %v10410 = vpop.f32.mrf.mxu0
    %v10411 = vadd.f32 %v10218, %v10410
    %v10412 = vpop.f32.mrf.mxu0
    %v10413 = vadd.f32 %v10220, %v10412
    %v10414 = vpop.f32.mrf.mxu0
    %v10415 = vadd.f32 %v10222, %v10414
    %v10416 = vpop.f32.mrf.mxu0
    %v10417 = vadd.f32 %v10224, %v10416
    %10418 = vmatprep.mubr.bf16.mxu0 %v5476
    %10419 = vmatmul.mubr.bf16.gmra.mxu0 %v5475
    %v10420 = vpop.f32.mrf.mxu0
    %v10421 = vadd.f32 %v10228, %v10420
    %v10422 = vpop.f32.mrf.mxu0
    %v10423 = vadd.f32 %v10230, %v10422
    %v10424 = vpop.f32.mrf.mxu0
    %v10425 = vadd.f32 %v10232, %v10424
    %v10426 = vpop.f32.mrf.mxu0
    %v10427 = vadd.f32 %v10234, %v10426
    %10428 = vmatprep.mubr.bf16.mxu0 %v5484
    %10429 = vmatmul.mubr.bf16.gmra.mxu0 %v5483
    %v10430 = vpop.f32.mrf.mxu0
    %v10431 = vadd.f32 %v10238, %v10430
    %v10432 = vpop.f32.mrf.mxu0
    %v10433 = vadd.f32 %v10240, %v10432
    %v10434 = vpop.f32.mrf.mxu0
    %v10435 = vadd.f32 %v10242, %v10434
    %v10436 = vpop.f32.mrf.mxu0
    %v10437 = vadd.f32 %v10244, %v10436
    %10438 = vmatprep.mubr.bf16.mxu0 %v5492
    %10439 = vmatmul.mubr.bf16.gmra.mxu0 %v5491
    %v10440 = vpop.f32.mrf.mxu0
    %v10441 = vadd.f32 %v10248, %v10440
    %v10442 = vpop.f32.mrf.mxu0
    %v10443 = vadd.f32 %v10250, %v10442
    %v10444 = vpop.f32.mrf.mxu0
    %v10445 = vadd.f32 %v10252, %v10444
    %v10446 = vpop.f32.mrf.mxu0
    %v10447 = vadd.f32 %v10254, %v10446
    %10448 = vmatprep.mubr.bf16.mxu0 %v5500
    %10449 = vmatmul.mubr.bf16.gmra.mxu0 %v5499
    %v10450 = vpop.f32.mrf.mxu0
    %v10451 = vadd.f32 %v10258, %v10450
    %v10452 = vpop.f32.mrf.mxu0
    %v10453 = vadd.f32 %v10260, %v10452
    %v10454 = vpop.f32.mrf.mxu0
    %v10455 = vadd.f32 %v10262, %v10454
    %v10456 = vpop.f32.mrf.mxu0
    %v10457 = vadd.f32 %v10264, %v10456
    %10458 = vmatprep.mubr.bf16.mxu0 %v5508
    %10459 = vmatmul.mubr.bf16.gmra.mxu0 %v5507
    %v10460 = vpop.f32.mrf.mxu0
    %v10461 = vadd.f32 %v10268, %v10460
    %v10462 = vpop.f32.mrf.mxu0
    %v10463 = vadd.f32 %v10270, %v10462
    %v10464 = vpop.f32.mrf.mxu0
    %v10465 = vadd.f32 %v10272, %v10464
    %v10466 = vpop.f32.mrf.mxu0
    %v10467 = vadd.f32 %v10274, %v10466
    %10468 = vmatprep.mubr.bf16.mxu0 %v5516
    %10469 = vmatmul.mubr.bf16.gmra.mxu0 %v5515
    %v10470 = vpop.f32.mrf.mxu0
    %v10471 = vadd.f32 %v10278, %v10470
    %v10472 = vpop.f32.mrf.mxu0
    %v10473 = vadd.f32 %v10280, %v10472
    %v10474 = vpop.f32.mrf.mxu0
    %v10475 = vadd.f32 %v10282, %v10474
    %v10476 = vpop.f32.mrf.mxu0
    %v10477 = vadd.f32 %v10284, %v10476
    %10478 = vmatprep.mubr.bf16.mxu0 %v5524
    %10479 = vmatmul.mubr.bf16.gmra.mxu0 %v5523
    %v10480 = vpop.f32.mrf.mxu0
    %v10481 = vadd.f32 %v10288, %v10480
    %v10482 = vpop.f32.mrf.mxu0
    %v10483 = vadd.f32 %v10290, %v10482
    %v10484 = vpop.f32.mrf.mxu0
    %v10485 = vadd.f32 %v10292, %v10484
    %v10486 = vpop.f32.mrf.mxu0
    %v10487 = vadd.f32 %v10294, %v10486
    %10488 = vmatprep.mubr.bf16.mxu0 %v5532
    %10489 = vmatmul.mubr.bf16.gmra.mxu0 %v5531
    %v10490 = vpop.f32.mrf.mxu0
    %v10491 = vadd.f32 %v10298, %v10490
    %v10492 = vpop.f32.mrf.mxu0
    %v10493 = vadd.f32 %v10300, %v10492
    %v10494 = vpop.f32.mrf.mxu0
    %v10495 = vadd.f32 %v10302, %v10494
    %v10496 = vpop.f32.mrf.mxu0
    %v10497 = vadd.f32 %v10304, %v10496
    %10498 = vmatprep.mubr.bf16.mxu0 %v5540
    %10499 = vmatmul.mubr.bf16.gmra.mxu0 %v5539
    %v10500 = vpop.f32.mrf.mxu0
    %v10501 = vadd.f32 %v10308, %v10500
    %v10502 = vpop.f32.mrf.mxu0
    %v10503 = vadd.f32 %v10310, %v10502
    %v10504 = vpop.f32.mrf.mxu0
    %v10505 = vadd.f32 %v10312, %v10504
    %v10506 = vpop.f32.mrf.mxu0
    %v10507 = vadd.f32 %v10314, %v10506
    %10508 = vmatprep.mubr.bf16.mxu0 %v5548
    %10509 = vmatmul.mubr.bf16.gmra.mxu0 %v5547
    %v10510 = vpop.f32.mrf.mxu0
    %v10511 = vadd.f32 %v10318, %v10510
    %v10512 = vpop.f32.mrf.mxu0
    %v10513 = vadd.f32 %v10320, %v10512
    %v10514 = vpop.f32.mrf.mxu0
    %v10515 = vadd.f32 %v10322, %v10514
    %v10516 = vpop.f32.mrf.mxu0
    %v10517 = vadd.f32 %v10324, %v10516
    %10518 = vmatprep.mubr.bf16.mxu0 %v5556
    %10519 = vmatmul.mubr.bf16.gmra.mxu0 %v5555
    %v10520 = vpop.f32.mrf.mxu0
    %v10521 = vadd.f32 %v10328, %v10520
    %v10522 = vpop.f32.mrf.mxu0
    %v10523 = vadd.f32 %v10330, %v10522
    %v10524 = vpop.f32.mrf.mxu0
    %v10525 = vadd.f32 %v10332, %v10524
    %v10526 = vpop.f32.mrf.mxu0
    %v10527 = vadd.f32 %v10334, %v10526
    %10528 = vmatprep.mubr.bf16.mxu0 %v5564
    %10529 = vmatmul.mubr.bf16.gmra.mxu0 %v5563
    %v10530 = vpop.f32.mrf.mxu0
    %v10531 = vadd.f32 %v10338, %v10530
    %v10532 = vpop.f32.mrf.mxu0
    %v10533 = vadd.f32 %v10340, %v10532
    %v10534 = vpop.f32.mrf.mxu0
    %v10535 = vadd.f32 %v10342, %v10534
    %v10536 = vpop.f32.mrf.mxu0
    %v10537 = vadd.f32 %v10344, %v10536
    %10538 = vmatprep.mubr.bf16.mxu0 %v5572
    %10539 = vmatmul.mubr.bf16.gmra.mxu0 %v5571
    %v10540 = vpop.f32.mrf.mxu0
    %v10541 = vadd.f32 %v10348, %v10540
    %v10542 = vpop.f32.mrf.mxu0
    %v10543 = vadd.f32 %v10350, %v10542
    %v10544 = vpop.f32.mrf.mxu0
    %v10545 = vadd.f32 %v10352, %v10544
    %v10546 = vpop.f32.mrf.mxu0
    %v10547 = vadd.f32 %v10354, %v10546
    %10548 = vmatprep.mubr.bf16.mxu0 %v5580
    %10549 = vmatmul.mubr.bf16.gmra.mxu0 %v5579
    %v10550 = vpop.f32.mrf.mxu0
    %v10551 = vadd.f32 %v10358, %v10550
    %v10552 = vpop.f32.mrf.mxu0
    %v10553 = vadd.f32 %v10360, %v10552
    %v10554 = vpop.f32.mrf.mxu0
    %v10555 = vadd.f32 %v10362, %v10554
    %v10556 = vpop.f32.mrf.mxu0
    %v10557 = vadd.f32 %v10364, %v10556
    %10558 = vdwg.mxu0
    %10559 = vmatprep.subr.bf16.mxu0 %v7930
    %10560 = vmatpush1.bf16.msra.mxu0 %v7929
    %10561 = vmatprep.subr.bf16.mxu0 %v7923
    %10562 = vmatpush1.bf16.msra.mxu0 %v7922
    %10563 = vmatprep.subr.bf16.mxu0 %v7916
    %10564 = vmatpush1.bf16.msra.mxu0 %v7915
    %10565 = vmatprep.subr.bf16.mxu0 %v7909
    %10566 = vmatpush1.bf16.msra.mxu0 %v7908
    %10567 = vmatprep.subr.bf16.mxu0 %v7902
    %10568 = vmatpush1.bf16.msra.mxu0 %v7901
    %10569 = vmatprep.subr.bf16.mxu0 %v7895
    %10570 = vmatpush1.bf16.msra.mxu0 %v7894
    %10571 = vmatprep.subr.bf16.mxu0 %v7888
    %10572 = vmatpush1.bf16.msra.mxu0 %v7887
    %10573 = vmatprep.subr.bf16.mxu0 %v7881
    %10574 = vmatpush1.bf16.msra.mxu0 %v7880
    %10575 = vmatprep.subr.bf16.mxu0 %v7986
    %10576 = vmatpush2.bf16.msra.mxu0 %v7985
    %10577 = vmatprep.subr.bf16.mxu0 %v7979
    %10578 = vmatpush2.bf16.msra.mxu0 %v7978
    %10579 = vmatprep.subr.bf16.mxu0 %v7972
    %10580 = vmatpush2.bf16.msra.mxu0 %v7971
    %10581 = vmatprep.subr.bf16.mxu0 %v7965
    %10582 = vmatpush2.bf16.msra.mxu0 %v7964
    %10583 = vmatprep.subr.bf16.mxu0 %v7958
    %10584 = vmatpush2.bf16.msra.mxu0 %v7957
    %10585 = vmatprep.subr.bf16.mxu0 %v7951
    %10586 = vmatpush2.bf16.msra.mxu0 %v7950
    %10587 = vmatprep.subr.bf16.mxu0 %v7944
    %10588 = vmatpush2.bf16.msra.mxu0 %v7943
    %10589 = vmatprep.subr.bf16.mxu0 %v7937
    %10590 = vmatpush2.bf16.msra.mxu0 %v7936
    %10591 = vmatprep.mubr.bf16.mxu0 %v5462
    %10592 = vmatmul.mubr.bf16.gmra.mxu0 %v5461
    %v10593 = vpop.f32.mrf.mxu0
    %v10594 = vadd.f32 %v10401, %v10593
    %v10595 = vpop.f32.mrf.mxu0
    %v10596 = vadd.f32 %v10403, %v10595
    %v10597 = vpop.f32.mrf.mxu0
    %v10598 = vadd.f32 %v10405, %v10597
    %v10599 = vpop.f32.mrf.mxu0
    %v10600 = vadd.f32 %v10407, %v10599
    %10601 = vmatprep.mubr.bf16.mxu0 %v5470
    %10602 = vmatmul.mubr.bf16.gmra.mxu0 %v5469
    %v10603 = vpop.f32.mrf.mxu0
    %v10604 = vadd.f32 %v10411, %v10603
    %v10605 = vpop.f32.mrf.mxu0
    %v10606 = vadd.f32 %v10413, %v10605
    %v10607 = vpop.f32.mrf.mxu0
    %v10608 = vadd.f32 %v10415, %v10607
    %v10609 = vpop.f32.mrf.mxu0
    %v10610 = vadd.f32 %v10417, %v10609
    %10611 = vmatprep.mubr.bf16.mxu0 %v5478
    %10612 = vmatmul.mubr.bf16.gmra.mxu0 %v5477
    %v10613 = vpop.f32.mrf.mxu0
    %v10614 = vadd.f32 %v10421, %v10613
    %v10615 = vpop.f32.mrf.mxu0
    %v10616 = vadd.f32 %v10423, %v10615
    %v10617 = vpop.f32.mrf.mxu0
    %v10618 = vadd.f32 %v10425, %v10617
    %v10619 = vpop.f32.mrf.mxu0
    %v10620 = vadd.f32 %v10427, %v10619
    %10621 = vmatprep.mubr.bf16.mxu0 %v5486
    %10622 = vmatmul.mubr.bf16.gmra.mxu0 %v5485
    %v10623 = vpop.f32.mrf.mxu0
    %v10624 = vadd.f32 %v10431, %v10623
    %v10625 = vpop.f32.mrf.mxu0
    %v10626 = vadd.f32 %v10433, %v10625
    %v10627 = vpop.f32.mrf.mxu0
    %v10628 = vadd.f32 %v10435, %v10627
    %v10629 = vpop.f32.mrf.mxu0
    %v10630 = vadd.f32 %v10437, %v10629
    %10631 = vmatprep.mubr.bf16.mxu0 %v5494
    %10632 = vmatmul.mubr.bf16.gmra.mxu0 %v5493
    %v10633 = vpop.f32.mrf.mxu0
    %v10634 = vadd.f32 %v10441, %v10633
    %v10635 = vpop.f32.mrf.mxu0
    %v10636 = vadd.f32 %v10443, %v10635
    %v10637 = vpop.f32.mrf.mxu0
    %v10638 = vadd.f32 %v10445, %v10637
    %v10639 = vpop.f32.mrf.mxu0
    %v10640 = vadd.f32 %v10447, %v10639
    %10641 = vmatprep.mubr.bf16.mxu0 %v5502
    %10642 = vmatmul.mubr.bf16.gmra.mxu0 %v5501
    %v10643 = vpop.f32.mrf.mxu0
    %v10644 = vadd.f32 %v10451, %v10643
    %v10645 = vpop.f32.mrf.mxu0
    %v10646 = vadd.f32 %v10453, %v10645
    %v10647 = vpop.f32.mrf.mxu0
    %v10648 = vadd.f32 %v10455, %v10647
    %v10649 = vpop.f32.mrf.mxu0
    %v10650 = vadd.f32 %v10457, %v10649
    %10651 = vmatprep.mubr.bf16.mxu0 %v5510
    %10652 = vmatmul.mubr.bf16.gmra.mxu0 %v5509
    %v10653 = vpop.f32.mrf.mxu0
    %v10654 = vadd.f32 %v10461, %v10653
    %v10655 = vpop.f32.mrf.mxu0
    %v10656 = vadd.f32 %v10463, %v10655
    %v10657 = vpop.f32.mrf.mxu0
    %v10658 = vadd.f32 %v10465, %v10657
    %v10659 = vpop.f32.mrf.mxu0
    %v10660 = vadd.f32 %v10467, %v10659
    %10661 = vmatprep.mubr.bf16.mxu0 %v5518
    %10662 = vmatmul.mubr.bf16.gmra.mxu0 %v5517
    %v10663 = vpop.f32.mrf.mxu0
    %v10664 = vadd.f32 %v10471, %v10663
    %v10665 = vpop.f32.mrf.mxu0
    %v10666 = vadd.f32 %v10473, %v10665
    %v10667 = vpop.f32.mrf.mxu0
    %v10668 = vadd.f32 %v10475, %v10667
    %v10669 = vpop.f32.mrf.mxu0
    %v10670 = vadd.f32 %v10477, %v10669
    %10671 = vmatprep.mubr.bf16.mxu0 %v5526
    %10672 = vmatmul.mubr.bf16.gmra.mxu0 %v5525
    %v10673 = vpop.f32.mrf.mxu0
    %v10674 = vadd.f32 %v10481, %v10673
    %v10675 = vpop.f32.mrf.mxu0
    %v10676 = vadd.f32 %v10483, %v10675
    %v10677 = vpop.f32.mrf.mxu0
    %v10678 = vadd.f32 %v10485, %v10677
    %v10679 = vpop.f32.mrf.mxu0
    %v10680 = vadd.f32 %v10487, %v10679
    %10681 = vmatprep.mubr.bf16.mxu0 %v5534
    %10682 = vmatmul.mubr.bf16.gmra.mxu0 %v5533
    %v10683 = vpop.f32.mrf.mxu0
    %v10684 = vadd.f32 %v10491, %v10683
    %v10685 = vpop.f32.mrf.mxu0
    %v10686 = vadd.f32 %v10493, %v10685
    %v10687 = vpop.f32.mrf.mxu0
    %v10688 = vadd.f32 %v10495, %v10687
    %v10689 = vpop.f32.mrf.mxu0
    %v10690 = vadd.f32 %v10497, %v10689
    %10691 = vmatprep.mubr.bf16.mxu0 %v5542
    %10692 = vmatmul.mubr.bf16.gmra.mxu0 %v5541
    %v10693 = vpop.f32.mrf.mxu0
    %v10694 = vadd.f32 %v10501, %v10693
    %v10695 = vpop.f32.mrf.mxu0
    %v10696 = vadd.f32 %v10503, %v10695
    %v10697 = vpop.f32.mrf.mxu0
    %v10698 = vadd.f32 %v10505, %v10697
    %v10699 = vpop.f32.mrf.mxu0
    %v10700 = vadd.f32 %v10507, %v10699
    %10701 = vmatprep.mubr.bf16.mxu0 %v5550
    %10702 = vmatmul.mubr.bf16.gmra.mxu0 %v5549
    %v10703 = vpop.f32.mrf.mxu0
    %v10704 = vadd.f32 %v10511, %v10703
    %v10705 = vpop.f32.mrf.mxu0
    %v10706 = vadd.f32 %v10513, %v10705
    %v10707 = vpop.f32.mrf.mxu0
    %v10708 = vadd.f32 %v10515, %v10707
    %v10709 = vpop.f32.mrf.mxu0
    %v10710 = vadd.f32 %v10517, %v10709
    %10711 = vmatprep.mubr.bf16.mxu0 %v5558
    %10712 = vmatmul.mubr.bf16.gmra.mxu0 %v5557
    %v10713 = vpop.f32.mrf.mxu0
    %v10714 = vadd.f32 %v10521, %v10713
    %v10715 = vpop.f32.mrf.mxu0
    %v10716 = vadd.f32 %v10523, %v10715
    %v10717 = vpop.f32.mrf.mxu0
    %v10718 = vadd.f32 %v10525, %v10717
    %v10719 = vpop.f32.mrf.mxu0
    %v10720 = vadd.f32 %v10527, %v10719
    %10721 = vmatprep.mubr.bf16.mxu0 %v5566
    %10722 = vmatmul.mubr.bf16.gmra.mxu0 %v5565
    %v10723 = vpop.f32.mrf.mxu0
    %v10724 = vadd.f32 %v10531, %v10723
    %v10725 = vpop.f32.mrf.mxu0
    %v10726 = vadd.f32 %v10533, %v10725
    %v10727 = vpop.f32.mrf.mxu0
    %v10728 = vadd.f32 %v10535, %v10727
    %v10729 = vpop.f32.mrf.mxu0
    %v10730 = vadd.f32 %v10537, %v10729
    %10731 = vmatprep.mubr.bf16.mxu0 %v5574
    %10732 = vmatmul.mubr.bf16.gmra.mxu0 %v5573
    %v10733 = vpop.f32.mrf.mxu0
    %v10734 = vadd.f32 %v10541, %v10733
    %v10735 = vpop.f32.mrf.mxu0
    %v10736 = vadd.f32 %v10543, %v10735
    %v10737 = vpop.f32.mrf.mxu0
    %v10738 = vadd.f32 %v10545, %v10737
    %v10739 = vpop.f32.mrf.mxu0
    %v10740 = vadd.f32 %v10547, %v10739
    %10741 = vmatprep.mubr.bf16.mxu0 %v5582
    %10742 = vmatmul.mubr.bf16.gmra.mxu0 %v5581
    %v10743 = vpop.f32.mrf.mxu0
    %v10744 = vadd.f32 %v10551, %v10743
    %v10745 = vpop.f32.mrf.mxu0
    %v10746 = vadd.f32 %v10553, %v10745
    %v10747 = vpop.f32.mrf.mxu0
    %v10748 = vadd.f32 %v10555, %v10747
    %v10749 = vpop.f32.mrf.mxu0
    %v10750 = vadd.f32 %v10557, %v10749
    %10751 = vdwg.mxu0
    %10752 = vmatprep.subr.bf16.mxu0 0
    %10753 = vmatpush1.bf16.msra.mxu0 %v7595
    %10754 = vmatprep.subr.bf16.mxu0 0
    %10755 = vmatpush1.bf16.msra.mxu0 %v7588
    %10756 = vmatprep.subr.bf16.mxu0 0
    %10757 = vmatpush1.bf16.msra.mxu0 %v7581
    %10758 = vmatprep.subr.bf16.mxu0 0
    %10759 = vmatpush1.bf16.msra.mxu0 %v7574
    %10760 = vmatprep.subr.bf16.mxu0 0
    %10761 = vmatpush1.bf16.msra.mxu0 %v7567
    %10762 = vmatprep.subr.bf16.mxu0 0
    %10763 = vmatpush1.bf16.msra.mxu0 %v7560
    %10764 = vmatprep.subr.bf16.mxu0 0
    %10765 = vmatpush1.bf16.msra.mxu0 %v7553
    %10766 = vmatprep.subr.bf16.mxu0 0
    %10767 = vmatpush1.bf16.msra.mxu0 %v7546
    %10768 = vmatprep.subr.bf16.mxu0 0
    %10769 = vmatpush2.bf16.msra.mxu0 %v7651
    %10770 = vmatprep.subr.bf16.mxu0 0
    %10771 = vmatpush2.bf16.msra.mxu0 %v7644
    %10772 = vmatprep.subr.bf16.mxu0 0
    %10773 = vmatpush2.bf16.msra.mxu0 %v7637
    %10774 = vmatprep.subr.bf16.mxu0 0
    %10775 = vmatpush2.bf16.msra.mxu0 %v7630
    %10776 = vmatprep.subr.bf16.mxu0 0
    %10777 = vmatpush2.bf16.msra.mxu0 %v7623
    %10778 = vmatprep.subr.bf16.mxu0 0
    %10779 = vmatpush2.bf16.msra.mxu0 %v7616
    %10780 = vmatprep.subr.bf16.mxu0 0
    %10781 = vmatpush2.bf16.msra.mxu0 %v7609
    %10782 = vmatprep.subr.bf16.mxu0 0
    %10783 = vmatpush2.bf16.msra.mxu0 %v7602
    %10784 = vmatprep.mubr.bf16.mxu0 %v5456
    %10785 = vmatmul.mubr.bf16.gmra.mxu0 %v5455
    %v10786 = vpop.f32.mrf.mxu0
    %v10787 = vadd.f32 %v6124, %v10786
    %v10788 = vpop.f32.mrf.mxu0
    %v10789 = vpop.f32.mrf.mxu0
    %v10790 = vadd.f32 %v6124, %v10789
    %v10791 = vpop.f32.mrf.mxu0
    %10792 = vmatprep.mubr.bf16.mxu0 %v5464
    %10793 = vmatmul.mubr.bf16.gmra.mxu0 %v5463
    %v10794 = vpop.f32.mrf.mxu0
    %v10795 = vadd.f32 %v6124, %v10794
    %v10796 = vpop.f32.mrf.mxu0
    %v10797 = vpop.f32.mrf.mxu0
    %v10798 = vadd.f32 %v6124, %v10797
    %v10799 = vpop.f32.mrf.mxu0
    %10800 = vmatprep.mubr.bf16.mxu0 %v5472
    %10801 = vmatmul.mubr.bf16.gmra.mxu0 %v5471
    %v10802 = vpop.f32.mrf.mxu0
    %v10803 = vadd.f32 %v6124, %v10802
    %v10804 = vpop.f32.mrf.mxu0
    %v10805 = vpop.f32.mrf.mxu0
    %v10806 = vadd.f32 %v6124, %v10805
    %v10807 = vpop.f32.mrf.mxu0
    %10808 = vmatprep.mubr.bf16.mxu0 %v5480
    %10809 = vmatmul.mubr.bf16.gmra.mxu0 %v5479
    %v10810 = vpop.f32.mrf.mxu0
    %v10811 = vadd.f32 %v6124, %v10810
    %v10812 = vpop.f32.mrf.mxu0
    %v10813 = vpop.f32.mrf.mxu0
    %v10814 = vadd.f32 %v6124, %v10813
    %v10815 = vpop.f32.mrf.mxu0
    %10816 = vmatprep.mubr.bf16.mxu0 %v5488
    %10817 = vmatmul.mubr.bf16.gmra.mxu0 %v5487
    %v10818 = vpop.f32.mrf.mxu0
    %v10819 = vadd.f32 %v6124, %v10818
    %v10820 = vpop.f32.mrf.mxu0
    %v10821 = vpop.f32.mrf.mxu0
    %v10822 = vadd.f32 %v6124, %v10821
    %v10823 = vpop.f32.mrf.mxu0
    %10824 = vmatprep.mubr.bf16.mxu0 %v5496
    %10825 = vmatmul.mubr.bf16.gmra.mxu0 %v5495
    %v10826 = vpop.f32.mrf.mxu0
    %v10827 = vadd.f32 %v6124, %v10826
    %v10828 = vpop.f32.mrf.mxu0
    %v10829 = vpop.f32.mrf.mxu0
    %v10830 = vadd.f32 %v6124, %v10829
    %v10831 = vpop.f32.mrf.mxu0
    %10832 = vmatprep.mubr.bf16.mxu0 %v5504
    %10833 = vmatmul.mubr.bf16.gmra.mxu0 %v5503
    %v10834 = vpop.f32.mrf.mxu0
    %v10835 = vadd.f32 %v6124, %v10834
    %v10836 = vpop.f32.mrf.mxu0
    %v10837 = vpop.f32.mrf.mxu0
    %v10838 = vadd.f32 %v6124, %v10837
    %v10839 = vpop.f32.mrf.mxu0
    %10840 = vmatprep.mubr.bf16.mxu0 %v5512
    %10841 = vmatmul.mubr.bf16.gmra.mxu0 %v5511
    %v10842 = vpop.f32.mrf.mxu0
    %v10843 = vadd.f32 %v6124, %v10842
    %v10844 = vpop.f32.mrf.mxu0
    %v10845 = vpop.f32.mrf.mxu0
    %v10846 = vadd.f32 %v6124, %v10845
    %v10847 = vpop.f32.mrf.mxu0
    %10848 = vmatprep.mubr.bf16.mxu0 %v5520
    %10849 = vmatmul.mubr.bf16.gmra.mxu0 %v5519
    %v10850 = vpop.f32.mrf.mxu0
    %v10851 = vadd.f32 %v6124, %v10850
    %v10852 = vpop.f32.mrf.mxu0
    %v10853 = vpop.f32.mrf.mxu0
    %v10854 = vadd.f32 %v6124, %v10853
    %v10855 = vpop.f32.mrf.mxu0
    %10856 = vmatprep.mubr.bf16.mxu0 %v5528
    %10857 = vmatmul.mubr.bf16.gmra.mxu0 %v5527
    %v10858 = vpop.f32.mrf.mxu0
    %v10859 = vadd.f32 %v6124, %v10858
    %v10860 = vpop.f32.mrf.mxu0
    %v10861 = vpop.f32.mrf.mxu0
    %v10862 = vadd.f32 %v6124, %v10861
    %v10863 = vpop.f32.mrf.mxu0
    %10864 = vmatprep.mubr.bf16.mxu0 %v5536
    %10865 = vmatmul.mubr.bf16.gmra.mxu0 %v5535
    %v10866 = vpop.f32.mrf.mxu0
    %v10867 = vadd.f32 %v6124, %v10866
    %v10868 = vpop.f32.mrf.mxu0
    %v10869 = vpop.f32.mrf.mxu0
    %v10870 = vadd.f32 %v6124, %v10869
    %v10871 = vpop.f32.mrf.mxu0
    %10872 = vmatprep.mubr.bf16.mxu0 %v5544
    %10873 = vmatmul.mubr.bf16.gmra.mxu0 %v5543
    %v10874 = vpop.f32.mrf.mxu0
    %v10875 = vadd.f32 %v6124, %v10874
    %v10876 = vpop.f32.mrf.mxu0
    %v10877 = vpop.f32.mrf.mxu0
    %v10878 = vadd.f32 %v6124, %v10877
    %v10879 = vpop.f32.mrf.mxu0
    %10880 = vmatprep.mubr.bf16.mxu0 %v5552
    %10881 = vmatmul.mubr.bf16.gmra.mxu0 %v5551
    %v10882 = vpop.f32.mrf.mxu0
    %v10883 = vadd.f32 %v6124, %v10882
    %v10884 = vpop.f32.mrf.mxu0
    %v10885 = vpop.f32.mrf.mxu0
    %v10886 = vadd.f32 %v6124, %v10885
    %v10887 = vpop.f32.mrf.mxu0
    %10888 = vmatprep.mubr.bf16.mxu0 %v5560
    %10889 = vmatmul.mubr.bf16.gmra.mxu0 %v5559
    %v10890 = vpop.f32.mrf.mxu0
    %v10891 = vadd.f32 %v6124, %v10890
    %v10892 = vpop.f32.mrf.mxu0
    %v10893 = vpop.f32.mrf.mxu0
    %v10894 = vadd.f32 %v6124, %v10893
    %v10895 = vpop.f32.mrf.mxu0
    %10896 = vmatprep.mubr.bf16.mxu0 %v5568
    %10897 = vmatmul.mubr.bf16.gmra.mxu0 %v5567
    %v10898 = vpop.f32.mrf.mxu0
    %v10899 = vadd.f32 %v6124, %v10898
    %v10900 = vpop.f32.mrf.mxu0
    %v10901 = vpop.f32.mrf.mxu0
    %v10902 = vadd.f32 %v6124, %v10901
    %v10903 = vpop.f32.mrf.mxu0
    %10904 = vmatprep.mubr.bf16.mxu0 %v5576
    %10905 = vmatmul.mubr.bf16.gmra.mxu0 %v5575
    %v10906 = vpop.f32.mrf.mxu0
    %v10907 = vadd.f32 %v6124, %v10906
    %v10908 = vpop.f32.mrf.mxu0
    %v10909 = vpop.f32.mrf.mxu0
    %v10910 = vadd.f32 %v6124, %v10909
    %v10911 = vpop.f32.mrf.mxu0
    %10912 = vdwg.mxu0
    %10913 = vmatprep.subr.bf16.mxu0 0
    %10914 = vmatpush1.bf16.msra.mxu0 %v7707
    %10915 = vmatprep.subr.bf16.mxu0 0
    %10916 = vmatpush1.bf16.msra.mxu0 %v7700
    %10917 = vmatprep.subr.bf16.mxu0 0
    %10918 = vmatpush1.bf16.msra.mxu0 %v7693
    %10919 = vmatprep.subr.bf16.mxu0 0
    %10920 = vmatpush1.bf16.msra.mxu0 %v7686
    %10921 = vmatprep.subr.bf16.mxu0 0
    %10922 = vmatpush1.bf16.msra.mxu0 %v7679
    %10923 = vmatprep.subr.bf16.mxu0 0
    %10924 = vmatpush1.bf16.msra.mxu0 %v7672
    %10925 = vmatprep.subr.bf16.mxu0 0
    %10926 = vmatpush1.bf16.msra.mxu0 %v7665
    %10927 = vmatprep.subr.bf16.mxu0 0
    %10928 = vmatpush1.bf16.msra.mxu0 %v7658
    %10929 = vmatprep.subr.bf16.mxu0 0
    %10930 = vmatpush2.bf16.msra.mxu0 %v7763
    %10931 = vmatprep.subr.bf16.mxu0 0
    %10932 = vmatpush2.bf16.msra.mxu0 %v7756
    %10933 = vmatprep.subr.bf16.mxu0 0
    %10934 = vmatpush2.bf16.msra.mxu0 %v7749
    %10935 = vmatprep.subr.bf16.mxu0 0
    %10936 = vmatpush2.bf16.msra.mxu0 %v7742
    %10937 = vmatprep.subr.bf16.mxu0 0
    %10938 = vmatpush2.bf16.msra.mxu0 %v7735
    %10939 = vmatprep.subr.bf16.mxu0 0
    %10940 = vmatpush2.bf16.msra.mxu0 %v7728
    %10941 = vmatprep.subr.bf16.mxu0 0
    %10942 = vmatpush2.bf16.msra.mxu0 %v7721
    %10943 = vmatprep.subr.bf16.mxu0 0
    %10944 = vmatpush2.bf16.msra.mxu0 %v7714
    %10945 = vmatprep.mubr.bf16.mxu0 %v5458
    %10946 = vmatmul.mubr.bf16.gmra.mxu0 %v5457
    %v10947 = vpop.f32.mrf.mxu0
    %v10948 = vadd.f32 %v10787, %v10947
    %v10949 = vpop.f32.mrf.mxu0
    %v10950 = vpop.f32.mrf.mxu0
    %v10951 = vadd.f32 %v10790, %v10950
    %v10952 = vpop.f32.mrf.mxu0
    %10953 = vmatprep.mubr.bf16.mxu0 %v5466
    %10954 = vmatmul.mubr.bf16.gmra.mxu0 %v5465
    %v10955 = vpop.f32.mrf.mxu0
    %v10956 = vadd.f32 %v10795, %v10955
    %v10957 = vpop.f32.mrf.mxu0
    %v10958 = vpop.f32.mrf.mxu0
    %v10959 = vadd.f32 %v10798, %v10958
    %v10960 = vpop.f32.mrf.mxu0
    %10961 = vmatprep.mubr.bf16.mxu0 %v5474
    %10962 = vmatmul.mubr.bf16.gmra.mxu0 %v5473
    %v10963 = vpop.f32.mrf.mxu0
    %v10964 = vadd.f32 %v10803, %v10963
    %v10965 = vpop.f32.mrf.mxu0
    %v10966 = vpop.f32.mrf.mxu0
    %v10967 = vadd.f32 %v10806, %v10966
    %v10968 = vpop.f32.mrf.mxu0
    %10969 = vmatprep.mubr.bf16.mxu0 %v5482
    %10970 = vmatmul.mubr.bf16.gmra.mxu0 %v5481
    %v10971 = vpop.f32.mrf.mxu0
    %v10972 = vadd.f32 %v10811, %v10971
    %v10973 = vpop.f32.mrf.mxu0
    %v10974 = vpop.f32.mrf.mxu0
    %v10975 = vadd.f32 %v10814, %v10974
    %v10976 = vpop.f32.mrf.mxu0
    %10977 = vmatprep.mubr.bf16.mxu0 %v5490
    %10978 = vmatmul.mubr.bf16.gmra.mxu0 %v5489
    %v10979 = vpop.f32.mrf.mxu0
    %v10980 = vadd.f32 %v10819, %v10979
    %v10981 = vpop.f32.mrf.mxu0
    %v10982 = vpop.f32.mrf.mxu0
    %v10983 = vadd.f32 %v10822, %v10982
    %v10984 = vpop.f32.mrf.mxu0
    %10985 = vmatprep.mubr.bf16.mxu0 %v5498
    %10986 = vmatmul.mubr.bf16.gmra.mxu0 %v5497
    %v10987 = vpop.f32.mrf.mxu0
    %v10988 = vadd.f32 %v10827, %v10987
    %v10989 = vpop.f32.mrf.mxu0
    %v10990 = vpop.f32.mrf.mxu0
    %v10991 = vadd.f32 %v10830, %v10990
    %v10992 = vpop.f32.mrf.mxu0
    %10993 = vmatprep.mubr.bf16.mxu0 %v5506
    %10994 = vmatmul.mubr.bf16.gmra.mxu0 %v5505
    %v10995 = vpop.f32.mrf.mxu0
    %v10996 = vadd.f32 %v10835, %v10995
    %v10997 = vpop.f32.mrf.mxu0
    %v10998 = vpop.f32.mrf.mxu0
    %v10999 = vadd.f32 %v10838, %v10998
    %v11000 = vpop.f32.mrf.mxu0
    %11001 = vmatprep.mubr.bf16.mxu0 %v5514
    %11002 = vmatmul.mubr.bf16.gmra.mxu0 %v5513
    %v11003 = vpop.f32.mrf.mxu0
    %v11004 = vadd.f32 %v10843, %v11003
    %v11005 = vpop.f32.mrf.mxu0
    %v11006 = vpop.f32.mrf.mxu0
    %v11007 = vadd.f32 %v10846, %v11006
    %v11008 = vpop.f32.mrf.mxu0
    %11009 = vmatprep.mubr.bf16.mxu0 %v5522
    %11010 = vmatmul.mubr.bf16.gmra.mxu0 %v5521
    %v11011 = vpop.f32.mrf.mxu0
    %v11012 = vadd.f32 %v10851, %v11011
    %v11013 = vpop.f32.mrf.mxu0
    %v11014 = vpop.f32.mrf.mxu0
    %v11015 = vadd.f32 %v10854, %v11014
    %v11016 = vpop.f32.mrf.mxu0
    %11017 = vmatprep.mubr.bf16.mxu0 %v5530
    %11018 = vmatmul.mubr.bf16.gmra.mxu0 %v5529
    %v11019 = vpop.f32.mrf.mxu0
    %v11020 = vadd.f32 %v10859, %v11019
    %v11021 = vpop.f32.mrf.mxu0
    %v11022 = vpop.f32.mrf.mxu0
    %v11023 = vadd.f32 %v10862, %v11022
    %v11024 = vpop.f32.mrf.mxu0
    %11025 = vmatprep.mubr.bf16.mxu0 %v5538
    %11026 = vmatmul.mubr.bf16.gmra.mxu0 %v5537
    %v11027 = vpop.f32.mrf.mxu0
    %v11028 = vadd.f32 %v10867, %v11027
    %v11029 = vpop.f32.mrf.mxu0
    %v11030 = vpop.f32.mrf.mxu0
    %v11031 = vadd.f32 %v10870, %v11030
    %v11032 = vpop.f32.mrf.mxu0
    %11033 = vmatprep.mubr.bf16.mxu0 %v5546
    %11034 = vmatmul.mubr.bf16.gmra.mxu0 %v5545
    %v11035 = vpop.f32.mrf.mxu0
    %v11036 = vadd.f32 %v10875, %v11035
    %v11037 = vpop.f32.mrf.mxu0
    %v11038 = vpop.f32.mrf.mxu0
    %v11039 = vadd.f32 %v10878, %v11038
    %v11040 = vpop.f32.mrf.mxu0
    %11041 = vmatprep.mubr.bf16.mxu0 %v5554
    %11042 = vmatmul.mubr.bf16.gmra.mxu0 %v5553
    %v11043 = vpop.f32.mrf.mxu0
    %v11044 = vadd.f32 %v10883, %v11043
    %v11045 = vpop.f32.mrf.mxu0
    %v11046 = vpop.f32.mrf.mxu0
    %v11047 = vadd.f32 %v10886, %v11046
    %v11048 = vpop.f32.mrf.mxu0
    %11049 = vmatprep.mubr.bf16.mxu0 %v5562
    %11050 = vmatmul.mubr.bf16.gmra.mxu0 %v5561
    %v11051 = vpop.f32.mrf.mxu0
    %v11052 = vadd.f32 %v10891, %v11051
    %v11053 = vpop.f32.mrf.mxu0
    %v11054 = vpop.f32.mrf.mxu0
    %v11055 = vadd.f32 %v10894, %v11054
    %v11056 = vpop.f32.mrf.mxu0
    %11057 = vmatprep.mubr.bf16.mxu0 %v5570
    %11058 = vmatmul.mubr.bf16.gmra.mxu0 %v5569
    %v11059 = vpop.f32.mrf.mxu0
    %v11060 = vadd.f32 %v10899, %v11059
    %v11061 = vpop.f32.mrf.mxu0
    %v11062 = vpop.f32.mrf.mxu0
    %v11063 = vadd.f32 %v10902, %v11062
    %v11064 = vpop.f32.mrf.mxu0
    %11065 = vmatprep.mubr.bf16.mxu0 %v5578
    %11066 = vmatmul.mubr.bf16.gmra.mxu0 %v5577
    %v11067 = vpop.f32.mrf.mxu0
    %v11068 = vadd.f32 %v10907, %v11067
    %v11069 = vpop.f32.mrf.mxu0
    %v11070 = vpop.f32.mrf.mxu0
    %v11071 = vadd.f32 %v10910, %v11070
    %v11072 = vpop.f32.mrf.mxu0
    %11073 = vdwg.mxu0
    %11074 = vmatprep.subr.bf16.mxu0 0
    %11075 = vmatpush1.bf16.msra.mxu0 %v7819
    %11076 = vmatprep.subr.bf16.mxu0 0
    %11077 = vmatpush1.bf16.msra.mxu0 %v7812
    %11078 = vmatprep.subr.bf16.mxu0 0
    %11079 = vmatpush1.bf16.msra.mxu0 %v7805
    %11080 = vmatprep.subr.bf16.mxu0 0
    %11081 = vmatpush1.bf16.msra.mxu0 %v7798
    %11082 = vmatprep.subr.bf16.mxu0 0
    %11083 = vmatpush1.bf16.msra.mxu0 %v7791
    %11084 = vmatprep.subr.bf16.mxu0 0
    %11085 = vmatpush1.bf16.msra.mxu0 %v7784
    %11086 = vmatprep.subr.bf16.mxu0 0
    %11087 = vmatpush1.bf16.msra.mxu0 %v7777
    %11088 = vmatprep.subr.bf16.mxu0 0
    %11089 = vmatpush1.bf16.msra.mxu0 %v7770
    %11090 = vmatprep.subr.bf16.mxu0 0
    %11091 = vmatpush2.bf16.msra.mxu0 %v7875
    %11092 = vmatprep.subr.bf16.mxu0 0
    %11093 = vmatpush2.bf16.msra.mxu0 %v7868
    %11094 = vmatprep.subr.bf16.mxu0 0
    %11095 = vmatpush2.bf16.msra.mxu0 %v7861
    %11096 = vmatprep.subr.bf16.mxu0 0
    %11097 = vmatpush2.bf16.msra.mxu0 %v7854
    %11098 = vmatprep.subr.bf16.mxu0 0
    %11099 = vmatpush2.bf16.msra.mxu0 %v7847
    %11100 = vmatprep.subr.bf16.mxu0 0
    %11101 = vmatpush2.bf16.msra.mxu0 %v7840
    %11102 = vmatprep.subr.bf16.mxu0 0
    %11103 = vmatpush2.bf16.msra.mxu0 %v7833
    %11104 = vmatprep.subr.bf16.mxu0 0
    %11105 = vmatpush2.bf16.msra.mxu0 %v7826
    %11106 = vmatprep.mubr.bf16.mxu0 %v5460
    %11107 = vmatmul.mubr.bf16.gmra.mxu0 %v5459
    %v11108 = vpop.f32.mrf.mxu0
    %v11109 = vadd.f32 %v10948, %v11108
    %v11110 = vpop.f32.mrf.mxu0
    %v11111 = vpop.f32.mrf.mxu0
    %v11112 = vadd.f32 %v10951, %v11111
    %v11113 = vpop.f32.mrf.mxu0
    %11114 = vmatprep.mubr.bf16.mxu0 %v5468
    %11115 = vmatmul.mubr.bf16.gmra.mxu0 %v5467
    %v11116 = vpop.f32.mrf.mxu0
    %v11117 = vadd.f32 %v10956, %v11116
    %v11118 = vpop.f32.mrf.mxu0
    %v11119 = vpop.f32.mrf.mxu0
    %v11120 = vadd.f32 %v10959, %v11119
    %v11121 = vpop.f32.mrf.mxu0
    %11122 = vmatprep.mubr.bf16.mxu0 %v5476
    %11123 = vmatmul.mubr.bf16.gmra.mxu0 %v5475
    %v11124 = vpop.f32.mrf.mxu0
    %v11125 = vadd.f32 %v10964, %v11124
    %v11126 = vpop.f32.mrf.mxu0
    %v11127 = vpop.f32.mrf.mxu0
    %v11128 = vadd.f32 %v10967, %v11127
    %v11129 = vpop.f32.mrf.mxu0
    %11130 = vmatprep.mubr.bf16.mxu0 %v5484
    %11131 = vmatmul.mubr.bf16.gmra.mxu0 %v5483
    %v11132 = vpop.f32.mrf.mxu0
    %v11133 = vadd.f32 %v10972, %v11132
    %v11134 = vpop.f32.mrf.mxu0
    %v11135 = vpop.f32.mrf.mxu0
    %v11136 = vadd.f32 %v10975, %v11135
    %v11137 = vpop.f32.mrf.mxu0
    %11138 = vmatprep.mubr.bf16.mxu0 %v5492
    %11139 = vmatmul.mubr.bf16.gmra.mxu0 %v5491
    %v11140 = vpop.f32.mrf.mxu0
    %v11141 = vadd.f32 %v10980, %v11140
    %v11142 = vpop.f32.mrf.mxu0
    %v11143 = vpop.f32.mrf.mxu0
    %v11144 = vadd.f32 %v10983, %v11143
    %v11145 = vpop.f32.mrf.mxu0
    %11146 = vmatprep.mubr.bf16.mxu0 %v5500
    %11147 = vmatmul.mubr.bf16.gmra.mxu0 %v5499
    %v11148 = vpop.f32.mrf.mxu0
    %v11149 = vadd.f32 %v10988, %v11148
    %v11150 = vpop.f32.mrf.mxu0
    %v11151 = vpop.f32.mrf.mxu0
    %v11152 = vadd.f32 %v10991, %v11151
    %v11153 = vpop.f32.mrf.mxu0
    %11154 = vmatprep.mubr.bf16.mxu0 %v5508
    %11155 = vmatmul.mubr.bf16.gmra.mxu0 %v5507
    %v11156 = vpop.f32.mrf.mxu0
    %v11157 = vadd.f32 %v10996, %v11156
    %v11158 = vpop.f32.mrf.mxu0
    %v11159 = vpop.f32.mrf.mxu0
    %v11160 = vadd.f32 %v10999, %v11159
    %v11161 = vpop.f32.mrf.mxu0
    %11162 = vmatprep.mubr.bf16.mxu0 %v5516
    %11163 = vmatmul.mubr.bf16.gmra.mxu0 %v5515
    %v11164 = vpop.f32.mrf.mxu0
    %v11165 = vadd.f32 %v11004, %v11164
    %v11166 = vpop.f32.mrf.mxu0
    %v11167 = vpop.f32.mrf.mxu0
    %v11168 = vadd.f32 %v11007, %v11167
    %v11169 = vpop.f32.mrf.mxu0
    %11170 = vmatprep.mubr.bf16.mxu0 %v5524
    %11171 = vmatmul.mubr.bf16.gmra.mxu0 %v5523
    %v11172 = vpop.f32.mrf.mxu0
    %v11173 = vadd.f32 %v11012, %v11172
    %v11174 = vpop.f32.mrf.mxu0
    %v11175 = vpop.f32.mrf.mxu0
    %v11176 = vadd.f32 %v11015, %v11175
    %v11177 = vpop.f32.mrf.mxu0
    %11178 = vmatprep.mubr.bf16.mxu0 %v5532
    %11179 = vmatmul.mubr.bf16.gmra.mxu0 %v5531
    %v11180 = vpop.f32.mrf.mxu0
    %v11181 = vadd.f32 %v11020, %v11180
    %v11182 = vpop.f32.mrf.mxu0
    %v11183 = vpop.f32.mrf.mxu0
    %v11184 = vadd.f32 %v11023, %v11183
    %v11185 = vpop.f32.mrf.mxu0
    %11186 = vmatprep.mubr.bf16.mxu0 %v5540
    %11187 = vmatmul.mubr.bf16.gmra.mxu0 %v5539
    %v11188 = vpop.f32.mrf.mxu0
    %v11189 = vadd.f32 %v11028, %v11188
    %v11190 = vpop.f32.mrf.mxu0
    %v11191 = vpop.f32.mrf.mxu0
    %v11192 = vadd.f32 %v11031, %v11191
    %v11193 = vpop.f32.mrf.mxu0
    %11194 = vmatprep.mubr.bf16.mxu0 %v5548
    %11195 = vmatmul.mubr.bf16.gmra.mxu0 %v5547
    %v11196 = vpop.f32.mrf.mxu0
    %v11197 = vadd.f32 %v11036, %v11196
    %v11198 = vpop.f32.mrf.mxu0
    %v11199 = vpop.f32.mrf.mxu0
    %v11200 = vadd.f32 %v11039, %v11199
    %v11201 = vpop.f32.mrf.mxu0
    %11202 = vmatprep.mubr.bf16.mxu0 %v5556
    %11203 = vmatmul.mubr.bf16.gmra.mxu0 %v5555
    %v11204 = vpop.f32.mrf.mxu0
    %v11205 = vadd.f32 %v11044, %v11204
    %v11206 = vpop.f32.mrf.mxu0
    %v11207 = vpop.f32.mrf.mxu0
    %v11208 = vadd.f32 %v11047, %v11207
    %v11209 = vpop.f32.mrf.mxu0
    %11210 = vmatprep.mubr.bf16.mxu0 %v5564
    %11211 = vmatmul.mubr.bf16.gmra.mxu0 %v5563
    %v11212 = vpop.f32.mrf.mxu0
    %v11213 = vadd.f32 %v11052, %v11212
    %v11214 = vpop.f32.mrf.mxu0
    %v11215 = vpop.f32.mrf.mxu0
    %v11216 = vadd.f32 %v11055, %v11215
    %v11217 = vpop.f32.mrf.mxu0
    %11218 = vmatprep.mubr.bf16.mxu0 %v5572
    %11219 = vmatmul.mubr.bf16.gmra.mxu0 %v5571
    %v11220 = vpop.f32.mrf.mxu0
    %v11221 = vadd.f32 %v11060, %v11220
    %v11222 = vpop.f32.mrf.mxu0
    %v11223 = vpop.f32.mrf.mxu0
    %v11224 = vadd.f32 %v11063, %v11223
    %v11225 = vpop.f32.mrf.mxu0
    %11226 = vmatprep.mubr.bf16.mxu0 %v5580
    %11227 = vmatmul.mubr.bf16.gmra.mxu0 %v5579
    %v11228 = vpop.f32.mrf.mxu0
    %v11229 = vadd.f32 %v11068, %v11228
    %v11230 = vpop.f32.mrf.mxu0
    %v11231 = vpop.f32.mrf.mxu0
    %v11232 = vadd.f32 %v11071, %v11231
    %v11233 = vpop.f32.mrf.mxu0
    %11234 = vdwg.mxu0
    %11235 = vmatprep.subr.bf16.mxu0 0
    %11236 = vmatpush1.bf16.msra.mxu0 %v7931
    %11237 = vmatprep.subr.bf16.mxu0 0
    %11238 = vmatpush1.bf16.msra.mxu0 %v7924
    %11239 = vmatprep.subr.bf16.mxu0 0
    %11240 = vmatpush1.bf16.msra.mxu0 %v7917
    %11241 = vmatprep.subr.bf16.mxu0 0
    %11242 = vmatpush1.bf16.msra.mxu0 %v7910
    %11243 = vmatprep.subr.bf16.mxu0 0
    %11244 = vmatpush1.bf16.msra.mxu0 %v7903
    %11245 = vmatprep.subr.bf16.mxu0 0
    %11246 = vmatpush1.bf16.msra.mxu0 %v7896
    %11247 = vmatprep.subr.bf16.mxu0 0
    %11248 = vmatpush1.bf16.msra.mxu0 %v7889
    %11249 = vmatprep.subr.bf16.mxu0 0
    %11250 = vmatpush1.bf16.msra.mxu0 %v7882
    %11251 = vmatprep.subr.bf16.mxu0 0
    %11252 = vmatpush2.bf16.msra.mxu0 %v7987
    %11253 = vmatprep.subr.bf16.mxu0 0
    %11254 = vmatpush2.bf16.msra.mxu0 %v7980
    %11255 = vmatprep.subr.bf16.mxu0 0
    %11256 = vmatpush2.bf16.msra.mxu0 %v7973
    %11257 = vmatprep.subr.bf16.mxu0 0
    %11258 = vmatpush2.bf16.msra.mxu0 %v7966
    %11259 = vmatprep.subr.bf16.mxu0 0
    %11260 = vmatpush2.bf16.msra.mxu0 %v7959
    %11261 = vmatprep.subr.bf16.mxu0 0
    %11262 = vmatpush2.bf16.msra.mxu0 %v7952
    %11263 = vmatprep.subr.bf16.mxu0 0
    %11264 = vmatpush2.bf16.msra.mxu0 %v7945
    %11265 = vmatprep.subr.bf16.mxu0 0
    %11266 = vmatpush2.bf16.msra.mxu0 %v7938
    %11267 = vmatprep.mubr.bf16.mxu0 %v5462
    %11268 = vmatmul.mubr.bf16.gmra.mxu0 %v5461
    %v11269 = vpop.f32.mrf.mxu0
    %v11270 = vadd.f32 %v11109, %v11269
    %v11271 = vpop.f32.mrf.mxu0
    %v11272 = vpop.f32.mrf.mxu0
    %v11273 = vadd.f32 %v11112, %v11272
    %v11274 = vpop.f32.mrf.mxu0
    %11275 = vmatprep.mubr.bf16.mxu0 %v5470
    %11276 = vmatmul.mubr.bf16.gmra.mxu0 %v5469
    %v11277 = vpop.f32.mrf.mxu0
    %v11278 = vadd.f32 %v11117, %v11277
    %v11279 = vpop.f32.mrf.mxu0
    %v11280 = vpop.f32.mrf.mxu0
    %v11281 = vadd.f32 %v11120, %v11280
    %v11282 = vpop.f32.mrf.mxu0
    %11283 = vmatprep.mubr.bf16.mxu0 %v5478
    %11284 = vmatmul.mubr.bf16.gmra.mxu0 %v5477
    %v11285 = vpop.f32.mrf.mxu0
    %v11286 = vadd.f32 %v11125, %v11285
    %v11287 = vpop.f32.mrf.mxu0
    %v11288 = vpop.f32.mrf.mxu0
    %v11289 = vadd.f32 %v11128, %v11288
    %v11290 = vpop.f32.mrf.mxu0
    %11291 = vmatprep.mubr.bf16.mxu0 %v5486
    %11292 = vmatmul.mubr.bf16.gmra.mxu0 %v5485
    %v11293 = vpop.f32.mrf.mxu0
    %v11294 = vadd.f32 %v11133, %v11293
    %v11295 = vpop.f32.mrf.mxu0
    %v11296 = vpop.f32.mrf.mxu0
    %v11297 = vadd.f32 %v11136, %v11296
    %v11298 = vpop.f32.mrf.mxu0
    %11299 = vmatprep.mubr.bf16.mxu0 %v5494
    %11300 = vmatmul.mubr.bf16.gmra.mxu0 %v5493
    %v11301 = vpop.f32.mrf.mxu0
    %v11302 = vadd.f32 %v11141, %v11301
    %v11303 = vpop.f32.mrf.mxu0
    %v11304 = vpop.f32.mrf.mxu0
    %v11305 = vadd.f32 %v11144, %v11304
    %v11306 = vpop.f32.mrf.mxu0
    %11307 = vmatprep.mubr.bf16.mxu0 %v5502
    %11308 = vmatmul.mubr.bf16.gmra.mxu0 %v5501
    %v11309 = vpop.f32.mrf.mxu0
    %v11310 = vadd.f32 %v11149, %v11309
    %v11311 = vpop.f32.mrf.mxu0
    %v11312 = vpop.f32.mrf.mxu0
    %v11313 = vadd.f32 %v11152, %v11312
    %v11314 = vpop.f32.mrf.mxu0
    %11315 = vmatprep.mubr.bf16.mxu0 %v5510
    %11316 = vmatmul.mubr.bf16.gmra.mxu0 %v5509
    %v11317 = vpop.f32.mrf.mxu0
    %v11318 = vadd.f32 %v11157, %v11317
    %v11319 = vpop.f32.mrf.mxu0
    %v11320 = vpop.f32.mrf.mxu0
    %v11321 = vadd.f32 %v11160, %v11320
    %v11322 = vpop.f32.mrf.mxu0
    %11323 = vmatprep.mubr.bf16.mxu0 %v5518
    %11324 = vmatmul.mubr.bf16.gmra.mxu0 %v5517
    %v11325 = vpop.f32.mrf.mxu0
    %v11326 = vadd.f32 %v11165, %v11325
    %v11327 = vpop.f32.mrf.mxu0
    %v11328 = vpop.f32.mrf.mxu0
    %v11329 = vadd.f32 %v11168, %v11328
    %v11330 = vpop.f32.mrf.mxu0
    %11331 = vmatprep.mubr.bf16.mxu0 %v5526
    %11332 = vmatmul.mubr.bf16.gmra.mxu0 %v5525
    %v11333 = vpop.f32.mrf.mxu0
    %v11334 = vadd.f32 %v11173, %v11333
    %v11335 = vpop.f32.mrf.mxu0
    %v11336 = vpop.f32.mrf.mxu0
    %v11337 = vadd.f32 %v11176, %v11336
    %v11338 = vpop.f32.mrf.mxu0
    %11339 = vmatprep.mubr.bf16.mxu0 %v5534
    %11340 = vmatmul.mubr.bf16.gmra.mxu0 %v5533
    %v11341 = vpop.f32.mrf.mxu0
    %v11342 = vadd.f32 %v11181, %v11341
    %v11343 = vpop.f32.mrf.mxu0
    %v11344 = vpop.f32.mrf.mxu0
    %v11345 = vadd.f32 %v11184, %v11344
    %v11346 = vpop.f32.mrf.mxu0
    %11347 = vmatprep.mubr.bf16.mxu0 %v5542
    %11348 = vmatmul.mubr.bf16.gmra.mxu0 %v5541
    %v11349 = vpop.f32.mrf.mxu0
    %v11350 = vadd.f32 %v11189, %v11349
    %v11351 = vpop.f32.mrf.mxu0
    %v11352 = vpop.f32.mrf.mxu0
    %v11353 = vadd.f32 %v11192, %v11352
    %v11354 = vpop.f32.mrf.mxu0
    %11355 = vmatprep.mubr.bf16.mxu0 %v5550
    %11356 = vmatmul.mubr.bf16.gmra.mxu0 %v5549
    %v11357 = vpop.f32.mrf.mxu0
    %v11358 = vadd.f32 %v11197, %v11357
    %v11359 = vpop.f32.mrf.mxu0
    %v11360 = vpop.f32.mrf.mxu0
    %v11361 = vadd.f32 %v11200, %v11360
    %v11362 = vpop.f32.mrf.mxu0
    %11363 = vmatprep.mubr.bf16.mxu0 %v5558
    %11364 = vmatmul.mubr.bf16.gmra.mxu0 %v5557
    %v11365 = vpop.f32.mrf.mxu0
    %v11366 = vadd.f32 %v11205, %v11365
    %v11367 = vpop.f32.mrf.mxu0
    %v11368 = vpop.f32.mrf.mxu0
    %v11369 = vadd.f32 %v11208, %v11368
    %v11370 = vpop.f32.mrf.mxu0
    %11371 = vmatprep.mubr.bf16.mxu0 %v5566
    %11372 = vmatmul.mubr.bf16.gmra.mxu0 %v5565
    %v11373 = vpop.f32.mrf.mxu0
    %v11374 = vadd.f32 %v11213, %v11373
    %v11375 = vpop.f32.mrf.mxu0
    %v11376 = vpop.f32.mrf.mxu0
    %v11377 = vadd.f32 %v11216, %v11376
    %v11378 = vpop.f32.mrf.mxu0
    %11379 = vmatprep.mubr.bf16.mxu0 %v5574
    %11380 = vmatmul.mubr.bf16.gmra.mxu0 %v5573
    %v11381 = vpop.f32.mrf.mxu0
    %v11382 = vadd.f32 %v11221, %v11381
    %v11383 = vpop.f32.mrf.mxu0
    %v11384 = vpop.f32.mrf.mxu0
    %v11385 = vadd.f32 %v11224, %v11384
    %v11386 = vpop.f32.mrf.mxu0
    %11387 = vmatprep.mubr.bf16.mxu0 %v5582
    %11388 = vmatmul.mubr.bf16.gmra.mxu0 %v5581
    %v11389 = vpop.f32.mrf.mxu0
    %v11390 = vadd.f32 %v11229, %v11389
    %v11391 = vpop.f32.mrf.mxu0
    %v11392 = vpop.f32.mrf.mxu0
    %v11393 = vadd.f32 %v11232, %v11392
    %v11394 = vpop.f32.mrf.mxu0
    %11395 = vdwg.mxu0
    %v11396 = vtanh.pop %v9050
    %v11397 = vtanh.pop %v9052
    %v11398 = vtanh.pop %v9822
    %v11399 = vtanh.pop %v9824
    %v11400 = vtanh.pop %v10594
    %v11401 = vtanh.pop %v10596
    %v11402 = vtanh.pop %v11270
    %v11403 = vtanh.pop %v9054
    %v11404 = vtanh.pop %v9056
    %v11405 = vtanh.pop %v9826
    %v11406 = vtanh.pop %v9828
    %v11407 = vtanh.pop %v10598
    %v11408 = vtanh.pop %v10600
    %v11409 = vtanh.pop %v11273
    %v11410 = vtanh.pop %v9060
    %v11411 = vtanh.pop %v9062
    %v11412 = vtanh.pop %v9832
    %v11413 = vtanh.pop %v9834
    %v11414 = vtanh.pop %v10604
    %v11415 = vtanh.pop %v10606
    %v11416 = vtanh.pop %v11278
    %v11417 = vtanh.pop %v9064
    %v11418 = vtanh.pop %v9066
    %v11419 = vtanh.pop %v9836
    %v11420 = vtanh.pop %v9838
    %v11421 = vtanh.pop %v10608
    %v11422 = vtanh.pop %v10610
    %v11423 = vtanh.pop %v11281
    %v11424 = vtanh.pop %v9070
    %v11425 = vtanh.pop %v9072
    %v11426 = vtanh.pop %v9842
    %v11427 = vtanh.pop %v9844
    %v11428 = vtanh.pop %v10614
    %v11429 = vtanh.pop %v10616
    %v11430 = vtanh.pop %v11286
    %v11431 = vtanh.pop %v9074
    %v11432 = vtanh.pop %v9076
    %v11433 = vtanh.pop %v9846
    %v11434 = vtanh.pop %v9848
    %v11435 = vtanh.pop %v10618
    %v11436 = vtanh.pop %v10620
    %v11437 = vtanh.pop %v11289
    %v11438 = vtanh.pop %v9080
    %v11439 = vtanh.pop %v9082
    %v11440 = vtanh.pop %v9852
    %v11441 = vtanh.pop %v9854
    %v11442 = vtanh.pop %v10624
    %v11443 = vtanh.pop %v10626
    %v11444 = vtanh.pop %v11294
    %v11445 = vtanh.pop %v9084
    %v11446 = vtanh.pop %v9086
    %v11447 = vtanh.pop %v9856
    %v11448 = vtanh.pop %v9858
    %v11449 = vtanh.pop %v10628
    %v11450 = vtanh.pop %v10630
    %v11451 = vtanh.pop %v11297
    %v11452 = vtanh.pop %v9090
    %v11453 = vtanh.pop %v9092
    %v11454 = vtanh.pop %v9862
    %v11455 = vtanh.pop %v9864
    %v11456 = vtanh.pop %v10634
    %v11457 = vtanh.pop %v10636
    %v11458 = vtanh.pop %v11302
    %v11459 = vtanh.pop %v9094
    %v11460 = vtanh.pop %v9096
    %v11461 = vtanh.pop %v9866
    %v11462 = vtanh.pop %v9868
    %v11463 = vtanh.pop %v10638
    %v11464 = vtanh.pop %v10640
    %v11465 = vtanh.pop %v11305
    %v11466 = vtanh.pop %v9100
    %v11467 = vtanh.pop %v9102
    %v11468 = vtanh.pop %v9872
    %v11469 = vtanh.pop %v9874
    %v11470 = vtanh.pop %v10644
    %v11471 = vtanh.pop %v10646
    %v11472 = vtanh.pop %v11310
    %v11473 = vtanh.pop %v9104
    %v11474 = vtanh.pop %v9106
    %v11475 = vtanh.pop %v9876
    %v11476 = vtanh.pop %v9878
    %v11477 = vtanh.pop %v10648
    %v11478 = vtanh.pop %v10650
    %v11479 = vtanh.pop %v11313
    %v11480 = vtanh.pop %v9110
    %v11481 = vtanh.pop %v9112
    %v11482 = vtanh.pop %v9882
    %v11483 = vtanh.pop %v9884
    %v11484 = vtanh.pop %v10654
    %v11485 = vtanh.pop %v10656
    %v11486 = vtanh.pop %v11318
    %v11487 = vtanh.pop %v9114
    %v11488 = vtanh.pop %v9116
    %v11489 = vtanh.pop %v9886
    %v11490 = vtanh.pop %v9888
    %v11491 = vtanh.pop %v10658
    %v11492 = vtanh.pop %v10660
    %v11493 = vtanh.pop %v11321
    %v11494 = vtanh.pop %v9120
    %v11495 = vtanh.pop %v9122
    %v11496 = vtanh.pop %v9892
    %v11497 = vtanh.pop %v9894
    %v11498 = vtanh.pop %v10664
    %v11499 = vtanh.pop %v10666
    %v11500 = vtanh.pop %v11326
    %v11501 = vtanh.pop %v9124
    %v11502 = vtanh.pop %v9126
    %v11503 = vtanh.pop %v9896
    %v11504 = vtanh.pop %v9898
    %v11505 = vtanh.pop %v10668
    %v11506 = vtanh.pop %v10670
    %v11507 = vtanh.pop %v11329
    %v11508 = vtanh.pop %v9130
    %v11509 = vtanh.pop %v9132
    %v11510 = vtanh.pop %v9902
    %v11511 = vtanh.pop %v9904
    %v11512 = vtanh.pop %v10674
    %v11513 = vtanh.pop %v10676
    %v11514 = vtanh.pop %v11334
    %v11515 = vtanh.pop %v9134
    %v11516 = vtanh.pop %v9136
    %v11517 = vtanh.pop %v9906
    %v11518 = vtanh.pop %v9908
    %v11519 = vtanh.pop %v10678
    %v11520 = vtanh.pop %v10680
    %v11521 = vtanh.pop %v11337
    %v11522 = vtanh.pop %v9140
    %v11523 = vtanh.pop %v9142
    %v11524 = vtanh.pop %v9912
    %v11525 = vtanh.pop %v9914
    %v11526 = vtanh.pop %v10684
    %v11527 = vtanh.pop %v10686
    %v11528 = vtanh.pop %v11342
    %v11529 = vtanh.pop %v9144
    %v11530 = vtanh.pop %v9146
    %v11531 = vtanh.pop %v9916
    %v11532 = vtanh.pop %v9918
    %v11533 = vtanh.pop %v10688
    %v11534 = vtanh.pop %v10690
    %v11535 = vtanh.pop %v11345
    %v11536 = vtanh.pop %v9150
    %v11537 = vtanh.pop %v9152
    %v11538 = vtanh.pop %v9922
    %v11539 = vtanh.pop %v9924
    %v11540 = vtanh.pop %v10694
    %v11541 = vtanh.pop %v10696
    %v11542 = vtanh.pop %v11350
    %v11543 = vtanh.pop %v9154
    %v11544 = vtanh.pop %v9156
    %v11545 = vtanh.pop %v9926
    %v11546 = vtanh.pop %v9928
    %v11547 = vtanh.pop %v10698
    %v11548 = vtanh.pop %v10700
    %v11549 = vtanh.pop %v11353
    %v11550 = vtanh.pop %v9160
    %v11551 = vtanh.pop %v9162
    %v11552 = vtanh.pop %v9932
    %v11553 = vtanh.pop %v9934
    %v11554 = vtanh.pop %v10704
    %v11555 = vtanh.pop %v10706
    %v11556 = vtanh.pop %v11358
    %v11557 = vtanh.pop %v9164
    %v11558 = vtanh.pop %v9166
    %v11559 = vtanh.pop %v9936
    %v11560 = vtanh.pop %v9938
    %v11561 = vtanh.pop %v10708
    %v11562 = vtanh.pop %v10710
    %v11563 = vtanh.pop %v11361
    %v11564 = vtanh.pop %v9170
    %v11565 = vtanh.pop %v9172
    %v11566 = vtanh.pop %v9942
    %v11567 = vtanh.pop %v9944
    %v11568 = vtanh.pop %v10714
    %v11569 = vtanh.pop %v10716
    %v11570 = vtanh.pop %v11366
    %v11571 = vtanh.pop %v9174
    %v11572 = vtanh.pop %v9176
    %v11573 = vtanh.pop %v9946
    %v11574 = vtanh.pop %v9948
    %v11575 = vtanh.pop %v10718
    %v11576 = vtanh.pop %v10720
    %v11577 = vtanh.pop %v11369
    %v11578 = vtanh.pop %v9180
    %v11579 = vtanh.pop %v9182
    %v11580 = vtanh.pop %v9952
    %v11581 = vtanh.pop %v9954
    %v11582 = vtanh.pop %v10724
    %v11583 = vtanh.pop %v10726
    %v11584 = vtanh.pop %v11374
    %v11585 = vtanh.pop %v9184
    %v11586 = vtanh.pop %v9186
    %v11587 = vtanh.pop %v9956
    %v11588 = vtanh.pop %v9958
    %v11589 = vtanh.pop %v10728
    %v11590 = vtanh.pop %v10730
    %v11591 = vtanh.pop %v11377
    %v11592 = vtanh.pop %v9190
    %v11593 = vtanh.pop %v9192
    %v11594 = vtanh.pop %v9962
    %v11595 = vtanh.pop %v9964
    %v11596 = vtanh.pop %v10734
    %v11597 = vtanh.pop %v10736
    %v11598 = vtanh.pop %v11382
    %v11599 = vtanh.pop %v9194
    %v11600 = vtanh.pop %v9196
    %v11601 = vtanh.pop %v9966
    %v11602 = vtanh.pop %v9968
    %v11603 = vtanh.pop %v10738
    %v11604 = vtanh.pop %v10740
    %v11605 = vtanh.pop %v11385
    %v11606 = vtanh.pop %v9200
    %v11607 = vtanh.pop %v9202
    %v11608 = vtanh.pop %v9972
    %v11609 = vtanh.pop %v9974
    %v11610 = vtanh.pop %v10744
    %v11611 = vtanh.pop %v10746
    %v11612 = vtanh.pop %v11390
    %v11613 = vtanh.pop %v9204
    %v11614 = vtanh.pop %v9206
    %v11615 = vtanh.pop %v9976
    %v11616 = vtanh.pop %v9978
    %v11617 = vtanh.pop %v10748
    %v11618 = vtanh.pop %v10750
    %v11619 = vtanh.pop %v11393
    %11620 = vst [vmem:[#allocation16] sm:$0xff] %v11396
    %11621 = vst [vmem:[#allocation16 + $0x8] sm:$0xff] %v11397
    %11622 = vst [vmem:[#allocation16 + $0x10] sm:$0xff] %v11398
    %11623 = vst [vmem:[#allocation16 + $0x18] sm:$0xff] %v11399
    %11624 = vst [vmem:[#allocation16 + $0x20] sm:$0xff] %v11400
    %11625 = vst [vmem:[#allocation16 + $0x28] sm:$0xff] %v11401
    %11626 = vst [vmem:[#allocation16 + $0x30] sm:$0xff] %v11402
    %11627 = vst [vmem:[#allocation16 + $0x38] sm:$0xff] %v11403
    %11628 = vst [vmem:[#allocation16 + $0x40] sm:$0xff] %v11404
    %11629 = vst [vmem:[#allocation16 + $0x48] sm:$0xff] %v11405
    %11630 = vst [vmem:[#allocation16 + $0x50] sm:$0xff] %v11406
    %11631 = vst [vmem:[#allocation16 + $0x58] sm:$0xff] %v11407
    %11632 = vst [vmem:[#allocation16 + $0x60] sm:$0xff] %v11408
    %11633 = vst [vmem:[#allocation16 + $0x68] sm:$0xff] %v11409
    %11634 = vst [vmem:[#allocation16 + $0x70] sm:$0xff] %v11410
    %11635 = vst [vmem:[#allocation16 + $0x78] sm:$0xff] %v11411
    %11636 = vst [vmem:[#allocation16 + $0x80] sm:$0xff] %v11412
    %11637 = vst [vmem:[#allocation16 + $0x88] sm:$0xff] %v11413
    %11638 = vst [vmem:[#allocation16 + $0x90] sm:$0xff] %v11414
    %11639 = vst [vmem:[#allocation16 + $0x98] sm:$0xff] %v11415
    %11640 = vst [vmem:[#allocation16 + $0xa0] sm:$0xff] %v11416
    %11641 = vst [vmem:[#allocation16 + $0xa8] sm:$0xff] %v11417
    %11642 = vst [vmem:[#allocation16 + $0xb0] sm:$0xff] %v11418
    %11643 = vst [vmem:[#allocation16 + $0xb8] sm:$0xff] %v11419
    %11644 = vst [vmem:[#allocation16 + $0xc0] sm:$0xff] %v11420
    %11645 = vst [vmem:[#allocation16 + $0xc8] sm:$0xff] %v11421
    %11646 = vst [vmem:[#allocation16 + $0xd0] sm:$0xff] %v11422
    %11647 = vst [vmem:[#allocation16 + $0xd8] sm:$0xff] %v11423
    %11648 = vst [vmem:[#allocation16 + $0xe0] sm:$0xff] %v11424
    %11649 = vst [vmem:[#allocation16 + $0xe8] sm:$0xff] %v11425
    %11650 = vst [vmem:[#allocation16 + $0xf0] sm:$0xff] %v11426
    %11651 = vst [vmem:[#allocation16 + $0xf8] sm:$0xff] %v11427
    %11652 = vst [vmem:[#allocation16 + $0x100] sm:$0xff] %v11428
    %11653 = vst [vmem:[#allocation16 + $0x108] sm:$0xff] %v11429
    %11654 = vst [vmem:[#allocation16 + $0x110] sm:$0xff] %v11430
    %11655 = vst [vmem:[#allocation16 + $0x118] sm:$0xff] %v11431
    %11656 = vst [vmem:[#allocation16 + $0x120] sm:$0xff] %v11432
    %11657 = vst [vmem:[#allocation16 + $0x128] sm:$0xff] %v11433
    %11658 = vst [vmem:[#allocation16 + $0x130] sm:$0xff] %v11434
    %11659 = vst [vmem:[#allocation16 + $0x138] sm:$0xff] %v11435
    %11660 = vst [vmem:[#allocation16 + $0x140] sm:$0xff] %v11436
    %11661 = vst [vmem:[#allocation16 + $0x148] sm:$0xff] %v11437
    %11662 = vst [vmem:[#allocation16 + $0x150] sm:$0xff] %v11438
    %11663 = vst [vmem:[#allocation16 + $0x158] sm:$0xff] %v11439
    %11664 = vst [vmem:[#allocation16 + $0x160] sm:$0xff] %v11440
    %11665 = vst [vmem:[#allocation16 + $0x168] sm:$0xff] %v11441
    %11666 = vst [vmem:[#allocation16 + $0x170] sm:$0xff] %v11442
    %11667 = vst [vmem:[#allocation16 + $0x178] sm:$0xff] %v11443
    %11668 = vst [vmem:[#allocation16 + $0x180] sm:$0xff] %v11444
    %11669 = vst [vmem:[#allocation16 + $0x188] sm:$0xff] %v11445
    %11670 = vst [vmem:[#allocation16 + $0x190] sm:$0xff] %v11446
    %11671 = vst [vmem:[#allocation16 + $0x198] sm:$0xff] %v11447
    %11672 = vst [vmem:[#allocation16 + $0x1a0] sm:$0xff] %v11448
    %11673 = vst [vmem:[#allocation16 + $0x1a8] sm:$0xff] %v11449
    %11674 = vst [vmem:[#allocation16 + $0x1b0] sm:$0xff] %v11450
    %11675 = vst [vmem:[#allocation16 + $0x1b8] sm:$0xff] %v11451
    %11676 = vst [vmem:[#allocation16 + $0x1c0] sm:$0xff] %v11452
    %11677 = vst [vmem:[#allocation16 + $0x1c8] sm:$0xff] %v11453
    %11678 = vst [vmem:[#allocation16 + $0x1d0] sm:$0xff] %v11454
    %11679 = vst [vmem:[#allocation16 + $0x1d8] sm:$0xff] %v11455
    %11680 = vst [vmem:[#allocation16 + $0x1e0] sm:$0xff] %v11456
    %11681 = vst [vmem:[#allocation16 + $0x1e8] sm:$0xff] %v11457
    %11682 = vst [vmem:[#allocation16 + $0x1f0] sm:$0xff] %v11458
    %11683 = vst [vmem:[#allocation16 + $0x1f8] sm:$0xff] %v11459
    %11684 = vst [vmem:[#allocation16 + $0x200] sm:$0xff] %v11460
    %11685 = vst [vmem:[#allocation16 + $0x208] sm:$0xff] %v11461
    %11686 = vst [vmem:[#allocation16 + $0x210] sm:$0xff] %v11462
    %11687 = vst [vmem:[#allocation16 + $0x218] sm:$0xff] %v11463
    %11688 = vst [vmem:[#allocation16 + $0x220] sm:$0xff] %v11464
    %11689 = vst [vmem:[#allocation16 + $0x228] sm:$0xff] %v11465
    %11690 = vst [vmem:[#allocation16 + $0x230] sm:$0xff] %v11466
    %11691 = vst [vmem:[#allocation16 + $0x238] sm:$0xff] %v11467
    %11692 = vst [vmem:[#allocation16 + $0x240] sm:$0xff] %v11468
    %11693 = vst [vmem:[#allocation16 + $0x248] sm:$0xff] %v11469
    %11694 = vst [vmem:[#allocation16 + $0x250] sm:$0xff] %v11470
    %11695 = vst [vmem:[#allocation16 + $0x258] sm:$0xff] %v11471
    %11696 = vst [vmem:[#allocation16 + $0x260] sm:$0xff] %v11472
    %11697 = vst [vmem:[#allocation16 + $0x268] sm:$0xff] %v11473
    %11698 = vst [vmem:[#allocation16 + $0x270] sm:$0xff] %v11474
    %11699 = vst [vmem:[#allocation16 + $0x278] sm:$0xff] %v11475
    %11700 = vst [vmem:[#allocation16 + $0x280] sm:$0xff] %v11476
    %11701 = vst [vmem:[#allocation16 + $0x288] sm:$0xff] %v11477
    %11702 = vst [vmem:[#allocation16 + $0x290] sm:$0xff] %v11478
    %11703 = vst [vmem:[#allocation16 + $0x298] sm:$0xff] %v11479
    %11704 = vst [vmem:[#allocation16 + $0x2a0] sm:$0xff] %v11480
    %11705 = vst [vmem:[#allocation16 + $0x2a8] sm:$0xff] %v11481
    %11706 = vst [vmem:[#allocation16 + $0x2b0] sm:$0xff] %v11482
    %11707 = vst [vmem:[#allocation16 + $0x2b8] sm:$0xff] %v11483
    %11708 = vst [vmem:[#allocation16 + $0x2c0] sm:$0xff] %v11484
    %11709 = vst [vmem:[#allocation16 + $0x2c8] sm:$0xff] %v11485
    %11710 = vst [vmem:[#allocation16 + $0x2d0] sm:$0xff] %v11486
    %11711 = vst [vmem:[#allocation16 + $0x2d8] sm:$0xff] %v11487
    %11712 = vst [vmem:[#allocation16 + $0x2e0] sm:$0xff] %v11488
    %11713 = vst [vmem:[#allocation16 + $0x2e8] sm:$0xff] %v11489
    %11714 = vst [vmem:[#allocation16 + $0x2f0] sm:$0xff] %v11490
    %11715 = vst [vmem:[#allocation16 + $0x2f8] sm:$0xff] %v11491
    %11716 = vst [vmem:[#allocation16 + $0x300] sm:$0xff] %v11492
    %11717 = vst [vmem:[#allocation16 + $0x308] sm:$0xff] %v11493
    %11718 = vst [vmem:[#allocation16 + $0x310] sm:$0xff] %v11494
    %11719 = vst [vmem:[#allocation16 + $0x318] sm:$0xff] %v11495
    %11720 = vst [vmem:[#allocation16 + $0x320] sm:$0xff] %v11496
    %11721 = vst [vmem:[#allocation16 + $0x328] sm:$0xff] %v11497
    %11722 = vst [vmem:[#allocation16 + $0x330] sm:$0xff] %v11498
    %11723 = vst [vmem:[#allocation16 + $0x338] sm:$0xff] %v11499
    %11724 = vst [vmem:[#allocation16 + $0x340] sm:$0xff] %v11500
    %11725 = vst [vmem:[#allocation16 + $0x348] sm:$0xff] %v11501
    %11726 = vst [vmem:[#allocation16 + $0x350] sm:$0xff] %v11502
    %11727 = vst [vmem:[#allocation16 + $0x358] sm:$0xff] %v11503
    %11728 = vst [vmem:[#allocation16 + $0x360] sm:$0xff] %v11504
    %11729 = vst [vmem:[#allocation16 + $0x368] sm:$0xff] %v11505
    %11730 = vst [vmem:[#allocation16 + $0x370] sm:$0xff] %v11506
    %11731 = vst [vmem:[#allocation16 + $0x378] sm:$0xff] %v11507
    %11732 = vst [vmem:[#allocation16 + $0x380] sm:$0xff] %v11508
    %11733 = vst [vmem:[#allocation16 + $0x388] sm:$0xff] %v11509
    %11734 = vst [vmem:[#allocation16 + $0x390] sm:$0xff] %v11510
    %11735 = vst [vmem:[#allocation16 + $0x398] sm:$0xff] %v11511
    %11736 = vst [vmem:[#allocation16 + $0x3a0] sm:$0xff] %v11512
    %11737 = vst [vmem:[#allocation16 + $0x3a8] sm:$0xff] %v11513
    %11738 = vst [vmem:[#allocation16 + $0x3b0] sm:$0xff] %v11514
    %11739 = vst [vmem:[#allocation16 + $0x3b8] sm:$0xff] %v11515
    %11740 = vst [vmem:[#allocation16 + $0x3c0] sm:$0xff] %v11516
    %11741 = vst [vmem:[#allocation16 + $0x3c8] sm:$0xff] %v11517
    %11742 = vst [vmem:[#allocation16 + $0x3d0] sm:$0xff] %v11518
    %11743 = vst [vmem:[#allocation16 + $0x3d8] sm:$0xff] %v11519
    %11744 = vst [vmem:[#allocation16 + $0x3e0] sm:$0xff] %v11520
    %11745 = vst [vmem:[#allocation16 + $0x3e8] sm:$0xff] %v11521
    %11746 = vst [vmem:[#allocation16 + $0x3f0] sm:$0xff] %v11522
    %11747 = vst [vmem:[#allocation16 + $0x3f8] sm:$0xff] %v11523
    %11748 = vst [vmem:[#allocation16 + $0x400] sm:$0xff] %v11524
    %11749 = vst [vmem:[#allocation16 + $0x408] sm:$0xff] %v11525
    %11750 = vst [vmem:[#allocation16 + $0x410] sm:$0xff] %v11526
    %11751 = vst [vmem:[#allocation16 + $0x418] sm:$0xff] %v11527
    %11752 = vst [vmem:[#allocation16 + $0x420] sm:$0xff] %v11528
    %11753 = vst [vmem:[#allocation16 + $0x428] sm:$0xff] %v11529
    %11754 = vst [vmem:[#allocation16 + $0x430] sm:$0xff] %v11530
    %11755 = vst [vmem:[#allocation16 + $0x438] sm:$0xff] %v11531
    %11756 = vst [vmem:[#allocation16 + $0x440] sm:$0xff] %v11532
    %11757 = vst [vmem:[#allocation16 + $0x448] sm:$0xff] %v11533
    %11758 = vst [vmem:[#allocation16 + $0x450] sm:$0xff] %v11534
    %11759 = vst [vmem:[#allocation16 + $0x458] sm:$0xff] %v11535
    %11760 = vst [vmem:[#allocation16 + $0x460] sm:$0xff] %v11536
    %11761 = vst [vmem:[#allocation16 + $0x468] sm:$0xff] %v11537
    %11762 = vst [vmem:[#allocation16 + $0x470] sm:$0xff] %v11538
    %11763 = vst [vmem:[#allocation16 + $0x478] sm:$0xff] %v11539
    %11764 = vst [vmem:[#allocation16 + $0x480] sm:$0xff] %v11540
    %11765 = vst [vmem:[#allocation16 + $0x488] sm:$0xff] %v11541
    %11766 = vst [vmem:[#allocation16 + $0x490] sm:$0xff] %v11542
    %11767 = vst [vmem:[#allocation16 + $0x498] sm:$0xff] %v11543
    %11768 = vst [vmem:[#allocation16 + $0x4a0] sm:$0xff] %v11544
    %11769 = vst [vmem:[#allocation16 + $0x4a8] sm:$0xff] %v11545
    %11770 = vst [vmem:[#allocation16 + $0x4b0] sm:$0xff] %v11546
    %11771 = vst [vmem:[#allocation16 + $0x4b8] sm:$0xff] %v11547
    %11772 = vst [vmem:[#allocation16 + $0x4c0] sm:$0xff] %v11548
    %11773 = vst [vmem:[#allocation16 + $0x4c8] sm:$0xff] %v11549
    %11774 = vst [vmem:[#allocation16 + $0x4d0] sm:$0xff] %v11550
    %11775 = vst [vmem:[#allocation16 + $0x4d8] sm:$0xff] %v11551
    %11776 = vst [vmem:[#allocation16 + $0x4e0] sm:$0xff] %v11552
    %11777 = vst [vmem:[#allocation16 + $0x4e8] sm:$0xff] %v11553
    %11778 = vst [vmem:[#allocation16 + $0x4f0] sm:$0xff] %v11554
    %11779 = vst [vmem:[#allocation16 + $0x4f8] sm:$0xff] %v11555
    %11780 = vst [vmem:[#allocation16 + $0x500] sm:$0xff] %v11556
    %11781 = vst [vmem:[#allocation16 + $0x508] sm:$0xff] %v11557
    %11782 = vst [vmem:[#allocation16 + $0x510] sm:$0xff] %v11558
    %11783 = vst [vmem:[#allocation16 + $0x518] sm:$0xff] %v11559
    %11784 = vst [vmem:[#allocation16 + $0x520] sm:$0xff] %v11560
    %11785 = vst [vmem:[#allocation16 + $0x528] sm:$0xff] %v11561
    %11786 = vst [vmem:[#allocation16 + $0x530] sm:$0xff] %v11562
    %11787 = vst [vmem:[#allocation16 + $0x538] sm:$0xff] %v11563
    %11788 = vst [vmem:[#allocation16 + $0x540] sm:$0xff] %v11564
    %11789 = vst [vmem:[#allocation16 + $0x548] sm:$0xff] %v11565
    %11790 = vst [vmem:[#allocation16 + $0x550] sm:$0xff] %v11566
    %11791 = vst [vmem:[#allocation16 + $0x558] sm:$0xff] %v11567
    %11792 = vst [vmem:[#allocation16 + $0x560] sm:$0xff] %v11568
    %11793 = vst [vmem:[#allocation16 + $0x568] sm:$0xff] %v11569
    %11794 = vst [vmem:[#allocation16 + $0x570] sm:$0xff] %v11570
    %11795 = vst [vmem:[#allocation16 + $0x578] sm:$0xff] %v11571
    %11796 = vst [vmem:[#allocation16 + $0x580] sm:$0xff] %v11572
    %11797 = vst [vmem:[#allocation16 + $0x588] sm:$0xff] %v11573
    %11798 = vst [vmem:[#allocation16 + $0x590] sm:$0xff] %v11574
    %11799 = vst [vmem:[#allocation16 + $0x598] sm:$0xff] %v11575
    %11800 = vst [vmem:[#allocation16 + $0x5a0] sm:$0xff] %v11576
    %11801 = vst [vmem:[#allocation16 + $0x5a8] sm:$0xff] %v11577
    %11802 = vst [vmem:[#allocation16 + $0x5b0] sm:$0xff] %v11578
    %11803 = vst [vmem:[#allocation16 + $0x5b8] sm:$0xff] %v11579
    %11804 = vst [vmem:[#allocation16 + $0x5c0] sm:$0xff] %v11580
    %11805 = vst [vmem:[#allocation16 + $0x5c8] sm:$0xff] %v11581
    %11806 = vst [vmem:[#allocation16 + $0x5d0] sm:$0xff] %v11582
    %11807 = vst [vmem:[#allocation16 + $0x5d8] sm:$0xff] %v11583
    %11808 = vst [vmem:[#allocation16 + $0x5e0] sm:$0xff] %v11584
    %11809 = vst [vmem:[#allocation16 + $0x5e8] sm:$0xff] %v11585
    %11810 = vst [vmem:[#allocation16 + $0x5f0] sm:$0xff] %v11586
    %11811 = vst [vmem:[#allocation16 + $0x5f8] sm:$0xff] %v11587
    %11812 = vst [vmem:[#allocation16 + $0x600] sm:$0xff] %v11588
    %11813 = vst [vmem:[#allocation16 + $0x608] sm:$0xff] %v11589
    %11814 = vst [vmem:[#allocation16 + $0x610] sm:$0xff] %v11590
    %11815 = vst [vmem:[#allocation16 + $0x618] sm:$0xff] %v11591
    %11816 = vst [vmem:[#allocation16 + $0x620] sm:$0xff] %v11592
    %11817 = vst [vmem:[#allocation16 + $0x628] sm:$0xff] %v11593
    %11818 = vst [vmem:[#allocation16 + $0x630] sm:$0xff] %v11594
    %11819 = vst [vmem:[#allocation16 + $0x638] sm:$0xff] %v11595
    %11820 = vst [vmem:[#allocation16 + $0x640] sm:$0xff] %v11596
    %11821 = vst [vmem:[#allocation16 + $0x648] sm:$0xff] %v11597
    %11822 = vst [vmem:[#allocation16 + $0x650] sm:$0xff] %v11598
    %11823 = vst [vmem:[#allocation16 + $0x658] sm:$0xff] %v11599
    %11824 = vst [vmem:[#allocation16 + $0x660] sm:$0xff] %v11600
    %11825 = vst [vmem:[#allocation16 + $0x668] sm:$0xff] %v11601
    %11826 = vst [vmem:[#allocation16 + $0x670] sm:$0xff] %v11602
    %11827 = vst [vmem:[#allocation16 + $0x678] sm:$0xff] %v11603
    %11828 = vst [vmem:[#allocation16 + $0x680] sm:$0xff] %v11604
    %11829 = vst [vmem:[#allocation16 + $0x688] sm:$0xff] %v11605
    %11830 = vst [vmem:[#allocation16 + $0x690] sm:$0xff] %v11606
    %11831 = vst [vmem:[#allocation16 + $0x698] sm:$0xff] %v11607
    %11832 = vst [vmem:[#allocation16 + $0x6a0] sm:$0xff] %v11608
    %11833 = vst [vmem:[#allocation16 + $0x6a8] sm:$0xff] %v11609
    %11834 = vst [vmem:[#allocation16 + $0x6b0] sm:$0xff] %v11610
    %11835 = vst [vmem:[#allocation16 + $0x6b8] sm:$0xff] %v11611
    %11836 = vst [vmem:[#allocation16 + $0x6c0] sm:$0xff] %v11612
    %11837 = vst [vmem:[#allocation16 + $0x6c8] sm:$0xff] %v11613
    %11838 = vst [vmem:[#allocation16 + $0x6d0] sm:$0xff] %v11614
    %11839 = vst [vmem:[#allocation16 + $0x6d8] sm:$0xff] %v11615
    %11840 = vst [vmem:[#allocation16 + $0x6e0] sm:$0xff] %v11616
    %11841 = vst [vmem:[#allocation16 + $0x6e8] sm:$0xff] %v11617
    %11842 = vst [vmem:[#allocation16 + $0x6f0] sm:$0xff] %v11618
    %11843 = vst [vmem:[#allocation16 + $0x6f8] sm:$0xff] %v11619
    // Predicated region
    $region70: #{tpu_custom_call.1} parent=1 // pred_check
      _
    $region71: #{tpu_custom_call.1} parent=1 // pred_check_branch
      %11845 = sbr.rel (0) target = $region73
    $region72: #{tpu_custom_call.1} parent=1 // pred_region
      %s11847 = ssub.s32 28672, 28672
      %11848 = vsyncadd [#allocation4], %s11847
      %s11849 = sshll.u32 [#allocation16], 4
      %s11850 = int_to_ptr.vmem [resolvable:$true] %s11849
      %11855 = dma.vmem_to_hbm [thread:$0]  %s11850, 28672, %s9, [#allocation4], 896, 896, 56
    $region73: #{tpu_custom_call.1} parent=1 // pred_fallthru
      _
    // Predicated region
    $region74: #{tpu_custom_call.1} parent=1 // pred_check
      _
    $region75: #{tpu_custom_call.1} parent=1 // pred_check_branch
      %11857 = sbr.rel (0) target = $region77
    $region76: #{tpu_custom_call.1} parent=1 // pred_region
      %11858 = dma.done [#allocation4], 28672
    $region77: #{tpu_custom_call.1} parent=1 // pred_fallthru
      _
    %11859 = vsyncpa [#allocation3], 1
    %11860 = vsyncpa [#allocation6], 1
    %11861 = vsyncpa [#allocation9], 1
    %11862 = vsyncpa [#allocation12], 1
    %11863 = vsyncpa [#allocation15], 1
    %11864 = vsyncpa [#allocation4], 1

</llo_original>
